<compile_context>
chip_gen: v7x
topology: tpu7x:2x2x1
jax: 0.10.0
libtpu: 0.0.40
codegen_flags: <defaults>
</compile_context>

<pallas_src>
import math
import functools

import jax
import jax.numpy as jnp
from jax import lax
from jax.experimental import pallas as pl
from jax.experimental.pallas import tpu as pltpu


def _round_up(v, m):
    return (v + m - 1) // m * m


def _erf(x):
    # Abramowitz & Stegun 7.1.26, |abs err| <= 1.5e-7.  Implemented with
    # exp/mul/add/select only so it lowers on every TPU generation (no
    # dependence on a native erf lowering); exp lands on the EUP slot.
    ax = jnp.abs(x)
    t = 1.0 / (1.0 + 0.3275911 * ax)
    poly = t * (0.254829592 + t * (-0.284496736 + t * (1.421413741
               + t * (-1.453152027 + t * 1.061405429))))
    e = 1.0 - poly * jnp.exp(-(ax * ax))
    return jnp.where(x >= 0.0, e, -e)


def _gelu_exact(x):
    # F.gelu default (approximate='none'): 0.5*x*(1+erf(x/sqrt(2)))
    return 0.5 * x * (1.0 + _erf(x * (1.0 / math.sqrt(2.0))))


def residual_block_kernel(x_ref, mask_ref, w1_ref, b1_ref, g1_ref, be1_ref,
                          w2_ref, b2_ref, g2_ref, be2_ref, wsc_ref, bsc_ref,
                          o_ref, buf_ref, *, H, W, K, Wp, Lp, M_pad, base_off,
                          eps=1e-5):
    inv_cnt = 1.0 / float(H * W)
    mask = mask_ref[...]                       # (1, Lp): 1.0 on interior cols
    Cbuf, Wbuf = buf_ref.shape

    def conv_kxk(rhs_slice, w_ref):
        # Direct accumulated per-tap dots: every KxK tap is a static lane
        # shift of the margined buffer; no im2col slab is written.
        acc = None
        for dy in range(K):
            for dx in range(K):
                off = base_off + dy * Wp + dx
                part = jnp.dot(w_ref[dy * K + dx], rhs_slice(off),
                               preferred_element_type=jnp.float32)
                acc = part if acc is None else acc + part
        return acc

    def inorm_gelu(acc, b, g, be):
        # InstanceNorm2d (biased var, eps, affine) over the H*W interior
        # columns only; one-pass statistics; then exact GELU.
        acc = acc + b
        am = acc * mask
        s1 = jnp.sum(am, axis=1, keepdims=True)
        s2 = jnp.sum(am * acc, axis=1, keepdims=True)     # = sum(mask*acc^2)
        mean = s1 * inv_cnt
        var = jnp.maximum(s2 * inv_cnt - mean * mean, 0.0)
        xn = (acc - mean) * lax.rsqrt(var + eps)
        return _gelu_exact(xn * g + be)

    # ---- conv1 (KxK, pad P) directly off the margined input block ----------
    acc1 = conv_kxk(lambda off: x_ref[:, off:off + Lp], w1_ref)
    # mask -> interior kept, ring + lane-pad zeroed (== conv2's zero padding)
    out1 = inorm_gelu(acc1, b1_ref[...], g1_ref[...], be1_ref[...]) * mask

    # ---- re-margin out1 in a persistent VMEM scratch (aligned stores) ------
    buf_ref[:, :M_pad] = jnp.zeros((Cbuf, M_pad), jnp.float32)
    if Wbuf > M_pad + Lp:
        buf_ref[:, M_pad + Lp:] = jnp.zeros((Cbuf, Wbuf - M_pad - Lp),
                                            jnp.float32)
    buf_ref[:, M_pad:M_pad + Lp] = out1

    # ---- conv2 (KxK, pad P) off the scratch ---------------------------------
    acc2 = conv_kxk(lambda off: buf_ref[:, off:off + Lp], w2_ref)
    out2 = inorm_gelu(acc2, b2_ref[...], g2_ref[...], be2_ref[...])

    # ---- shortcut 1x1 conv on the original input (center-tap slice) --------
    xc = x_ref[:, M_pad:M_pad + Lp]
    identity = jnp.dot(wsc_ref[...], xc,
                       preferred_element_type=jnp.float32) + bsc_ref[...]

    # Non-interior columns hold don't-care (finite) values; wrapper slices
    # them away.  Lane width Lp is a multiple of 128 -> unmasked stores.
    o_ref[...] = _gelu_exact(out2 + identity).astype(o_ref.dtype)


def residual_block(x_nchw, params, *, K=5):
    """x_nchw: (N, Cin, H, W) like PyTorch; params in PyTorch layouts."""
    N, Cin, H, W = x_nchw.shape
    Cout = params["w1"].shape[0]
    P = K // 2
    Hp, Wp = H + 2 * P, W + 2 * P
    L = Hp * Wp
    Lp = _round_up(L, 128)              # lane-dense activation width
    M = P * Wp + P                      # true conv lane margin
    M_pad = _round_up(M, 128)           # aligned interior offset in buffers
    base_off = M_pad - M                # tap slice base offset
    t_max = (K - 1) * Wp + (K - 1)      # largest tap shift
    Wbuf = _round_up(max(base_off + t_max + Lp, M_pad + Lp), 128)
    Cin_p = _round_up(Cin, 8)
    Cout_p = _round_up(Cout, 8)
    f32 = jnp.float32

    # -- layout plumbing (outside the kernel): pad channels to a sublane
    #    multiple, pad spatially by P, flatten spatial onto lanes, and place
    #    the data at lane offset M_pad inside a zero buffer of width Wbuf so
    #    every conv tap is a pure static lane shift in-kernel.
    x = x_nchw.astype(f32)
    x = jnp.pad(x, ((0, 0), (0, Cin_p - Cin), (P, P), (P, P)))
    x = x.reshape(N, Cin_p, L)
    x = jnp.pad(x, ((0, 0), (0, 0), (M_pad, Wbuf - M_pad - L)))

    def conv_w(w, cin, cin_p):
        # torch (Cout, Cin, K, K) -> (K*K, Cout_p, cin_p), tap-major
        wt = jnp.transpose(w.astype(f32), (2, 3, 0, 1))       # (K,K,Cout,Cin)
        wt = jnp.pad(wt, ((0, 0), (0, 0),
                          (0, Cout_p - Cout), (0, cin_p - cin)))
        return wt.reshape(K * K, Cout_p, cin_p)

    def vec(v):
        v = jnp.pad(v.astype(f32).reshape(-1), (0, Cout_p - Cout))
        return v.reshape(Cout_p, 1)

    w1m = conv_w(params["w1"], Cin, Cin_p)
    w2m = conv_w(params["w2"], Cout, Cout_p)
    wscm = jnp.pad(params["wsc"].astype(f32).reshape(Cout, Cin),
                   ((0, Cout_p - Cout), (0, Cin_p - Cin)))

    yy, xx = jnp.meshgrid(jnp.arange(Hp), jnp.arange(Wp), indexing="ij")
    interior = (yy >= P) & (yy < P + H) & (xx >= P) & (xx < P + W)
    mask = jnp.pad(interior.astype(f32).reshape(1, L), ((0, 0), (0, Lp - L)))

    kernel = functools.partial(residual_block_kernel, H=H, W=W, K=K, Wp=Wp,
                               Lp=Lp, M_pad=M_pad, base_off=base_off)

    c2 = lambda shape: pl.BlockSpec(shape, lambda n: (0, 0))
    c3 = lambda shape: pl.BlockSpec(shape, lambda n: (0, 0, 0))

    grid_spec = pltpu.PrefetchScalarGridSpec(
        num_scalar_prefetch=0,
        grid=(N,),
        in_specs=[
            pl.BlockSpec((None, Cin_p, Wbuf), lambda n: (n, 0, 0)),   # image
            c2((1, Lp)),                               # interior mask
            c3((K * K, Cout_p, Cin_p)),                # w1 taps
            c2((Cout_p, 1)), c2((Cout_p, 1)), c2((Cout_p, 1)),
            c3((K * K, Cout_p, Cout_p)),               # w2 taps
            c2((Cout_p, 1)), c2((Cout_p, 1)), c2((Cout_p, 1)),
            c2((Cout_p, Cin_p)),                       # wsc (1x1 shortcut)
            c2((Cout_p, 1)),                           # bsc
        ],
        out_specs=pl.BlockSpec((None, Cout_p, Lp), lambda n: (n, 0, 0)),
        scratch_shapes=[pltpu.VMEM((Cout_p, Wbuf), jnp.float32)],
    )

    out = pl.pallas_call(
        kernel,
        out_shape=jax.ShapeDtypeStruct((N, Cout_p, Lp), x_nchw.dtype),
        grid_spec=grid_spec,
        compiler_params=pltpu.CompilerParams(
            dimension_semantics=("parallel",)),   # batch is independent work
    )(x, mask, w1m, vec(params["b1"]), vec(params["g1"]), vec(params["be1"]),
      w2m, vec(params["b2"]), vec(params["g2"]), vec(params["be2"]),
      wscm, vec(params["bsc"]))

    # de-pad: drop lane padding, channel padding, and the spatial ring
    out = out[:, :Cout, :L].reshape(N, Cout, Hp, Wp)[:, :, P:P + H, P:P + W]
    return out


# ----------------------------- pure-JAX reference -----------------------------
def ref_forward(x, p, *, K=5):
    dn = ("NCHW", "OIHW", "NCHW")

    def conv(x, w, b, pad):
        y = lax.conv_general_dilated(x, w, (1, 1), [(pad, pad), (pad, pad)],
                                     dimension_numbers=dn)
        return y + b.reshape(1, -1, 1, 1)

    def inorm(x, g, b, eps=1e-5):
        m = jnp.mean(x, axis=(2, 3), keepdims=True)
        v = jnp.mean(jnp.square(x - m), axis=(2, 3), keepdims=True)
        return ((x - m) * lax.rsqrt(v + eps) * g.reshape(1, -1, 1, 1)
                + b.reshape(1, -1, 1, 1))

    gelu = lambda t: 0.5 * t * (1.0 + jax.scipy.special.erf(
        t / jnp.sqrt(2.0).astype(t.dtype)))

    identity = conv(x, p["wsc"], p["bsc"], 0)
    out = gelu(inorm(conv(x, p["w1"], p["b1"], K // 2), p["g1"], p["be1"]))
    out = gelu(inorm(conv(out, p["w2"], p["b2"], K // 2), p["g2"], p["be2"]))
    return gelu(out + identity)


if __name__ == "__main__":
    # Small shapes consistent with the module: N=2, Cin=4, H=W=16, Cout=8, stride=1.
    N, Cin, H, W, Cout, K = 2, 4, 16, 16, 8, 5

    key = jax.random.PRNGKey(0)
    ks = jax.random.split(key, 12)

    x = jax.random.normal(ks[0], (N, Cin, H, W), jnp.float32)   # PyTorch NCHW

    params = {
        "w1":  0.1 * jax.random.normal(ks[1], (Cout, Cin, K, K), jnp.float32),
        "b1":  0.1 * jax.random.normal(ks[2], (Cout,), jnp.float32),
        "g1":  1.0 + 0.1 * jax.random.normal(ks[3], (Cout,), jnp.float32),
        "be1": 0.1 * jax.random.normal(ks[4], (Cout,), jnp.float32),
        "w2":  0.1 * jax.random.normal(ks[5], (Cout, Cout, K, K), jnp.float32),
        "b2":  0.1 * jax.random.normal(ks[6], (Cout,), jnp.float32),
        "g2":  1.0 + 0.1 * jax.random.normal(ks[7], (Cout,), jnp.float32),
        "be2": 0.1 * jax.random.normal(ks[8], (Cout,), jnp.float32),
        "wsc": 0.1 * jax.random.normal(ks[9], (Cout, Cin, 1, 1), jnp.float32),
        "bsc": 0.1 * jax.random.normal(ks[10], (Cout,), jnp.float32),
    }

    out = jax.block_until_ready(residual_block(x, params, K=K))
    ref = jax.block_until_ready(ref_forward(x, params, K=K))

    assert out.shape == (N, Cout, H, W)
    assert jnp.allclose(out, ref, atol=1e-4, rtol=1e-4), (
        float(jnp.max(jnp.abs(out - ref))))

    print("KERNEL_OK")
</pallas_src>

<mosaic_0001>
module attributes {stable_mosaic.version = 11 : i64} {
  func.func @residual_block_kernel(%arg0: i32, %arg1: memref<1x8x768xf32, #tpu.memory_space<vmem>>, %arg2: memref<1x512xf32, #tpu.memory_space<vmem>>, %arg3: memref<25x8x8xf32, #tpu.memory_space<vmem>>, %arg4: memref<8x1xf32, #tpu.memory_space<vmem>>, %arg5: memref<8x1xf32, #tpu.memory_space<vmem>>, %arg6: memref<8x1xf32, #tpu.memory_space<vmem>>, %arg7: memref<25x8x8xf32, #tpu.memory_space<vmem>>, %arg8: memref<8x1xf32, #tpu.memory_space<vmem>>, %arg9: memref<8x1xf32, #tpu.memory_space<vmem>>, %arg10: memref<8x1xf32, #tpu.memory_space<vmem>>, %arg11: memref<8x8xf32, #tpu.memory_space<vmem>>, %arg12: memref<8x1xf32, #tpu.memory_space<vmem>>, %arg13: memref<1x8x512xf32, #tpu.memory_space<vmem>>, %arg14: memref<8x768xf32, #tpu.memory_space<vmem>>) attributes {dimension_semantics = [#tpu.dimension_semantics<parallel>], iteration_bounds = array<i64: 2>, scalar_prefetch = 0 : i64, scratch_operands = 1 : i64, tpu.core_type = #tpu.core_type<tc>, window_params = [{transform_indices = @transform_0, window_bounds = array<i64: 1, 8, 768>}, {pipeline_mode = #tpu.pipeline_mode<synchronous>, transform_indices = @transform_1, window_bounds = array<i64: 1, 512>}, {pipeline_mode = #tpu.pipeline_mode<synchronous>, transform_indices = @transform_2, window_bounds = array<i64: 25, 8, 8>}, {pipeline_mode = #tpu.pipeline_mode<synchronous>, transform_indices = @transform_3, window_bounds = array<i64: 8, 1>}, {pipeline_mode = #tpu.pipeline_mode<synchronous>, transform_indices = @transform_4, window_bounds = array<i64: 8, 1>}, {pipeline_mode = #tpu.pipeline_mode<synchronous>, transform_indices = @transform_5, window_bounds = array<i64: 8, 1>}, {pipeline_mode = #tpu.pipeline_mode<synchronous>, transform_indices = @transform_6, window_bounds = array<i64: 25, 8, 8>}, {pipeline_mode = #tpu.pipeline_mode<synchronous>, transform_indices = @transform_7, window_bounds = array<i64: 8, 1>}, {pipeline_mode = #tpu.pipeline_mode<synchronous>, transform_indices = @transform_8, window_bounds = array<i64: 8, 1>}, {pipeline_mode = #tpu.pipeline_mode<synchronous>, transform_indices = @transform_9, window_bounds = array<i64: 8, 1>}, {pipeline_mode = #tpu.pipeline_mode<synchronous>, transform_indices = @transform_10, window_bounds = array<i64: 8, 8>}, {pipeline_mode = #tpu.pipeline_mode<synchronous>, transform_indices = @transform_11, window_bounds = array<i64: 8, 1>}, {transform_indices = @transform_12, window_bounds = array<i64: 1, 8, 512>}]} {
    %c0 = arith.constant 0 : index
    %c0_0 = arith.constant 0 : index
    %0 = vector.load %arg2[%c0, %c0_0] : memref<1x512xf32, #tpu.memory_space<vmem>>, vector<1x512xf32>
    %c0_1 = arith.constant 0 : index
    %c0_2 = arith.constant 0 : index
    %c0_3 = arith.constant 0 : index
    %1 = vector.load %arg3[%c0_1, %c0_2, %c0_3] : memref<25x8x8xf32, #tpu.memory_space<vmem>>, vector<1x8x8xf32>
    %2 = vector.shape_cast %1 : vector<1x8x8xf32> to vector<8x8xf32>
    %c0_4 = arith.constant 0 : index
    %c0_5 = arith.constant 0 : index
    %c86 = arith.constant 86 : index
    %3 = vector.load %arg1[%c0_4, %c0_5, %c86] : memref<1x8x768xf32, #tpu.memory_space<vmem>>, vector<1x8x512xf32>
    %4 = vector.shape_cast %3 : vector<1x8x512xf32> to vector<8x512xf32>
    %cst = arith.constant dense<0.000000e+00> : vector<8x512xf32>
    %5 = tpu.matmul %2, %4, %cst {dimension_numbers = #tpu.dot_dimension_numbers<[1], [0], [0], [1], [0, 0, 1, 1], [], []>} : vector<8x8xf32>, vector<8x512xf32>, vector<8x512xf32> -> vector<8x512xf32>
    %c1 = arith.constant 1 : index
    %c0_6 = arith.constant 0 : index
    %c0_7 = arith.constant 0 : index
    %6 = vector.load %arg3[%c1, %c0_6, %c0_7] : memref<25x8x8xf32, #tpu.memory_space<vmem>>, vector<1x8x8xf32>
    %7 = vector.shape_cast %6 : vector<1x8x8xf32> to vector<8x8xf32>
    %c0_8 = arith.constant 0 : index
    %c0_9 = arith.constant 0 : index
    %c87 = arith.constant 87 : index
    %8 = vector.load %arg1[%c0_8, %c0_9, %c87] : memref<1x8x768xf32, #tpu.memory_space<vmem>>, vector<1x8x512xf32>
    %9 = vector.shape_cast %8 : vector<1x8x512xf32> to vector<8x512xf32>
    %cst_10 = arith.constant dense<0.000000e+00> : vector<8x512xf32>
    %10 = tpu.matmul %7, %9, %cst_10 {dimension_numbers = #tpu.dot_dimension_numbers<[1], [0], [0], [1], [0, 0, 1, 1], [], []>} : vector<8x8xf32>, vector<8x512xf32>, vector<8x512xf32> -> vector<8x512xf32>
    %11 = arith.addf %5, %10 : vector<8x512xf32>
    %c2 = arith.constant 2 : index
    %c0_11 = arith.constant 0 : index
    %c0_12 = arith.constant 0 : index
    %12 = vector.load %arg3[%c2, %c0_11, %c0_12] : memref<25x8x8xf32, #tpu.memory_space<vmem>>, vector<1x8x8xf32>
    %13 = vector.shape_cast %12 : vector<1x8x8xf32> to vector<8x8xf32>
    %c0_13 = arith.constant 0 : index
    %c0_14 = arith.constant 0 : index
    %c88 = arith.constant 88 : index
    %14 = vector.load %arg1[%c0_13, %c0_14, %c88] : memref<1x8x768xf32, #tpu.memory_space<vmem>>, vector<1x8x512xf32>
    %15 = vector.shape_cast %14 : vector<1x8x512xf32> to vector<8x512xf32>
    %cst_15 = arith.constant dense<0.000000e+00> : vector<8x512xf32>
    %16 = tpu.matmul %13, %15, %cst_15 {dimension_numbers = #tpu.dot_dimension_numbers<[1], [0], [0], [1], [0, 0, 1, 1], [], []>} : vector<8x8xf32>, vector<8x512xf32>, vector<8x512xf32> -> vector<8x512xf32>
    %17 = arith.addf %11, %16 : vector<8x512xf32>
    %c3 = arith.constant 3 : index
    %c0_16 = arith.constant 0 : index
    %c0_17 = arith.constant 0 : index
    %18 = vector.load %arg3[%c3, %c0_16, %c0_17] : memref<25x8x8xf32, #tpu.memory_space<vmem>>, vector<1x8x8xf32>
    %19 = vector.shape_cast %18 : vector<1x8x8xf32> to vector<8x8xf32>
    %c0_18 = arith.constant 0 : index
    %c0_19 = arith.constant 0 : index
    %c89 = arith.constant 89 : index
    %20 = vector.load %arg1[%c0_18, %c0_19, %c89] : memref<1x8x768xf32, #tpu.memory_space<vmem>>, vector<1x8x512xf32>
    %21 = vector.shape_cast %20 : vector<1x8x512xf32> to vector<8x512xf32>
    %cst_20 = arith.constant dense<0.000000e+00> : vector<8x512xf32>
    %22 = tpu.matmul %19, %21, %cst_20 {dimension_numbers = #tpu.dot_dimension_numbers<[1], [0], [0], [1], [0, 0, 1, 1], [], []>} : vector<8x8xf32>, vector<8x512xf32>, vector<8x512xf32> -> vector<8x512xf32>
    %23 = arith.addf %17, %22 : vector<8x512xf32>
    %c4 = arith.constant 4 : index
    %c0_21 = arith.constant 0 : index
    %c0_22 = arith.constant 0 : index
    %24 = vector.load %arg3[%c4, %c0_21, %c0_22] : memref<25x8x8xf32, #tpu.memory_space<vmem>>, vector<1x8x8xf32>
    %25 = vector.shape_cast %24 : vector<1x8x8xf32> to vector<8x8xf32>
    %c0_23 = arith.constant 0 : index
    %c0_24 = arith.constant 0 : index
    %c90 = arith.constant 90 : index
    %26 = vector.load %arg1[%c0_23, %c0_24, %c90] : memref<1x8x768xf32, #tpu.memory_space<vmem>>, vector<1x8x512xf32>
    %27 = vector.shape_cast %26 : vector<1x8x512xf32> to vector<8x512xf32>
    %cst_25 = arith.constant dense<0.000000e+00> : vector<8x512xf32>
    %28 = tpu.matmul %25, %27, %cst_25 {dimension_numbers = #tpu.dot_dimension_numbers<[1], [0], [0], [1], [0, 0, 1, 1], [], []>} : vector<8x8xf32>, vector<8x512xf32>, vector<8x512xf32> -> vector<8x512xf32>
    %29 = arith.addf %23, %28 : vector<8x512xf32>
    %c5 = arith.constant 5 : index
    %c0_26 = arith.constant 0 : index
    %c0_27 = arith.constant 0 : index
    %30 = vector.load %arg3[%c5, %c0_26, %c0_27] : memref<25x8x8xf32, #tpu.memory_space<vmem>>, vector<1x8x8xf32>
    %31 = vector.shape_cast %30 : vector<1x8x8xf32> to vector<8x8xf32>
    %c0_28 = arith.constant 0 : index
    %c0_29 = arith.constant 0 : index
    %c106 = arith.constant 106 : index
    %32 = vector.load %arg1[%c0_28, %c0_29, %c106] : memref<1x8x768xf32, #tpu.memory_space<vmem>>, vector<1x8x512xf32>
    %33 = vector.shape_cast %32 : vector<1x8x512xf32> to vector<8x512xf32>
    %cst_30 = arith.constant dense<0.000000e+00> : vector<8x512xf32>
    %34 = tpu.matmul %31, %33, %cst_30 {dimension_numbers = #tpu.dot_dimension_numbers<[1], [0], [0], [1], [0, 0, 1, 1], [], []>} : vector<8x8xf32>, vector<8x512xf32>, vector<8x512xf32> -> vector<8x512xf32>
    %35 = arith.addf %29, %34 : vector<8x512xf32>
    %c6 = arith.constant 6 : index
    %c0_31 = arith.constant 0 : index
    %c0_32 = arith.constant 0 : index
    %36 = vector.load %arg3[%c6, %c0_31, %c0_32] : memref<25x8x8xf32, #tpu.memory_space<vmem>>, vector<1x8x8xf32>
    %37 = vector.shape_cast %36 : vector<1x8x8xf32> to vector<8x8xf32>
    %c0_33 = arith.constant 0 : index
    %c0_34 = arith.constant 0 : index
    %c107 = arith.constant 107 : index
    %38 = vector.load %arg1[%c0_33, %c0_34, %c107] : memref<1x8x768xf32, #tpu.memory_space<vmem>>, vector<1x8x512xf32>
    %39 = vector.shape_cast %38 : vector<1x8x512xf32> to vector<8x512xf32>
    %cst_35 = arith.constant dense<0.000000e+00> : vector<8x512xf32>
    %40 = tpu.matmul %37, %39, %cst_35 {dimension_numbers = #tpu.dot_dimension_numbers<[1], [0], [0], [1], [0, 0, 1, 1], [], []>} : vector<8x8xf32>, vector<8x512xf32>, vector<8x512xf32> -> vector<8x512xf32>
    %41 = arith.addf %35, %40 : vector<8x512xf32>
    %c7 = arith.constant 7 : index
    %c0_36 = arith.constant 0 : index
    %c0_37 = arith.constant 0 : index
    %42 = vector.load %arg3[%c7, %c0_36, %c0_37] : memref<25x8x8xf32, #tpu.memory_space<vmem>>, vector<1x8x8xf32>
    %43 = vector.shape_cast %42 : vector<1x8x8xf32> to vector<8x8xf32>
    %c0_38 = arith.constant 0 : index
    %c0_39 = arith.constant 0 : index
    %c108 = arith.constant 108 : index
    %44 = vector.load %arg1[%c0_38, %c0_39, %c108] : memref<1x8x768xf32, #tpu.memory_space<vmem>>, vector<1x8x512xf32>
    %45 = vector.shape_cast %44 : vector<1x8x512xf32> to vector<8x512xf32>
    %cst_40 = arith.constant dense<0.000000e+00> : vector<8x512xf32>
    %46 = tpu.matmul %43, %45, %cst_40 {dimension_numbers = #tpu.dot_dimension_numbers<[1], [0], [0], [1], [0, 0, 1, 1], [], []>} : vector<8x8xf32>, vector<8x512xf32>, vector<8x512xf32> -> vector<8x512xf32>
    %47 = arith.addf %41, %46 : vector<8x512xf32>
    %c8 = arith.constant 8 : index
    %c0_41 = arith.constant 0 : index
    %c0_42 = arith.constant 0 : index
    %48 = vector.load %arg3[%c8, %c0_41, %c0_42] : memref<25x8x8xf32, #tpu.memory_space<vmem>>, vector<1x8x8xf32>
    %49 = vector.shape_cast %48 : vector<1x8x8xf32> to vector<8x8xf32>
    %c0_43 = arith.constant 0 : index
    %c0_44 = arith.constant 0 : index
    %c109 = arith.constant 109 : index
    %50 = vector.load %arg1[%c0_43, %c0_44, %c109] : memref<1x8x768xf32, #tpu.memory_space<vmem>>, vector<1x8x512xf32>
    %51 = vector.shape_cast %50 : vector<1x8x512xf32> to vector<8x512xf32>
    %cst_45 = arith.constant dense<0.000000e+00> : vector<8x512xf32>
    %52 = tpu.matmul %49, %51, %cst_45 {dimension_numbers = #tpu.dot_dimension_numbers<[1], [0], [0], [1], [0, 0, 1, 1], [], []>} : vector<8x8xf32>, vector<8x512xf32>, vector<8x512xf32> -> vector<8x512xf32>
    %53 = arith.addf %47, %52 : vector<8x512xf32>
    %c9 = arith.constant 9 : index
    %c0_46 = arith.constant 0 : index
    %c0_47 = arith.constant 0 : index
    %54 = vector.load %arg3[%c9, %c0_46, %c0_47] : memref<25x8x8xf32, #tpu.memory_space<vmem>>, vector<1x8x8xf32>
    %55 = vector.shape_cast %54 : vector<1x8x8xf32> to vector<8x8xf32>
    %c0_48 = arith.constant 0 : index
    %c0_49 = arith.constant 0 : index
    %c110 = arith.constant 110 : index
    %56 = vector.load %arg1[%c0_48, %c0_49, %c110] : memref<1x8x768xf32, #tpu.memory_space<vmem>>, vector<1x8x512xf32>
    %57 = vector.shape_cast %56 : vector<1x8x512xf32> to vector<8x512xf32>
    %cst_50 = arith.constant dense<0.000000e+00> : vector<8x512xf32>
    %58 = tpu.matmul %55, %57, %cst_50 {dimension_numbers = #tpu.dot_dimension_numbers<[1], [0], [0], [1], [0, 0, 1, 1], [], []>} : vector<8x8xf32>, vector<8x512xf32>, vector<8x512xf32> -> vector<8x512xf32>
    %59 = arith.addf %53, %58 : vector<8x512xf32>
    %c10 = arith.constant 10 : index
    %c0_51 = arith.constant 0 : index
    %c0_52 = arith.constant 0 : index
    %60 = vector.load %arg3[%c10, %c0_51, %c0_52] : memref<25x8x8xf32, #tpu.memory_space<vmem>>, vector<1x8x8xf32>
    %61 = vector.shape_cast %60 : vector<1x8x8xf32> to vector<8x8xf32>
    %c0_53 = arith.constant 0 : index
    %c0_54 = arith.constant 0 : index
    %c126 = arith.constant 126 : index
    %62 = vector.load %arg1[%c0_53, %c0_54, %c126] : memref<1x8x768xf32, #tpu.memory_space<vmem>>, vector<1x8x512xf32>
    %63 = vector.shape_cast %62 : vector<1x8x512xf32> to vector<8x512xf32>
    %cst_55 = arith.constant dense<0.000000e+00> : vector<8x512xf32>
    %64 = tpu.matmul %61, %63, %cst_55 {dimension_numbers = #tpu.dot_dimension_numbers<[1], [0], [0], [1], [0, 0, 1, 1], [], []>} : vector<8x8xf32>, vector<8x512xf32>, vector<8x512xf32> -> vector<8x512xf32>
    %65 = arith.addf %59, %64 : vector<8x512xf32>
    %c11 = arith.constant 11 : index
    %c0_56 = arith.constant 0 : index
    %c0_57 = arith.constant 0 : index
    %66 = vector.load %arg3[%c11, %c0_56, %c0_57] : memref<25x8x8xf32, #tpu.memory_space<vmem>>, vector<1x8x8xf32>
    %67 = vector.shape_cast %66 : vector<1x8x8xf32> to vector<8x8xf32>
    %c0_58 = arith.constant 0 : index
    %c0_59 = arith.constant 0 : index
    %c127 = arith.constant 127 : index
    %68 = vector.load %arg1[%c0_58, %c0_59, %c127] : memref<1x8x768xf32, #tpu.memory_space<vmem>>, vector<1x8x512xf32>
    %69 = vector.shape_cast %68 : vector<1x8x512xf32> to vector<8x512xf32>
    %cst_60 = arith.constant dense<0.000000e+00> : vector<8x512xf32>
    %70 = tpu.matmul %67, %69, %cst_60 {dimension_numbers = #tpu.dot_dimension_numbers<[1], [0], [0], [1], [0, 0, 1, 1], [], []>} : vector<8x8xf32>, vector<8x512xf32>, vector<8x512xf32> -> vector<8x512xf32>
    %71 = arith.addf %65, %70 : vector<8x512xf32>
    %c12 = arith.constant 12 : index
    %c0_61 = arith.constant 0 : index
    %c0_62 = arith.constant 0 : index
    %72 = vector.load %arg3[%c12, %c0_61, %c0_62] : memref<25x8x8xf32, #tpu.memory_space<vmem>>, vector<1x8x8xf32>
    %73 = vector.shape_cast %72 : vector<1x8x8xf32> to vector<8x8xf32>
    %c0_63 = arith.constant 0 : index
    %c0_64 = arith.constant 0 : index
    %c128 = arith.constant 128 : index
    %74 = vector.load %arg1[%c0_63, %c0_64, %c128] : memref<1x8x768xf32, #tpu.memory_space<vmem>>, vector<1x8x512xf32>
    %75 = vector.shape_cast %74 : vector<1x8x512xf32> to vector<8x512xf32>
    %cst_65 = arith.constant dense<0.000000e+00> : vector<8x512xf32>
    %76 = tpu.matmul %73, %75, %cst_65 {dimension_numbers = #tpu.dot_dimension_numbers<[1], [0], [0], [1], [0, 0, 1, 1], [], []>} : vector<8x8xf32>, vector<8x512xf32>, vector<8x512xf32> -> vector<8x512xf32>
    %77 = arith.addf %71, %76 : vector<8x512xf32>
    %c13 = arith.constant 13 : index
    %c0_66 = arith.constant 0 : index
    %c0_67 = arith.constant 0 : index
    %78 = vector.load %arg3[%c13, %c0_66, %c0_67] : memref<25x8x8xf32, #tpu.memory_space<vmem>>, vector<1x8x8xf32>
    %79 = vector.shape_cast %78 : vector<1x8x8xf32> to vector<8x8xf32>
    %c0_68 = arith.constant 0 : index
    %c0_69 = arith.constant 0 : index
    %c129 = arith.constant 129 : index
    %80 = vector.load %arg1[%c0_68, %c0_69, %c129] : memref<1x8x768xf32, #tpu.memory_space<vmem>>, vector<1x8x512xf32>
    %81 = vector.shape_cast %80 : vector<1x8x512xf32> to vector<8x512xf32>
    %cst_70 = arith.constant dense<0.000000e+00> : vector<8x512xf32>
    %82 = tpu.matmul %79, %81, %cst_70 {dimension_numbers = #tpu.dot_dimension_numbers<[1], [0], [0], [1], [0, 0, 1, 1], [], []>} : vector<8x8xf32>, vector<8x512xf32>, vector<8x512xf32> -> vector<8x512xf32>
    %83 = arith.addf %77, %82 : vector<8x512xf32>
    %c14 = arith.constant 14 : index
    %c0_71 = arith.constant 0 : index
    %c0_72 = arith.constant 0 : index
    %84 = vector.load %arg3[%c14, %c0_71, %c0_72] : memref<25x8x8xf32, #tpu.memory_space<vmem>>, vector<1x8x8xf32>
    %85 = vector.shape_cast %84 : vector<1x8x8xf32> to vector<8x8xf32>
    %c0_73 = arith.constant 0 : index
    %c0_74 = arith.constant 0 : index
    %c130 = arith.constant 130 : index
    %86 = vector.load %arg1[%c0_73, %c0_74, %c130] : memref<1x8x768xf32, #tpu.memory_space<vmem>>, vector<1x8x512xf32>
    %87 = vector.shape_cast %86 : vector<1x8x512xf32> to vector<8x512xf32>
    %cst_75 = arith.constant dense<0.000000e+00> : vector<8x512xf32>
    %88 = tpu.matmul %85, %87, %cst_75 {dimension_numbers = #tpu.dot_dimension_numbers<[1], [0], [0], [1], [0, 0, 1, 1], [], []>} : vector<8x8xf32>, vector<8x512xf32>, vector<8x512xf32> -> vector<8x512xf32>
    %89 = arith.addf %83, %88 : vector<8x512xf32>
    %c15 = arith.constant 15 : index
    %c0_76 = arith.constant 0 : index
    %c0_77 = arith.constant 0 : index
    %90 = vector.load %arg3[%c15, %c0_76, %c0_77] : memref<25x8x8xf32, #tpu.memory_space<vmem>>, vector<1x8x8xf32>
    %91 = vector.shape_cast %90 : vector<1x8x8xf32> to vector<8x8xf32>
    %c0_78 = arith.constant 0 : index
    %c0_79 = arith.constant 0 : index
    %c146 = arith.constant 146 : index
    %92 = vector.load %arg1[%c0_78, %c0_79, %c146] : memref<1x8x768xf32, #tpu.memory_space<vmem>>, vector<1x8x512xf32>
    %93 = vector.shape_cast %92 : vector<1x8x512xf32> to vector<8x512xf32>
    %cst_80 = arith.constant dense<0.000000e+00> : vector<8x512xf32>
    %94 = tpu.matmul %91, %93, %cst_80 {dimension_numbers = #tpu.dot_dimension_numbers<[1], [0], [0], [1], [0, 0, 1, 1], [], []>} : vector<8x8xf32>, vector<8x512xf32>, vector<8x512xf32> -> vector<8x512xf32>
    %95 = arith.addf %89, %94 : vector<8x512xf32>
    %c16 = arith.constant 16 : index
    %c0_81 = arith.constant 0 : index
    %c0_82 = arith.constant 0 : index
    %96 = vector.load %arg3[%c16, %c0_81, %c0_82] : memref<25x8x8xf32, #tpu.memory_space<vmem>>, vector<1x8x8xf32>
    %97 = vector.shape_cast %96 : vector<1x8x8xf32> to vector<8x8xf32>
    %c0_83 = arith.constant 0 : index
    %c0_84 = arith.constant 0 : index
    %c147 = arith.constant 147 : index
    %98 = vector.load %arg1[%c0_83, %c0_84, %c147] : memref<1x8x768xf32, #tpu.memory_space<vmem>>, vector<1x8x512xf32>
    %99 = vector.shape_cast %98 : vector<1x8x512xf32> to vector<8x512xf32>
    %cst_85 = arith.constant dense<0.000000e+00> : vector<8x512xf32>
    %100 = tpu.matmul %97, %99, %cst_85 {dimension_numbers = #tpu.dot_dimension_numbers<[1], [0], [0], [1], [0, 0, 1, 1], [], []>} : vector<8x8xf32>, vector<8x512xf32>, vector<8x512xf32> -> vector<8x512xf32>
    %101 = arith.addf %95, %100 : vector<8x512xf32>
    %c17 = arith.constant 17 : index
    %c0_86 = arith.constant 0 : index
    %c0_87 = arith.constant 0 : index
    %102 = vector.load %arg3[%c17, %c0_86, %c0_87] : memref<25x8x8xf32, #tpu.memory_space<vmem>>, vector<1x8x8xf32>
    %103 = vector.shape_cast %102 : vector<1x8x8xf32> to vector<8x8xf32>
    %c0_88 = arith.constant 0 : index
    %c0_89 = arith.constant 0 : index
    %c148 = arith.constant 148 : index
    %104 = vector.load %arg1[%c0_88, %c0_89, %c148] : memref<1x8x768xf32, #tpu.memory_space<vmem>>, vector<1x8x512xf32>
    %105 = vector.shape_cast %104 : vector<1x8x512xf32> to vector<8x512xf32>
    %cst_90 = arith.constant dense<0.000000e+00> : vector<8x512xf32>
    %106 = tpu.matmul %103, %105, %cst_90 {dimension_numbers = #tpu.dot_dimension_numbers<[1], [0], [0], [1], [0, 0, 1, 1], [], []>} : vector<8x8xf32>, vector<8x512xf32>, vector<8x512xf32> -> vector<8x512xf32>
    %107 = arith.addf %101, %106 : vector<8x512xf32>
    %c18 = arith.constant 18 : index
    %c0_91 = arith.constant 0 : index
    %c0_92 = arith.constant 0 : index
    %108 = vector.load %arg3[%c18, %c0_91, %c0_92] : memref<25x8x8xf32, #tpu.memory_space<vmem>>, vector<1x8x8xf32>
    %109 = vector.shape_cast %108 : vector<1x8x8xf32> to vector<8x8xf32>
    %c0_93 = arith.constant 0 : index
    %c0_94 = arith.constant 0 : index
    %c149 = arith.constant 149 : index
    %110 = vector.load %arg1[%c0_93, %c0_94, %c149] : memref<1x8x768xf32, #tpu.memory_space<vmem>>, vector<1x8x512xf32>
    %111 = vector.shape_cast %110 : vector<1x8x512xf32> to vector<8x512xf32>
    %cst_95 = arith.constant dense<0.000000e+00> : vector<8x512xf32>
    %112 = tpu.matmul %109, %111, %cst_95 {dimension_numbers = #tpu.dot_dimension_numbers<[1], [0], [0], [1], [0, 0, 1, 1], [], []>} : vector<8x8xf32>, vector<8x512xf32>, vector<8x512xf32> -> vector<8x512xf32>
    %113 = arith.addf %107, %112 : vector<8x512xf32>
    %c19 = arith.constant 19 : index
    %c0_96 = arith.constant 0 : index
    %c0_97 = arith.constant 0 : index
    %114 = vector.load %arg3[%c19, %c0_96, %c0_97] : memref<25x8x8xf32, #tpu.memory_space<vmem>>, vector<1x8x8xf32>
    %115 = vector.shape_cast %114 : vector<1x8x8xf32> to vector<8x8xf32>
    %c0_98 = arith.constant 0 : index
    %c0_99 = arith.constant 0 : index
    %c150 = arith.constant 150 : index
    %116 = vector.load %arg1[%c0_98, %c0_99, %c150] : memref<1x8x768xf32, #tpu.memory_space<vmem>>, vector<1x8x512xf32>
    %117 = vector.shape_cast %116 : vector<1x8x512xf32> to vector<8x512xf32>
    %cst_100 = arith.constant dense<0.000000e+00> : vector<8x512xf32>
    %118 = tpu.matmul %115, %117, %cst_100 {dimension_numbers = #tpu.dot_dimension_numbers<[1], [0], [0], [1], [0, 0, 1, 1], [], []>} : vector<8x8xf32>, vector<8x512xf32>, vector<8x512xf32> -> vector<8x512xf32>
    %119 = arith.addf %113, %118 : vector<8x512xf32>
    %c20 = arith.constant 20 : index
    %c0_101 = arith.constant 0 : index
    %c0_102 = arith.constant 0 : index
    %120 = vector.load %arg3[%c20, %c0_101, %c0_102] : memref<25x8x8xf32, #tpu.memory_space<vmem>>, vector<1x8x8xf32>
    %121 = vector.shape_cast %120 : vector<1x8x8xf32> to vector<8x8xf32>
    %c0_103 = arith.constant 0 : index
    %c0_104 = arith.constant 0 : index
    %c166 = arith.constant 166 : index
    %122 = vector.load %arg1[%c0_103, %c0_104, %c166] : memref<1x8x768xf32, #tpu.memory_space<vmem>>, vector<1x8x512xf32>
    %123 = vector.shape_cast %122 : vector<1x8x512xf32> to vector<8x512xf32>
    %cst_105 = arith.constant dense<0.000000e+00> : vector<8x512xf32>
    %124 = tpu.matmul %121, %123, %cst_105 {dimension_numbers = #tpu.dot_dimension_numbers<[1], [0], [0], [1], [0, 0, 1, 1], [], []>} : vector<8x8xf32>, vector<8x512xf32>, vector<8x512xf32> -> vector<8x512xf32>
    %125 = arith.addf %119, %124 : vector<8x512xf32>
    %c21 = arith.constant 21 : index
    %c0_106 = arith.constant 0 : index
    %c0_107 = arith.constant 0 : index
    %126 = vector.load %arg3[%c21, %c0_106, %c0_107] : memref<25x8x8xf32, #tpu.memory_space<vmem>>, vector<1x8x8xf32>
    %127 = vector.shape_cast %126 : vector<1x8x8xf32> to vector<8x8xf32>
    %c0_108 = arith.constant 0 : index
    %c0_109 = arith.constant 0 : index
    %c167 = arith.constant 167 : index
    %128 = vector.load %arg1[%c0_108, %c0_109, %c167] : memref<1x8x768xf32, #tpu.memory_space<vmem>>, vector<1x8x512xf32>
    %129 = vector.shape_cast %128 : vector<1x8x512xf32> to vector<8x512xf32>
    %cst_110 = arith.constant dense<0.000000e+00> : vector<8x512xf32>
    %130 = tpu.matmul %127, %129, %cst_110 {dimension_numbers = #tpu.dot_dimension_numbers<[1], [0], [0], [1], [0, 0, 1, 1], [], []>} : vector<8x8xf32>, vector<8x512xf32>, vector<8x512xf32> -> vector<8x512xf32>
    %131 = arith.addf %125, %130 : vector<8x512xf32>
    %c22 = arith.constant 22 : index
    %c0_111 = arith.constant 0 : index
    %c0_112 = arith.constant 0 : index
    %132 = vector.load %arg3[%c22, %c0_111, %c0_112] : memref<25x8x8xf32, #tpu.memory_space<vmem>>, vector<1x8x8xf32>
    %133 = vector.shape_cast %132 : vector<1x8x8xf32> to vector<8x8xf32>
    %c0_113 = arith.constant 0 : index
    %c0_114 = arith.constant 0 : index
    %c168 = arith.constant 168 : index
    %134 = vector.load %arg1[%c0_113, %c0_114, %c168] : memref<1x8x768xf32, #tpu.memory_space<vmem>>, vector<1x8x512xf32>
    %135 = vector.shape_cast %134 : vector<1x8x512xf32> to vector<8x512xf32>
    %cst_115 = arith.constant dense<0.000000e+00> : vector<8x512xf32>
    %136 = tpu.matmul %133, %135, %cst_115 {dimension_numbers = #tpu.dot_dimension_numbers<[1], [0], [0], [1], [0, 0, 1, 1], [], []>} : vector<8x8xf32>, vector<8x512xf32>, vector<8x512xf32> -> vector<8x512xf32>
    %137 = arith.addf %131, %136 : vector<8x512xf32>
    %c23 = arith.constant 23 : index
    %c0_116 = arith.constant 0 : index
    %c0_117 = arith.constant 0 : index
    %138 = vector.load %arg3[%c23, %c0_116, %c0_117] : memref<25x8x8xf32, #tpu.memory_space<vmem>>, vector<1x8x8xf32>
    %139 = vector.shape_cast %138 : vector<1x8x8xf32> to vector<8x8xf32>
    %c0_118 = arith.constant 0 : index
    %c0_119 = arith.constant 0 : index
    %c169 = arith.constant 169 : index
    %140 = vector.load %arg1[%c0_118, %c0_119, %c169] : memref<1x8x768xf32, #tpu.memory_space<vmem>>, vector<1x8x512xf32>
    %141 = vector.shape_cast %140 : vector<1x8x512xf32> to vector<8x512xf32>
    %cst_120 = arith.constant dense<0.000000e+00> : vector<8x512xf32>
    %142 = tpu.matmul %139, %141, %cst_120 {dimension_numbers = #tpu.dot_dimension_numbers<[1], [0], [0], [1], [0, 0, 1, 1], [], []>} : vector<8x8xf32>, vector<8x512xf32>, vector<8x512xf32> -> vector<8x512xf32>
    %143 = arith.addf %137, %142 : vector<8x512xf32>
    %c24 = arith.constant 24 : index
    %c0_121 = arith.constant 0 : index
    %c0_122 = arith.constant 0 : index
    %144 = vector.load %arg3[%c24, %c0_121, %c0_122] : memref<25x8x8xf32, #tpu.memory_space<vmem>>, vector<1x8x8xf32>
    %145 = vector.shape_cast %144 : vector<1x8x8xf32> to vector<8x8xf32>
    %c0_123 = arith.constant 0 : index
    %c0_124 = arith.constant 0 : index
    %c170 = arith.constant 170 : index
    %146 = vector.load %arg1[%c0_123, %c0_124, %c170] : memref<1x8x768xf32, #tpu.memory_space<vmem>>, vector<1x8x512xf32>
    %147 = vector.shape_cast %146 : vector<1x8x512xf32> to vector<8x512xf32>
    %cst_125 = arith.constant dense<0.000000e+00> : vector<8x512xf32>
    %148 = tpu.matmul %145, %147, %cst_125 {dimension_numbers = #tpu.dot_dimension_numbers<[1], [0], [0], [1], [0, 0, 1, 1], [], []>} : vector<8x8xf32>, vector<8x512xf32>, vector<8x512xf32> -> vector<8x512xf32>
    %149 = arith.addf %143, %148 : vector<8x512xf32>
    %c0_126 = arith.constant 0 : index
    %c0_127 = arith.constant 0 : index
    %150 = vector.load %arg4[%c0_126, %c0_127] : memref<8x1xf32, #tpu.memory_space<vmem>>, vector<8x1xf32>
    %c0_128 = arith.constant 0 : index
    %c0_129 = arith.constant 0 : index
    %151 = vector.load %arg5[%c0_128, %c0_129] : memref<8x1xf32, #tpu.memory_space<vmem>>, vector<8x1xf32>
    %c0_130 = arith.constant 0 : index
    %c0_131 = arith.constant 0 : index
    %152 = vector.load %arg6[%c0_130, %c0_131] : memref<8x1xf32, #tpu.memory_space<vmem>>, vector<8x1xf32>
    %153 = vector.broadcast %150 : vector<8x1xf32> to vector<8x512xf32>
    %154 = arith.addf %149, %153 : vector<8x512xf32>
    %155 = vector.broadcast %0 : vector<1x512xf32> to vector<8x512xf32>
    %156 = arith.mulf %154, %155 : vector<8x512xf32>
    %cst_132 = arith.constant dense<0.000000e+00> : vector<8xf32>
    %157 = vector.multi_reduction <add>, %156, %cst_132 [1] : vector<8x512xf32> to vector<8xf32>
    %158 = vector.shape_cast %157 : vector<8xf32> to vector<8x1xf32>
    %159 = arith.mulf %156, %154 : vector<8x512xf32>
    %cst_133 = arith.constant dense<0.000000e+00> : vector<8xf32>
    %160 = vector.multi_reduction <add>, %159, %cst_133 [1] : vector<8x512xf32> to vector<8xf32>
    %161 = vector.shape_cast %160 : vector<8xf32> to vector<8x1xf32>
    %cst_134 = arith.constant 3.906250e-03 : f32
    %162 = vector.broadcast %cst_134 : f32 to vector<8x1xf32>
    %163 = arith.mulf %158, %162 : vector<8x1xf32>
    %cst_135 = arith.constant 3.906250e-03 : f32
    %164 = vector.broadcast %cst_135 : f32 to vector<8x1xf32>
    %165 = arith.mulf %161, %164 : vector<8x1xf32>
    %166 = arith.mulf %163, %163 : vector<8x1xf32>
    %167 = arith.subf %165, %166 : vector<8x1xf32>
    %cst_136 = arith.constant 0.000000e+00 : f32
    %168 = vector.broadcast %cst_136 : f32 to vector<8x1xf32>
    %169 = arith.maximumf %167, %168 : vector<8x1xf32>
    %170 = vector.broadcast %163 : vector<8x1xf32> to vector<8x512xf32>
    %171 = arith.subf %154, %170 : vector<8x512xf32>
    %cst_137 = arith.constant 9.99999974E-6 : f32
    %172 = vector.broadcast %cst_137 : f32 to vector<8x1xf32>
    %173 = arith.addf %169, %172 : vector<8x1xf32>
    %174 = math.rsqrt %173 : vector<8x1xf32>
    %175 = vector.broadcast %174 : vector<8x1xf32> to vector<8x512xf32>
    %176 = arith.mulf %171, %175 : vector<8x512xf32>
    %177 = vector.broadcast %151 : vector<8x1xf32> to vector<8x512xf32>
    %178 = arith.mulf %176, %177 : vector<8x512xf32>
    %179 = vector.broadcast %152 : vector<8x1xf32> to vector<8x512xf32>
    %180 = arith.addf %178, %179 : vector<8x512xf32>
    %cst_138 = arith.constant 5.000000e-01 : f32
    %181 = vector.broadcast %cst_138 : f32 to vector<8x512xf32>
    %182 = arith.mulf %181, %180 : vector<8x512xf32>
    %cst_139 = arith.constant 0.707106769 : f32
    %183 = vector.broadcast %cst_139 : f32 to vector<8x512xf32>
    %184 = arith.mulf %180, %183 : vector<8x512xf32>
    %185 = math.absf %184 : vector<8x512xf32>
    %cst_140 = arith.constant 0.327591091 : f32
    %186 = vector.broadcast %cst_140 : f32 to vector<8x512xf32>
    %187 = arith.mulf %186, %185 : vector<8x512xf32>
    %cst_141 = arith.constant 1.000000e+00 : f32
    %188 = vector.broadcast %cst_141 : f32 to vector<8x512xf32>
    %189 = arith.addf %188, %187 : vector<8x512xf32>
    %cst_142 = arith.constant 1.000000e+00 : f32
    %190 = vector.broadcast %cst_142 : f32 to vector<8x512xf32>
    %191 = arith.divf %190, %189 : vector<8x512xf32>
    %cst_143 = arith.constant 1.06140542 : f32
    %192 = vector.broadcast %cst_143 : f32 to vector<8x512xf32>
    %193 = arith.mulf %191, %192 : vector<8x512xf32>
    %cst_144 = arith.constant -1.45315206 : f32
    %194 = vector.broadcast %cst_144 : f32 to vector<8x512xf32>
    %195 = arith.addf %194, %193 : vector<8x512xf32>
    %196 = arith.mulf %191, %195 : vector<8x512xf32>
    %cst_145 = arith.constant 1.42141378 : f32
    %197 = vector.broadcast %cst_145 : f32 to vector<8x512xf32>
    %198 = arith.addf %197, %196 : vector<8x512xf32>
    %199 = arith.mulf %191, %198 : vector<8x512xf32>
    %cst_146 = arith.constant -0.284496725 : f32
    %200 = vector.broadcast %cst_146 : f32 to vector<8x512xf32>
    %201 = arith.addf %200, %199 : vector<8x512xf32>
    %202 = arith.mulf %191, %201 : vector<8x512xf32>
    %cst_147 = arith.constant 0.254829586 : f32
    %203 = vector.broadcast %cst_147 : f32 to vector<8x512xf32>
    %204 = arith.addf %203, %202 : vector<8x512xf32>
    %205 = arith.mulf %191, %204 : vector<8x512xf32>
    %206 = arith.mulf %185, %185 : vector<8x512xf32>
    %cst_148 = arith.constant 0.000000e+00 : f32
    %207 = vector.broadcast %cst_148 : f32 to vector<8x512xf32>
    %208 = arith.subf %207, %206 : vector<8x512xf32>
    %209 = math.exp %208 : vector<8x512xf32>
    %210 = arith.mulf %205, %209 : vector<8x512xf32>
    %cst_149 = arith.constant 1.000000e+00 : f32
    %211 = vector.broadcast %cst_149 : f32 to vector<8x512xf32>
    %212 = arith.subf %211, %210 : vector<8x512xf32>
    %cst_150 = arith.constant 0.000000e+00 : f32
    %213 = vector.broadcast %cst_150 : f32 to vector<8x512xf32>
    %214 = arith.cmpf oge, %184, %213 : vector<8x512xf32>
    %cst_151 = arith.constant 0.000000e+00 : f32
    %215 = vector.broadcast %cst_151 : f32 to vector<8x512xf32>
    %216 = arith.subf %215, %212 : vector<8x512xf32>
    %217 = arith.select %214, %212, %216 : vector<8x512xi1>, vector<8x512xf32>
    %cst_152 = arith.constant 1.000000e+00 : f32
    %218 = vector.broadcast %cst_152 : f32 to vector<8x512xf32>
    %219 = arith.addf %218, %217 : vector<8x512xf32>
    %220 = arith.mulf %182, %219 : vector<8x512xf32>
    %221 = vector.broadcast %0 : vector<1x512xf32> to vector<8x512xf32>
    %222 = arith.mulf %220, %221 : vector<8x512xf32>
    %cst_153 = arith.constant 0.000000e+00 : f32
    %223 = vector.broadcast %cst_153 : f32 to vector<8x128xf32>
    %c0_154 = arith.constant 0 : index
    %c0_155 = arith.constant 0 : index
    %224 = vector.load %arg14[%c0_154, %c0_155] : memref<8x768xf32, #tpu.memory_space<vmem>>, vector<8x128xf32>
    tpu.vector_store %arg14[%c0_154, %c0_155], %223 {strides = array<i32>} : memref<8x768xf32, #tpu.memory_space<vmem>>, vector<8x128xf32>,
    %cst_156 = arith.constant 0.000000e+00 : f32
    %225 = vector.broadcast %cst_156 : f32 to vector<8x128xf32>
    %c0_157 = arith.constant 0 : index
    %c640 = arith.constant 640 : index
    %226 = vector.load %arg14[%c0_157, %c640] : memref<8x768xf32, #tpu.memory_space<vmem>>, vector<8x128xf32>
    tpu.vector_store %arg14[%c0_157, %c640], %225 {strides = array<i32>} : memref<8x768xf32, #tpu.memory_space<vmem>>, vector<8x128xf32>,
    %c0_158 = arith.constant 0 : index
    %c128_159 = arith.constant 128 : index
    %227 = vector.load %arg14[%c0_158, %c128_159] : memref<8x768xf32, #tpu.memory_space<vmem>>, vector<8x512xf32>
    tpu.vector_store %arg14[%c0_158, %c128_159], %222 {strides = array<i32>} : memref<8x768xf32, #tpu.memory_space<vmem>>, vector<8x512xf32>,
    %c0_160 = arith.constant 0 : index
    %c0_161 = arith.constant 0 : index
    %c0_162 = arith.constant 0 : index
    %228 = vector.load %arg7[%c0_160, %c0_161, %c0_162] : memref<25x8x8xf32, #tpu.memory_space<vmem>>, vector<1x8x8xf32>
    %229 = vector.shape_cast %228 : vector<1x8x8xf32> to vector<8x8xf32>
    %c0_163 = arith.constant 0 : index
    %c86_164 = arith.constant 86 : index
    %230 = vector.load %arg14[%c0_163, %c86_164] : memref<8x768xf32, #tpu.memory_space<vmem>>, vector<8x512xf32>
    %cst_165 = arith.constant dense<0.000000e+00> : vector<8x512xf32>
    %231 = tpu.matmul %229, %230, %cst_165 {dimension_numbers = #tpu.dot_dimension_numbers<[1], [0], [0], [1], [0, 0, 1, 1], [], []>} : vector<8x8xf32>, vector<8x512xf32>, vector<8x512xf32> -> vector<8x512xf32>
    %c1_166 = arith.constant 1 : index
    %c0_167 = arith.constant 0 : index
    %c0_168 = arith.constant 0 : index
    %232 = vector.load %arg7[%c1_166, %c0_167, %c0_168] : memref<25x8x8xf32, #tpu.memory_space<vmem>>, vector<1x8x8xf32>
    %233 = vector.shape_cast %232 : vector<1x8x8xf32> to vector<8x8xf32>
    %c0_169 = arith.constant 0 : index
    %c87_170 = arith.constant 87 : index
    %234 = vector.load %arg14[%c0_169, %c87_170] : memref<8x768xf32, #tpu.memory_space<vmem>>, vector<8x512xf32>
    %cst_171 = arith.constant dense<0.000000e+00> : vector<8x512xf32>
    %235 = tpu.matmul %233, %234, %cst_171 {dimension_numbers = #tpu.dot_dimension_numbers<[1], [0], [0], [1], [0, 0, 1, 1], [], []>} : vector<8x8xf32>, vector<8x512xf32>, vector<8x512xf32> -> vector<8x512xf32>
    %236 = arith.addf %231, %235 : vector<8x512xf32>
    %c2_172 = arith.constant 2 : index
    %c0_173 = arith.constant 0 : index
    %c0_174 = arith.constant 0 : index
    %237 = vector.load %arg7[%c2_172, %c0_173, %c0_174] : memref<25x8x8xf32, #tpu.memory_space<vmem>>, vector<1x8x8xf32>
    %238 = vector.shape_cast %237 : vector<1x8x8xf32> to vector<8x8xf32>
    %c0_175 = arith.constant 0 : index
    %c88_176 = arith.constant 88 : index
    %239 = vector.load %arg14[%c0_175, %c88_176] : memref<8x768xf32, #tpu.memory_space<vmem>>, vector<8x512xf32>
    %cst_177 = arith.constant dense<0.000000e+00> : vector<8x512xf32>
    %240 = tpu.matmul %238, %239, %cst_177 {dimension_numbers = #tpu.dot_dimension_numbers<[1], [0], [0], [1], [0, 0, 1, 1], [], []>} : vector<8x8xf32>, vector<8x512xf32>, vector<8x512xf32> -> vector<8x512xf32>
    %241 = arith.addf %236, %240 : vector<8x512xf32>
    %c3_178 = arith.constant 3 : index
    %c0_179 = arith.constant 0 : index
    %c0_180 = arith.constant 0 : index
    %242 = vector.load %arg7[%c3_178, %c0_179, %c0_180] : memref<25x8x8xf32, #tpu.memory_space<vmem>>, vector<1x8x8xf32>
    %243 = vector.shape_cast %242 : vector<1x8x8xf32> to vector<8x8xf32>
    %c0_181 = arith.constant 0 : index
    %c89_182 = arith.constant 89 : index
    %244 = vector.load %arg14[%c0_181, %c89_182] : memref<8x768xf32, #tpu.memory_space<vmem>>, vector<8x512xf32>
    %cst_183 = arith.constant dense<0.000000e+00> : vector<8x512xf32>
    %245 = tpu.matmul %243, %244, %cst_183 {dimension_numbers = #tpu.dot_dimension_numbers<[1], [0], [0], [1], [0, 0, 1, 1], [], []>} : vector<8x8xf32>, vector<8x512xf32>, vector<8x512xf32> -> vector<8x512xf32>
    %246 = arith.addf %241, %245 : vector<8x512xf32>
    %c4_184 = arith.constant 4 : index
    %c0_185 = arith.constant 0 : index
    %c0_186 = arith.constant 0 : index
    %247 = vector.load %arg7[%c4_184, %c0_185, %c0_186] : memref<25x8x8xf32, #tpu.memory_space<vmem>>, vector<1x8x8xf32>
    %248 = vector.shape_cast %247 : vector<1x8x8xf32> to vector<8x8xf32>
    %c0_187 = arith.constant 0 : index
    %c90_188 = arith.constant 90 : index
    %249 = vector.load %arg14[%c0_187, %c90_188] : memref<8x768xf32, #tpu.memory_space<vmem>>, vector<8x512xf32>
    %cst_189 = arith.constant dense<0.000000e+00> : vector<8x512xf32>
    %250 = tpu.matmul %248, %249, %cst_189 {dimension_numbers = #tpu.dot_dimension_numbers<[1], [0], [0], [1], [0, 0, 1, 1], [], []>} : vector<8x8xf32>, vector<8x512xf32>, vector<8x512xf32> -> vector<8x512xf32>
    %251 = arith.addf %246, %250 : vector<8x512xf32>
    %c5_190 = arith.constant 5 : index
    %c0_191 = arith.constant 0 : index
    %c0_192 = arith.constant 0 : index
    %252 = vector.load %arg7[%c5_190, %c0_191, %c0_192] : memref<25x8x8xf32, #tpu.memory_space<vmem>>, vector<1x8x8xf32>
    %253 = vector.shape_cast %252 : vector<1x8x8xf32> to vector<8x8xf32>
    %c0_193 = arith.constant 0 : index
    %c106_194 = arith.constant 106 : index
    %254 = vector.load %arg14[%c0_193, %c106_194] : memref<8x768xf32, #tpu.memory_space<vmem>>, vector<8x512xf32>
    %cst_195 = arith.constant dense<0.000000e+00> : vector<8x512xf32>
    %255 = tpu.matmul %253, %254, %cst_195 {dimension_numbers = #tpu.dot_dimension_numbers<[1], [0], [0], [1], [0, 0, 1, 1], [], []>} : vector<8x8xf32>, vector<8x512xf32>, vector<8x512xf32> -> vector<8x512xf32>
    %256 = arith.addf %251, %255 : vector<8x512xf32>
    %c6_196 = arith.constant 6 : index
    %c0_197 = arith.constant 0 : index
    %c0_198 = arith.constant 0 : index
    %257 = vector.load %arg7[%c6_196, %c0_197, %c0_198] : memref<25x8x8xf32, #tpu.memory_space<vmem>>, vector<1x8x8xf32>
    %258 = vector.shape_cast %257 : vector<1x8x8xf32> to vector<8x8xf32>
    %c0_199 = arith.constant 0 : index
    %c107_200 = arith.constant 107 : index
    %259 = vector.load %arg14[%c0_199, %c107_200] : memref<8x768xf32, #tpu.memory_space<vmem>>, vector<8x512xf32>
    %cst_201 = arith.constant dense<0.000000e+00> : vector<8x512xf32>
    %260 = tpu.matmul %258, %259, %cst_201 {dimension_numbers = #tpu.dot_dimension_numbers<[1], [0], [0], [1], [0, 0, 1, 1], [], []>} : vector<8x8xf32>, vector<8x512xf32>, vector<8x512xf32> -> vector<8x512xf32>
    %261 = arith.addf %256, %260 : vector<8x512xf32>
    %c7_202 = arith.constant 7 : index
    %c0_203 = arith.constant 0 : index
    %c0_204 = arith.constant 0 : index
    %262 = vector.load %arg7[%c7_202, %c0_203, %c0_204] : memref<25x8x8xf32, #tpu.memory_space<vmem>>, vector<1x8x8xf32>
    %263 = vector.shape_cast %262 : vector<1x8x8xf32> to vector<8x8xf32>
    %c0_205 = arith.constant 0 : index
    %c108_206 = arith.constant 108 : index
    %264 = vector.load %arg14[%c0_205, %c108_206] : memref<8x768xf32, #tpu.memory_space<vmem>>, vector<8x512xf32>
    %cst_207 = arith.constant dense<0.000000e+00> : vector<8x512xf32>
    %265 = tpu.matmul %263, %264, %cst_207 {dimension_numbers = #tpu.dot_dimension_numbers<[1], [0], [0], [1], [0, 0, 1, 1], [], []>} : vector<8x8xf32>, vector<8x512xf32>, vector<8x512xf32> -> vector<8x512xf32>
    %266 = arith.addf %261, %265 : vector<8x512xf32>
    %c8_208 = arith.constant 8 : index
    %c0_209 = arith.constant 0 : index
    %c0_210 = arith.constant 0 : index
    %267 = vector.load %arg7[%c8_208, %c0_209, %c0_210] : memref<25x8x8xf32, #tpu.memory_space<vmem>>, vector<1x8x8xf32>
    %268 = vector.shape_cast %267 : vector<1x8x8xf32> to vector<8x8xf32>
    %c0_211 = arith.constant 0 : index
    %c109_212 = arith.constant 109 : index
    %269 = vector.load %arg14[%c0_211, %c109_212] : memref<8x768xf32, #tpu.memory_space<vmem>>, vector<8x512xf32>
    %cst_213 = arith.constant dense<0.000000e+00> : vector<8x512xf32>
    %270 = tpu.matmul %268, %269, %cst_213 {dimension_numbers = #tpu.dot_dimension_numbers<[1], [0], [0], [1], [0, 0, 1, 1], [], []>} : vector<8x8xf32>, vector<8x512xf32>, vector<8x512xf32> -> vector<8x512xf32>
    %271 = arith.addf %266, %270 : vector<8x512xf32>
    %c9_214 = arith.constant 9 : index
    %c0_215 = arith.constant 0 : index
    %c0_216 = arith.constant 0 : index
    %272 = vector.load %arg7[%c9_214, %c0_215, %c0_216] : memref<25x8x8xf32, #tpu.memory_space<vmem>>, vector<1x8x8xf32>
    %273 = vector.shape_cast %272 : vector<1x8x8xf32> to vector<8x8xf32>
    %c0_217 = arith.constant 0 : index
    %c110_218 = arith.constant 110 : index
    %274 = vector.load %arg14[%c0_217, %c110_218] : memref<8x768xf32, #tpu.memory_space<vmem>>, vector<8x512xf32>
    %cst_219 = arith.constant dense<0.000000e+00> : vector<8x512xf32>
    %275 = tpu.matmul %273, %274, %cst_219 {dimension_numbers = #tpu.dot_dimension_numbers<[1], [0], [0], [1], [0, 0, 1, 1], [], []>} : vector<8x8xf32>, vector<8x512xf32>, vector<8x512xf32> -> vector<8x512xf32>
    %276 = arith.addf %271, %275 : vector<8x512xf32>
    %c10_220 = arith.constant 10 : index
    %c0_221 = arith.constant 0 : index
    %c0_222 = arith.constant 0 : index
    %277 = vector.load %arg7[%c10_220, %c0_221, %c0_222] : memref<25x8x8xf32, #tpu.memory_space<vmem>>, vector<1x8x8xf32>
    %278 = vector.shape_cast %277 : vector<1x8x8xf32> to vector<8x8xf32>
    %c0_223 = arith.constant 0 : index
    %c126_224 = arith.constant 126 : index
    %279 = vector.load %arg14[%c0_223, %c126_224] : memref<8x768xf32, #tpu.memory_space<vmem>>, vector<8x512xf32>
    %cst_225 = arith.constant dense<0.000000e+00> : vector<8x512xf32>
    %280 = tpu.matmul %278, %279, %cst_225 {dimension_numbers = #tpu.dot_dimension_numbers<[1], [0], [0], [1], [0, 0, 1, 1], [], []>} : vector<8x8xf32>, vector<8x512xf32>, vector<8x512xf32> -> vector<8x512xf32>
    %281 = arith.addf %276, %280 : vector<8x512xf32>
    %c11_226 = arith.constant 11 : index
    %c0_227 = arith.constant 0 : index
    %c0_228 = arith.constant 0 : index
    %282 = vector.load %arg7[%c11_226, %c0_227, %c0_228] : memref<25x8x8xf32, #tpu.memory_space<vmem>>, vector<1x8x8xf32>
    %283 = vector.shape_cast %282 : vector<1x8x8xf32> to vector<8x8xf32>
    %c0_229 = arith.constant 0 : index
    %c127_230 = arith.constant 127 : index
    %284 = vector.load %arg14[%c0_229, %c127_230] : memref<8x768xf32, #tpu.memory_space<vmem>>, vector<8x512xf32>
    %cst_231 = arith.constant dense<0.000000e+00> : vector<8x512xf32>
    %285 = tpu.matmul %283, %284, %cst_231 {dimension_numbers = #tpu.dot_dimension_numbers<[1], [0], [0], [1], [0, 0, 1, 1], [], []>} : vector<8x8xf32>, vector<8x512xf32>, vector<8x512xf32> -> vector<8x512xf32>
    %286 = arith.addf %281, %285 : vector<8x512xf32>
    %c12_232 = arith.constant 12 : index
    %c0_233 = arith.constant 0 : index
    %c0_234 = arith.constant 0 : index
    %287 = vector.load %arg7[%c12_232, %c0_233, %c0_234] : memref<25x8x8xf32, #tpu.memory_space<vmem>>, vector<1x8x8xf32>
    %288 = vector.shape_cast %287 : vector<1x8x8xf32> to vector<8x8xf32>
    %c0_235 = arith.constant 0 : index
    %c128_236 = arith.constant 128 : index
    %289 = vector.load %arg14[%c0_235, %c128_236] : memref<8x768xf32, #tpu.memory_space<vmem>>, vector<8x512xf32>
    %cst_237 = arith.constant dense<0.000000e+00> : vector<8x512xf32>
    %290 = tpu.matmul %288, %289, %cst_237 {dimension_numbers = #tpu.dot_dimension_numbers<[1], [0], [0], [1], [0, 0, 1, 1], [], []>} : vector<8x8xf32>, vector<8x512xf32>, vector<8x512xf32> -> vector<8x512xf32>
    %291 = arith.addf %286, %290 : vector<8x512xf32>
    %c13_238 = arith.constant 13 : index
    %c0_239 = arith.constant 0 : index
    %c0_240 = arith.constant 0 : index
    %292 = vector.load %arg7[%c13_238, %c0_239, %c0_240] : memref<25x8x8xf32, #tpu.memory_space<vmem>>, vector<1x8x8xf32>
    %293 = vector.shape_cast %292 : vector<1x8x8xf32> to vector<8x8xf32>
    %c0_241 = arith.constant 0 : index
    %c129_242 = arith.constant 129 : index
    %294 = vector.load %arg14[%c0_241, %c129_242] : memref<8x768xf32, #tpu.memory_space<vmem>>, vector<8x512xf32>
    %cst_243 = arith.constant dense<0.000000e+00> : vector<8x512xf32>
    %295 = tpu.matmul %293, %294, %cst_243 {dimension_numbers = #tpu.dot_dimension_numbers<[1], [0], [0], [1], [0, 0, 1, 1], [], []>} : vector<8x8xf32>, vector<8x512xf32>, vector<8x512xf32> -> vector<8x512xf32>
    %296 = arith.addf %291, %295 : vector<8x512xf32>
    %c14_244 = arith.constant 14 : index
    %c0_245 = arith.constant 0 : index
    %c0_246 = arith.constant 0 : index
    %297 = vector.load %arg7[%c14_244, %c0_245, %c0_246] : memref<25x8x8xf32, #tpu.memory_space<vmem>>, vector<1x8x8xf32>
    %298 = vector.shape_cast %297 : vector<1x8x8xf32> to vector<8x8xf32>
    %c0_247 = arith.constant 0 : index
    %c130_248 = arith.constant 130 : index
    %299 = vector.load %arg14[%c0_247, %c130_248] : memref<8x768xf32, #tpu.memory_space<vmem>>, vector<8x512xf32>
    %cst_249 = arith.constant dense<0.000000e+00> : vector<8x512xf32>
    %300 = tpu.matmul %298, %299, %cst_249 {dimension_numbers = #tpu.dot_dimension_numbers<[1], [0], [0], [1], [0, 0, 1, 1], [], []>} : vector<8x8xf32>, vector<8x512xf32>, vector<8x512xf32> -> vector<8x512xf32>
    %301 = arith.addf %296, %300 : vector<8x512xf32>
    %c15_250 = arith.constant 15 : index
    %c0_251 = arith.constant 0 : index
    %c0_252 = arith.constant 0 : index
    %302 = vector.load %arg7[%c15_250, %c0_251, %c0_252] : memref<25x8x8xf32, #tpu.memory_space<vmem>>, vector<1x8x8xf32>
    %303 = vector.shape_cast %302 : vector<1x8x8xf32> to vector<8x8xf32>
    %c0_253 = arith.constant 0 : index
    %c146_254 = arith.constant 146 : index
    %304 = vector.load %arg14[%c0_253, %c146_254] : memref<8x768xf32, #tpu.memory_space<vmem>>, vector<8x512xf32>
    %cst_255 = arith.constant dense<0.000000e+00> : vector<8x512xf32>
    %305 = tpu.matmul %303, %304, %cst_255 {dimension_numbers = #tpu.dot_dimension_numbers<[1], [0], [0], [1], [0, 0, 1, 1], [], []>} : vector<8x8xf32>, vector<8x512xf32>, vector<8x512xf32> -> vector<8x512xf32>
    %306 = arith.addf %301, %305 : vector<8x512xf32>
    %c16_256 = arith.constant 16 : index
    %c0_257 = arith.constant 0 : index
    %c0_258 = arith.constant 0 : index
    %307 = vector.load %arg7[%c16_256, %c0_257, %c0_258] : memref<25x8x8xf32, #tpu.memory_space<vmem>>, vector<1x8x8xf32>
    %308 = vector.shape_cast %307 : vector<1x8x8xf32> to vector<8x8xf32>
    %c0_259 = arith.constant 0 : index
    %c147_260 = arith.constant 147 : index
    %309 = vector.load %arg14[%c0_259, %c147_260] : memref<8x768xf32, #tpu.memory_space<vmem>>, vector<8x512xf32>
    %cst_261 = arith.constant dense<0.000000e+00> : vector<8x512xf32>
    %310 = tpu.matmul %308, %309, %cst_261 {dimension_numbers = #tpu.dot_dimension_numbers<[1], [0], [0], [1], [0, 0, 1, 1], [], []>} : vector<8x8xf32>, vector<8x512xf32>, vector<8x512xf32> -> vector<8x512xf32>
    %311 = arith.addf %306, %310 : vector<8x512xf32>
    %c17_262 = arith.constant 17 : index
    %c0_263 = arith.constant 0 : index
    %c0_264 = arith.constant 0 : index
    %312 = vector.load %arg7[%c17_262, %c0_263, %c0_264] : memref<25x8x8xf32, #tpu.memory_space<vmem>>, vector<1x8x8xf32>
    %313 = vector.shape_cast %312 : vector<1x8x8xf32> to vector<8x8xf32>
    %c0_265 = arith.constant 0 : index
    %c148_266 = arith.constant 148 : index
    %314 = vector.load %arg14[%c0_265, %c148_266] : memref<8x768xf32, #tpu.memory_space<vmem>>, vector<8x512xf32>
    %cst_267 = arith.constant dense<0.000000e+00> : vector<8x512xf32>
    %315 = tpu.matmul %313, %314, %cst_267 {dimension_numbers = #tpu.dot_dimension_numbers<[1], [0], [0], [1], [0, 0, 1, 1], [], []>} : vector<8x8xf32>, vector<8x512xf32>, vector<8x512xf32> -> vector<8x512xf32>
    %316 = arith.addf %311, %315 : vector<8x512xf32>
    %c18_268 = arith.constant 18 : index
    %c0_269 = arith.constant 0 : index
    %c0_270 = arith.constant 0 : index
    %317 = vector.load %arg7[%c18_268, %c0_269, %c0_270] : memref<25x8x8xf32, #tpu.memory_space<vmem>>, vector<1x8x8xf32>
    %318 = vector.shape_cast %317 : vector<1x8x8xf32> to vector<8x8xf32>
    %c0_271 = arith.constant 0 : index
    %c149_272 = arith.constant 149 : index
    %319 = vector.load %arg14[%c0_271, %c149_272] : memref<8x768xf32, #tpu.memory_space<vmem>>, vector<8x512xf32>
    %cst_273 = arith.constant dense<0.000000e+00> : vector<8x512xf32>
    %320 = tpu.matmul %318, %319, %cst_273 {dimension_numbers = #tpu.dot_dimension_numbers<[1], [0], [0], [1], [0, 0, 1, 1], [], []>} : vector<8x8xf32>, vector<8x512xf32>, vector<8x512xf32> -> vector<8x512xf32>
    %321 = arith.addf %316, %320 : vector<8x512xf32>
    %c19_274 = arith.constant 19 : index
    %c0_275 = arith.constant 0 : index
    %c0_276 = arith.constant 0 : index
    %322 = vector.load %arg7[%c19_274, %c0_275, %c0_276] : memref<25x8x8xf32, #tpu.memory_space<vmem>>, vector<1x8x8xf32>
    %323 = vector.shape_cast %322 : vector<1x8x8xf32> to vector<8x8xf32>
    %c0_277 = arith.constant 0 : index
    %c150_278 = arith.constant 150 : index
    %324 = vector.load %arg14[%c0_277, %c150_278] : memref<8x768xf32, #tpu.memory_space<vmem>>, vector<8x512xf32>
    %cst_279 = arith.constant dense<0.000000e+00> : vector<8x512xf32>
    %325 = tpu.matmul %323, %324, %cst_279 {dimension_numbers = #tpu.dot_dimension_numbers<[1], [0], [0], [1], [0, 0, 1, 1], [], []>} : vector<8x8xf32>, vector<8x512xf32>, vector<8x512xf32> -> vector<8x512xf32>
    %326 = arith.addf %321, %325 : vector<8x512xf32>
    %c20_280 = arith.constant 20 : index
    %c0_281 = arith.constant 0 : index
    %c0_282 = arith.constant 0 : index
    %327 = vector.load %arg7[%c20_280, %c0_281, %c0_282] : memref<25x8x8xf32, #tpu.memory_space<vmem>>, vector<1x8x8xf32>
    %328 = vector.shape_cast %327 : vector<1x8x8xf32> to vector<8x8xf32>
    %c0_283 = arith.constant 0 : index
    %c166_284 = arith.constant 166 : index
    %329 = vector.load %arg14[%c0_283, %c166_284] : memref<8x768xf32, #tpu.memory_space<vmem>>, vector<8x512xf32>
    %cst_285 = arith.constant dense<0.000000e+00> : vector<8x512xf32>
    %330 = tpu.matmul %328, %329, %cst_285 {dimension_numbers = #tpu.dot_dimension_numbers<[1], [0], [0], [1], [0, 0, 1, 1], [], []>} : vector<8x8xf32>, vector<8x512xf32>, vector<8x512xf32> -> vector<8x512xf32>
    %331 = arith.addf %326, %330 : vector<8x512xf32>
    %c21_286 = arith.constant 21 : index
    %c0_287 = arith.constant 0 : index
    %c0_288 = arith.constant 0 : index
    %332 = vector.load %arg7[%c21_286, %c0_287, %c0_288] : memref<25x8x8xf32, #tpu.memory_space<vmem>>, vector<1x8x8xf32>
    %333 = vector.shape_cast %332 : vector<1x8x8xf32> to vector<8x8xf32>
    %c0_289 = arith.constant 0 : index
    %c167_290 = arith.constant 167 : index
    %334 = vector.load %arg14[%c0_289, %c167_290] : memref<8x768xf32, #tpu.memory_space<vmem>>, vector<8x512xf32>
    %cst_291 = arith.constant dense<0.000000e+00> : vector<8x512xf32>
    %335 = tpu.matmul %333, %334, %cst_291 {dimension_numbers = #tpu.dot_dimension_numbers<[1], [0], [0], [1], [0, 0, 1, 1], [], []>} : vector<8x8xf32>, vector<8x512xf32>, vector<8x512xf32> -> vector<8x512xf32>
    %336 = arith.addf %331, %335 : vector<8x512xf32>
    %c22_292 = arith.constant 22 : index
    %c0_293 = arith.constant 0 : index
    %c0_294 = arith.constant 0 : index
    %337 = vector.load %arg7[%c22_292, %c0_293, %c0_294] : memref<25x8x8xf32, #tpu.memory_space<vmem>>, vector<1x8x8xf32>
    %338 = vector.shape_cast %337 : vector<1x8x8xf32> to vector<8x8xf32>
    %c0_295 = arith.constant 0 : index
    %c168_296 = arith.constant 168 : index
    %339 = vector.load %arg14[%c0_295, %c168_296] : memref<8x768xf32, #tpu.memory_space<vmem>>, vector<8x512xf32>
    %cst_297 = arith.constant dense<0.000000e+00> : vector<8x512xf32>
    %340 = tpu.matmul %338, %339, %cst_297 {dimension_numbers = #tpu.dot_dimension_numbers<[1], [0], [0], [1], [0, 0, 1, 1], [], []>} : vector<8x8xf32>, vector<8x512xf32>, vector<8x512xf32> -> vector<8x512xf32>
    %341 = arith.addf %336, %340 : vector<8x512xf32>
    %c23_298 = arith.constant 23 : index
    %c0_299 = arith.constant 0 : index
    %c0_300 = arith.constant 0 : index
    %342 = vector.load %arg7[%c23_298, %c0_299, %c0_300] : memref<25x8x8xf32, #tpu.memory_space<vmem>>, vector<1x8x8xf32>
    %343 = vector.shape_cast %342 : vector<1x8x8xf32> to vector<8x8xf32>
    %c0_301 = arith.constant 0 : index
    %c169_302 = arith.constant 169 : index
    %344 = vector.load %arg14[%c0_301, %c169_302] : memref<8x768xf32, #tpu.memory_space<vmem>>, vector<8x512xf32>
    %cst_303 = arith.constant dense<0.000000e+00> : vector<8x512xf32>
    %345 = tpu.matmul %343, %344, %cst_303 {dimension_numbers = #tpu.dot_dimension_numbers<[1], [0], [0], [1], [0, 0, 1, 1], [], []>} : vector<8x8xf32>, vector<8x512xf32>, vector<8x512xf32> -> vector<8x512xf32>
    %346 = arith.addf %341, %345 : vector<8x512xf32>
    %c24_304 = arith.constant 24 : index
    %c0_305 = arith.constant 0 : index
    %c0_306 = arith.constant 0 : index
    %347 = vector.load %arg7[%c24_304, %c0_305, %c0_306] : memref<25x8x8xf32, #tpu.memory_space<vmem>>, vector<1x8x8xf32>
    %348 = vector.shape_cast %347 : vector<1x8x8xf32> to vector<8x8xf32>
    %c0_307 = arith.constant 0 : index
    %c170_308 = arith.constant 170 : index
    %349 = vector.load %arg14[%c0_307, %c170_308] : memref<8x768xf32, #tpu.memory_space<vmem>>, vector<8x512xf32>
    %cst_309 = arith.constant dense<0.000000e+00> : vector<8x512xf32>
    %350 = tpu.matmul %348, %349, %cst_309 {dimension_numbers = #tpu.dot_dimension_numbers<[1], [0], [0], [1], [0, 0, 1, 1], [], []>} : vector<8x8xf32>, vector<8x512xf32>, vector<8x512xf32> -> vector<8x512xf32>
    %351 = arith.addf %346, %350 : vector<8x512xf32>
    %c0_310 = arith.constant 0 : index
    %c0_311 = arith.constant 0 : index
    %352 = vector.load %arg8[%c0_310, %c0_311] : memref<8x1xf32, #tpu.memory_space<vmem>>, vector<8x1xf32>
    %c0_312 = arith.constant 0 : index
    %c0_313 = arith.constant 0 : index
    %353 = vector.load %arg9[%c0_312, %c0_313] : memref<8x1xf32, #tpu.memory_space<vmem>>, vector<8x1xf32>
    %c0_314 = arith.constant 0 : index
    %c0_315 = arith.constant 0 : index
    %354 = vector.load %arg10[%c0_314, %c0_315] : memref<8x1xf32, #tpu.memory_space<vmem>>, vector<8x1xf32>
    %355 = vector.broadcast %352 : vector<8x1xf32> to vector<8x512xf32>
    %356 = arith.addf %351, %355 : vector<8x512xf32>
    %357 = vector.broadcast %0 : vector<1x512xf32> to vector<8x512xf32>
    %358 = arith.mulf %356, %357 : vector<8x512xf32>
    %cst_316 = arith.constant dense<0.000000e+00> : vector<8xf32>
    %359 = vector.multi_reduction <add>, %358, %cst_316 [1] : vector<8x512xf32> to vector<8xf32>
    %360 = vector.shape_cast %359 : vector<8xf32> to vector<8x1xf32>
    %361 = arith.mulf %358, %356 : vector<8x512xf32>
    %cst_317 = arith.constant dense<0.000000e+00> : vector<8xf32>
    %362 = vector.multi_reduction <add>, %361, %cst_317 [1] : vector<8x512xf32> to vector<8xf32>
    %363 = vector.shape_cast %362 : vector<8xf32> to vector<8x1xf32>
    %cst_318 = arith.constant 3.906250e-03 : f32
    %364 = vector.broadcast %cst_318 : f32 to vector<8x1xf32>
    %365 = arith.mulf %360, %364 : vector<8x1xf32>
    %cst_319 = arith.constant 3.906250e-03 : f32
    %366 = vector.broadcast %cst_319 : f32 to vector<8x1xf32>
    %367 = arith.mulf %363, %366 : vector<8x1xf32>
    %368 = arith.mulf %365, %365 : vector<8x1xf32>
    %369 = arith.subf %367, %368 : vector<8x1xf32>
    %cst_320 = arith.constant 0.000000e+00 : f32
    %370 = vector.broadcast %cst_320 : f32 to vector<8x1xf32>
    %371 = arith.maximumf %369, %370 : vector<8x1xf32>
    %372 = vector.broadcast %365 : vector<8x1xf32> to vector<8x512xf32>
    %373 = arith.subf %356, %372 : vector<8x512xf32>
    %cst_321 = arith.constant 9.99999974E-6 : f32
    %374 = vector.broadcast %cst_321 : f32 to vector<8x1xf32>
    %375 = arith.addf %371, %374 : vector<8x1xf32>
    %376 = math.rsqrt %375 : vector<8x1xf32>
    %377 = vector.broadcast %376 : vector<8x1xf32> to vector<8x512xf32>
    %378 = arith.mulf %373, %377 : vector<8x512xf32>
    %379 = vector.broadcast %353 : vector<8x1xf32> to vector<8x512xf32>
    %380 = arith.mulf %378, %379 : vector<8x512xf32>
    %381 = vector.broadcast %354 : vector<8x1xf32> to vector<8x512xf32>
    %382 = arith.addf %380, %381 : vector<8x512xf32>
    %cst_322 = arith.constant 5.000000e-01 : f32
    %383 = vector.broadcast %cst_322 : f32 to vector<8x512xf32>
    %384 = arith.mulf %383, %382 : vector<8x512xf32>
    %cst_323 = arith.constant 0.707106769 : f32
    %385 = vector.broadcast %cst_323 : f32 to vector<8x512xf32>
    %386 = arith.mulf %382, %385 : vector<8x512xf32>
    %387 = math.absf %386 : vector<8x512xf32>
    %cst_324 = arith.constant 0.327591091 : f32
    %388 = vector.broadcast %cst_324 : f32 to vector<8x512xf32>
    %389 = arith.mulf %388, %387 : vector<8x512xf32>
    %cst_325 = arith.constant 1.000000e+00 : f32
    %390 = vector.broadcast %cst_325 : f32 to vector<8x512xf32>
    %391 = arith.addf %390, %389 : vector<8x512xf32>
    %cst_326 = arith.constant 1.000000e+00 : f32
    %392 = vector.broadcast %cst_326 : f32 to vector<8x512xf32>
    %393 = arith.divf %392, %391 : vector<8x512xf32>
    %cst_327 = arith.constant 1.06140542 : f32
    %394 = vector.broadcast %cst_327 : f32 to vector<8x512xf32>
    %395 = arith.mulf %393, %394 : vector<8x512xf32>
    %cst_328 = arith.constant -1.45315206 : f32
    %396 = vector.broadcast %cst_328 : f32 to vector<8x512xf32>
    %397 = arith.addf %396, %395 : vector<8x512xf32>
    %398 = arith.mulf %393, %397 : vector<8x512xf32>
    %cst_329 = arith.constant 1.42141378 : f32
    %399 = vector.broadcast %cst_329 : f32 to vector<8x512xf32>
    %400 = arith.addf %399, %398 : vector<8x512xf32>
    %401 = arith.mulf %393, %400 : vector<8x512xf32>
    %cst_330 = arith.constant -0.284496725 : f32
    %402 = vector.broadcast %cst_330 : f32 to vector<8x512xf32>
    %403 = arith.addf %402, %401 : vector<8x512xf32>
    %404 = arith.mulf %393, %403 : vector<8x512xf32>
    %cst_331 = arith.constant 0.254829586 : f32
    %405 = vector.broadcast %cst_331 : f32 to vector<8x512xf32>
    %406 = arith.addf %405, %404 : vector<8x512xf32>
    %407 = arith.mulf %393, %406 : vector<8x512xf32>
    %408 = arith.mulf %387, %387 : vector<8x512xf32>
    %cst_332 = arith.constant 0.000000e+00 : f32
    %409 = vector.broadcast %cst_332 : f32 to vector<8x512xf32>
    %410 = arith.subf %409, %408 : vector<8x512xf32>
    %411 = math.exp %410 : vector<8x512xf32>
    %412 = arith.mulf %407, %411 : vector<8x512xf32>
    %cst_333 = arith.constant 1.000000e+00 : f32
    %413 = vector.broadcast %cst_333 : f32 to vector<8x512xf32>
    %414 = arith.subf %413, %412 : vector<8x512xf32>
    %cst_334 = arith.constant 0.000000e+00 : f32
    %415 = vector.broadcast %cst_334 : f32 to vector<8x512xf32>
    %416 = arith.cmpf oge, %386, %415 : vector<8x512xf32>
    %cst_335 = arith.constant 0.000000e+00 : f32
    %417 = vector.broadcast %cst_335 : f32 to vector<8x512xf32>
    %418 = arith.subf %417, %414 : vector<8x512xf32>
    %419 = arith.select %416, %414, %418 : vector<8x512xi1>, vector<8x512xf32>
    %cst_336 = arith.constant 1.000000e+00 : f32
    %420 = vector.broadcast %cst_336 : f32 to vector<8x512xf32>
    %421 = arith.addf %420, %419 : vector<8x512xf32>
    %422 = arith.mulf %384, %421 : vector<8x512xf32>
    %c0_337 = arith.constant 0 : index
    %c0_338 = arith.constant 0 : index
    %c128_339 = arith.constant 128 : index
    %423 = vector.load %arg1[%c0_337, %c0_338, %c128_339] : memref<1x8x768xf32, #tpu.memory_space<vmem>>, vector<1x8x512xf32>
    %424 = vector.shape_cast %423 : vector<1x8x512xf32> to vector<8x512xf32>
    %c0_340 = arith.constant 0 : index
    %c0_341 = arith.constant 0 : index
    %425 = vector.load %arg11[%c0_340, %c0_341] : memref<8x8xf32, #tpu.memory_space<vmem>>, vector<8x8xf32>
    %cst_342 = arith.constant dense<0.000000e+00> : vector<8x512xf32>
    %426 = tpu.matmul %425, %424, %cst_342 {dimension_numbers = #tpu.dot_dimension_numbers<[1], [0], [0], [1], [0, 0, 1, 1], [], []>} : vector<8x8xf32>, vector<8x512xf32>, vector<8x512xf32> -> vector<8x512xf32>
    %c0_343 = arith.constant 0 : index
    %c0_344 = arith.constant 0 : index
    %427 = vector.load %arg12[%c0_343, %c0_344] : memref<8x1xf32, #tpu.memory_space<vmem>>, vector<8x1xf32>
    %428 = vector.broadcast %427 : vector<8x1xf32> to vector<8x512xf32>
    %429 = arith.addf %426, %428 : vector<8x512xf32>
    %430 = arith.addf %422, %429 : vector<8x512xf32>
    %cst_345 = arith.constant 5.000000e-01 : f32
    %431 = vector.broadcast %cst_345 : f32 to vector<8x512xf32>
    %432 = arith.mulf %431, %430 : vector<8x512xf32>
    %cst_346 = arith.constant 0.707106769 : f32
    %433 = vector.broadcast %cst_346 : f32 to vector<8x512xf32>
    %434 = arith.mulf %430, %433 : vector<8x512xf32>
    %435 = math.absf %434 : vector<8x512xf32>
    %cst_347 = arith.constant 0.327591091 : f32
    %436 = vector.broadcast %cst_347 : f32 to vector<8x512xf32>
    %437 = arith.mulf %436, %435 : vector<8x512xf32>
    %cst_348 = arith.constant 1.000000e+00 : f32
    %438 = vector.broadcast %cst_348 : f32 to vector<8x512xf32>
    %439 = arith.addf %438, %437 : vector<8x512xf32>
    %cst_349 = arith.constant 1.000000e+00 : f32
    %440 = vector.broadcast %cst_349 : f32 to vector<8x512xf32>
    %441 = arith.divf %440, %439 : vector<8x512xf32>
    %cst_350 = arith.constant 1.06140542 : f32
    %442 = vector.broadcast %cst_350 : f32 to vector<8x512xf32>
    %443 = arith.mulf %441, %442 : vector<8x512xf32>
    %cst_351 = arith.constant -1.45315206 : f32
    %444 = vector.broadcast %cst_351 : f32 to vector<8x512xf32>
    %445 = arith.addf %444, %443 : vector<8x512xf32>
    %446 = arith.mulf %441, %445 : vector<8x512xf32>
    %cst_352 = arith.constant 1.42141378 : f32
    %447 = vector.broadcast %cst_352 : f32 to vector<8x512xf32>
    %448 = arith.addf %447, %446 : vector<8x512xf32>
    %449 = arith.mulf %441, %448 : vector<8x512xf32>
    %cst_353 = arith.constant -0.284496725 : f32
    %450 = vector.broadcast %cst_353 : f32 to vector<8x512xf32>
    %451 = arith.addf %450, %449 : vector<8x512xf32>
    %452 = arith.mulf %441, %451 : vector<8x512xf32>
    %cst_354 = arith.constant 0.254829586 : f32
    %453 = vector.broadcast %cst_354 : f32 to vector<8x512xf32>
    %454 = arith.addf %453, %452 : vector<8x512xf32>
    %455 = arith.mulf %441, %454 : vector<8x512xf32>
    %456 = arith.mulf %435, %435 : vector<8x512xf32>
    %cst_355 = arith.constant 0.000000e+00 : f32
    %457 = vector.broadcast %cst_355 : f32 to vector<8x512xf32>
    %458 = arith.subf %457, %456 : vector<8x512xf32>
    %459 = math.exp %458 : vector<8x512xf32>
    %460 = arith.mulf %455, %459 : vector<8x512xf32>
    %cst_356 = arith.constant 1.000000e+00 : f32
    %461 = vector.broadcast %cst_356 : f32 to vector<8x512xf32>
    %462 = arith.subf %461, %460 : vector<8x512xf32>
    %cst_357 = arith.constant 0.000000e+00 : f32
    %463 = vector.broadcast %cst_357 : f32 to vector<8x512xf32>
    %464 = arith.cmpf oge, %434, %463 : vector<8x512xf32>
    %cst_358 = arith.constant 0.000000e+00 : f32
    %465 = vector.broadcast %cst_358 : f32 to vector<8x512xf32>
    %466 = arith.subf %465, %462 : vector<8x512xf32>
    %467 = arith.select %464, %462, %466 : vector<8x512xi1>, vector<8x512xf32>
    %cst_359 = arith.constant 1.000000e+00 : f32
    %468 = vector.broadcast %cst_359 : f32 to vector<8x512xf32>
    %469 = arith.addf %468, %467 : vector<8x512xf32>
    %470 = arith.mulf %432, %469 : vector<8x512xf32>
    %c0_360 = arith.constant 0 : index
    %c0_361 = arith.constant 0 : index
    %c0_362 = arith.constant 0 : index
    %471 = vector.load %arg13[%c0_360, %c0_361, %c0_362] : memref<1x8x512xf32, #tpu.memory_space<vmem>>, vector<1x8x512xf32>
    %472 = vector.shape_cast %471 : vector<1x8x512xf32> to vector<8x512xf32>
    %473 = vector.shape_cast %470 : vector<8x512xf32> to vector<1x8x512xf32>
    tpu.vector_store %arg13[%c0_360, %c0_361, %c0_362], %473 {strides = array<i32>} : memref<1x8x512xf32, #tpu.memory_space<vmem>>, vector<1x8x512xf32>,
    return
  }
  func.func @transform_0(%arg0: i32) -> (i32, i32, i32) {
    %c0_i32 = arith.constant 0 : i32
    %c0_i32_0 = arith.constant 0 : i32
    %c0_i32_1 = arith.constant 0 : i32
    return %arg0, %c0_i32, %c0_i32_0 : i32, i32, i32
  }
  func.func @transform_1(%arg0: i32) -> (i32, i32) {
    %c0_i32 = arith.constant 0 : i32
    %c0_i32_0 = arith.constant 0 : i32
    %c0_i32_1 = arith.constant 0 : i32
    return %c0_i32, %c0_i32_0 : i32, i32
  }
  func.func @transform_2(%arg0: i32) -> (i32, i32, i32) {
    %c0_i32 = arith.constant 0 : i32
    %c0_i32_0 = arith.constant 0 : i32
    %c0_i32_1 = arith.constant 0 : i32
    %c0_i32_2 = arith.constant 0 : i32
    return %c0_i32, %c0_i32_0, %c0_i32_1 : i32, i32, i32
  }
  func.func @transform_3(%arg0: i32) -> (i32, i32) {
    %c0_i32 = arith.constant 0 : i32
    %c0_i32_0 = arith.constant 0 : i32
    %c0_i32_1 = arith.constant 0 : i32
    return %c0_i32, %c0_i32_0 : i32, i32
  }
  func.func @transform_4(%arg0: i32) -> (i32, i32) {
    %c0_i32 = arith.constant 0 : i32
    %c0_i32_0 = arith.constant 0 : i32
    %c0_i32_1 = arith.constant 0 : i32
    return %c0_i32, %c0_i32_0 : i32, i32
  }
  func.func @transform_5(%arg0: i32) -> (i32, i32) {
    %c0_i32 = arith.constant 0 : i32
    %c0_i32_0 = arith.constant 0 : i32
    %c0_i32_1 = arith.constant 0 : i32
    return %c0_i32, %c0_i32_0 : i32, i32
  }
  func.func @transform_6(%arg0: i32) -> (i32, i32, i32) {
    %c0_i32 = arith.constant 0 : i32
    %c0_i32_0 = arith.constant 0 : i32
    %c0_i32_1 = arith.constant 0 : i32
    %c0_i32_2 = arith.constant 0 : i32
    return %c0_i32, %c0_i32_0, %c0_i32_1 : i32, i32, i32
  }
  func.func @transform_7(%arg0: i32) -> (i32, i32) {
    %c0_i32 = arith.constant 0 : i32
    %c0_i32_0 = arith.constant 0 : i32
    %c0_i32_1 = arith.constant 0 : i32
    return %c0_i32, %c0_i32_0 : i32, i32
  }
  func.func @transform_8(%arg0: i32) -> (i32, i32) {
    %c0_i32 = arith.constant 0 : i32
    %c0_i32_0 = arith.constant 0 : i32
    %c0_i32_1 = arith.constant 0 : i32
    return %c0_i32, %c0_i32_0 : i32, i32
  }
  func.func @transform_9(%arg0: i32) -> (i32, i32) {
    %c0_i32 = arith.constant 0 : i32
    %c0_i32_0 = arith.constant 0 : i32
    %c0_i32_1 = arith.constant 0 : i32
    return %c0_i32, %c0_i32_0 : i32, i32
  }
  func.func @transform_10(%arg0: i32) -> (i32, i32) {
    %c0_i32 = arith.constant 0 : i32
    %c0_i32_0 = arith.constant 0 : i32
    %c0_i32_1 = arith.constant 0 : i32
    return %c0_i32, %c0_i32_0 : i32, i32
  }
  func.func @transform_11(%arg0: i32) -> (i32, i32) {
    %c0_i32 = arith.constant 0 : i32
    %c0_i32_0 = arith.constant 0 : i32
    %c0_i32_1 = arith.constant 0 : i32
    return %c0_i32, %c0_i32_0 : i32, i32
  }
  func.func @transform_12(%arg0: i32) -> (i32, i32, i32) {
    %c0_i32 = arith.constant 0 : i32
    %c0_i32_0 = arith.constant 0 : i32
    %c0_i32_1 = arith.constant 0 : i32
    return %arg0, %c0_i32, %c0_i32_0 : i32, i32, i32
  }
}

</mosaic_0001>

<llo_original>
// kernel: tpu_custom_call.1
$region0: #{tpu_custom_call.1}
  #allocation0 [shape = 'u32[]', space=smem, size = 0x4, offset = 0x4, fixed_abs, tag = 'smem constant byte address 0x4 - core index']
  #allocation1 [shape = 'u32[144,128]{1,0:T(1,128)}', space=vmem, size = 0x12000, scoped, tag = 'internal scratch']
  #allocation2 [shape = 'f32[8,768]{1,0:T(8,128)}', space=vmem, size = 0x6000, scoped, tag = 'scratch operand']
  %s0 = inlined_call_operand.vmem [shape: f32[2,8,768], index: 0, kind: input, shape index: {}]
  %s1 = inlined_call_operand.vmem [shape: f32[1,512], index: 1, kind: input, shape index: {}]
  %s2 = inlined_call_operand.vmem [shape: f32[25,8,8], index: 2, kind: input, shape index: {}]
  %s3 = inlined_call_operand.vmem [shape: f32[8,1], index: 3, kind: input, shape index: {}]
  %s4 = inlined_call_operand.vmem [shape: f32[8,1], index: 4, kind: input, shape index: {}]
  %s5 = inlined_call_operand.vmem [shape: f32[8,1], index: 5, kind: input, shape index: {}]
  %s6 = inlined_call_operand.vmem [shape: f32[25,8,8], index: 6, kind: input, shape index: {}]
  %s7 = inlined_call_operand.vmem [shape: f32[8,1], index: 7, kind: input, shape index: {}]
  %s8 = inlined_call_operand.vmem [shape: f32[8,1], index: 8, kind: input, shape index: {}]
  %s9 = inlined_call_operand.vmem [shape: f32[8,1], index: 9, kind: input, shape index: {}]
  %s10 = inlined_call_operand.vmem [shape: f32[8,8], index: 10, kind: input, shape index: {}]
  %s11 = inlined_call_operand.vmem [shape: f32[8,1], index: 11, kind: input, shape index: {}]
  %s12 = inlined_call_operand.hbm [shape: f32[2,8,512], index: 12, kind: output, shape index: {}]
  %s13 = sld [smem:[#allocation0]]
  $region81: #{tpu_custom_call.1} parent=0
    _
  %s15 = ssub.s32 1, %s13
  %s16 = scalar_select 0, %s15, %s13
  $region1: #{tpu_custom_call.1} parent=0
    #allocation3 [shape = 'u8[32768]{0}', space=vmem, size = 0x8000, scoped, tag = 'output window, operand 0']
    #allocation4 [shape = 's32[2]{0}', space=sflag, size = 0x8, scoped, tag = 'scoped memory for tpu_custom_call.1']
    %17 = vsyncpa [#allocation4], 0
    %s18 = scalar_lea.sflag [#allocation4], 1
    %19 = vsyncpa %s18, 0
    loop: start=0, step=1, limit=4
    $region2: #{tpu_custom_call.1} parent=1 // loop_pre_header
      _
    $region3: #{tpu_custom_call.1} parent=1 // loop_header
      %s21 = sphi 0, %s25
      %p22 = scmp.ge.s32.totalorder %s21, 4
      %s31 = sphi 0, %s33
      %s34 = sphi 0, %s31
      %s35 = sphi 0, %s34
      %s51 = sphi 0, %s35
      %s55 = sphi 0, %s55
      %s57 = sphi 0, %s55
      %s58 = sphi 0, %s57
      %s72 = sphi 0, %s58
      %s76 = sphi 0, %s76
      %s78 = sphi 0, %s76
      %s79 = sphi 0, %s78
      %s93 = sphi 0, %s79
      %s97 = sphi 0, %s97
      %s99 = sphi 0, %s97
      %s100 = sphi 0, %s99
      %s114 = sphi 0, %s100
      %s118 = sphi 0, %s118
      %s120 = sphi 0, %s118
      %s121 = sphi 0, %s120
      %s135 = sphi 0, %s121
      %s139 = sphi 0, %s139
      %s141 = sphi 0, %s139
      %s142 = sphi 0, %s141
      %s156 = sphi 0, %s142
      %s160 = sphi 0, %s160
      %s162 = sphi 0, %s160
      %s163 = sphi 0, %s162
      %s177 = sphi 0, %s163
      %s181 = sphi 0, %s181
      %s183 = sphi 0, %s181
      %s184 = sphi 0, %s183
      %s198 = sphi 0, %s184
      %s202 = sphi 0, %s202
      %s204 = sphi 0, %s202
      %s205 = sphi 0, %s204
      %s219 = sphi 0, %s205
      %s223 = sphi 0, %s223
      %s225 = sphi 0, %s223
      %s226 = sphi 0, %s225
      %s240 = sphi 0, %s226
      %s244 = sphi 0, %s244
      %s246 = sphi 0, %s244
      %s247 = sphi 0, %s246
      %s261 = sphi 0, %s247
      %s265 = sphi 0, %s265
      %s267 = sphi 0, %s265
      %s268 = sphi 0, %s267
      %s282 = sphi 0, %s268
      %s288 = sphi 0, %s290
      %s291 = sphi 0, %s288
      %s292 = sphi 0, %s291
      %s308 = sphi 0, %s292
    $region4: #{tpu_custom_call.1} parent=1 // loop_header_branch
      %24 = sbr.rel (%p22) target = $region8
    $region5: #{tpu_custom_call.1} parent=1 // loop_body
      %s26 = ssub.s32 %s21, 1
      %s27 = ssub.s32 %s21, 2
      %s28 = sadd.s32 %s21, 1
      %s29 = ssub.s32 %s21, %s28
      %p30 = scmp.eq.s32.totalorder %s29, 0
      %s32 = sadd.s32 %s31, 1
      %s33 = scalar_select %p30, %s31, %s32
      %p36 = pneg %p30
      %p37 = scmp.eq.s32.totalorder %s21, 1
      %p38 = por %p36, %p37
      %p39 = scmp.ne.s32.totalorder %s31, %s34
      %p40 = scmp.eq.s32.totalorder %s21, 0
      %p41 = por %p39, %p40
      %p42 = scmp.ne.s32.totalorder %s31, %s34
      %p43 = scmp.eq.s32.totalorder %s26, 1
      %p44 = por %p42, %p43
      %p45 = scmp.ne.s32.totalorder %s34, %s35
      %p46 = scmp.eq.s32.totalorder %s26, 0
      %p47 = por %p45, %p46
      %p48 = scmp.ne.s32.totalorder %s34, %s35
      %p49 = scmp.eq.s32.totalorder %s27, 1
      %p50 = por %p48, %p49
      %p52 = scmp.ne.s32.totalorder %s35, %s51
      %p53 = scmp.eq.s32.totalorder %s27, 0
      %p54 = por %p52, %p53
      %s56 = sadd.s32 %s55, 1
      %p59 = scmp.eq.s32.totalorder %s21, 1
      %p60 = scmp.ne.s32.totalorder %s55, %s57
      %p61 = scmp.eq.s32.totalorder %s21, 0
      %p62 = por %p60, %p61
      %p63 = scmp.ne.s32.totalorder %s55, %s57
      %p64 = scmp.eq.s32.totalorder %s26, 1
      %p65 = por %p63, %p64
      %p66 = scmp.ne.s32.totalorder %s57, %s58
      %p67 = scmp.eq.s32.totalorder %s26, 0
      %p68 = por %p66, %p67
      %p69 = scmp.ne.s32.totalorder %s57, %s58
      %p70 = scmp.eq.s32.totalorder %s27, 1
      %p71 = por %p69, %p70
      %p73 = scmp.ne.s32.totalorder %s58, %s72
      %p74 = scmp.eq.s32.totalorder %s27, 0
      %p75 = por %p73, %p74
      %s77 = sadd.s32 %s76, 1
      %p80 = scmp.eq.s32.totalorder %s21, 1
      %p81 = scmp.ne.s32.totalorder %s76, %s78
      %p82 = scmp.eq.s32.totalorder %s21, 0
      %p83 = por %p81, %p82
      %p84 = scmp.ne.s32.totalorder %s76, %s78
      %p85 = scmp.eq.s32.totalorder %s26, 1
      %p86 = por %p84, %p85
      %p87 = scmp.ne.s32.totalorder %s78, %s79
      %p88 = scmp.eq.s32.totalorder %s26, 0
      %p89 = por %p87, %p88
      %p90 = scmp.ne.s32.totalorder %s78, %s79
      %p91 = scmp.eq.s32.totalorder %s27, 1
      %p92 = por %p90, %p91
      %p94 = scmp.ne.s32.totalorder %s79, %s93
      %p95 = scmp.eq.s32.totalorder %s27, 0
      %p96 = por %p94, %p95
      %s98 = sadd.s32 %s97, 1
      %p101 = scmp.eq.s32.totalorder %s21, 1
      %p102 = scmp.ne.s32.totalorder %s97, %s99
      %p103 = scmp.eq.s32.totalorder %s21, 0
      %p104 = por %p102, %p103
      %p105 = scmp.ne.s32.totalorder %s97, %s99
      %p106 = scmp.eq.s32.totalorder %s26, 1
      %p107 = por %p105, %p106
      %p108 = scmp.ne.s32.totalorder %s99, %s100
      %p109 = scmp.eq.s32.totalorder %s26, 0
      %p110 = por %p108, %p109
      %p111 = scmp.ne.s32.totalorder %s99, %s100
      %p112 = scmp.eq.s32.totalorder %s27, 1
      %p113 = por %p111, %p112
      %p115 = scmp.ne.s32.totalorder %s100, %s114
      %p116 = scmp.eq.s32.totalorder %s27, 0
      %p117 = por %p115, %p116
      %s119 = sadd.s32 %s118, 1
      %p122 = scmp.eq.s32.totalorder %s21, 1
      %p123 = scmp.ne.s32.totalorder %s118, %s120
      %p124 = scmp.eq.s32.totalorder %s21, 0
      %p125 = por %p123, %p124
      %p126 = scmp.ne.s32.totalorder %s118, %s120
      %p127 = scmp.eq.s32.totalorder %s26, 1
      %p128 = por %p126, %p127
      %p129 = scmp.ne.s32.totalorder %s120, %s121
      %p130 = scmp.eq.s32.totalorder %s26, 0
      %p131 = por %p129, %p130
      %p132 = scmp.ne.s32.totalorder %s120, %s121
      %p133 = scmp.eq.s32.totalorder %s27, 1
      %p134 = por %p132, %p133
      %p136 = scmp.ne.s32.totalorder %s121, %s135
      %p137 = scmp.eq.s32.totalorder %s27, 0
      %p138 = por %p136, %p137
      %s140 = sadd.s32 %s139, 1
      %p143 = scmp.eq.s32.totalorder %s21, 1
      %p144 = scmp.ne.s32.totalorder %s139, %s141
      %p145 = scmp.eq.s32.totalorder %s21, 0
      %p146 = por %p144, %p145
      %p147 = scmp.ne.s32.totalorder %s139, %s141
      %p148 = scmp.eq.s32.totalorder %s26, 1
      %p149 = por %p147, %p148
      %p150 = scmp.ne.s32.totalorder %s141, %s142
      %p151 = scmp.eq.s32.totalorder %s26, 0
      %p152 = por %p150, %p151
      %p153 = scmp.ne.s32.totalorder %s141, %s142
      %p154 = scmp.eq.s32.totalorder %s27, 1
      %p155 = por %p153, %p154
      %p157 = scmp.ne.s32.totalorder %s142, %s156
      %p158 = scmp.eq.s32.totalorder %s27, 0
      %p159 = por %p157, %p158
      %s161 = sadd.s32 %s160, 1
      %p164 = scmp.eq.s32.totalorder %s21, 1
      %p165 = scmp.ne.s32.totalorder %s160, %s162
      %p166 = scmp.eq.s32.totalorder %s21, 0
      %p167 = por %p165, %p166
      %p168 = scmp.ne.s32.totalorder %s160, %s162
      %p169 = scmp.eq.s32.totalorder %s26, 1
      %p170 = por %p168, %p169
      %p171 = scmp.ne.s32.totalorder %s162, %s163
      %p172 = scmp.eq.s32.totalorder %s26, 0
      %p173 = por %p171, %p172
      %p174 = scmp.ne.s32.totalorder %s162, %s163
      %p175 = scmp.eq.s32.totalorder %s27, 1
      %p176 = por %p174, %p175
      %p178 = scmp.ne.s32.totalorder %s163, %s177
      %p179 = scmp.eq.s32.totalorder %s27, 0
      %p180 = por %p178, %p179
      %s182 = sadd.s32 %s181, 1
      %p185 = scmp.eq.s32.totalorder %s21, 1
      %p186 = scmp.ne.s32.totalorder %s181, %s183
      %p187 = scmp.eq.s32.totalorder %s21, 0
      %p188 = por %p186, %p187
      %p189 = scmp.ne.s32.totalorder %s181, %s183
      %p190 = scmp.eq.s32.totalorder %s26, 1
      %p191 = por %p189, %p190
      %p192 = scmp.ne.s32.totalorder %s183, %s184
      %p193 = scmp.eq.s32.totalorder %s26, 0
      %p194 = por %p192, %p193
      %p195 = scmp.ne.s32.totalorder %s183, %s184
      %p196 = scmp.eq.s32.totalorder %s27, 1
      %p197 = por %p195, %p196
      %p199 = scmp.ne.s32.totalorder %s184, %s198
      %p200 = scmp.eq.s32.totalorder %s27, 0
      %p201 = por %p199, %p200
      %s203 = sadd.s32 %s202, 1
      %p206 = scmp.eq.s32.totalorder %s21, 1
      %p207 = scmp.ne.s32.totalorder %s202, %s204
      %p208 = scmp.eq.s32.totalorder %s21, 0
      %p209 = por %p207, %p208
      %p210 = scmp.ne.s32.totalorder %s202, %s204
      %p211 = scmp.eq.s32.totalorder %s26, 1
      %p212 = por %p210, %p211
      %p213 = scmp.ne.s32.totalorder %s204, %s205
      %p214 = scmp.eq.s32.totalorder %s26, 0
      %p215 = por %p213, %p214
      %p216 = scmp.ne.s32.totalorder %s204, %s205
      %p217 = scmp.eq.s32.totalorder %s27, 1
      %p218 = por %p216, %p217
      %p220 = scmp.ne.s32.totalorder %s205, %s219
      %p221 = scmp.eq.s32.totalorder %s27, 0
      %p222 = por %p220, %p221
      %s224 = sadd.s32 %s223, 1
      %p227 = scmp.eq.s32.totalorder %s21, 1
      %p228 = scmp.ne.s32.totalorder %s223, %s225
      %p229 = scmp.eq.s32.totalorder %s21, 0
      %p230 = por %p228, %p229
      %p231 = scmp.ne.s32.totalorder %s223, %s225
      %p232 = scmp.eq.s32.totalorder %s26, 1
      %p233 = por %p231, %p232
      %p234 = scmp.ne.s32.totalorder %s225, %s226
      %p235 = scmp.eq.s32.totalorder %s26, 0
      %p236 = por %p234, %p235
      %p237 = scmp.ne.s32.totalorder %s225, %s226
      %p238 = scmp.eq.s32.totalorder %s27, 1
      %p239 = por %p237, %p238
      %p241 = scmp.ne.s32.totalorder %s226, %s240
      %p242 = scmp.eq.s32.totalorder %s27, 0
      %p243 = por %p241, %p242
      %s245 = sadd.s32 %s244, 1
      %p248 = scmp.eq.s32.totalorder %s21, 1
      %p249 = scmp.ne.s32.totalorder %s244, %s246
      %p250 = scmp.eq.s32.totalorder %s21, 0
      %p251 = por %p249, %p250
      %p252 = scmp.ne.s32.totalorder %s244, %s246
      %p253 = scmp.eq.s32.totalorder %s26, 1
      %p254 = por %p252, %p253
      %p255 = scmp.ne.s32.totalorder %s246, %s247
      %p256 = scmp.eq.s32.totalorder %s26, 0
      %p257 = por %p255, %p256
      %p258 = scmp.ne.s32.totalorder %s246, %s247
      %p259 = scmp.eq.s32.totalorder %s27, 1
      %p260 = por %p258, %p259
      %p262 = scmp.ne.s32.totalorder %s247, %s261
      %p263 = scmp.eq.s32.totalorder %s27, 0
      %p264 = por %p262, %p263
      %s266 = sadd.s32 %s265, 1
      %p269 = scmp.eq.s32.totalorder %s21, 1
      %p270 = scmp.ne.s32.totalorder %s265, %s267
      %p271 = scmp.eq.s32.totalorder %s21, 0
      %p272 = por %p270, %p271
      %p273 = scmp.ne.s32.totalorder %s265, %s267
      %p274 = scmp.eq.s32.totalorder %s26, 1
      %p275 = por %p273, %p274
      %p276 = scmp.ne.s32.totalorder %s267, %s268
      %p277 = scmp.eq.s32.totalorder %s26, 0
      %p278 = por %p276, %p277
      %p279 = scmp.ne.s32.totalorder %s267, %s268
      %p280 = scmp.eq.s32.totalorder %s27, 1
      %p281 = por %p279, %p280
      %p283 = scmp.ne.s32.totalorder %s268, %s282
      %p284 = scmp.eq.s32.totalorder %s27, 0
      %p285 = por %p283, %p284
      %s286 = ssub.s32 %s21, %s28
      %p287 = scmp.eq.s32.totalorder %s286, 0
      %s289 = sadd.s32 %s288, 1
      %s290 = scalar_select %p287, %s288, %s289
      %p293 = pneg %p287
      %p294 = scmp.eq.s32.totalorder %s21, 1
      %p295 = por %p293, %p294
      %p296 = scmp.ne.s32.totalorder %s288, %s291
      %p297 = scmp.eq.s32.totalorder %s21, 0
      %p298 = por %p296, %p297
      %p299 = scmp.ne.s32.totalorder %s288, %s291
      %p300 = scmp.eq.s32.totalorder %s26, 1
      %p301 = por %p299, %p300
      %p302 = scmp.ne.s32.totalorder %s291, %s292
      %p303 = scmp.eq.s32.totalorder %s26, 0
      %p304 = por %p302, %p303
      %p305 = scmp.ne.s32.totalorder %s291, %s292
      %p306 = scmp.eq.s32.totalorder %s27, 1
      %p307 = por %p305, %p306
      %p309 = scmp.ne.s32.totalorder %s292, %s308
      %p310 = scmp.eq.s32.totalorder %s27, 0
      %p311 = por %p309, %p310
      %p312 = scmp.le.s32.totalorder 1, %s21
      %p313 = scmp.lt.s32.totalorder %s21, 3
      %p314 = pnand %p312, %p313
      %p315 = pneg %p314
      // Predicated region
      $region9: #{tpu_custom_call.1} parent=5 // pred_check
        _
      $region10: #{tpu_custom_call.1} parent=5 // pred_check_branch
        %317 = sbr.rel (%p314) target = $region12
      $region11: #{tpu_custom_call.1} parent=5 // pred_region
        %s318 = ssub.s32 %s21, 1
        // Predicated region
        $region13: #{tpu_custom_call.1} parent=11 // pred_check
          %p319 = pneg %p68
        $region14: #{tpu_custom_call.1} parent=11 // pred_check_branch
          %321 = sbr.rel (%p319) target = $region16
        $region15: #{tpu_custom_call.1} parent=11 // pred_region
          _
        $region16: #{tpu_custom_call.1} parent=11 // pred_fallthru
          _
        // Predicated region
        $region17: #{tpu_custom_call.1} parent=11 // pred_check
          %p322 = pneg %p89
        $region18: #{tpu_custom_call.1} parent=11 // pred_check_branch
          %324 = sbr.rel (%p322) target = $region20
        $region19: #{tpu_custom_call.1} parent=11 // pred_region
          _
        $region20: #{tpu_custom_call.1} parent=11 // pred_fallthru
          _
        // Predicated region
        $region21: #{tpu_custom_call.1} parent=11 // pred_check
          %p325 = pneg %p110
        $region22: #{tpu_custom_call.1} parent=11 // pred_check_branch
          %327 = sbr.rel (%p325) target = $region24
        $region23: #{tpu_custom_call.1} parent=11 // pred_region
          _
        $region24: #{tpu_custom_call.1} parent=11 // pred_fallthru
          _
        // Predicated region
        $region25: #{tpu_custom_call.1} parent=11 // pred_check
          %p328 = pneg %p131
        $region26: #{tpu_custom_call.1} parent=11 // pred_check_branch
          %330 = sbr.rel (%p328) target = $region28
        $region27: #{tpu_custom_call.1} parent=11 // pred_region
          _
        $region28: #{tpu_custom_call.1} parent=11 // pred_fallthru
          _
        // Predicated region
        $region29: #{tpu_custom_call.1} parent=11 // pred_check
          %p331 = pneg %p152
        $region30: #{tpu_custom_call.1} parent=11 // pred_check_branch
          %333 = sbr.rel (%p331) target = $region32
        $region31: #{tpu_custom_call.1} parent=11 // pred_region
          _
        $region32: #{tpu_custom_call.1} parent=11 // pred_fallthru
          _
        // Predicated region
        $region33: #{tpu_custom_call.1} parent=11 // pred_check
          %p334 = pneg %p173
        $region34: #{tpu_custom_call.1} parent=11 // pred_check_branch
          %336 = sbr.rel (%p334) target = $region36
        $region35: #{tpu_custom_call.1} parent=11 // pred_region
          _
        $region36: #{tpu_custom_call.1} parent=11 // pred_fallthru
          _
        // Predicated region
        $region37: #{tpu_custom_call.1} parent=11 // pred_check
          %p337 = pneg %p194
        $region38: #{tpu_custom_call.1} parent=11 // pred_check_branch
          %339 = sbr.rel (%p337) target = $region40
        $region39: #{tpu_custom_call.1} parent=11 // pred_region
          _
        $region40: #{tpu_custom_call.1} parent=11 // pred_fallthru
          _
        // Predicated region
        $region41: #{tpu_custom_call.1} parent=11 // pred_check
          %p340 = pneg %p215
        $region42: #{tpu_custom_call.1} parent=11 // pred_check_branch
          %342 = sbr.rel (%p340) target = $region44
        $region43: #{tpu_custom_call.1} parent=11 // pred_region
          _
        $region44: #{tpu_custom_call.1} parent=11 // pred_fallthru
          _
        // Predicated region
        $region45: #{tpu_custom_call.1} parent=11 // pred_check
          %p343 = pneg %p236
        $region46: #{tpu_custom_call.1} parent=11 // pred_check_branch
          %345 = sbr.rel (%p343) target = $region48
        $region47: #{tpu_custom_call.1} parent=11 // pred_region
          _
        $region48: #{tpu_custom_call.1} parent=11 // pred_fallthru
          _
        // Predicated region
        $region49: #{tpu_custom_call.1} parent=11 // pred_check
          %p346 = pneg %p257
        $region50: #{tpu_custom_call.1} parent=11 // pred_check_branch
          %348 = sbr.rel (%p346) target = $region52
        $region51: #{tpu_custom_call.1} parent=11 // pred_region
          _
        $region52: #{tpu_custom_call.1} parent=11 // pred_fallthru
          _
        // Predicated region
        $region53: #{tpu_custom_call.1} parent=11 // pred_check
          %p349 = pneg %p278
        $region54: #{tpu_custom_call.1} parent=11 // pred_check_branch
          %351 = sbr.rel (%p349) target = $region56
        $region55: #{tpu_custom_call.1} parent=11 // pred_region
          _
        $region56: #{tpu_custom_call.1} parent=11 // pred_fallthru
          _
      $region12: #{tpu_custom_call.1} parent=5 // pred_fallthru
        _
      %p352 = scmp.lt.s32.totalorder %s21, 2
      // Predicated region
      $region57: #{tpu_custom_call.1} parent=5 // pred_check
        %p353 = pneg %p352
      $region58: #{tpu_custom_call.1} parent=5 // pred_check_branch
        %355 = sbr.rel (%p353) target = $region60
      $region59: #{tpu_custom_call.1} parent=5 // pred_region
        // Predicated region
        $region61: #{tpu_custom_call.1} parent=59 // pred_check
          %p356 = pneg %p41
        $region62: #{tpu_custom_call.1} parent=59 // pred_check_branch
          %358 = sbr.rel (%p356) target = $region64
        $region63: #{tpu_custom_call.1} parent=59 // pred_region
          %p359 = scmp.lt.s32.totalorder %s21, 1
          %s360 = scalar_select %p359, %s21, 1
          %s361 = smul.addr %s360, 6
          %s362 = smul.addr %s361, 8
          %s363 = scalar_lea.vmem %s0, %s362
        $region64: #{tpu_custom_call.1} parent=59 // pred_fallthru
          _
      $region60: #{tpu_custom_call.1} parent=5 // pred_fallthru
        _
      %p364 = scmp.le.s32.totalorder 1, %s21
      %p365 = scmp.lt.s32.totalorder %s21, 3
      %p366 = pnand %p364, %p365
      %p367 = pneg %p366
      // Predicated region
      $region65: #{tpu_custom_call.1} parent=5 // pred_check
        _
      $region66: #{tpu_custom_call.1} parent=5 // pred_check_branch
        %369 = sbr.rel (%p366) target = $region68
      $region67: #{tpu_custom_call.1} parent=5 // pred_region
        %s370 = ssub.s32 %s21, 1
        %p371 = scmp.lt.s32.totalorder %s26, 1
        %s372 = scalar_select %p371, %s26, 1
        %s373 = smul.addr %s372, 6
        %s374 = smul.addr %s373, 8
        %s375 = scalar_lea.vmem %s0, %s374
        %p376 = pneg %p47
        %p377 = pneg %p44
        %p378 = pneg %p68
        %p379 = pneg %p65
        %p380 = pneg %p89
        %p381 = pneg %p86
        %p382 = pneg %p110
        %p383 = pneg %p107
        %p384 = pneg %p131
        %p385 = pneg %p128
        %p386 = pneg %p152
        %p387 = pneg %p149
        %p388 = pneg %p173
        %p389 = pneg %p170
        %p390 = pneg %p194
        %p391 = pneg %p191
        %p392 = pneg %p215
        %p393 = pneg %p212
        %p394 = pneg %p236
        %p395 = pneg %p233
        %p396 = pneg %p257
        %p397 = pneg %p254
        %p398 = pneg %p278
        %p399 = pneg %p275
        %p400 = pneg %p304
        %p401 = pneg %p301
        %s402 = sand.u32 %s291, 1
        %s403 = scalar_lea.sflag [#allocation4], %s402
        %s404 = sand.u32 %s291, 1
        %s405 = smul.addr %s404, 32
        %s406 = scalar_lea.vmem [#allocation3], %s405
        %p407 = scmp.lt.s32.totalorder %s26, 1
        %s408 = scalar_select %p407, %s26, 1
        %s409 = smul.addr %s408, 6
        %s410 = smul.addr %s409, 8
        %s411 = scalar_lea.vmem %s0, %s410
        %v412 = vld [vmem:[%s1] sm:$0xf]
        %v413 = vld [vmem:[%s2] sm:$0xff]
        %v414 = vld [vmem:[%s411] sm:$0xff]
        %v415 = vld [vmem:[%s411 + $0x8] sm:$0xff]
        %v416 = vld [vmem:[%s411 + $0x10] sm:$0xff]
        %v417 = vld [vmem:[%s411 + $0x18] sm:$0xff]
        %v418 = vld [vmem:[%s411 + $0x20] sm:$0xff]
        %s419 = scalar_lea.vmem %s2, 8
        %v420 = vld [vmem:[%s419] sm:$0xff]
        %426 = vrot.lane.b32.xlu0 %v414, 41
        %v427 = vpop.permute.xlu0 %426
        %428 = vrot.lane.b32.xlu0 %v415, 41
        %v429 = vpop.permute.xlu0 %428
        %430 = vrot.lane.b32.xlu0 %v416, 41
        %v431 = vpop.permute.xlu0 %430
        %432 = vrot.lane.b32.xlu0 %v417, 41
        %v433 = vpop.permute.xlu0 %432
        %434 = vrot.lane.b32.xlu0 %v418, 41
        %v435 = vpop.permute.xlu0 %434
        %vm436 = vcmask 334848
        %v437 = vsel %vm436, %v427, %v429
        %v438 = vsel %vm436, %v429, %v431
        %v439 = vsel %vm436, %v431, %v433
        %v440 = vsel %vm436, %v433, %v435
        %vm445 = vcmask 64512
        %v447 = vsel %vm445, %v420, 0
        %449 = vmatprep.subr.mxu0 %v438
        %450 = vmatpush1.msra.mxu0 %v437
        %451 = vmatprep.subr.mxu0 0.0
        %452 = vmatpush1.msra.mxu0 0.0
        %453 = vmatprep.subr.mxu0 0.0
        %454 = vmatpush1.msra.mxu0 0.0
        %455 = vmatprep.subr.mxu0 0.0
        %456 = vmatpush1.msra.mxu0 0.0
        %457 = vmatprep.subr.mxu0 0.0
        %458 = vmatpush1.msra.mxu0 0.0
        %459 = vmatprep.subr.mxu0 0.0
        %460 = vmatpush1.msra.mxu0 0.0
        %461 = vmatprep.subr.mxu0 0.0
        %462 = vmatpush1.msra.mxu0 0.0
        %463 = vmatprep.subr.mxu0 0.0
        %464 = vmatpush1.msra.mxu0 0.0
        %465 = vmatprep.subr.mxu0 0.0
        %466 = vmatpush1.msra.mxu0 0.0
        %467 = vmatprep.subr.mxu0 0.0
        %468 = vmatpush1.msra.mxu0 0.0
        %469 = vmatprep.subr.mxu0 0.0
        %470 = vmatpush1.msra.mxu0 0.0
        %471 = vmatprep.subr.mxu0 0.0
        %472 = vmatpush1.msra.mxu0 0.0
        %473 = vmatprep.subr.mxu0 0.0
        %474 = vmatpush1.msra.mxu0 0.0
        %475 = vmatprep.subr.mxu0 0.0
        %476 = vmatpush1.msra.mxu0 0.0
        %477 = vmatprep.subr.mxu0 0.0
        %478 = vmatpush1.msra.mxu0 0.0
        %479 = vmatprep.subr.mxu0 0.0
        %480 = vmatpush1.msra.mxu0 0.0
        %481 = vmatprep.subr.mxu0 0.0
        %482 = vmatpush1.msra.mxu0 0.0
        %483 = vmatprep.subr.mxu0 0.0
        %484 = vmatpush1.msra.mxu0 0.0
        %485 = vmatprep.subr.mxu0 0.0
        %486 = vmatpush1.msra.mxu0 0.0
        %487 = vmatprep.subr.mxu0 0.0
        %488 = vmatpush1.msra.mxu0 0.0
        %489 = vmatprep.subr.mxu0 0.0
        %490 = vmatpush1.msra.mxu0 0.0
        %491 = vmatprep.subr.mxu0 0.0
        %492 = vmatpush1.msra.mxu0 0.0
        %493 = vmatprep.subr.mxu0 0.0
        %494 = vmatpush1.msra.mxu0 0.0
        %495 = vmatprep.subr.mxu0 0.0
        %496 = vmatpush1.msra.mxu0 0.0
        %497 = vmatprep.subr.mxu0 0.0
        %498 = vmatpush1.msra.mxu0 0.0
        %499 = vmatprep.subr.mxu0 0.0
        %500 = vmatpush1.msra.mxu0 0.0
        %501 = vmatprep.subr.mxu0 0.0
        %502 = vmatpush1.msra.mxu0 0.0
        %503 = vmatprep.subr.mxu0 0.0
        %504 = vmatpush1.msra.mxu0 0.0
        %505 = vmatprep.subr.mxu0 0.0
        %506 = vmatpush1.msra.mxu0 0.0
        %507 = vmatprep.subr.mxu0 0.0
        %508 = vmatpush1.msra.mxu0 0.0
        %509 = vmatprep.subr.mxu0 0.0
        %510 = vmatpush1.msra.mxu0 0.0
        %511 = vmatprep.subr.mxu0 0.0
        %512 = vmatpush1.msra.mxu0 0.0
        %513 = vmatprep.mubr.f32.mxu0 0.0
        %514 = vmatmul.mubr.f32.gmra.mrb[0].mxu0 %v447
        %v515 = vpop.f32.mrb[0].mxu0
        %v516 = vadd.f32 0.0, %v515
        %v517 = vpop.f32.mrb[0].mxu0
        %v518 = vadd.f32 0.0, %v517
        %519 = vdwg.mxu0
        %520 = vmatprep.subr.mxu0 %v440
        %521 = vmatpush1.msra.mxu0 %v439
        %522 = vmatprep.subr.mxu0 0.0
        %523 = vmatpush1.msra.mxu0 0.0
        %524 = vmatprep.subr.mxu0 0.0
        %525 = vmatpush1.msra.mxu0 0.0
        %526 = vmatprep.subr.mxu0 0.0
        %527 = vmatpush1.msra.mxu0 0.0
        %528 = vmatprep.subr.mxu0 0.0
        %529 = vmatpush1.msra.mxu0 0.0
        %530 = vmatprep.subr.mxu0 0.0
        %531 = vmatpush1.msra.mxu0 0.0
        %532 = vmatprep.subr.mxu0 0.0
        %533 = vmatpush1.msra.mxu0 0.0
        %534 = vmatprep.subr.mxu0 0.0
        %535 = vmatpush1.msra.mxu0 0.0
        %536 = vmatprep.subr.mxu0 0.0
        %537 = vmatpush1.msra.mxu0 0.0
        %538 = vmatprep.subr.mxu0 0.0
        %539 = vmatpush1.msra.mxu0 0.0
        %540 = vmatprep.subr.mxu0 0.0
        %541 = vmatpush1.msra.mxu0 0.0
        %542 = vmatprep.subr.mxu0 0.0
        %543 = vmatpush1.msra.mxu0 0.0
        %544 = vmatprep.subr.mxu0 0.0
        %545 = vmatpush1.msra.mxu0 0.0
        %546 = vmatprep.subr.mxu0 0.0
        %547 = vmatpush1.msra.mxu0 0.0
        %548 = vmatprep.subr.mxu0 0.0
        %549 = vmatpush1.msra.mxu0 0.0
        %550 = vmatprep.subr.mxu0 0.0
        %551 = vmatpush1.msra.mxu0 0.0
        %552 = vmatprep.subr.mxu0 0.0
        %553 = vmatpush1.msra.mxu0 0.0
        %554 = vmatprep.subr.mxu0 0.0
        %555 = vmatpush1.msra.mxu0 0.0
        %556 = vmatprep.subr.mxu0 0.0
        %557 = vmatpush1.msra.mxu0 0.0
        %558 = vmatprep.subr.mxu0 0.0
        %559 = vmatpush1.msra.mxu0 0.0
        %560 = vmatprep.subr.mxu0 0.0
        %561 = vmatpush1.msra.mxu0 0.0
        %562 = vmatprep.subr.mxu0 0.0
        %563 = vmatpush1.msra.mxu0 0.0
        %564 = vmatprep.subr.mxu0 0.0
        %565 = vmatpush1.msra.mxu0 0.0
        %566 = vmatprep.subr.mxu0 0.0
        %567 = vmatpush1.msra.mxu0 0.0
        %568 = vmatprep.subr.mxu0 0.0
        %569 = vmatpush1.msra.mxu0 0.0
        %570 = vmatprep.subr.mxu0 0.0
        %571 = vmatpush1.msra.mxu0 0.0
        %572 = vmatprep.subr.mxu0 0.0
        %573 = vmatpush1.msra.mxu0 0.0
        %574 = vmatprep.subr.mxu0 0.0
        %575 = vmatpush1.msra.mxu0 0.0
        %576 = vmatprep.subr.mxu0 0.0
        %577 = vmatpush1.msra.mxu0 0.0
        %578 = vmatprep.subr.mxu0 0.0
        %579 = vmatpush1.msra.mxu0 0.0
        %580 = vmatprep.subr.mxu0 0.0
        %581 = vmatpush1.msra.mxu0 0.0
        %582 = vmatprep.subr.mxu0 0.0
        %583 = vmatpush1.msra.mxu0 0.0
        %584 = vmatprep.mubr.f32.mxu0 0.0
        %585 = vmatmul.mubr.f32.gmra.mrb[0].mxu0 %v447
        %v586 = vpop.f32.mrb[0].mxu0
        %v587 = vadd.f32 0.0, %v586
        %v588 = vpop.f32.mrb[0].mxu0
        %v589 = vadd.f32 0.0, %v588
        %590 = vdwg.mxu0
        %591 = vrot.lane.b32.xlu0 %v414, 42
        %v592 = vpop.permute.xlu0 %591
        %593 = vrot.lane.b32.xlu0 %v415, 42
        %v594 = vpop.permute.xlu0 %593
        %595 = vrot.lane.b32.xlu0 %v416, 42
        %v596 = vpop.permute.xlu0 %595
        %597 = vrot.lane.b32.xlu0 %v417, 42
        %v598 = vpop.permute.xlu0 %597
        %599 = vrot.lane.b32.xlu0 %v418, 42
        %v600 = vpop.permute.xlu0 %599
        %vm601 = vcmask 343040
        %v602 = vsel %vm601, %v592, %v594
        %v603 = vsel %vm601, %v594, %v596
        %v604 = vsel %vm601, %v596, %v598
        %v605 = vsel %vm601, %v598, %v600
        %v611 = vsel %vm445, %v413, 0
        %613 = vmatprep.subr.mxu0 %v603
        %614 = vmatpush1.msra.mxu0 %v602
        %615 = vmatprep.subr.mxu0 0.0
        %616 = vmatpush1.msra.mxu0 0.0
        %617 = vmatprep.subr.mxu0 0.0
        %618 = vmatpush1.msra.mxu0 0.0
        %619 = vmatprep.subr.mxu0 0.0
        %620 = vmatpush1.msra.mxu0 0.0
        %621 = vmatprep.subr.mxu0 0.0
        %622 = vmatpush1.msra.mxu0 0.0
        %623 = vmatprep.subr.mxu0 0.0
        %624 = vmatpush1.msra.mxu0 0.0
        %625 = vmatprep.subr.mxu0 0.0
        %626 = vmatpush1.msra.mxu0 0.0
        %627 = vmatprep.subr.mxu0 0.0
        %628 = vmatpush1.msra.mxu0 0.0
        %629 = vmatprep.subr.mxu0 0.0
        %630 = vmatpush1.msra.mxu0 0.0
        %631 = vmatprep.subr.mxu0 0.0
        %632 = vmatpush1.msra.mxu0 0.0
        %633 = vmatprep.subr.mxu0 0.0
        %634 = vmatpush1.msra.mxu0 0.0
        %635 = vmatprep.subr.mxu0 0.0
        %636 = vmatpush1.msra.mxu0 0.0
        %637 = vmatprep.subr.mxu0 0.0
        %638 = vmatpush1.msra.mxu0 0.0
        %639 = vmatprep.subr.mxu0 0.0
        %640 = vmatpush1.msra.mxu0 0.0
        %641 = vmatprep.subr.mxu0 0.0
        %642 = vmatpush1.msra.mxu0 0.0
        %643 = vmatprep.subr.mxu0 0.0
        %644 = vmatpush1.msra.mxu0 0.0
        %645 = vmatprep.subr.mxu0 0.0
        %646 = vmatpush1.msra.mxu0 0.0
        %647 = vmatprep.subr.mxu0 0.0
        %648 = vmatpush1.msra.mxu0 0.0
        %649 = vmatprep.subr.mxu0 0.0
        %650 = vmatpush1.msra.mxu0 0.0
        %651 = vmatprep.subr.mxu0 0.0
        %652 = vmatpush1.msra.mxu0 0.0
        %653 = vmatprep.subr.mxu0 0.0
        %654 = vmatpush1.msra.mxu0 0.0
        %655 = vmatprep.subr.mxu0 0.0
        %656 = vmatpush1.msra.mxu0 0.0
        %657 = vmatprep.subr.mxu0 0.0
        %658 = vmatpush1.msra.mxu0 0.0
        %659 = vmatprep.subr.mxu0 0.0
        %660 = vmatpush1.msra.mxu0 0.0
        %661 = vmatprep.subr.mxu0 0.0
        %662 = vmatpush1.msra.mxu0 0.0
        %663 = vmatprep.subr.mxu0 0.0
        %664 = vmatpush1.msra.mxu0 0.0
        %665 = vmatprep.subr.mxu0 0.0
        %666 = vmatpush1.msra.mxu0 0.0
        %667 = vmatprep.subr.mxu0 0.0
        %668 = vmatpush1.msra.mxu0 0.0
        %669 = vmatprep.subr.mxu0 0.0
        %670 = vmatpush1.msra.mxu0 0.0
        %671 = vmatprep.subr.mxu0 0.0
        %672 = vmatpush1.msra.mxu0 0.0
        %673 = vmatprep.subr.mxu0 0.0
        %674 = vmatpush1.msra.mxu0 0.0
        %675 = vmatprep.subr.mxu0 0.0
        %676 = vmatpush1.msra.mxu0 0.0
        %677 = vmatprep.mubr.f32.mxu0 0.0
        %678 = vmatmul.mubr.f32.gmra.mrb[0].mxu0 %v611
        %v679 = vpop.f32.mrb[0].mxu0
        %v680 = vadd.f32 %v516, %v679
        %v681 = vpop.f32.mrb[0].mxu0
        %v682 = vadd.f32 %v518, %v681
        %683 = vdwg.mxu0
        %684 = vmatprep.subr.mxu0 %v605
        %685 = vmatpush1.msra.mxu0 %v604
        %686 = vmatprep.subr.mxu0 0.0
        %687 = vmatpush1.msra.mxu0 0.0
        %688 = vmatprep.subr.mxu0 0.0
        %689 = vmatpush1.msra.mxu0 0.0
        %690 = vmatprep.subr.mxu0 0.0
        %691 = vmatpush1.msra.mxu0 0.0
        %692 = vmatprep.subr.mxu0 0.0
        %693 = vmatpush1.msra.mxu0 0.0
        %694 = vmatprep.subr.mxu0 0.0
        %695 = vmatpush1.msra.mxu0 0.0
        %696 = vmatprep.subr.mxu0 0.0
        %697 = vmatpush1.msra.mxu0 0.0
        %698 = vmatprep.subr.mxu0 0.0
        %699 = vmatpush1.msra.mxu0 0.0
        %700 = vmatprep.subr.mxu0 0.0
        %701 = vmatpush1.msra.mxu0 0.0
        %702 = vmatprep.subr.mxu0 0.0
        %703 = vmatpush1.msra.mxu0 0.0
        %704 = vmatprep.subr.mxu0 0.0
        %705 = vmatpush1.msra.mxu0 0.0
        %706 = vmatprep.subr.mxu0 0.0
        %707 = vmatpush1.msra.mxu0 0.0
        %708 = vmatprep.subr.mxu0 0.0
        %709 = vmatpush1.msra.mxu0 0.0
        %710 = vmatprep.subr.mxu0 0.0
        %711 = vmatpush1.msra.mxu0 0.0
        %712 = vmatprep.subr.mxu0 0.0
        %713 = vmatpush1.msra.mxu0 0.0
        %714 = vmatprep.subr.mxu0 0.0
        %715 = vmatpush1.msra.mxu0 0.0
        %716 = vmatprep.subr.mxu0 0.0
        %717 = vmatpush1.msra.mxu0 0.0
        %718 = vmatprep.subr.mxu0 0.0
        %719 = vmatpush1.msra.mxu0 0.0
        %720 = vmatprep.subr.mxu0 0.0
        %721 = vmatpush1.msra.mxu0 0.0
        %722 = vmatprep.subr.mxu0 0.0
        %723 = vmatpush1.msra.mxu0 0.0
        %724 = vmatprep.subr.mxu0 0.0
        %725 = vmatpush1.msra.mxu0 0.0
        %726 = vmatprep.subr.mxu0 0.0
        %727 = vmatpush1.msra.mxu0 0.0
        %728 = vmatprep.subr.mxu0 0.0
        %729 = vmatpush1.msra.mxu0 0.0
        %730 = vmatprep.subr.mxu0 0.0
        %731 = vmatpush1.msra.mxu0 0.0
        %732 = vmatprep.subr.mxu0 0.0
        %733 = vmatpush1.msra.mxu0 0.0
        %734 = vmatprep.subr.mxu0 0.0
        %735 = vmatpush1.msra.mxu0 0.0
        %736 = vmatprep.subr.mxu0 0.0
        %737 = vmatpush1.msra.mxu0 0.0
        %738 = vmatprep.subr.mxu0 0.0
        %739 = vmatpush1.msra.mxu0 0.0
        %740 = vmatprep.subr.mxu0 0.0
        %741 = vmatpush1.msra.mxu0 0.0
        %742 = vmatprep.subr.mxu0 0.0
        %743 = vmatpush1.msra.mxu0 0.0
        %744 = vmatprep.subr.mxu0 0.0
        %745 = vmatpush1.msra.mxu0 0.0
        %746 = vmatprep.subr.mxu0 0.0
        %747 = vmatpush1.msra.mxu0 0.0
        %748 = vmatprep.mubr.f32.mxu0 0.0
        %749 = vmatmul.mubr.f32.gmra.mrb[0].mxu0 %v611
        %v750 = vpop.f32.mrb[0].mxu0
        %v751 = vadd.f32 %v587, %v750
        %v752 = vpop.f32.mrb[0].mxu0
        %v753 = vadd.f32 %v589, %v752
        %754 = vdwg.mxu0
        %s755 = scalar_lea.vmem %s2, 16
        %v756 = vld [vmem:[%s755] sm:$0xff]
        %757 = vrot.lane.b32.xlu0 %v414, 40
        %v758 = vpop.permute.xlu0 %757
        %759 = vrot.lane.b32.xlu0 %v415, 40
        %v760 = vpop.permute.xlu0 %759
        %761 = vrot.lane.b32.xlu0 %v416, 40
        %v762 = vpop.permute.xlu0 %761
        %763 = vrot.lane.b32.xlu0 %v417, 40
        %v764 = vpop.permute.xlu0 %763
        %765 = vrot.lane.b32.xlu0 %v418, 40
        %v766 = vpop.permute.xlu0 %765
        %vm767 = vcmask 326656
        %v768 = vsel %vm767, %v758, %v760
        %v769 = vsel %vm767, %v760, %v762
        %v770 = vsel %vm767, %v762, %v764
        %v771 = vsel %vm767, %v764, %v766
        %v777 = vsel %vm445, %v756, 0
        %779 = vmatprep.subr.mxu0 %v769
        %780 = vmatpush1.msra.mxu0 %v768
        %781 = vmatprep.subr.mxu0 0.0
        %782 = vmatpush1.msra.mxu0 0.0
        %783 = vmatprep.subr.mxu0 0.0
        %784 = vmatpush1.msra.mxu0 0.0
        %785 = vmatprep.subr.mxu0 0.0
        %786 = vmatpush1.msra.mxu0 0.0
        %787 = vmatprep.subr.mxu0 0.0
        %788 = vmatpush1.msra.mxu0 0.0
        %789 = vmatprep.subr.mxu0 0.0
        %790 = vmatpush1.msra.mxu0 0.0
        %791 = vmatprep.subr.mxu0 0.0
        %792 = vmatpush1.msra.mxu0 0.0
        %793 = vmatprep.subr.mxu0 0.0
        %794 = vmatpush1.msra.mxu0 0.0
        %795 = vmatprep.subr.mxu0 0.0
        %796 = vmatpush1.msra.mxu0 0.0
        %797 = vmatprep.subr.mxu0 0.0
        %798 = vmatpush1.msra.mxu0 0.0
        %799 = vmatprep.subr.mxu0 0.0
        %800 = vmatpush1.msra.mxu0 0.0
        %801 = vmatprep.subr.mxu0 0.0
        %802 = vmatpush1.msra.mxu0 0.0
        %803 = vmatprep.subr.mxu0 0.0
        %804 = vmatpush1.msra.mxu0 0.0
        %805 = vmatprep.subr.mxu0 0.0
        %806 = vmatpush1.msra.mxu0 0.0
        %807 = vmatprep.subr.mxu0 0.0
        %808 = vmatpush1.msra.mxu0 0.0
        %809 = vmatprep.subr.mxu0 0.0
        %810 = vmatpush1.msra.mxu0 0.0
        %811 = vmatprep.subr.mxu0 0.0
        %812 = vmatpush1.msra.mxu0 0.0
        %813 = vmatprep.subr.mxu0 0.0
        %814 = vmatpush1.msra.mxu0 0.0
        %815 = vmatprep.subr.mxu0 0.0
        %816 = vmatpush1.msra.mxu0 0.0
        %817 = vmatprep.subr.mxu0 0.0
        %818 = vmatpush1.msra.mxu0 0.0
        %819 = vmatprep.subr.mxu0 0.0
        %820 = vmatpush1.msra.mxu0 0.0
        %821 = vmatprep.subr.mxu0 0.0
        %822 = vmatpush1.msra.mxu0 0.0
        %823 = vmatprep.subr.mxu0 0.0
        %824 = vmatpush1.msra.mxu0 0.0
        %825 = vmatprep.subr.mxu0 0.0
        %826 = vmatpush1.msra.mxu0 0.0
        %827 = vmatprep.subr.mxu0 0.0
        %828 = vmatpush1.msra.mxu0 0.0
        %829 = vmatprep.subr.mxu0 0.0
        %830 = vmatpush1.msra.mxu0 0.0
        %831 = vmatprep.subr.mxu0 0.0
        %832 = vmatpush1.msra.mxu0 0.0
        %833 = vmatprep.subr.mxu0 0.0
        %834 = vmatpush1.msra.mxu0 0.0
        %835 = vmatprep.subr.mxu0 0.0
        %836 = vmatpush1.msra.mxu0 0.0
        %837 = vmatprep.subr.mxu0 0.0
        %838 = vmatpush1.msra.mxu0 0.0
        %839 = vmatprep.subr.mxu0 0.0
        %840 = vmatpush1.msra.mxu0 0.0
        %841 = vmatprep.subr.mxu0 0.0
        %842 = vmatpush1.msra.mxu0 0.0
        %843 = vmatprep.mubr.f32.mxu0 0.0
        %844 = vmatmul.mubr.f32.gmra.mrb[0].mxu0 %v777
        %v845 = vpop.f32.mrb[0].mxu0
        %v846 = vadd.f32 0.0, %v845
        %v847 = vpop.f32.mrb[0].mxu0
        %v848 = vadd.f32 0.0, %v847
        %849 = vdwg.mxu0
        %850 = vmatprep.subr.mxu0 %v771
        %851 = vmatpush1.msra.mxu0 %v770
        %852 = vmatprep.subr.mxu0 0.0
        %853 = vmatpush1.msra.mxu0 0.0
        %854 = vmatprep.subr.mxu0 0.0
        %855 = vmatpush1.msra.mxu0 0.0
        %856 = vmatprep.subr.mxu0 0.0
        %857 = vmatpush1.msra.mxu0 0.0
        %858 = vmatprep.subr.mxu0 0.0
        %859 = vmatpush1.msra.mxu0 0.0
        %860 = vmatprep.subr.mxu0 0.0
        %861 = vmatpush1.msra.mxu0 0.0
        %862 = vmatprep.subr.mxu0 0.0
        %863 = vmatpush1.msra.mxu0 0.0
        %864 = vmatprep.subr.mxu0 0.0
        %865 = vmatpush1.msra.mxu0 0.0
        %866 = vmatprep.subr.mxu0 0.0
        %867 = vmatpush1.msra.mxu0 0.0
        %868 = vmatprep.subr.mxu0 0.0
        %869 = vmatpush1.msra.mxu0 0.0
        %870 = vmatprep.subr.mxu0 0.0
        %871 = vmatpush1.msra.mxu0 0.0
        %872 = vmatprep.subr.mxu0 0.0
        %873 = vmatpush1.msra.mxu0 0.0
        %874 = vmatprep.subr.mxu0 0.0
        %875 = vmatpush1.msra.mxu0 0.0
        %876 = vmatprep.subr.mxu0 0.0
        %877 = vmatpush1.msra.mxu0 0.0
        %878 = vmatprep.subr.mxu0 0.0
        %879 = vmatpush1.msra.mxu0 0.0
        %880 = vmatprep.subr.mxu0 0.0
        %881 = vmatpush1.msra.mxu0 0.0
        %882 = vmatprep.subr.mxu0 0.0
        %883 = vmatpush1.msra.mxu0 0.0
        %884 = vmatprep.subr.mxu0 0.0
        %885 = vmatpush1.msra.mxu0 0.0
        %886 = vmatprep.subr.mxu0 0.0
        %887 = vmatpush1.msra.mxu0 0.0
        %888 = vmatprep.subr.mxu0 0.0
        %889 = vmatpush1.msra.mxu0 0.0
        %890 = vmatprep.subr.mxu0 0.0
        %891 = vmatpush1.msra.mxu0 0.0
        %892 = vmatprep.subr.mxu0 0.0
        %893 = vmatpush1.msra.mxu0 0.0
        %894 = vmatprep.subr.mxu0 0.0
        %895 = vmatpush1.msra.mxu0 0.0
        %896 = vmatprep.subr.mxu0 0.0
        %897 = vmatpush1.msra.mxu0 0.0
        %898 = vmatprep.subr.mxu0 0.0
        %899 = vmatpush1.msra.mxu0 0.0
        %900 = vmatprep.subr.mxu0 0.0
        %901 = vmatpush1.msra.mxu0 0.0
        %902 = vmatprep.subr.mxu0 0.0
        %903 = vmatpush1.msra.mxu0 0.0
        %904 = vmatprep.subr.mxu0 0.0
        %905 = vmatpush1.msra.mxu0 0.0
        %906 = vmatprep.subr.mxu0 0.0
        %907 = vmatpush1.msra.mxu0 0.0
        %908 = vmatprep.subr.mxu0 0.0
        %909 = vmatpush1.msra.mxu0 0.0
        %910 = vmatprep.subr.mxu0 0.0
        %911 = vmatpush1.msra.mxu0 0.0
        %912 = vmatprep.subr.mxu0 0.0
        %913 = vmatpush1.msra.mxu0 0.0
        %914 = vmatprep.mubr.f32.mxu0 0.0
        %915 = vmatmul.mubr.f32.gmra.mrb[0].mxu0 %v777
        %v916 = vpop.f32.mrb[0].mxu0
        %v917 = vadd.f32 0.0, %v916
        %v918 = vpop.f32.mrb[0].mxu0
        %v919 = vadd.f32 0.0, %v918
        %920 = vdwg.mxu0
        %v921 = vadd.f32 %v680, %v846
        %v922 = vadd.f32 %v682, %v848
        %v923 = vadd.f32 %v751, %v917
        %v924 = vadd.f32 %v753, %v919
        %s925 = scalar_lea.vmem %s2, 24
        %v926 = vld [vmem:[%s925] sm:$0xff]
        %927 = vrot.lane.b32.xlu0 %v414, 39
        %v928 = vpop.permute.xlu0 %927
        %929 = vrot.lane.b32.xlu0 %v415, 39
        %v930 = vpop.permute.xlu0 %929
        %931 = vrot.lane.b32.xlu0 %v416, 39
        %v932 = vpop.permute.xlu0 %931
        %933 = vrot.lane.b32.xlu0 %v417, 39
        %v934 = vpop.permute.xlu0 %933
        %935 = vrot.lane.b32.xlu0 %v418, 39
        %v936 = vpop.permute.xlu0 %935
        %vm937 = vcmask 318464
        %v938 = vsel %vm937, %v928, %v930
        %v939 = vsel %vm937, %v930, %v932
        %v940 = vsel %vm937, %v932, %v934
        %v941 = vsel %vm937, %v934, %v936
        %v947 = vsel %vm445, %v926, 0
        %949 = vmatprep.subr.mxu0 %v939
        %950 = vmatpush1.msra.mxu0 %v938
        %951 = vmatprep.subr.mxu0 0.0
        %952 = vmatpush1.msra.mxu0 0.0
        %953 = vmatprep.subr.mxu0 0.0
        %954 = vmatpush1.msra.mxu0 0.0
        %955 = vmatprep.subr.mxu0 0.0
        %956 = vmatpush1.msra.mxu0 0.0
        %957 = vmatprep.subr.mxu0 0.0
        %958 = vmatpush1.msra.mxu0 0.0
        %959 = vmatprep.subr.mxu0 0.0
        %960 = vmatpush1.msra.mxu0 0.0
        %961 = vmatprep.subr.mxu0 0.0
        %962 = vmatpush1.msra.mxu0 0.0
        %963 = vmatprep.subr.mxu0 0.0
        %964 = vmatpush1.msra.mxu0 0.0
        %965 = vmatprep.subr.mxu0 0.0
        %966 = vmatpush1.msra.mxu0 0.0
        %967 = vmatprep.subr.mxu0 0.0
        %968 = vmatpush1.msra.mxu0 0.0
        %969 = vmatprep.subr.mxu0 0.0
        %970 = vmatpush1.msra.mxu0 0.0
        %971 = vmatprep.subr.mxu0 0.0
        %972 = vmatpush1.msra.mxu0 0.0
        %973 = vmatprep.subr.mxu0 0.0
        %974 = vmatpush1.msra.mxu0 0.0
        %975 = vmatprep.subr.mxu0 0.0
        %976 = vmatpush1.msra.mxu0 0.0
        %977 = vmatprep.subr.mxu0 0.0
        %978 = vmatpush1.msra.mxu0 0.0
        %979 = vmatprep.subr.mxu0 0.0
        %980 = vmatpush1.msra.mxu0 0.0
        %981 = vmatprep.subr.mxu0 0.0
        %982 = vmatpush1.msra.mxu0 0.0
        %983 = vmatprep.subr.mxu0 0.0
        %984 = vmatpush1.msra.mxu0 0.0
        %985 = vmatprep.subr.mxu0 0.0
        %986 = vmatpush1.msra.mxu0 0.0
        %987 = vmatprep.subr.mxu0 0.0
        %988 = vmatpush1.msra.mxu0 0.0
        %989 = vmatprep.subr.mxu0 0.0
        %990 = vmatpush1.msra.mxu0 0.0
        %991 = vmatprep.subr.mxu0 0.0
        %992 = vmatpush1.msra.mxu0 0.0
        %993 = vmatprep.subr.mxu0 0.0
        %994 = vmatpush1.msra.mxu0 0.0
        %995 = vmatprep.subr.mxu0 0.0
        %996 = vmatpush1.msra.mxu0 0.0
        %997 = vmatprep.subr.mxu0 0.0
        %998 = vmatpush1.msra.mxu0 0.0
        %999 = vmatprep.subr.mxu0 0.0
        %1000 = vmatpush1.msra.mxu0 0.0
        %1001 = vmatprep.subr.mxu0 0.0
        %1002 = vmatpush1.msra.mxu0 0.0
        %1003 = vmatprep.subr.mxu0 0.0
        %1004 = vmatpush1.msra.mxu0 0.0
        %1005 = vmatprep.subr.mxu0 0.0
        %1006 = vmatpush1.msra.mxu0 0.0
        %1007 = vmatprep.subr.mxu0 0.0
        %1008 = vmatpush1.msra.mxu0 0.0
        %1009 = vmatprep.subr.mxu0 0.0
        %1010 = vmatpush1.msra.mxu0 0.0
        %1011 = vmatprep.subr.mxu0 0.0
        %1012 = vmatpush1.msra.mxu0 0.0
        %1013 = vmatprep.mubr.f32.mxu0 0.0
        %1014 = vmatmul.mubr.f32.gmra.mrb[0].mxu0 %v947
        %v1015 = vpop.f32.mrb[0].mxu0
        %v1016 = vadd.f32 0.0, %v1015
        %v1017 = vpop.f32.mrb[0].mxu0
        %v1018 = vadd.f32 0.0, %v1017
        %1019 = vdwg.mxu0
        %1020 = vmatprep.subr.mxu0 %v941
        %1021 = vmatpush1.msra.mxu0 %v940
        %1022 = vmatprep.subr.mxu0 0.0
        %1023 = vmatpush1.msra.mxu0 0.0
        %1024 = vmatprep.subr.mxu0 0.0
        %1025 = vmatpush1.msra.mxu0 0.0
        %1026 = vmatprep.subr.mxu0 0.0
        %1027 = vmatpush1.msra.mxu0 0.0
        %1028 = vmatprep.subr.mxu0 0.0
        %1029 = vmatpush1.msra.mxu0 0.0
        %1030 = vmatprep.subr.mxu0 0.0
        %1031 = vmatpush1.msra.mxu0 0.0
        %1032 = vmatprep.subr.mxu0 0.0
        %1033 = vmatpush1.msra.mxu0 0.0
        %1034 = vmatprep.subr.mxu0 0.0
        %1035 = vmatpush1.msra.mxu0 0.0
        %1036 = vmatprep.subr.mxu0 0.0
        %1037 = vmatpush1.msra.mxu0 0.0
        %1038 = vmatprep.subr.mxu0 0.0
        %1039 = vmatpush1.msra.mxu0 0.0
        %1040 = vmatprep.subr.mxu0 0.0
        %1041 = vmatpush1.msra.mxu0 0.0
        %1042 = vmatprep.subr.mxu0 0.0
        %1043 = vmatpush1.msra.mxu0 0.0
        %1044 = vmatprep.subr.mxu0 0.0
        %1045 = vmatpush1.msra.mxu0 0.0
        %1046 = vmatprep.subr.mxu0 0.0
        %1047 = vmatpush1.msra.mxu0 0.0
        %1048 = vmatprep.subr.mxu0 0.0
        %1049 = vmatpush1.msra.mxu0 0.0
        %1050 = vmatprep.subr.mxu0 0.0
        %1051 = vmatpush1.msra.mxu0 0.0
        %1052 = vmatprep.subr.mxu0 0.0
        %1053 = vmatpush1.msra.mxu0 0.0
        %1054 = vmatprep.subr.mxu0 0.0
        %1055 = vmatpush1.msra.mxu0 0.0
        %1056 = vmatprep.subr.mxu0 0.0
        %1057 = vmatpush1.msra.mxu0 0.0
        %1058 = vmatprep.subr.mxu0 0.0
        %1059 = vmatpush1.msra.mxu0 0.0
        %1060 = vmatprep.subr.mxu0 0.0
        %1061 = vmatpush1.msra.mxu0 0.0
        %1062 = vmatprep.subr.mxu0 0.0
        %1063 = vmatpush1.msra.mxu0 0.0
        %1064 = vmatprep.subr.mxu0 0.0
        %1065 = vmatpush1.msra.mxu0 0.0
        %1066 = vmatprep.subr.mxu0 0.0
        %1067 = vmatpush1.msra.mxu0 0.0
        %1068 = vmatprep.subr.mxu0 0.0
        %1069 = vmatpush1.msra.mxu0 0.0
        %1070 = vmatprep.subr.mxu0 0.0
        %1071 = vmatpush1.msra.mxu0 0.0
        %1072 = vmatprep.subr.mxu0 0.0
        %1073 = vmatpush1.msra.mxu0 0.0
        %1074 = vmatprep.subr.mxu0 0.0
        %1075 = vmatpush1.msra.mxu0 0.0
        %1076 = vmatprep.subr.mxu0 0.0
        %1077 = vmatpush1.msra.mxu0 0.0
        %1078 = vmatprep.subr.mxu0 0.0
        %1079 = vmatpush1.msra.mxu0 0.0
        %1080 = vmatprep.subr.mxu0 0.0
        %1081 = vmatpush1.msra.mxu0 0.0
        %1082 = vmatprep.subr.mxu0 0.0
        %1083 = vmatpush1.msra.mxu0 0.0
        %1084 = vmatprep.mubr.f32.mxu0 0.0
        %1085 = vmatmul.mubr.f32.gmra.mrb[0].mxu0 %v947
        %v1086 = vpop.f32.mrb[0].mxu0
        %v1087 = vadd.f32 0.0, %v1086
        %v1088 = vpop.f32.mrb[0].mxu0
        %v1089 = vadd.f32 0.0, %v1088
        %1090 = vdwg.mxu0
        %v1091 = vadd.f32 %v921, %v1016
        %v1092 = vadd.f32 %v922, %v1018
        %v1093 = vadd.f32 %v923, %v1087
        %v1094 = vadd.f32 %v924, %v1089
        %s1095 = scalar_lea.vmem %s2, 32
        %v1096 = vld [vmem:[%s1095] sm:$0xff]
        %1097 = vrot.lane.b32.xlu0 %v414, 38
        %v1098 = vpop.permute.xlu0 %1097
        %1099 = vrot.lane.b32.xlu0 %v415, 38
        %v1100 = vpop.permute.xlu0 %1099
        %1101 = vrot.lane.b32.xlu0 %v416, 38
        %v1102 = vpop.permute.xlu0 %1101
        %1103 = vrot.lane.b32.xlu0 %v417, 38
        %v1104 = vpop.permute.xlu0 %1103
        %1105 = vrot.lane.b32.xlu0 %v418, 38
        %v1106 = vpop.permute.xlu0 %1105
        %vm1107 = vcmask 310272
        %v1108 = vsel %vm1107, %v1098, %v1100
        %v1109 = vsel %vm1107, %v1100, %v1102
        %v1110 = vsel %vm1107, %v1102, %v1104
        %v1111 = vsel %vm1107, %v1104, %v1106
        %v1117 = vsel %vm445, %v1096, 0
        %1119 = vmatprep.subr.mxu0 %v1109
        %1120 = vmatpush1.msra.mxu0 %v1108
        %1121 = vmatprep.subr.mxu0 0.0
        %1122 = vmatpush1.msra.mxu0 0.0
        %1123 = vmatprep.subr.mxu0 0.0
        %1124 = vmatpush1.msra.mxu0 0.0
        %1125 = vmatprep.subr.mxu0 0.0
        %1126 = vmatpush1.msra.mxu0 0.0
        %1127 = vmatprep.subr.mxu0 0.0
        %1128 = vmatpush1.msra.mxu0 0.0
        %1129 = vmatprep.subr.mxu0 0.0
        %1130 = vmatpush1.msra.mxu0 0.0
        %1131 = vmatprep.subr.mxu0 0.0
        %1132 = vmatpush1.msra.mxu0 0.0
        %1133 = vmatprep.subr.mxu0 0.0
        %1134 = vmatpush1.msra.mxu0 0.0
        %1135 = vmatprep.subr.mxu0 0.0
        %1136 = vmatpush1.msra.mxu0 0.0
        %1137 = vmatprep.subr.mxu0 0.0
        %1138 = vmatpush1.msra.mxu0 0.0
        %1139 = vmatprep.subr.mxu0 0.0
        %1140 = vmatpush1.msra.mxu0 0.0
        %1141 = vmatprep.subr.mxu0 0.0
        %1142 = vmatpush1.msra.mxu0 0.0
        %1143 = vmatprep.subr.mxu0 0.0
        %1144 = vmatpush1.msra.mxu0 0.0
        %1145 = vmatprep.subr.mxu0 0.0
        %1146 = vmatpush1.msra.mxu0 0.0
        %1147 = vmatprep.subr.mxu0 0.0
        %1148 = vmatpush1.msra.mxu0 0.0
        %1149 = vmatprep.subr.mxu0 0.0
        %1150 = vmatpush1.msra.mxu0 0.0
        %1151 = vmatprep.subr.mxu0 0.0
        %1152 = vmatpush1.msra.mxu0 0.0
        %1153 = vmatprep.subr.mxu0 0.0
        %1154 = vmatpush1.msra.mxu0 0.0
        %1155 = vmatprep.subr.mxu0 0.0
        %1156 = vmatpush1.msra.mxu0 0.0
        %1157 = vmatprep.subr.mxu0 0.0
        %1158 = vmatpush1.msra.mxu0 0.0
        %1159 = vmatprep.subr.mxu0 0.0
        %1160 = vmatpush1.msra.mxu0 0.0
        %1161 = vmatprep.subr.mxu0 0.0
        %1162 = vmatpush1.msra.mxu0 0.0
        %1163 = vmatprep.subr.mxu0 0.0
        %1164 = vmatpush1.msra.mxu0 0.0
        %1165 = vmatprep.subr.mxu0 0.0
        %1166 = vmatpush1.msra.mxu0 0.0
        %1167 = vmatprep.subr.mxu0 0.0
        %1168 = vmatpush1.msra.mxu0 0.0
        %1169 = vmatprep.subr.mxu0 0.0
        %1170 = vmatpush1.msra.mxu0 0.0
        %1171 = vmatprep.subr.mxu0 0.0
        %1172 = vmatpush1.msra.mxu0 0.0
        %1173 = vmatprep.subr.mxu0 0.0
        %1174 = vmatpush1.msra.mxu0 0.0
        %1175 = vmatprep.subr.mxu0 0.0
        %1176 = vmatpush1.msra.mxu0 0.0
        %1177 = vmatprep.subr.mxu0 0.0
        %1178 = vmatpush1.msra.mxu0 0.0
        %1179 = vmatprep.subr.mxu0 0.0
        %1180 = vmatpush1.msra.mxu0 0.0
        %1181 = vmatprep.subr.mxu0 0.0
        %1182 = vmatpush1.msra.mxu0 0.0
        %1183 = vmatprep.mubr.f32.mxu0 0.0
        %1184 = vmatmul.mubr.f32.gmra.mrb[0].mxu0 %v1117
        %v1185 = vpop.f32.mrb[0].mxu0
        %v1186 = vadd.f32 0.0, %v1185
        %v1187 = vpop.f32.mrb[0].mxu0
        %v1188 = vadd.f32 0.0, %v1187
        %1189 = vdwg.mxu0
        %1190 = vmatprep.subr.mxu0 %v1111
        %1191 = vmatpush1.msra.mxu0 %v1110
        %1192 = vmatprep.subr.mxu0 0.0
        %1193 = vmatpush1.msra.mxu0 0.0
        %1194 = vmatprep.subr.mxu0 0.0
        %1195 = vmatpush1.msra.mxu0 0.0
        %1196 = vmatprep.subr.mxu0 0.0
        %1197 = vmatpush1.msra.mxu0 0.0
        %1198 = vmatprep.subr.mxu0 0.0
        %1199 = vmatpush1.msra.mxu0 0.0
        %1200 = vmatprep.subr.mxu0 0.0
        %1201 = vmatpush1.msra.mxu0 0.0
        %1202 = vmatprep.subr.mxu0 0.0
        %1203 = vmatpush1.msra.mxu0 0.0
        %1204 = vmatprep.subr.mxu0 0.0
        %1205 = vmatpush1.msra.mxu0 0.0
        %1206 = vmatprep.subr.mxu0 0.0
        %1207 = vmatpush1.msra.mxu0 0.0
        %1208 = vmatprep.subr.mxu0 0.0
        %1209 = vmatpush1.msra.mxu0 0.0
        %1210 = vmatprep.subr.mxu0 0.0
        %1211 = vmatpush1.msra.mxu0 0.0
        %1212 = vmatprep.subr.mxu0 0.0
        %1213 = vmatpush1.msra.mxu0 0.0
        %1214 = vmatprep.subr.mxu0 0.0
        %1215 = vmatpush1.msra.mxu0 0.0
        %1216 = vmatprep.subr.mxu0 0.0
        %1217 = vmatpush1.msra.mxu0 0.0
        %1218 = vmatprep.subr.mxu0 0.0
        %1219 = vmatpush1.msra.mxu0 0.0
        %1220 = vmatprep.subr.mxu0 0.0
        %1221 = vmatpush1.msra.mxu0 0.0
        %1222 = vmatprep.subr.mxu0 0.0
        %1223 = vmatpush1.msra.mxu0 0.0
        %1224 = vmatprep.subr.mxu0 0.0
        %1225 = vmatpush1.msra.mxu0 0.0
        %1226 = vmatprep.subr.mxu0 0.0
        %1227 = vmatpush1.msra.mxu0 0.0
        %1228 = vmatprep.subr.mxu0 0.0
        %1229 = vmatpush1.msra.mxu0 0.0
        %1230 = vmatprep.subr.mxu0 0.0
        %1231 = vmatpush1.msra.mxu0 0.0
        %1232 = vmatprep.subr.mxu0 0.0
        %1233 = vmatpush1.msra.mxu0 0.0
        %1234 = vmatprep.subr.mxu0 0.0
        %1235 = vmatpush1.msra.mxu0 0.0
        %1236 = vmatprep.subr.mxu0 0.0
        %1237 = vmatpush1.msra.mxu0 0.0
        %1238 = vmatprep.subr.mxu0 0.0
        %1239 = vmatpush1.msra.mxu0 0.0
        %1240 = vmatprep.subr.mxu0 0.0
        %1241 = vmatpush1.msra.mxu0 0.0
        %1242 = vmatprep.subr.mxu0 0.0
        %1243 = vmatpush1.msra.mxu0 0.0
        %1244 = vmatprep.subr.mxu0 0.0
        %1245 = vmatpush1.msra.mxu0 0.0
        %1246 = vmatprep.subr.mxu0 0.0
        %1247 = vmatpush1.msra.mxu0 0.0
        %1248 = vmatprep.subr.mxu0 0.0
        %1249 = vmatpush1.msra.mxu0 0.0
        %1250 = vmatprep.subr.mxu0 0.0
        %1251 = vmatpush1.msra.mxu0 0.0
        %1252 = vmatprep.subr.mxu0 0.0
        %1253 = vmatpush1.msra.mxu0 0.0
        %1254 = vmatprep.mubr.f32.mxu0 0.0
        %1255 = vmatmul.mubr.f32.gmra.mrb[0].mxu0 %v1117
        %v1256 = vpop.f32.mrb[0].mxu0
        %v1257 = vadd.f32 0.0, %v1256
        %v1258 = vpop.f32.mrb[0].mxu0
        %v1259 = vadd.f32 0.0, %v1258
        %1260 = vdwg.mxu0
        %v1261 = vadd.f32 %v1091, %v1186
        %v1262 = vadd.f32 %v1092, %v1188
        %v1263 = vadd.f32 %v1093, %v1257
        %v1264 = vadd.f32 %v1094, %v1259
        %s1265 = scalar_lea.vmem %s2, 40
        %v1266 = vld [vmem:[%s1265] sm:$0xff]
        %1267 = vrot.lane.b32.xlu0 %v414, 22
        %v1268 = vpop.permute.xlu0 %1267
        %1269 = vrot.lane.b32.xlu0 %v415, 22
        %v1270 = vpop.permute.xlu0 %1269
        %1271 = vrot.lane.b32.xlu0 %v416, 22
        %v1272 = vpop.permute.xlu0 %1271
        %1273 = vrot.lane.b32.xlu0 %v417, 22
        %v1274 = vpop.permute.xlu0 %1273
        %1275 = vrot.lane.b32.xlu0 %v418, 22
        %v1276 = vpop.permute.xlu0 %1275
        %vm1277 = vcmask 179200
        %v1278 = vsel %vm1277, %v1268, %v1270
        %v1279 = vsel %vm1277, %v1270, %v1272
        %v1280 = vsel %vm1277, %v1272, %v1274
        %v1281 = vsel %vm1277, %v1274, %v1276
        %v1287 = vsel %vm445, %v1266, 0
        %1289 = vmatprep.subr.mxu0 %v1279
        %1290 = vmatpush1.msra.mxu0 %v1278
        %1291 = vmatprep.subr.mxu0 0.0
        %1292 = vmatpush1.msra.mxu0 0.0
        %1293 = vmatprep.subr.mxu0 0.0
        %1294 = vmatpush1.msra.mxu0 0.0
        %1295 = vmatprep.subr.mxu0 0.0
        %1296 = vmatpush1.msra.mxu0 0.0
        %1297 = vmatprep.subr.mxu0 0.0
        %1298 = vmatpush1.msra.mxu0 0.0
        %1299 = vmatprep.subr.mxu0 0.0
        %1300 = vmatpush1.msra.mxu0 0.0
        %1301 = vmatprep.subr.mxu0 0.0
        %1302 = vmatpush1.msra.mxu0 0.0
        %1303 = vmatprep.subr.mxu0 0.0
        %1304 = vmatpush1.msra.mxu0 0.0
        %1305 = vmatprep.subr.mxu0 0.0
        %1306 = vmatpush1.msra.mxu0 0.0
        %1307 = vmatprep.subr.mxu0 0.0
        %1308 = vmatpush1.msra.mxu0 0.0
        %1309 = vmatprep.subr.mxu0 0.0
        %1310 = vmatpush1.msra.mxu0 0.0
        %1311 = vmatprep.subr.mxu0 0.0
        %1312 = vmatpush1.msra.mxu0 0.0
        %1313 = vmatprep.subr.mxu0 0.0
        %1314 = vmatpush1.msra.mxu0 0.0
        %1315 = vmatprep.subr.mxu0 0.0
        %1316 = vmatpush1.msra.mxu0 0.0
        %1317 = vmatprep.subr.mxu0 0.0
        %1318 = vmatpush1.msra.mxu0 0.0
        %1319 = vmatprep.subr.mxu0 0.0
        %1320 = vmatpush1.msra.mxu0 0.0
        %1321 = vmatprep.subr.mxu0 0.0
        %1322 = vmatpush1.msra.mxu0 0.0
        %1323 = vmatprep.subr.mxu0 0.0
        %1324 = vmatpush1.msra.mxu0 0.0
        %1325 = vmatprep.subr.mxu0 0.0
        %1326 = vmatpush1.msra.mxu0 0.0
        %1327 = vmatprep.subr.mxu0 0.0
        %1328 = vmatpush1.msra.mxu0 0.0
        %1329 = vmatprep.subr.mxu0 0.0
        %1330 = vmatpush1.msra.mxu0 0.0
        %1331 = vmatprep.subr.mxu0 0.0
        %1332 = vmatpush1.msra.mxu0 0.0
        %1333 = vmatprep.subr.mxu0 0.0
        %1334 = vmatpush1.msra.mxu0 0.0
        %1335 = vmatprep.subr.mxu0 0.0
        %1336 = vmatpush1.msra.mxu0 0.0
        %1337 = vmatprep.subr.mxu0 0.0
        %1338 = vmatpush1.msra.mxu0 0.0
        %1339 = vmatprep.subr.mxu0 0.0
        %1340 = vmatpush1.msra.mxu0 0.0
        %1341 = vmatprep.subr.mxu0 0.0
        %1342 = vmatpush1.msra.mxu0 0.0
        %1343 = vmatprep.subr.mxu0 0.0
        %1344 = vmatpush1.msra.mxu0 0.0
        %1345 = vmatprep.subr.mxu0 0.0
        %1346 = vmatpush1.msra.mxu0 0.0
        %1347 = vmatprep.subr.mxu0 0.0
        %1348 = vmatpush1.msra.mxu0 0.0
        %1349 = vmatprep.subr.mxu0 0.0
        %1350 = vmatpush1.msra.mxu0 0.0
        %1351 = vmatprep.subr.mxu0 0.0
        %1352 = vmatpush1.msra.mxu0 0.0
        %1353 = vmatprep.mubr.f32.mxu0 0.0
        %1354 = vmatmul.mubr.f32.gmra.mrb[0].mxu0 %v1287
        %v1355 = vpop.f32.mrb[0].mxu0
        %v1356 = vadd.f32 0.0, %v1355
        %v1357 = vpop.f32.mrb[0].mxu0
        %v1358 = vadd.f32 0.0, %v1357
        %1359 = vdwg.mxu0
        %1360 = vmatprep.subr.mxu0 %v1281
        %1361 = vmatpush1.msra.mxu0 %v1280
        %1362 = vmatprep.subr.mxu0 0.0
        %1363 = vmatpush1.msra.mxu0 0.0
        %1364 = vmatprep.subr.mxu0 0.0
        %1365 = vmatpush1.msra.mxu0 0.0
        %1366 = vmatprep.subr.mxu0 0.0
        %1367 = vmatpush1.msra.mxu0 0.0
        %1368 = vmatprep.subr.mxu0 0.0
        %1369 = vmatpush1.msra.mxu0 0.0
        %1370 = vmatprep.subr.mxu0 0.0
        %1371 = vmatpush1.msra.mxu0 0.0
        %1372 = vmatprep.subr.mxu0 0.0
        %1373 = vmatpush1.msra.mxu0 0.0
        %1374 = vmatprep.subr.mxu0 0.0
        %1375 = vmatpush1.msra.mxu0 0.0
        %1376 = vmatprep.subr.mxu0 0.0
        %1377 = vmatpush1.msra.mxu0 0.0
        %1378 = vmatprep.subr.mxu0 0.0
        %1379 = vmatpush1.msra.mxu0 0.0
        %1380 = vmatprep.subr.mxu0 0.0
        %1381 = vmatpush1.msra.mxu0 0.0
        %1382 = vmatprep.subr.mxu0 0.0
        %1383 = vmatpush1.msra.mxu0 0.0
        %1384 = vmatprep.subr.mxu0 0.0
        %1385 = vmatpush1.msra.mxu0 0.0
        %1386 = vmatprep.subr.mxu0 0.0
        %1387 = vmatpush1.msra.mxu0 0.0
        %1388 = vmatprep.subr.mxu0 0.0
        %1389 = vmatpush1.msra.mxu0 0.0
        %1390 = vmatprep.subr.mxu0 0.0
        %1391 = vmatpush1.msra.mxu0 0.0
        %1392 = vmatprep.subr.mxu0 0.0
        %1393 = vmatpush1.msra.mxu0 0.0
        %1394 = vmatprep.subr.mxu0 0.0
        %1395 = vmatpush1.msra.mxu0 0.0
        %1396 = vmatprep.subr.mxu0 0.0
        %1397 = vmatpush1.msra.mxu0 0.0
        %1398 = vmatprep.subr.mxu0 0.0
        %1399 = vmatpush1.msra.mxu0 0.0
        %1400 = vmatprep.subr.mxu0 0.0
        %1401 = vmatpush1.msra.mxu0 0.0
        %1402 = vmatprep.subr.mxu0 0.0
        %1403 = vmatpush1.msra.mxu0 0.0
        %1404 = vmatprep.subr.mxu0 0.0
        %1405 = vmatpush1.msra.mxu0 0.0
        %1406 = vmatprep.subr.mxu0 0.0
        %1407 = vmatpush1.msra.mxu0 0.0
        %1408 = vmatprep.subr.mxu0 0.0
        %1409 = vmatpush1.msra.mxu0 0.0
        %1410 = vmatprep.subr.mxu0 0.0
        %1411 = vmatpush1.msra.mxu0 0.0
        %1412 = vmatprep.subr.mxu0 0.0
        %1413 = vmatpush1.msra.mxu0 0.0
        %1414 = vmatprep.subr.mxu0 0.0
        %1415 = vmatpush1.msra.mxu0 0.0
        %1416 = vmatprep.subr.mxu0 0.0
        %1417 = vmatpush1.msra.mxu0 0.0
        %1418 = vmatprep.subr.mxu0 0.0
        %1419 = vmatpush1.msra.mxu0 0.0
        %1420 = vmatprep.subr.mxu0 0.0
        %1421 = vmatpush1.msra.mxu0 0.0
        %1422 = vmatprep.subr.mxu0 0.0
        %1423 = vmatpush1.msra.mxu0 0.0
        %1424 = vmatprep.mubr.f32.mxu0 0.0
        %1425 = vmatmul.mubr.f32.gmra.mrb[0].mxu0 %v1287
        %v1426 = vpop.f32.mrb[0].mxu0
        %v1427 = vadd.f32 0.0, %v1426
        %v1428 = vpop.f32.mrb[0].mxu0
        %v1429 = vadd.f32 0.0, %v1428
        %1430 = vdwg.mxu0
        %v1431 = vadd.f32 %v1261, %v1356
        %v1432 = vadd.f32 %v1262, %v1358
        %v1433 = vadd.f32 %v1263, %v1427
        %v1434 = vadd.f32 %v1264, %v1429
        %s1435 = scalar_lea.vmem %s2, 48
        %v1436 = vld [vmem:[%s1435] sm:$0xff]
        %1437 = vrot.lane.b32.xlu0 %v414, 21
        %v1438 = vpop.permute.xlu0 %1437
        %1439 = vrot.lane.b32.xlu0 %v415, 21
        %v1440 = vpop.permute.xlu0 %1439
        %1441 = vrot.lane.b32.xlu0 %v416, 21
        %v1442 = vpop.permute.xlu0 %1441
        %1443 = vrot.lane.b32.xlu0 %v417, 21
        %v1444 = vpop.permute.xlu0 %1443
        %1445 = vrot.lane.b32.xlu0 %v418, 21
        %v1446 = vpop.permute.xlu0 %1445
        %vm1447 = vcmask 171008
        %v1448 = vsel %vm1447, %v1438, %v1440
        %v1449 = vsel %vm1447, %v1440, %v1442
        %v1450 = vsel %vm1447, %v1442, %v1444
        %v1451 = vsel %vm1447, %v1444, %v1446
        %v1457 = vsel %vm445, %v1436, 0
        %1459 = vmatprep.subr.mxu0 %v1449
        %1460 = vmatpush1.msra.mxu0 %v1448
        %1461 = vmatprep.subr.mxu0 0.0
        %1462 = vmatpush1.msra.mxu0 0.0
        %1463 = vmatprep.subr.mxu0 0.0
        %1464 = vmatpush1.msra.mxu0 0.0
        %1465 = vmatprep.subr.mxu0 0.0
        %1466 = vmatpush1.msra.mxu0 0.0
        %1467 = vmatprep.subr.mxu0 0.0
        %1468 = vmatpush1.msra.mxu0 0.0
        %1469 = vmatprep.subr.mxu0 0.0
        %1470 = vmatpush1.msra.mxu0 0.0
        %1471 = vmatprep.subr.mxu0 0.0
        %1472 = vmatpush1.msra.mxu0 0.0
        %1473 = vmatprep.subr.mxu0 0.0
        %1474 = vmatpush1.msra.mxu0 0.0
        %1475 = vmatprep.subr.mxu0 0.0
        %1476 = vmatpush1.msra.mxu0 0.0
        %1477 = vmatprep.subr.mxu0 0.0
        %1478 = vmatpush1.msra.mxu0 0.0
        %1479 = vmatprep.subr.mxu0 0.0
        %1480 = vmatpush1.msra.mxu0 0.0
        %1481 = vmatprep.subr.mxu0 0.0
        %1482 = vmatpush1.msra.mxu0 0.0
        %1483 = vmatprep.subr.mxu0 0.0
        %1484 = vmatpush1.msra.mxu0 0.0
        %1485 = vmatprep.subr.mxu0 0.0
        %1486 = vmatpush1.msra.mxu0 0.0
        %1487 = vmatprep.subr.mxu0 0.0
        %1488 = vmatpush1.msra.mxu0 0.0
        %1489 = vmatprep.subr.mxu0 0.0
        %1490 = vmatpush1.msra.mxu0 0.0
        %1491 = vmatprep.subr.mxu0 0.0
        %1492 = vmatpush1.msra.mxu0 0.0
        %1493 = vmatprep.subr.mxu0 0.0
        %1494 = vmatpush1.msra.mxu0 0.0
        %1495 = vmatprep.subr.mxu0 0.0
        %1496 = vmatpush1.msra.mxu0 0.0
        %1497 = vmatprep.subr.mxu0 0.0
        %1498 = vmatpush1.msra.mxu0 0.0
        %1499 = vmatprep.subr.mxu0 0.0
        %1500 = vmatpush1.msra.mxu0 0.0
        %1501 = vmatprep.subr.mxu0 0.0
        %1502 = vmatpush1.msra.mxu0 0.0
        %1503 = vmatprep.subr.mxu0 0.0
        %1504 = vmatpush1.msra.mxu0 0.0
        %1505 = vmatprep.subr.mxu0 0.0
        %1506 = vmatpush1.msra.mxu0 0.0
        %1507 = vmatprep.subr.mxu0 0.0
        %1508 = vmatpush1.msra.mxu0 0.0
        %1509 = vmatprep.subr.mxu0 0.0
        %1510 = vmatpush1.msra.mxu0 0.0
        %1511 = vmatprep.subr.mxu0 0.0
        %1512 = vmatpush1.msra.mxu0 0.0
        %1513 = vmatprep.subr.mxu0 0.0
        %1514 = vmatpush1.msra.mxu0 0.0
        %1515 = vmatprep.subr.mxu0 0.0
        %1516 = vmatpush1.msra.mxu0 0.0
        %1517 = vmatprep.subr.mxu0 0.0
        %1518 = vmatpush1.msra.mxu0 0.0
        %1519 = vmatprep.subr.mxu0 0.0
        %1520 = vmatpush1.msra.mxu0 0.0
        %1521 = vmatprep.subr.mxu0 0.0
        %1522 = vmatpush1.msra.mxu0 0.0
        %1523 = vmatprep.mubr.f32.mxu0 0.0
        %1524 = vmatmul.mubr.f32.gmra.mrb[0].mxu0 %v1457
        %v1525 = vpop.f32.mrb[0].mxu0
        %v1526 = vadd.f32 0.0, %v1525
        %v1527 = vpop.f32.mrb[0].mxu0
        %v1528 = vadd.f32 0.0, %v1527
        %1529 = vdwg.mxu0
        %1530 = vmatprep.subr.mxu0 %v1451
        %1531 = vmatpush1.msra.mxu0 %v1450
        %1532 = vmatprep.subr.mxu0 0.0
        %1533 = vmatpush1.msra.mxu0 0.0
        %1534 = vmatprep.subr.mxu0 0.0
        %1535 = vmatpush1.msra.mxu0 0.0
        %1536 = vmatprep.subr.mxu0 0.0
        %1537 = vmatpush1.msra.mxu0 0.0
        %1538 = vmatprep.subr.mxu0 0.0
        %1539 = vmatpush1.msra.mxu0 0.0
        %1540 = vmatprep.subr.mxu0 0.0
        %1541 = vmatpush1.msra.mxu0 0.0
        %1542 = vmatprep.subr.mxu0 0.0
        %1543 = vmatpush1.msra.mxu0 0.0
        %1544 = vmatprep.subr.mxu0 0.0
        %1545 = vmatpush1.msra.mxu0 0.0
        %1546 = vmatprep.subr.mxu0 0.0
        %1547 = vmatpush1.msra.mxu0 0.0
        %1548 = vmatprep.subr.mxu0 0.0
        %1549 = vmatpush1.msra.mxu0 0.0
        %1550 = vmatprep.subr.mxu0 0.0
        %1551 = vmatpush1.msra.mxu0 0.0
        %1552 = vmatprep.subr.mxu0 0.0
        %1553 = vmatpush1.msra.mxu0 0.0
        %1554 = vmatprep.subr.mxu0 0.0
        %1555 = vmatpush1.msra.mxu0 0.0
        %1556 = vmatprep.subr.mxu0 0.0
        %1557 = vmatpush1.msra.mxu0 0.0
        %1558 = vmatprep.subr.mxu0 0.0
        %1559 = vmatpush1.msra.mxu0 0.0
        %1560 = vmatprep.subr.mxu0 0.0
        %1561 = vmatpush1.msra.mxu0 0.0
        %1562 = vmatprep.subr.mxu0 0.0
        %1563 = vmatpush1.msra.mxu0 0.0
        %1564 = vmatprep.subr.mxu0 0.0
        %1565 = vmatpush1.msra.mxu0 0.0
        %1566 = vmatprep.subr.mxu0 0.0
        %1567 = vmatpush1.msra.mxu0 0.0
        %1568 = vmatprep.subr.mxu0 0.0
        %1569 = vmatpush1.msra.mxu0 0.0
        %1570 = vmatprep.subr.mxu0 0.0
        %1571 = vmatpush1.msra.mxu0 0.0
        %1572 = vmatprep.subr.mxu0 0.0
        %1573 = vmatpush1.msra.mxu0 0.0
        %1574 = vmatprep.subr.mxu0 0.0
        %1575 = vmatpush1.msra.mxu0 0.0
        %1576 = vmatprep.subr.mxu0 0.0
        %1577 = vmatpush1.msra.mxu0 0.0
        %1578 = vmatprep.subr.mxu0 0.0
        %1579 = vmatpush1.msra.mxu0 0.0
        %1580 = vmatprep.subr.mxu0 0.0
        %1581 = vmatpush1.msra.mxu0 0.0
        %1582 = vmatprep.subr.mxu0 0.0
        %1583 = vmatpush1.msra.mxu0 0.0
        %1584 = vmatprep.subr.mxu0 0.0
        %1585 = vmatpush1.msra.mxu0 0.0
        %1586 = vmatprep.subr.mxu0 0.0
        %1587 = vmatpush1.msra.mxu0 0.0
        %1588 = vmatprep.subr.mxu0 0.0
        %1589 = vmatpush1.msra.mxu0 0.0
        %1590 = vmatprep.subr.mxu0 0.0
        %1591 = vmatpush1.msra.mxu0 0.0
        %1592 = vmatprep.subr.mxu0 0.0
        %1593 = vmatpush1.msra.mxu0 0.0
        %1594 = vmatprep.mubr.f32.mxu0 0.0
        %1595 = vmatmul.mubr.f32.gmra.mrb[0].mxu0 %v1457
        %v1596 = vpop.f32.mrb[0].mxu0
        %v1597 = vadd.f32 0.0, %v1596
        %v1598 = vpop.f32.mrb[0].mxu0
        %v1599 = vadd.f32 0.0, %v1598
        %1600 = vdwg.mxu0
        %v1601 = vadd.f32 %v1431, %v1526
        %v1602 = vadd.f32 %v1432, %v1528
        %v1603 = vadd.f32 %v1433, %v1597
        %v1604 = vadd.f32 %v1434, %v1599
        %s1605 = scalar_lea.vmem %s2, 56
        %v1606 = vld [vmem:[%s1605] sm:$0xff]
        %1607 = vrot.lane.b32.xlu0 %v414, 20
        %v1608 = vpop.permute.xlu0 %1607
        %1609 = vrot.lane.b32.xlu0 %v415, 20
        %v1610 = vpop.permute.xlu0 %1609
        %1611 = vrot.lane.b32.xlu0 %v416, 20
        %v1612 = vpop.permute.xlu0 %1611
        %1613 = vrot.lane.b32.xlu0 %v417, 20
        %v1614 = vpop.permute.xlu0 %1613
        %1615 = vrot.lane.b32.xlu0 %v418, 20
        %v1616 = vpop.permute.xlu0 %1615
        %vm1617 = vcmask 162816
        %v1618 = vsel %vm1617, %v1608, %v1610
        %v1619 = vsel %vm1617, %v1610, %v1612
        %v1620 = vsel %vm1617, %v1612, %v1614
        %v1621 = vsel %vm1617, %v1614, %v1616
        %v1627 = vsel %vm445, %v1606, 0
        %1629 = vmatprep.subr.mxu0 %v1619
        %1630 = vmatpush1.msra.mxu0 %v1618
        %1631 = vmatprep.subr.mxu0 0.0
        %1632 = vmatpush1.msra.mxu0 0.0
        %1633 = vmatprep.subr.mxu0 0.0
        %1634 = vmatpush1.msra.mxu0 0.0
        %1635 = vmatprep.subr.mxu0 0.0
        %1636 = vmatpush1.msra.mxu0 0.0
        %1637 = vmatprep.subr.mxu0 0.0
        %1638 = vmatpush1.msra.mxu0 0.0
        %1639 = vmatprep.subr.mxu0 0.0
        %1640 = vmatpush1.msra.mxu0 0.0
        %1641 = vmatprep.subr.mxu0 0.0
        %1642 = vmatpush1.msra.mxu0 0.0
        %1643 = vmatprep.subr.mxu0 0.0
        %1644 = vmatpush1.msra.mxu0 0.0
        %1645 = vmatprep.subr.mxu0 0.0
        %1646 = vmatpush1.msra.mxu0 0.0
        %1647 = vmatprep.subr.mxu0 0.0
        %1648 = vmatpush1.msra.mxu0 0.0
        %1649 = vmatprep.subr.mxu0 0.0
        %1650 = vmatpush1.msra.mxu0 0.0
        %1651 = vmatprep.subr.mxu0 0.0
        %1652 = vmatpush1.msra.mxu0 0.0
        %1653 = vmatprep.subr.mxu0 0.0
        %1654 = vmatpush1.msra.mxu0 0.0
        %1655 = vmatprep.subr.mxu0 0.0
        %1656 = vmatpush1.msra.mxu0 0.0
        %1657 = vmatprep.subr.mxu0 0.0
        %1658 = vmatpush1.msra.mxu0 0.0
        %1659 = vmatprep.subr.mxu0 0.0
        %1660 = vmatpush1.msra.mxu0 0.0
        %1661 = vmatprep.subr.mxu0 0.0
        %1662 = vmatpush1.msra.mxu0 0.0
        %1663 = vmatprep.subr.mxu0 0.0
        %1664 = vmatpush1.msra.mxu0 0.0
        %1665 = vmatprep.subr.mxu0 0.0
        %1666 = vmatpush1.msra.mxu0 0.0
        %1667 = vmatprep.subr.mxu0 0.0
        %1668 = vmatpush1.msra.mxu0 0.0
        %1669 = vmatprep.subr.mxu0 0.0
        %1670 = vmatpush1.msra.mxu0 0.0
        %1671 = vmatprep.subr.mxu0 0.0
        %1672 = vmatpush1.msra.mxu0 0.0
        %1673 = vmatprep.subr.mxu0 0.0
        %1674 = vmatpush1.msra.mxu0 0.0
        %1675 = vmatprep.subr.mxu0 0.0
        %1676 = vmatpush1.msra.mxu0 0.0
        %1677 = vmatprep.subr.mxu0 0.0
        %1678 = vmatpush1.msra.mxu0 0.0
        %1679 = vmatprep.subr.mxu0 0.0
        %1680 = vmatpush1.msra.mxu0 0.0
        %1681 = vmatprep.subr.mxu0 0.0
        %1682 = vmatpush1.msra.mxu0 0.0
        %1683 = vmatprep.subr.mxu0 0.0
        %1684 = vmatpush1.msra.mxu0 0.0
        %1685 = vmatprep.subr.mxu0 0.0
        %1686 = vmatpush1.msra.mxu0 0.0
        %1687 = vmatprep.subr.mxu0 0.0
        %1688 = vmatpush1.msra.mxu0 0.0
        %1689 = vmatprep.subr.mxu0 0.0
        %1690 = vmatpush1.msra.mxu0 0.0
        %1691 = vmatprep.subr.mxu0 0.0
        %1692 = vmatpush1.msra.mxu0 0.0
        %1693 = vmatprep.mubr.f32.mxu0 0.0
        %1694 = vmatmul.mubr.f32.gmra.mrb[0].mxu0 %v1627
        %v1695 = vpop.f32.mrb[0].mxu0
        %v1696 = vadd.f32 0.0, %v1695
        %v1697 = vpop.f32.mrb[0].mxu0
        %v1698 = vadd.f32 0.0, %v1697
        %1699 = vdwg.mxu0
        %1700 = vmatprep.subr.mxu0 %v1621
        %1701 = vmatpush1.msra.mxu0 %v1620
        %1702 = vmatprep.subr.mxu0 0.0
        %1703 = vmatpush1.msra.mxu0 0.0
        %1704 = vmatprep.subr.mxu0 0.0
        %1705 = vmatpush1.msra.mxu0 0.0
        %1706 = vmatprep.subr.mxu0 0.0
        %1707 = vmatpush1.msra.mxu0 0.0
        %1708 = vmatprep.subr.mxu0 0.0
        %1709 = vmatpush1.msra.mxu0 0.0
        %1710 = vmatprep.subr.mxu0 0.0
        %1711 = vmatpush1.msra.mxu0 0.0
        %1712 = vmatprep.subr.mxu0 0.0
        %1713 = vmatpush1.msra.mxu0 0.0
        %1714 = vmatprep.subr.mxu0 0.0
        %1715 = vmatpush1.msra.mxu0 0.0
        %1716 = vmatprep.subr.mxu0 0.0
        %1717 = vmatpush1.msra.mxu0 0.0
        %1718 = vmatprep.subr.mxu0 0.0
        %1719 = vmatpush1.msra.mxu0 0.0
        %1720 = vmatprep.subr.mxu0 0.0
        %1721 = vmatpush1.msra.mxu0 0.0
        %1722 = vmatprep.subr.mxu0 0.0
        %1723 = vmatpush1.msra.mxu0 0.0
        %1724 = vmatprep.subr.mxu0 0.0
        %1725 = vmatpush1.msra.mxu0 0.0
        %1726 = vmatprep.subr.mxu0 0.0
        %1727 = vmatpush1.msra.mxu0 0.0
        %1728 = vmatprep.subr.mxu0 0.0
        %1729 = vmatpush1.msra.mxu0 0.0
        %1730 = vmatprep.subr.mxu0 0.0
        %1731 = vmatpush1.msra.mxu0 0.0
        %1732 = vmatprep.subr.mxu0 0.0
        %1733 = vmatpush1.msra.mxu0 0.0
        %1734 = vmatprep.subr.mxu0 0.0
        %1735 = vmatpush1.msra.mxu0 0.0
        %1736 = vmatprep.subr.mxu0 0.0
        %1737 = vmatpush1.msra.mxu0 0.0
        %1738 = vmatprep.subr.mxu0 0.0
        %1739 = vmatpush1.msra.mxu0 0.0
        %1740 = vmatprep.subr.mxu0 0.0
        %1741 = vmatpush1.msra.mxu0 0.0
        %1742 = vmatprep.subr.mxu0 0.0
        %1743 = vmatpush1.msra.mxu0 0.0
        %1744 = vmatprep.subr.mxu0 0.0
        %1745 = vmatpush1.msra.mxu0 0.0
        %1746 = vmatprep.subr.mxu0 0.0
        %1747 = vmatpush1.msra.mxu0 0.0
        %1748 = vmatprep.subr.mxu0 0.0
        %1749 = vmatpush1.msra.mxu0 0.0
        %1750 = vmatprep.subr.mxu0 0.0
        %1751 = vmatpush1.msra.mxu0 0.0
        %1752 = vmatprep.subr.mxu0 0.0
        %1753 = vmatpush1.msra.mxu0 0.0
        %1754 = vmatprep.subr.mxu0 0.0
        %1755 = vmatpush1.msra.mxu0 0.0
        %1756 = vmatprep.subr.mxu0 0.0
        %1757 = vmatpush1.msra.mxu0 0.0
        %1758 = vmatprep.subr.mxu0 0.0
        %1759 = vmatpush1.msra.mxu0 0.0
        %1760 = vmatprep.subr.mxu0 0.0
        %1761 = vmatpush1.msra.mxu0 0.0
        %1762 = vmatprep.subr.mxu0 0.0
        %1763 = vmatpush1.msra.mxu0 0.0
        %1764 = vmatprep.mubr.f32.mxu0 0.0
        %1765 = vmatmul.mubr.f32.gmra.mrb[0].mxu0 %v1627
        %v1766 = vpop.f32.mrb[0].mxu0
        %v1767 = vadd.f32 0.0, %v1766
        %v1768 = vpop.f32.mrb[0].mxu0
        %v1769 = vadd.f32 0.0, %v1768
        %1770 = vdwg.mxu0
        %v1771 = vadd.f32 %v1601, %v1696
        %v1772 = vadd.f32 %v1602, %v1698
        %v1773 = vadd.f32 %v1603, %v1767
        %v1774 = vadd.f32 %v1604, %v1769
        %s1775 = scalar_lea.vmem %s2, 64
        %v1776 = vld [vmem:[%s1775] sm:$0xff]
        %1777 = vrot.lane.b32.xlu0 %v414, 19
        %v1778 = vpop.permute.xlu0 %1777
        %1779 = vrot.lane.b32.xlu0 %v415, 19
        %v1780 = vpop.permute.xlu0 %1779
        %1781 = vrot.lane.b32.xlu0 %v416, 19
        %v1782 = vpop.permute.xlu0 %1781
        %1783 = vrot.lane.b32.xlu0 %v417, 19
        %v1784 = vpop.permute.xlu0 %1783
        %1785 = vrot.lane.b32.xlu0 %v418, 19
        %v1786 = vpop.permute.xlu0 %1785
        %vm1787 = vcmask 154624
        %v1788 = vsel %vm1787, %v1778, %v1780
        %v1789 = vsel %vm1787, %v1780, %v1782
        %v1790 = vsel %vm1787, %v1782, %v1784
        %v1791 = vsel %vm1787, %v1784, %v1786
        %v1797 = vsel %vm445, %v1776, 0
        %1799 = vmatprep.subr.mxu0 %v1789
        %1800 = vmatpush1.msra.mxu0 %v1788
        %1801 = vmatprep.subr.mxu0 0.0
        %1802 = vmatpush1.msra.mxu0 0.0
        %1803 = vmatprep.subr.mxu0 0.0
        %1804 = vmatpush1.msra.mxu0 0.0
        %1805 = vmatprep.subr.mxu0 0.0
        %1806 = vmatpush1.msra.mxu0 0.0
        %1807 = vmatprep.subr.mxu0 0.0
        %1808 = vmatpush1.msra.mxu0 0.0
        %1809 = vmatprep.subr.mxu0 0.0
        %1810 = vmatpush1.msra.mxu0 0.0
        %1811 = vmatprep.subr.mxu0 0.0
        %1812 = vmatpush1.msra.mxu0 0.0
        %1813 = vmatprep.subr.mxu0 0.0
        %1814 = vmatpush1.msra.mxu0 0.0
        %1815 = vmatprep.subr.mxu0 0.0
        %1816 = vmatpush1.msra.mxu0 0.0
        %1817 = vmatprep.subr.mxu0 0.0
        %1818 = vmatpush1.msra.mxu0 0.0
        %1819 = vmatprep.subr.mxu0 0.0
        %1820 = vmatpush1.msra.mxu0 0.0
        %1821 = vmatprep.subr.mxu0 0.0
        %1822 = vmatpush1.msra.mxu0 0.0
        %1823 = vmatprep.subr.mxu0 0.0
        %1824 = vmatpush1.msra.mxu0 0.0
        %1825 = vmatprep.subr.mxu0 0.0
        %1826 = vmatpush1.msra.mxu0 0.0
        %1827 = vmatprep.subr.mxu0 0.0
        %1828 = vmatpush1.msra.mxu0 0.0
        %1829 = vmatprep.subr.mxu0 0.0
        %1830 = vmatpush1.msra.mxu0 0.0
        %1831 = vmatprep.subr.mxu0 0.0
        %1832 = vmatpush1.msra.mxu0 0.0
        %1833 = vmatprep.subr.mxu0 0.0
        %1834 = vmatpush1.msra.mxu0 0.0
        %1835 = vmatprep.subr.mxu0 0.0
        %1836 = vmatpush1.msra.mxu0 0.0
        %1837 = vmatprep.subr.mxu0 0.0
        %1838 = vmatpush1.msra.mxu0 0.0
        %1839 = vmatprep.subr.mxu0 0.0
        %1840 = vmatpush1.msra.mxu0 0.0
        %1841 = vmatprep.subr.mxu0 0.0
        %1842 = vmatpush1.msra.mxu0 0.0
        %1843 = vmatprep.subr.mxu0 0.0
        %1844 = vmatpush1.msra.mxu0 0.0
        %1845 = vmatprep.subr.mxu0 0.0
        %1846 = vmatpush1.msra.mxu0 0.0
        %1847 = vmatprep.subr.mxu0 0.0
        %1848 = vmatpush1.msra.mxu0 0.0
        %1849 = vmatprep.subr.mxu0 0.0
        %1850 = vmatpush1.msra.mxu0 0.0
        %1851 = vmatprep.subr.mxu0 0.0
        %1852 = vmatpush1.msra.mxu0 0.0
        %1853 = vmatprep.subr.mxu0 0.0
        %1854 = vmatpush1.msra.mxu0 0.0
        %1855 = vmatprep.subr.mxu0 0.0
        %1856 = vmatpush1.msra.mxu0 0.0
        %1857 = vmatprep.subr.mxu0 0.0
        %1858 = vmatpush1.msra.mxu0 0.0
        %1859 = vmatprep.subr.mxu0 0.0
        %1860 = vmatpush1.msra.mxu0 0.0
        %1861 = vmatprep.subr.mxu0 0.0
        %1862 = vmatpush1.msra.mxu0 0.0
        %1863 = vmatprep.mubr.f32.mxu0 0.0
        %1864 = vmatmul.mubr.f32.gmra.mrb[0].mxu0 %v1797
        %v1865 = vpop.f32.mrb[0].mxu0
        %v1866 = vadd.f32 0.0, %v1865
        %v1867 = vpop.f32.mrb[0].mxu0
        %v1868 = vadd.f32 0.0, %v1867
        %1869 = vdwg.mxu0
        %1870 = vmatprep.subr.mxu0 %v1791
        %1871 = vmatpush1.msra.mxu0 %v1790
        %1872 = vmatprep.subr.mxu0 0.0
        %1873 = vmatpush1.msra.mxu0 0.0
        %1874 = vmatprep.subr.mxu0 0.0
        %1875 = vmatpush1.msra.mxu0 0.0
        %1876 = vmatprep.subr.mxu0 0.0
        %1877 = vmatpush1.msra.mxu0 0.0
        %1878 = vmatprep.subr.mxu0 0.0
        %1879 = vmatpush1.msra.mxu0 0.0
        %1880 = vmatprep.subr.mxu0 0.0
        %1881 = vmatpush1.msra.mxu0 0.0
        %1882 = vmatprep.subr.mxu0 0.0
        %1883 = vmatpush1.msra.mxu0 0.0
        %1884 = vmatprep.subr.mxu0 0.0
        %1885 = vmatpush1.msra.mxu0 0.0
        %1886 = vmatprep.subr.mxu0 0.0
        %1887 = vmatpush1.msra.mxu0 0.0
        %1888 = vmatprep.subr.mxu0 0.0
        %1889 = vmatpush1.msra.mxu0 0.0
        %1890 = vmatprep.subr.mxu0 0.0
        %1891 = vmatpush1.msra.mxu0 0.0
        %1892 = vmatprep.subr.mxu0 0.0
        %1893 = vmatpush1.msra.mxu0 0.0
        %1894 = vmatprep.subr.mxu0 0.0
        %1895 = vmatpush1.msra.mxu0 0.0
        %1896 = vmatprep.subr.mxu0 0.0
        %1897 = vmatpush1.msra.mxu0 0.0
        %1898 = vmatprep.subr.mxu0 0.0
        %1899 = vmatpush1.msra.mxu0 0.0
        %1900 = vmatprep.subr.mxu0 0.0
        %1901 = vmatpush1.msra.mxu0 0.0
        %1902 = vmatprep.subr.mxu0 0.0
        %1903 = vmatpush1.msra.mxu0 0.0
        %1904 = vmatprep.subr.mxu0 0.0
        %1905 = vmatpush1.msra.mxu0 0.0
        %1906 = vmatprep.subr.mxu0 0.0
        %1907 = vmatpush1.msra.mxu0 0.0
        %1908 = vmatprep.subr.mxu0 0.0
        %1909 = vmatpush1.msra.mxu0 0.0
        %1910 = vmatprep.subr.mxu0 0.0
        %1911 = vmatpush1.msra.mxu0 0.0
        %1912 = vmatprep.subr.mxu0 0.0
        %1913 = vmatpush1.msra.mxu0 0.0
        %1914 = vmatprep.subr.mxu0 0.0
        %1915 = vmatpush1.msra.mxu0 0.0
        %1916 = vmatprep.subr.mxu0 0.0
        %1917 = vmatpush1.msra.mxu0 0.0
        %1918 = vmatprep.subr.mxu0 0.0
        %1919 = vmatpush1.msra.mxu0 0.0
        %1920 = vmatprep.subr.mxu0 0.0
        %1921 = vmatpush1.msra.mxu0 0.0
        %1922 = vmatprep.subr.mxu0 0.0
        %1923 = vmatpush1.msra.mxu0 0.0
        %1924 = vmatprep.subr.mxu0 0.0
        %1925 = vmatpush1.msra.mxu0 0.0
        %1926 = vmatprep.subr.mxu0 0.0
        %1927 = vmatpush1.msra.mxu0 0.0
        %1928 = vmatprep.subr.mxu0 0.0
        %1929 = vmatpush1.msra.mxu0 0.0
        %1930 = vmatprep.subr.mxu0 0.0
        %1931 = vmatpush1.msra.mxu0 0.0
        %1932 = vmatprep.subr.mxu0 0.0
        %1933 = vmatpush1.msra.mxu0 0.0
        %1934 = vmatprep.mubr.f32.mxu0 0.0
        %1935 = vmatmul.mubr.f32.gmra.mrb[0].mxu0 %v1797
        %v1936 = vpop.f32.mrb[0].mxu0
        %v1937 = vadd.f32 0.0, %v1936
        %v1938 = vpop.f32.mrb[0].mxu0
        %v1939 = vadd.f32 0.0, %v1938
        %1940 = vdwg.mxu0
        %v1941 = vadd.f32 %v1771, %v1866
        %v1942 = vadd.f32 %v1772, %v1868
        %v1943 = vadd.f32 %v1773, %v1937
        %v1944 = vadd.f32 %v1774, %v1939
        %s1945 = scalar_lea.vmem %s2, 72
        %v1946 = vld [vmem:[%s1945] sm:$0xff]
        %1947 = vrot.lane.b32.xlu0 %v414, 18
        %v1948 = vpop.permute.xlu0 %1947
        %1949 = vrot.lane.b32.xlu0 %v415, 18
        %v1950 = vpop.permute.xlu0 %1949
        %1951 = vrot.lane.b32.xlu0 %v416, 18
        %v1952 = vpop.permute.xlu0 %1951
        %1953 = vrot.lane.b32.xlu0 %v417, 18
        %v1954 = vpop.permute.xlu0 %1953
        %1955 = vrot.lane.b32.xlu0 %v418, 18
        %v1956 = vpop.permute.xlu0 %1955
        %vm1957 = vcmask 146432
        %v1958 = vsel %vm1957, %v1948, %v1950
        %v1959 = vsel %vm1957, %v1950, %v1952
        %v1960 = vsel %vm1957, %v1952, %v1954
        %v1961 = vsel %vm1957, %v1954, %v1956
        %v1967 = vsel %vm445, %v1946, 0
        %1969 = vmatprep.subr.mxu0 %v1959
        %1970 = vmatpush1.msra.mxu0 %v1958
        %1971 = vmatprep.subr.mxu0 0.0
        %1972 = vmatpush1.msra.mxu0 0.0
        %1973 = vmatprep.subr.mxu0 0.0
        %1974 = vmatpush1.msra.mxu0 0.0
        %1975 = vmatprep.subr.mxu0 0.0
        %1976 = vmatpush1.msra.mxu0 0.0
        %1977 = vmatprep.subr.mxu0 0.0
        %1978 = vmatpush1.msra.mxu0 0.0
        %1979 = vmatprep.subr.mxu0 0.0
        %1980 = vmatpush1.msra.mxu0 0.0
        %1981 = vmatprep.subr.mxu0 0.0
        %1982 = vmatpush1.msra.mxu0 0.0
        %1983 = vmatprep.subr.mxu0 0.0
        %1984 = vmatpush1.msra.mxu0 0.0
        %1985 = vmatprep.subr.mxu0 0.0
        %1986 = vmatpush1.msra.mxu0 0.0
        %1987 = vmatprep.subr.mxu0 0.0
        %1988 = vmatpush1.msra.mxu0 0.0
        %1989 = vmatprep.subr.mxu0 0.0
        %1990 = vmatpush1.msra.mxu0 0.0
        %1991 = vmatprep.subr.mxu0 0.0
        %1992 = vmatpush1.msra.mxu0 0.0
        %1993 = vmatprep.subr.mxu0 0.0
        %1994 = vmatpush1.msra.mxu0 0.0
        %1995 = vmatprep.subr.mxu0 0.0
        %1996 = vmatpush1.msra.mxu0 0.0
        %1997 = vmatprep.subr.mxu0 0.0
        %1998 = vmatpush1.msra.mxu0 0.0
        %1999 = vmatprep.subr.mxu0 0.0
        %2000 = vmatpush1.msra.mxu0 0.0
        %2001 = vmatprep.subr.mxu0 0.0
        %2002 = vmatpush1.msra.mxu0 0.0
        %2003 = vmatprep.subr.mxu0 0.0
        %2004 = vmatpush1.msra.mxu0 0.0
        %2005 = vmatprep.subr.mxu0 0.0
        %2006 = vmatpush1.msra.mxu0 0.0
        %2007 = vmatprep.subr.mxu0 0.0
        %2008 = vmatpush1.msra.mxu0 0.0
        %2009 = vmatprep.subr.mxu0 0.0
        %2010 = vmatpush1.msra.mxu0 0.0
        %2011 = vmatprep.subr.mxu0 0.0
        %2012 = vmatpush1.msra.mxu0 0.0
        %2013 = vmatprep.subr.mxu0 0.0
        %2014 = vmatpush1.msra.mxu0 0.0
        %2015 = vmatprep.subr.mxu0 0.0
        %2016 = vmatpush1.msra.mxu0 0.0
        %2017 = vmatprep.subr.mxu0 0.0
        %2018 = vmatpush1.msra.mxu0 0.0
        %2019 = vmatprep.subr.mxu0 0.0
        %2020 = vmatpush1.msra.mxu0 0.0
        %2021 = vmatprep.subr.mxu0 0.0
        %2022 = vmatpush1.msra.mxu0 0.0
        %2023 = vmatprep.subr.mxu0 0.0
        %2024 = vmatpush1.msra.mxu0 0.0
        %2025 = vmatprep.subr.mxu0 0.0
        %2026 = vmatpush1.msra.mxu0 0.0
        %2027 = vmatprep.subr.mxu0 0.0
        %2028 = vmatpush1.msra.mxu0 0.0
        %2029 = vmatprep.subr.mxu0 0.0
        %2030 = vmatpush1.msra.mxu0 0.0
        %2031 = vmatprep.subr.mxu0 0.0
        %2032 = vmatpush1.msra.mxu0 0.0
        %2033 = vmatprep.mubr.f32.mxu0 0.0
        %2034 = vmatmul.mubr.f32.gmra.mrb[0].mxu0 %v1967
        %v2035 = vpop.f32.mrb[0].mxu0
        %v2036 = vadd.f32 0.0, %v2035
        %v2037 = vpop.f32.mrb[0].mxu0
        %v2038 = vadd.f32 0.0, %v2037
        %2039 = vdwg.mxu0
        %2040 = vmatprep.subr.mxu0 %v1961
        %2041 = vmatpush1.msra.mxu0 %v1960
        %2042 = vmatprep.subr.mxu0 0.0
        %2043 = vmatpush1.msra.mxu0 0.0
        %2044 = vmatprep.subr.mxu0 0.0
        %2045 = vmatpush1.msra.mxu0 0.0
        %2046 = vmatprep.subr.mxu0 0.0
        %2047 = vmatpush1.msra.mxu0 0.0
        %2048 = vmatprep.subr.mxu0 0.0
        %2049 = vmatpush1.msra.mxu0 0.0
        %2050 = vmatprep.subr.mxu0 0.0
        %2051 = vmatpush1.msra.mxu0 0.0
        %2052 = vmatprep.subr.mxu0 0.0
        %2053 = vmatpush1.msra.mxu0 0.0
        %2054 = vmatprep.subr.mxu0 0.0
        %2055 = vmatpush1.msra.mxu0 0.0
        %2056 = vmatprep.subr.mxu0 0.0
        %2057 = vmatpush1.msra.mxu0 0.0
        %2058 = vmatprep.subr.mxu0 0.0
        %2059 = vmatpush1.msra.mxu0 0.0
        %2060 = vmatprep.subr.mxu0 0.0
        %2061 = vmatpush1.msra.mxu0 0.0
        %2062 = vmatprep.subr.mxu0 0.0
        %2063 = vmatpush1.msra.mxu0 0.0
        %2064 = vmatprep.subr.mxu0 0.0
        %2065 = vmatpush1.msra.mxu0 0.0
        %2066 = vmatprep.subr.mxu0 0.0
        %2067 = vmatpush1.msra.mxu0 0.0
        %2068 = vmatprep.subr.mxu0 0.0
        %2069 = vmatpush1.msra.mxu0 0.0
        %2070 = vmatprep.subr.mxu0 0.0
        %2071 = vmatpush1.msra.mxu0 0.0
        %2072 = vmatprep.subr.mxu0 0.0
        %2073 = vmatpush1.msra.mxu0 0.0
        %2074 = vmatprep.subr.mxu0 0.0
        %2075 = vmatpush1.msra.mxu0 0.0
        %2076 = vmatprep.subr.mxu0 0.0
        %2077 = vmatpush1.msra.mxu0 0.0
        %2078 = vmatprep.subr.mxu0 0.0
        %2079 = vmatpush1.msra.mxu0 0.0
        %2080 = vmatprep.subr.mxu0 0.0
        %2081 = vmatpush1.msra.mxu0 0.0
        %2082 = vmatprep.subr.mxu0 0.0
        %2083 = vmatpush1.msra.mxu0 0.0
        %2084 = vmatprep.subr.mxu0 0.0
        %2085 = vmatpush1.msra.mxu0 0.0
        %2086 = vmatprep.subr.mxu0 0.0
        %2087 = vmatpush1.msra.mxu0 0.0
        %2088 = vmatprep.subr.mxu0 0.0
        %2089 = vmatpush1.msra.mxu0 0.0
        %2090 = vmatprep.subr.mxu0 0.0
        %2091 = vmatpush1.msra.mxu0 0.0
        %2092 = vmatprep.subr.mxu0 0.0
        %2093 = vmatpush1.msra.mxu0 0.0
        %2094 = vmatprep.subr.mxu0 0.0
        %2095 = vmatpush1.msra.mxu0 0.0
        %2096 = vmatprep.subr.mxu0 0.0
        %2097 = vmatpush1.msra.mxu0 0.0
        %2098 = vmatprep.subr.mxu0 0.0
        %2099 = vmatpush1.msra.mxu0 0.0
        %2100 = vmatprep.subr.mxu0 0.0
        %2101 = vmatpush1.msra.mxu0 0.0
        %2102 = vmatprep.subr.mxu0 0.0
        %2103 = vmatpush1.msra.mxu0 0.0
        %2104 = vmatprep.mubr.f32.mxu0 0.0
        %2105 = vmatmul.mubr.f32.gmra.mrb[0].mxu0 %v1967
        %v2106 = vpop.f32.mrb[0].mxu0
        %v2107 = vadd.f32 0.0, %v2106
        %v2108 = vpop.f32.mrb[0].mxu0
        %v2109 = vadd.f32 0.0, %v2108
        %2110 = vdwg.mxu0
        %v2111 = vadd.f32 %v1941, %v2036
        %v2112 = vadd.f32 %v1942, %v2038
        %v2113 = vadd.f32 %v1943, %v2107
        %v2114 = vadd.f32 %v1944, %v2109
        %s2115 = scalar_lea.vmem %s2, 80
        %v2116 = vld [vmem:[%s2115] sm:$0xff]
        %2117 = vrot.lane.b32.xlu0 %v414, 2
        %v2118 = vpop.permute.xlu0 %2117
        %2119 = vrot.lane.b32.xlu0 %v415, 2
        %v2120 = vpop.permute.xlu0 %2119
        %2121 = vrot.lane.b32.xlu0 %v416, 2
        %v2122 = vpop.permute.xlu0 %2121
        %2123 = vrot.lane.b32.xlu0 %v417, 2
        %v2124 = vpop.permute.xlu0 %2123
        %2125 = vrot.lane.b32.xlu0 %v418, 2
        %v2126 = vpop.permute.xlu0 %2125
        %vm2127 = vcmask 15360
        %v2128 = vsel %vm2127, %v2118, %v2120
        %v2129 = vsel %vm2127, %v2120, %v2122
        %v2130 = vsel %vm2127, %v2122, %v2124
        %v2131 = vsel %vm2127, %v2124, %v2126
        %v2137 = vsel %vm445, %v2116, 0
        %2139 = vmatprep.subr.mxu0 %v2129
        %2140 = vmatpush1.msra.mxu0 %v2128
        %2141 = vmatprep.subr.mxu0 0.0
        %2142 = vmatpush1.msra.mxu0 0.0
        %2143 = vmatprep.subr.mxu0 0.0
        %2144 = vmatpush1.msra.mxu0 0.0
        %2145 = vmatprep.subr.mxu0 0.0
        %2146 = vmatpush1.msra.mxu0 0.0
        %2147 = vmatprep.subr.mxu0 0.0
        %2148 = vmatpush1.msra.mxu0 0.0
        %2149 = vmatprep.subr.mxu0 0.0
        %2150 = vmatpush1.msra.mxu0 0.0
        %2151 = vmatprep.subr.mxu0 0.0
        %2152 = vmatpush1.msra.mxu0 0.0
        %2153 = vmatprep.subr.mxu0 0.0
        %2154 = vmatpush1.msra.mxu0 0.0
        %2155 = vmatprep.subr.mxu0 0.0
        %2156 = vmatpush1.msra.mxu0 0.0
        %2157 = vmatprep.subr.mxu0 0.0
        %2158 = vmatpush1.msra.mxu0 0.0
        %2159 = vmatprep.subr.mxu0 0.0
        %2160 = vmatpush1.msra.mxu0 0.0
        %2161 = vmatprep.subr.mxu0 0.0
        %2162 = vmatpush1.msra.mxu0 0.0
        %2163 = vmatprep.subr.mxu0 0.0
        %2164 = vmatpush1.msra.mxu0 0.0
        %2165 = vmatprep.subr.mxu0 0.0
        %2166 = vmatpush1.msra.mxu0 0.0
        %2167 = vmatprep.subr.mxu0 0.0
        %2168 = vmatpush1.msra.mxu0 0.0
        %2169 = vmatprep.subr.mxu0 0.0
        %2170 = vmatpush1.msra.mxu0 0.0
        %2171 = vmatprep.subr.mxu0 0.0
        %2172 = vmatpush1.msra.mxu0 0.0
        %2173 = vmatprep.subr.mxu0 0.0
        %2174 = vmatpush1.msra.mxu0 0.0
        %2175 = vmatprep.subr.mxu0 0.0
        %2176 = vmatpush1.msra.mxu0 0.0
        %2177 = vmatprep.subr.mxu0 0.0
        %2178 = vmatpush1.msra.mxu0 0.0
        %2179 = vmatprep.subr.mxu0 0.0
        %2180 = vmatpush1.msra.mxu0 0.0
        %2181 = vmatprep.subr.mxu0 0.0
        %2182 = vmatpush1.msra.mxu0 0.0
        %2183 = vmatprep.subr.mxu0 0.0
        %2184 = vmatpush1.msra.mxu0 0.0
        %2185 = vmatprep.subr.mxu0 0.0
        %2186 = vmatpush1.msra.mxu0 0.0
        %2187 = vmatprep.subr.mxu0 0.0
        %2188 = vmatpush1.msra.mxu0 0.0
        %2189 = vmatprep.subr.mxu0 0.0
        %2190 = vmatpush1.msra.mxu0 0.0
        %2191 = vmatprep.subr.mxu0 0.0
        %2192 = vmatpush1.msra.mxu0 0.0
        %2193 = vmatprep.subr.mxu0 0.0
        %2194 = vmatpush1.msra.mxu0 0.0
        %2195 = vmatprep.subr.mxu0 0.0
        %2196 = vmatpush1.msra.mxu0 0.0
        %2197 = vmatprep.subr.mxu0 0.0
        %2198 = vmatpush1.msra.mxu0 0.0
        %2199 = vmatprep.subr.mxu0 0.0
        %2200 = vmatpush1.msra.mxu0 0.0
        %2201 = vmatprep.subr.mxu0 0.0
        %2202 = vmatpush1.msra.mxu0 0.0
        %2203 = vmatprep.mubr.f32.mxu0 0.0
        %2204 = vmatmul.mubr.f32.gmra.mrb[0].mxu0 %v2137
        %v2205 = vpop.f32.mrb[0].mxu0
        %v2206 = vadd.f32 0.0, %v2205
        %v2207 = vpop.f32.mrb[0].mxu0
        %v2208 = vadd.f32 0.0, %v2207
        %2209 = vdwg.mxu0
        %2210 = vmatprep.subr.mxu0 %v2131
        %2211 = vmatpush1.msra.mxu0 %v2130
        %2212 = vmatprep.subr.mxu0 0.0
        %2213 = vmatpush1.msra.mxu0 0.0
        %2214 = vmatprep.subr.mxu0 0.0
        %2215 = vmatpush1.msra.mxu0 0.0
        %2216 = vmatprep.subr.mxu0 0.0
        %2217 = vmatpush1.msra.mxu0 0.0
        %2218 = vmatprep.subr.mxu0 0.0
        %2219 = vmatpush1.msra.mxu0 0.0
        %2220 = vmatprep.subr.mxu0 0.0
        %2221 = vmatpush1.msra.mxu0 0.0
        %2222 = vmatprep.subr.mxu0 0.0
        %2223 = vmatpush1.msra.mxu0 0.0
        %2224 = vmatprep.subr.mxu0 0.0
        %2225 = vmatpush1.msra.mxu0 0.0
        %2226 = vmatprep.subr.mxu0 0.0
        %2227 = vmatpush1.msra.mxu0 0.0
        %2228 = vmatprep.subr.mxu0 0.0
        %2229 = vmatpush1.msra.mxu0 0.0
        %2230 = vmatprep.subr.mxu0 0.0
        %2231 = vmatpush1.msra.mxu0 0.0
        %2232 = vmatprep.subr.mxu0 0.0
        %2233 = vmatpush1.msra.mxu0 0.0
        %2234 = vmatprep.subr.mxu0 0.0
        %2235 = vmatpush1.msra.mxu0 0.0
        %2236 = vmatprep.subr.mxu0 0.0
        %2237 = vmatpush1.msra.mxu0 0.0
        %2238 = vmatprep.subr.mxu0 0.0
        %2239 = vmatpush1.msra.mxu0 0.0
        %2240 = vmatprep.subr.mxu0 0.0
        %2241 = vmatpush1.msra.mxu0 0.0
        %2242 = vmatprep.subr.mxu0 0.0
        %2243 = vmatpush1.msra.mxu0 0.0
        %2244 = vmatprep.subr.mxu0 0.0
        %2245 = vmatpush1.msra.mxu0 0.0
        %2246 = vmatprep.subr.mxu0 0.0
        %2247 = vmatpush1.msra.mxu0 0.0
        %2248 = vmatprep.subr.mxu0 0.0
        %2249 = vmatpush1.msra.mxu0 0.0
        %2250 = vmatprep.subr.mxu0 0.0
        %2251 = vmatpush1.msra.mxu0 0.0
        %2252 = vmatprep.subr.mxu0 0.0
        %2253 = vmatpush1.msra.mxu0 0.0
        %2254 = vmatprep.subr.mxu0 0.0
        %2255 = vmatpush1.msra.mxu0 0.0
        %2256 = vmatprep.subr.mxu0 0.0
        %2257 = vmatpush1.msra.mxu0 0.0
        %2258 = vmatprep.subr.mxu0 0.0
        %2259 = vmatpush1.msra.mxu0 0.0
        %2260 = vmatprep.subr.mxu0 0.0
        %2261 = vmatpush1.msra.mxu0 0.0
        %2262 = vmatprep.subr.mxu0 0.0
        %2263 = vmatpush1.msra.mxu0 0.0
        %2264 = vmatprep.subr.mxu0 0.0
        %2265 = vmatpush1.msra.mxu0 0.0
        %2266 = vmatprep.subr.mxu0 0.0
        %2267 = vmatpush1.msra.mxu0 0.0
        %2268 = vmatprep.subr.mxu0 0.0
        %2269 = vmatpush1.msra.mxu0 0.0
        %2270 = vmatprep.subr.mxu0 0.0
        %2271 = vmatpush1.msra.mxu0 0.0
        %2272 = vmatprep.subr.mxu0 0.0
        %2273 = vmatpush1.msra.mxu0 0.0
        %2274 = vmatprep.mubr.f32.mxu0 0.0
        %2275 = vmatmul.mubr.f32.gmra.mrb[0].mxu0 %v2137
        %v2276 = vpop.f32.mrb[0].mxu0
        %v2277 = vadd.f32 0.0, %v2276
        %v2278 = vpop.f32.mrb[0].mxu0
        %v2279 = vadd.f32 0.0, %v2278
        %2280 = vdwg.mxu0
        %v2281 = vadd.f32 %v2111, %v2206
        %v2282 = vadd.f32 %v2112, %v2208
        %v2283 = vadd.f32 %v2113, %v2277
        %v2284 = vadd.f32 %v2114, %v2279
        %s2285 = scalar_lea.vmem %s2, 88
        %v2286 = vld [vmem:[%s2285] sm:$0xff]
        %2287 = vrot.lane.b32.xlu0 %v414, 1
        %v2288 = vpop.permute.xlu0 %2287
        %2289 = vrot.lane.b32.xlu0 %v415, 1
        %v2290 = vpop.permute.xlu0 %2289
        %2291 = vrot.lane.b32.xlu0 %v416, 1
        %v2292 = vpop.permute.xlu0 %2291
        %2293 = vrot.lane.b32.xlu0 %v417, 1
        %v2294 = vpop.permute.xlu0 %2293
        %2295 = vrot.lane.b32.xlu0 %v418, 1
        %v2296 = vpop.permute.xlu0 %2295
        %vm2297 = vcmask 7168
        %v2298 = vsel %vm2297, %v2288, %v2290
        %v2299 = vsel %vm2297, %v2290, %v2292
        %v2300 = vsel %vm2297, %v2292, %v2294
        %v2301 = vsel %vm2297, %v2294, %v2296
        %v2307 = vsel %vm445, %v2286, 0
        %2309 = vmatprep.subr.mxu0 %v2299
        %2310 = vmatpush1.msra.mxu0 %v2298
        %2311 = vmatprep.subr.mxu0 0.0
        %2312 = vmatpush1.msra.mxu0 0.0
        %2313 = vmatprep.subr.mxu0 0.0
        %2314 = vmatpush1.msra.mxu0 0.0
        %2315 = vmatprep.subr.mxu0 0.0
        %2316 = vmatpush1.msra.mxu0 0.0
        %2317 = vmatprep.subr.mxu0 0.0
        %2318 = vmatpush1.msra.mxu0 0.0
        %2319 = vmatprep.subr.mxu0 0.0
        %2320 = vmatpush1.msra.mxu0 0.0
        %2321 = vmatprep.subr.mxu0 0.0
        %2322 = vmatpush1.msra.mxu0 0.0
        %2323 = vmatprep.subr.mxu0 0.0
        %2324 = vmatpush1.msra.mxu0 0.0
        %2325 = vmatprep.subr.mxu0 0.0
        %2326 = vmatpush1.msra.mxu0 0.0
        %2327 = vmatprep.subr.mxu0 0.0
        %2328 = vmatpush1.msra.mxu0 0.0
        %2329 = vmatprep.subr.mxu0 0.0
        %2330 = vmatpush1.msra.mxu0 0.0
        %2331 = vmatprep.subr.mxu0 0.0
        %2332 = vmatpush1.msra.mxu0 0.0
        %2333 = vmatprep.subr.mxu0 0.0
        %2334 = vmatpush1.msra.mxu0 0.0
        %2335 = vmatprep.subr.mxu0 0.0
        %2336 = vmatpush1.msra.mxu0 0.0
        %2337 = vmatprep.subr.mxu0 0.0
        %2338 = vmatpush1.msra.mxu0 0.0
        %2339 = vmatprep.subr.mxu0 0.0
        %2340 = vmatpush1.msra.mxu0 0.0
        %2341 = vmatprep.subr.mxu0 0.0
        %2342 = vmatpush1.msra.mxu0 0.0
        %2343 = vmatprep.subr.mxu0 0.0
        %2344 = vmatpush1.msra.mxu0 0.0
        %2345 = vmatprep.subr.mxu0 0.0
        %2346 = vmatpush1.msra.mxu0 0.0
        %2347 = vmatprep.subr.mxu0 0.0
        %2348 = vmatpush1.msra.mxu0 0.0
        %2349 = vmatprep.subr.mxu0 0.0
        %2350 = vmatpush1.msra.mxu0 0.0
        %2351 = vmatprep.subr.mxu0 0.0
        %2352 = vmatpush1.msra.mxu0 0.0
        %2353 = vmatprep.subr.mxu0 0.0
        %2354 = vmatpush1.msra.mxu0 0.0
        %2355 = vmatprep.subr.mxu0 0.0
        %2356 = vmatpush1.msra.mxu0 0.0
        %2357 = vmatprep.subr.mxu0 0.0
        %2358 = vmatpush1.msra.mxu0 0.0
        %2359 = vmatprep.subr.mxu0 0.0
        %2360 = vmatpush1.msra.mxu0 0.0
        %2361 = vmatprep.subr.mxu0 0.0
        %2362 = vmatpush1.msra.mxu0 0.0
        %2363 = vmatprep.subr.mxu0 0.0
        %2364 = vmatpush1.msra.mxu0 0.0
        %2365 = vmatprep.subr.mxu0 0.0
        %2366 = vmatpush1.msra.mxu0 0.0
        %2367 = vmatprep.subr.mxu0 0.0
        %2368 = vmatpush1.msra.mxu0 0.0
        %2369 = vmatprep.subr.mxu0 0.0
        %2370 = vmatpush1.msra.mxu0 0.0
        %2371 = vmatprep.subr.mxu0 0.0
        %2372 = vmatpush1.msra.mxu0 0.0
        %2373 = vmatprep.mubr.f32.mxu0 0.0
        %2374 = vmatmul.mubr.f32.gmra.mrb[0].mxu0 %v2307
        %v2375 = vpop.f32.mrb[0].mxu0
        %v2376 = vadd.f32 0.0, %v2375
        %v2377 = vpop.f32.mrb[0].mxu0
        %v2378 = vadd.f32 0.0, %v2377
        %2379 = vdwg.mxu0
        %2380 = vmatprep.subr.mxu0 %v2301
        %2381 = vmatpush1.msra.mxu0 %v2300
        %2382 = vmatprep.subr.mxu0 0.0
        %2383 = vmatpush1.msra.mxu0 0.0
        %2384 = vmatprep.subr.mxu0 0.0
        %2385 = vmatpush1.msra.mxu0 0.0
        %2386 = vmatprep.subr.mxu0 0.0
        %2387 = vmatpush1.msra.mxu0 0.0
        %2388 = vmatprep.subr.mxu0 0.0
        %2389 = vmatpush1.msra.mxu0 0.0
        %2390 = vmatprep.subr.mxu0 0.0
        %2391 = vmatpush1.msra.mxu0 0.0
        %2392 = vmatprep.subr.mxu0 0.0
        %2393 = vmatpush1.msra.mxu0 0.0
        %2394 = vmatprep.subr.mxu0 0.0
        %2395 = vmatpush1.msra.mxu0 0.0
        %2396 = vmatprep.subr.mxu0 0.0
        %2397 = vmatpush1.msra.mxu0 0.0
        %2398 = vmatprep.subr.mxu0 0.0
        %2399 = vmatpush1.msra.mxu0 0.0
        %2400 = vmatprep.subr.mxu0 0.0
        %2401 = vmatpush1.msra.mxu0 0.0
        %2402 = vmatprep.subr.mxu0 0.0
        %2403 = vmatpush1.msra.mxu0 0.0
        %2404 = vmatprep.subr.mxu0 0.0
        %2405 = vmatpush1.msra.mxu0 0.0
        %2406 = vmatprep.subr.mxu0 0.0
        %2407 = vmatpush1.msra.mxu0 0.0
        %2408 = vmatprep.subr.mxu0 0.0
        %2409 = vmatpush1.msra.mxu0 0.0
        %2410 = vmatprep.subr.mxu0 0.0
        %2411 = vmatpush1.msra.mxu0 0.0
        %2412 = vmatprep.subr.mxu0 0.0
        %2413 = vmatpush1.msra.mxu0 0.0
        %2414 = vmatprep.subr.mxu0 0.0
        %2415 = vmatpush1.msra.mxu0 0.0
        %2416 = vmatprep.subr.mxu0 0.0
        %2417 = vmatpush1.msra.mxu0 0.0
        %2418 = vmatprep.subr.mxu0 0.0
        %2419 = vmatpush1.msra.mxu0 0.0
        %2420 = vmatprep.subr.mxu0 0.0
        %2421 = vmatpush1.msra.mxu0 0.0
        %2422 = vmatprep.subr.mxu0 0.0
        %2423 = vmatpush1.msra.mxu0 0.0
        %2424 = vmatprep.subr.mxu0 0.0
        %2425 = vmatpush1.msra.mxu0 0.0
        %2426 = vmatprep.subr.mxu0 0.0
        %2427 = vmatpush1.msra.mxu0 0.0
        %2428 = vmatprep.subr.mxu0 0.0
        %2429 = vmatpush1.msra.mxu0 0.0
        %2430 = vmatprep.subr.mxu0 0.0
        %2431 = vmatpush1.msra.mxu0 0.0
        %2432 = vmatprep.subr.mxu0 0.0
        %2433 = vmatpush1.msra.mxu0 0.0
        %2434 = vmatprep.subr.mxu0 0.0
        %2435 = vmatpush1.msra.mxu0 0.0
        %2436 = vmatprep.subr.mxu0 0.0
        %2437 = vmatpush1.msra.mxu0 0.0
        %2438 = vmatprep.subr.mxu0 0.0
        %2439 = vmatpush1.msra.mxu0 0.0
        %2440 = vmatprep.subr.mxu0 0.0
        %2441 = vmatpush1.msra.mxu0 0.0
        %2442 = vmatprep.subr.mxu0 0.0
        %2443 = vmatpush1.msra.mxu0 0.0
        %2444 = vmatprep.mubr.f32.mxu0 0.0
        %2445 = vmatmul.mubr.f32.gmra.mrb[0].mxu0 %v2307
        %v2446 = vpop.f32.mrb[0].mxu0
        %v2447 = vadd.f32 0.0, %v2446
        %v2448 = vpop.f32.mrb[0].mxu0
        %v2449 = vadd.f32 0.0, %v2448
        %2450 = vdwg.mxu0
        %v2451 = vadd.f32 %v2281, %v2376
        %v2452 = vadd.f32 %v2282, %v2378
        %v2453 = vadd.f32 %v2283, %v2447
        %v2454 = vadd.f32 %v2284, %v2449
        %s2455 = scalar_lea.vmem %s2, 96
        %v2456 = vld [vmem:[%s2455] sm:$0xff]
        %v2458 = vsel %vm445, %v2456, 0
        %2460 = vmatprep.subr.mxu0 %v416
        %2461 = vmatpush1.msra.mxu0 %v415
        %2462 = vmatprep.subr.mxu0 0.0
        %2463 = vmatpush1.msra.mxu0 0.0
        %2464 = vmatprep.subr.mxu0 0.0
        %2465 = vmatpush1.msra.mxu0 0.0
        %2466 = vmatprep.subr.mxu0 0.0
        %2467 = vmatpush1.msra.mxu0 0.0
        %2468 = vmatprep.subr.mxu0 0.0
        %2469 = vmatpush1.msra.mxu0 0.0
        %2470 = vmatprep.subr.mxu0 0.0
        %2471 = vmatpush1.msra.mxu0 0.0
        %2472 = vmatprep.subr.mxu0 0.0
        %2473 = vmatpush1.msra.mxu0 0.0
        %2474 = vmatprep.subr.mxu0 0.0
        %2475 = vmatpush1.msra.mxu0 0.0
        %2476 = vmatprep.subr.mxu0 0.0
        %2477 = vmatpush1.msra.mxu0 0.0
        %2478 = vmatprep.subr.mxu0 0.0
        %2479 = vmatpush1.msra.mxu0 0.0
        %2480 = vmatprep.subr.mxu0 0.0
        %2481 = vmatpush1.msra.mxu0 0.0
        %2482 = vmatprep.subr.mxu0 0.0
        %2483 = vmatpush1.msra.mxu0 0.0
        %2484 = vmatprep.subr.mxu0 0.0
        %2485 = vmatpush1.msra.mxu0 0.0
        %2486 = vmatprep.subr.mxu0 0.0
        %2487 = vmatpush1.msra.mxu0 0.0
        %2488 = vmatprep.subr.mxu0 0.0
        %2489 = vmatpush1.msra.mxu0 0.0
        %2490 = vmatprep.subr.mxu0 0.0
        %2491 = vmatpush1.msra.mxu0 0.0
        %2492 = vmatprep.subr.mxu0 0.0
        %2493 = vmatpush1.msra.mxu0 0.0
        %2494 = vmatprep.subr.mxu0 0.0
        %2495 = vmatpush1.msra.mxu0 0.0
        %2496 = vmatprep.subr.mxu0 0.0
        %2497 = vmatpush1.msra.mxu0 0.0
        %2498 = vmatprep.subr.mxu0 0.0
        %2499 = vmatpush1.msra.mxu0 0.0
        %2500 = vmatprep.subr.mxu0 0.0
        %2501 = vmatpush1.msra.mxu0 0.0
        %2502 = vmatprep.subr.mxu0 0.0
        %2503 = vmatpush1.msra.mxu0 0.0
        %2504 = vmatprep.subr.mxu0 0.0
        %2505 = vmatpush1.msra.mxu0 0.0
        %2506 = vmatprep.subr.mxu0 0.0
        %2507 = vmatpush1.msra.mxu0 0.0
        %2508 = vmatprep.subr.mxu0 0.0
        %2509 = vmatpush1.msra.mxu0 0.0
        %2510 = vmatprep.subr.mxu0 0.0
        %2511 = vmatpush1.msra.mxu0 0.0
        %2512 = vmatprep.subr.mxu0 0.0
        %2513 = vmatpush1.msra.mxu0 0.0
        %2514 = vmatprep.subr.mxu0 0.0
        %2515 = vmatpush1.msra.mxu0 0.0
        %2516 = vmatprep.subr.mxu0 0.0
        %2517 = vmatpush1.msra.mxu0 0.0
        %2518 = vmatprep.subr.mxu0 0.0
        %2519 = vmatpush1.msra.mxu0 0.0
        %2520 = vmatprep.subr.mxu0 0.0
        %2521 = vmatpush1.msra.mxu0 0.0
        %2522 = vmatprep.subr.mxu0 0.0
        %2523 = vmatpush1.msra.mxu0 0.0
        %2524 = vmatprep.mubr.f32.mxu0 0.0
        %2525 = vmatmul.mubr.f32.gmra.mrb[0].mxu0 %v2458
        %v2526 = vpop.f32.mrb[0].mxu0
        %v2527 = vadd.f32 0.0, %v2526
        %v2528 = vpop.f32.mrb[0].mxu0
        %v2529 = vadd.f32 0.0, %v2528
        %2530 = vdwg.mxu0
        %2531 = vmatprep.subr.mxu0 %v418
        %2532 = vmatpush1.msra.mxu0 %v417
        %2533 = vmatprep.subr.mxu0 0.0
        %2534 = vmatpush1.msra.mxu0 0.0
        %2535 = vmatprep.subr.mxu0 0.0
        %2536 = vmatpush1.msra.mxu0 0.0
        %2537 = vmatprep.subr.mxu0 0.0
        %2538 = vmatpush1.msra.mxu0 0.0
        %2539 = vmatprep.subr.mxu0 0.0
        %2540 = vmatpush1.msra.mxu0 0.0
        %2541 = vmatprep.subr.mxu0 0.0
        %2542 = vmatpush1.msra.mxu0 0.0
        %2543 = vmatprep.subr.mxu0 0.0
        %2544 = vmatpush1.msra.mxu0 0.0
        %2545 = vmatprep.subr.mxu0 0.0
        %2546 = vmatpush1.msra.mxu0 0.0
        %2547 = vmatprep.subr.mxu0 0.0
        %2548 = vmatpush1.msra.mxu0 0.0
        %2549 = vmatprep.subr.mxu0 0.0
        %2550 = vmatpush1.msra.mxu0 0.0
        %2551 = vmatprep.subr.mxu0 0.0
        %2552 = vmatpush1.msra.mxu0 0.0
        %2553 = vmatprep.subr.mxu0 0.0
        %2554 = vmatpush1.msra.mxu0 0.0
        %2555 = vmatprep.subr.mxu0 0.0
        %2556 = vmatpush1.msra.mxu0 0.0
        %2557 = vmatprep.subr.mxu0 0.0
        %2558 = vmatpush1.msra.mxu0 0.0
        %2559 = vmatprep.subr.mxu0 0.0
        %2560 = vmatpush1.msra.mxu0 0.0
        %2561 = vmatprep.subr.mxu0 0.0
        %2562 = vmatpush1.msra.mxu0 0.0
        %2563 = vmatprep.subr.mxu0 0.0
        %2564 = vmatpush1.msra.mxu0 0.0
        %2565 = vmatprep.subr.mxu0 0.0
        %2566 = vmatpush1.msra.mxu0 0.0
        %2567 = vmatprep.subr.mxu0 0.0
        %2568 = vmatpush1.msra.mxu0 0.0
        %2569 = vmatprep.subr.mxu0 0.0
        %2570 = vmatpush1.msra.mxu0 0.0
        %2571 = vmatprep.subr.mxu0 0.0
        %2572 = vmatpush1.msra.mxu0 0.0
        %2573 = vmatprep.subr.mxu0 0.0
        %2574 = vmatpush1.msra.mxu0 0.0
        %2575 = vmatprep.subr.mxu0 0.0
        %2576 = vmatpush1.msra.mxu0 0.0
        %2577 = vmatprep.subr.mxu0 0.0
        %2578 = vmatpush1.msra.mxu0 0.0
        %2579 = vmatprep.subr.mxu0 0.0
        %2580 = vmatpush1.msra.mxu0 0.0
        %2581 = vmatprep.subr.mxu0 0.0
        %2582 = vmatpush1.msra.mxu0 0.0
        %2583 = vmatprep.subr.mxu0 0.0
        %2584 = vmatpush1.msra.mxu0 0.0
        %2585 = vmatprep.subr.mxu0 0.0
        %2586 = vmatpush1.msra.mxu0 0.0
        %2587 = vmatprep.subr.mxu0 0.0
        %2588 = vmatpush1.msra.mxu0 0.0
        %2589 = vmatprep.subr.mxu0 0.0
        %2590 = vmatpush1.msra.mxu0 0.0
        %2591 = vmatprep.subr.mxu0 0.0
        %2592 = vmatpush1.msra.mxu0 0.0
        %2593 = vmatprep.subr.mxu0 0.0
        %2594 = vmatpush1.msra.mxu0 0.0
        %2595 = vmatprep.mubr.f32.mxu0 0.0
        %2596 = vmatmul.mubr.f32.gmra.mrb[0].mxu0 %v2458
        %v2597 = vpop.f32.mrb[0].mxu0
        %v2598 = vadd.f32 0.0, %v2597
        %v2599 = vpop.f32.mrb[0].mxu0
        %v2600 = vadd.f32 0.0, %v2599
        %2601 = vdwg.mxu0
        %v2602 = vadd.f32 %v2451, %v2527
        %v2603 = vadd.f32 %v2452, %v2529
        %v2604 = vadd.f32 %v2453, %v2598
        %v2605 = vadd.f32 %v2454, %v2600
        %s2606 = scalar_lea.vmem %s2, 104
        %v2607 = vld [vmem:[%s2606] sm:$0xff]
        %v2608 = vld [vmem:[%s411 + $0x8] sm:$0xff]
        %v2609 = vld [vmem:[%s411 + $0x10] sm:$0xff]
        %v2610 = vld [vmem:[%s411 + $0x18] sm:$0xff]
        %v2611 = vld [vmem:[%s411 + $0x20] sm:$0xff]
        %v2612 = vld [vmem:[%s411 + $0x28] sm:$0xff]
        %2618 = vrot.lane.b32.xlu0 %v2608, 127
        %v2619 = vpop.permute.xlu0 %2618
        %2620 = vrot.lane.b32.xlu0 %v2609, 127
        %v2621 = vpop.permute.xlu0 %2620
        %2622 = vrot.lane.b32.xlu0 %v2610, 127
        %v2623 = vpop.permute.xlu0 %2622
        %2624 = vrot.lane.b32.xlu0 %v2611, 127
        %v2625 = vpop.permute.xlu0 %2624
        %2626 = vrot.lane.b32.xlu0 %v2612, 127
        %v2627 = vpop.permute.xlu0 %2626
        %vm2628 = vcmask 1039360
        %v2629 = vsel %vm2628, %v2619, %v2621
        %v2630 = vsel %vm2628, %v2621, %v2623
        %v2631 = vsel %vm2628, %v2623, %v2625
        %v2632 = vsel %vm2628, %v2625, %v2627
        %v2638 = vsel %vm445, %v2607, 0
        %2640 = vmatprep.subr.mxu0 %v2630
        %2641 = vmatpush1.msra.mxu0 %v2629
        %2642 = vmatprep.subr.mxu0 0.0
        %2643 = vmatpush1.msra.mxu0 0.0
        %2644 = vmatprep.subr.mxu0 0.0
        %2645 = vmatpush1.msra.mxu0 0.0
        %2646 = vmatprep.subr.mxu0 0.0
        %2647 = vmatpush1.msra.mxu0 0.0
        %2648 = vmatprep.subr.mxu0 0.0
        %2649 = vmatpush1.msra.mxu0 0.0
        %2650 = vmatprep.subr.mxu0 0.0
        %2651 = vmatpush1.msra.mxu0 0.0
        %2652 = vmatprep.subr.mxu0 0.0
        %2653 = vmatpush1.msra.mxu0 0.0
        %2654 = vmatprep.subr.mxu0 0.0
        %2655 = vmatpush1.msra.mxu0 0.0
        %2656 = vmatprep.subr.mxu0 0.0
        %2657 = vmatpush1.msra.mxu0 0.0
        %2658 = vmatprep.subr.mxu0 0.0
        %2659 = vmatpush1.msra.mxu0 0.0
        %2660 = vmatprep.subr.mxu0 0.0
        %2661 = vmatpush1.msra.mxu0 0.0
        %2662 = vmatprep.subr.mxu0 0.0
        %2663 = vmatpush1.msra.mxu0 0.0
        %2664 = vmatprep.subr.mxu0 0.0
        %2665 = vmatpush1.msra.mxu0 0.0
        %2666 = vmatprep.subr.mxu0 0.0
        %2667 = vmatpush1.msra.mxu0 0.0
        %2668 = vmatprep.subr.mxu0 0.0
        %2669 = vmatpush1.msra.mxu0 0.0
        %2670 = vmatprep.subr.mxu0 0.0
        %2671 = vmatpush1.msra.mxu0 0.0
        %2672 = vmatprep.subr.mxu0 0.0
        %2673 = vmatpush1.msra.mxu0 0.0
        %2674 = vmatprep.subr.mxu0 0.0
        %2675 = vmatpush1.msra.mxu0 0.0
        %2676 = vmatprep.subr.mxu0 0.0
        %2677 = vmatpush1.msra.mxu0 0.0
        %2678 = vmatprep.subr.mxu0 0.0
        %2679 = vmatpush1.msra.mxu0 0.0
        %2680 = vmatprep.subr.mxu0 0.0
        %2681 = vmatpush1.msra.mxu0 0.0
        %2682 = vmatprep.subr.mxu0 0.0
        %2683 = vmatpush1.msra.mxu0 0.0
        %2684 = vmatprep.subr.mxu0 0.0
        %2685 = vmatpush1.msra.mxu0 0.0
        %2686 = vmatprep.subr.mxu0 0.0
        %2687 = vmatpush1.msra.mxu0 0.0
        %2688 = vmatprep.subr.mxu0 0.0
        %2689 = vmatpush1.msra.mxu0 0.0
        %2690 = vmatprep.subr.mxu0 0.0
        %2691 = vmatpush1.msra.mxu0 0.0
        %2692 = vmatprep.subr.mxu0 0.0
        %2693 = vmatpush1.msra.mxu0 0.0
        %2694 = vmatprep.subr.mxu0 0.0
        %2695 = vmatpush1.msra.mxu0 0.0
        %2696 = vmatprep.subr.mxu0 0.0
        %2697 = vmatpush1.msra.mxu0 0.0
        %2698 = vmatprep.subr.mxu0 0.0
        %2699 = vmatpush1.msra.mxu0 0.0
        %2700 = vmatprep.subr.mxu0 0.0
        %2701 = vmatpush1.msra.mxu0 0.0
        %2702 = vmatprep.subr.mxu0 0.0
        %2703 = vmatpush1.msra.mxu0 0.0
        %2704 = vmatprep.mubr.f32.mxu0 0.0
        %2705 = vmatmul.mubr.f32.gmra.mrb[0].mxu0 %v2638
        %v2706 = vpop.f32.mrb[0].mxu0
        %v2707 = vadd.f32 0.0, %v2706
        %v2708 = vpop.f32.mrb[0].mxu0
        %v2709 = vadd.f32 0.0, %v2708
        %2710 = vdwg.mxu0
        %2711 = vmatprep.subr.mxu0 %v2632
        %2712 = vmatpush1.msra.mxu0 %v2631
        %2713 = vmatprep.subr.mxu0 0.0
        %2714 = vmatpush1.msra.mxu0 0.0
        %2715 = vmatprep.subr.mxu0 0.0
        %2716 = vmatpush1.msra.mxu0 0.0
        %2717 = vmatprep.subr.mxu0 0.0
        %2718 = vmatpush1.msra.mxu0 0.0
        %2719 = vmatprep.subr.mxu0 0.0
        %2720 = vmatpush1.msra.mxu0 0.0
        %2721 = vmatprep.subr.mxu0 0.0
        %2722 = vmatpush1.msra.mxu0 0.0
        %2723 = vmatprep.subr.mxu0 0.0
        %2724 = vmatpush1.msra.mxu0 0.0
        %2725 = vmatprep.subr.mxu0 0.0
        %2726 = vmatpush1.msra.mxu0 0.0
        %2727 = vmatprep.subr.mxu0 0.0
        %2728 = vmatpush1.msra.mxu0 0.0
        %2729 = vmatprep.subr.mxu0 0.0
        %2730 = vmatpush1.msra.mxu0 0.0
        %2731 = vmatprep.subr.mxu0 0.0
        %2732 = vmatpush1.msra.mxu0 0.0
        %2733 = vmatprep.subr.mxu0 0.0
        %2734 = vmatpush1.msra.mxu0 0.0
        %2735 = vmatprep.subr.mxu0 0.0
        %2736 = vmatpush1.msra.mxu0 0.0
        %2737 = vmatprep.subr.mxu0 0.0
        %2738 = vmatpush1.msra.mxu0 0.0
        %2739 = vmatprep.subr.mxu0 0.0
        %2740 = vmatpush1.msra.mxu0 0.0
        %2741 = vmatprep.subr.mxu0 0.0
        %2742 = vmatpush1.msra.mxu0 0.0
        %2743 = vmatprep.subr.mxu0 0.0
        %2744 = vmatpush1.msra.mxu0 0.0
        %2745 = vmatprep.subr.mxu0 0.0
        %2746 = vmatpush1.msra.mxu0 0.0
        %2747 = vmatprep.subr.mxu0 0.0
        %2748 = vmatpush1.msra.mxu0 0.0
        %2749 = vmatprep.subr.mxu0 0.0
        %2750 = vmatpush1.msra.mxu0 0.0
        %2751 = vmatprep.subr.mxu0 0.0
        %2752 = vmatpush1.msra.mxu0 0.0
        %2753 = vmatprep.subr.mxu0 0.0
        %2754 = vmatpush1.msra.mxu0 0.0
        %2755 = vmatprep.subr.mxu0 0.0
        %2756 = vmatpush1.msra.mxu0 0.0
        %2757 = vmatprep.subr.mxu0 0.0
        %2758 = vmatpush1.msra.mxu0 0.0
        %2759 = vmatprep.subr.mxu0 0.0
        %2760 = vmatpush1.msra.mxu0 0.0
        %2761 = vmatprep.subr.mxu0 0.0
        %2762 = vmatpush1.msra.mxu0 0.0
        %2763 = vmatprep.subr.mxu0 0.0
        %2764 = vmatpush1.msra.mxu0 0.0
        %2765 = vmatprep.subr.mxu0 0.0
        %2766 = vmatpush1.msra.mxu0 0.0
        %2767 = vmatprep.subr.mxu0 0.0
        %2768 = vmatpush1.msra.mxu0 0.0
        %2769 = vmatprep.subr.mxu0 0.0
        %2770 = vmatpush1.msra.mxu0 0.0
        %2771 = vmatprep.subr.mxu0 0.0
        %2772 = vmatpush1.msra.mxu0 0.0
        %2773 = vmatprep.subr.mxu0 0.0
        %2774 = vmatpush1.msra.mxu0 0.0
        %2775 = vmatprep.mubr.f32.mxu0 0.0
        %2776 = vmatmul.mubr.f32.gmra.mrb[0].mxu0 %v2638
        %v2777 = vpop.f32.mrb[0].mxu0
        %v2778 = vadd.f32 0.0, %v2777
        %v2779 = vpop.f32.mrb[0].mxu0
        %v2780 = vadd.f32 0.0, %v2779
        %2781 = vdwg.mxu0
        %v2782 = vadd.f32 %v2602, %v2707
        %v2783 = vadd.f32 %v2603, %v2709
        %v2784 = vadd.f32 %v2604, %v2778
        %v2785 = vadd.f32 %v2605, %v2780
        %s2786 = scalar_lea.vmem %s2, 112
        %v2787 = vld [vmem:[%s2786] sm:$0xff]
        %2788 = vrot.lane.b32.xlu0 %v2608, 126
        %v2789 = vpop.permute.xlu0 %2788
        %2790 = vrot.lane.b32.xlu0 %v2609, 126
        %v2791 = vpop.permute.xlu0 %2790
        %2792 = vrot.lane.b32.xlu0 %v2610, 126
        %v2793 = vpop.permute.xlu0 %2792
        %2794 = vrot.lane.b32.xlu0 %v2611, 126
        %v2795 = vpop.permute.xlu0 %2794
        %2796 = vrot.lane.b32.xlu0 %v2612, 126
        %v2797 = vpop.permute.xlu0 %2796
        %vm2798 = vcmask 1031168
        %v2799 = vsel %vm2798, %v2789, %v2791
        %v2800 = vsel %vm2798, %v2791, %v2793
        %v2801 = vsel %vm2798, %v2793, %v2795
        %v2802 = vsel %vm2798, %v2795, %v2797
        %v2808 = vsel %vm445, %v2787, 0
        %2810 = vmatprep.subr.mxu0 %v2800
        %2811 = vmatpush1.msra.mxu0 %v2799
        %2812 = vmatprep.subr.mxu0 0.0
        %2813 = vmatpush1.msra.mxu0 0.0
        %2814 = vmatprep.subr.mxu0 0.0
        %2815 = vmatpush1.msra.mxu0 0.0
        %2816 = vmatprep.subr.mxu0 0.0
        %2817 = vmatpush1.msra.mxu0 0.0
        %2818 = vmatprep.subr.mxu0 0.0
        %2819 = vmatpush1.msra.mxu0 0.0
        %2820 = vmatprep.subr.mxu0 0.0
        %2821 = vmatpush1.msra.mxu0 0.0
        %2822 = vmatprep.subr.mxu0 0.0
        %2823 = vmatpush1.msra.mxu0 0.0
        %2824 = vmatprep.subr.mxu0 0.0
        %2825 = vmatpush1.msra.mxu0 0.0
        %2826 = vmatprep.subr.mxu0 0.0
        %2827 = vmatpush1.msra.mxu0 0.0
        %2828 = vmatprep.subr.mxu0 0.0
        %2829 = vmatpush1.msra.mxu0 0.0
        %2830 = vmatprep.subr.mxu0 0.0
        %2831 = vmatpush1.msra.mxu0 0.0
        %2832 = vmatprep.subr.mxu0 0.0
        %2833 = vmatpush1.msra.mxu0 0.0
        %2834 = vmatprep.subr.mxu0 0.0
        %2835 = vmatpush1.msra.mxu0 0.0
        %2836 = vmatprep.subr.mxu0 0.0
        %2837 = vmatpush1.msra.mxu0 0.0
        %2838 = vmatprep.subr.mxu0 0.0
        %2839 = vmatpush1.msra.mxu0 0.0
        %2840 = vmatprep.subr.mxu0 0.0
        %2841 = vmatpush1.msra.mxu0 0.0
        %2842 = vmatprep.subr.mxu0 0.0
        %2843 = vmatpush1.msra.mxu0 0.0
        %2844 = vmatprep.subr.mxu0 0.0
        %2845 = vmatpush1.msra.mxu0 0.0
        %2846 = vmatprep.subr.mxu0 0.0
        %2847 = vmatpush1.msra.mxu0 0.0
        %2848 = vmatprep.subr.mxu0 0.0
        %2849 = vmatpush1.msra.mxu0 0.0
        %2850 = vmatprep.subr.mxu0 0.0
        %2851 = vmatpush1.msra.mxu0 0.0
        %2852 = vmatprep.subr.mxu0 0.0
        %2853 = vmatpush1.msra.mxu0 0.0
        %2854 = vmatprep.subr.mxu0 0.0
        %2855 = vmatpush1.msra.mxu0 0.0
        %2856 = vmatprep.subr.mxu0 0.0
        %2857 = vmatpush1.msra.mxu0 0.0
        %2858 = vmatprep.subr.mxu0 0.0
        %2859 = vmatpush1.msra.mxu0 0.0
        %2860 = vmatprep.subr.mxu0 0.0
        %2861 = vmatpush1.msra.mxu0 0.0
        %2862 = vmatprep.subr.mxu0 0.0
        %2863 = vmatpush1.msra.mxu0 0.0
        %2864 = vmatprep.subr.mxu0 0.0
        %2865 = vmatpush1.msra.mxu0 0.0
        %2866 = vmatprep.subr.mxu0 0.0
        %2867 = vmatpush1.msra.mxu0 0.0
        %2868 = vmatprep.subr.mxu0 0.0
        %2869 = vmatpush1.msra.mxu0 0.0
        %2870 = vmatprep.subr.mxu0 0.0
        %2871 = vmatpush1.msra.mxu0 0.0
        %2872 = vmatprep.subr.mxu0 0.0
        %2873 = vmatpush1.msra.mxu0 0.0
        %2874 = vmatprep.mubr.f32.mxu0 0.0
        %2875 = vmatmul.mubr.f32.gmra.mrb[0].mxu0 %v2808
        %v2876 = vpop.f32.mrb[0].mxu0
        %v2877 = vadd.f32 0.0, %v2876
        %v2878 = vpop.f32.mrb[0].mxu0
        %v2879 = vadd.f32 0.0, %v2878
        %2880 = vdwg.mxu0
        %2881 = vmatprep.subr.mxu0 %v2802
        %2882 = vmatpush1.msra.mxu0 %v2801
        %2883 = vmatprep.subr.mxu0 0.0
        %2884 = vmatpush1.msra.mxu0 0.0
        %2885 = vmatprep.subr.mxu0 0.0
        %2886 = vmatpush1.msra.mxu0 0.0
        %2887 = vmatprep.subr.mxu0 0.0
        %2888 = vmatpush1.msra.mxu0 0.0
        %2889 = vmatprep.subr.mxu0 0.0
        %2890 = vmatpush1.msra.mxu0 0.0
        %2891 = vmatprep.subr.mxu0 0.0
        %2892 = vmatpush1.msra.mxu0 0.0
        %2893 = vmatprep.subr.mxu0 0.0
        %2894 = vmatpush1.msra.mxu0 0.0
        %2895 = vmatprep.subr.mxu0 0.0
        %2896 = vmatpush1.msra.mxu0 0.0
        %2897 = vmatprep.subr.mxu0 0.0
        %2898 = vmatpush1.msra.mxu0 0.0
        %2899 = vmatprep.subr.mxu0 0.0
        %2900 = vmatpush1.msra.mxu0 0.0
        %2901 = vmatprep.subr.mxu0 0.0
        %2902 = vmatpush1.msra.mxu0 0.0
        %2903 = vmatprep.subr.mxu0 0.0
        %2904 = vmatpush1.msra.mxu0 0.0
        %2905 = vmatprep.subr.mxu0 0.0
        %2906 = vmatpush1.msra.mxu0 0.0
        %2907 = vmatprep.subr.mxu0 0.0
        %2908 = vmatpush1.msra.mxu0 0.0
        %2909 = vmatprep.subr.mxu0 0.0
        %2910 = vmatpush1.msra.mxu0 0.0
        %2911 = vmatprep.subr.mxu0 0.0
        %2912 = vmatpush1.msra.mxu0 0.0
        %2913 = vmatprep.subr.mxu0 0.0
        %2914 = vmatpush1.msra.mxu0 0.0
        %2915 = vmatprep.subr.mxu0 0.0
        %2916 = vmatpush1.msra.mxu0 0.0
        %2917 = vmatprep.subr.mxu0 0.0
        %2918 = vmatpush1.msra.mxu0 0.0
        %2919 = vmatprep.subr.mxu0 0.0
        %2920 = vmatpush1.msra.mxu0 0.0
        %2921 = vmatprep.subr.mxu0 0.0
        %2922 = vmatpush1.msra.mxu0 0.0
        %2923 = vmatprep.subr.mxu0 0.0
        %2924 = vmatpush1.msra.mxu0 0.0
        %2925 = vmatprep.subr.mxu0 0.0
        %2926 = vmatpush1.msra.mxu0 0.0
        %2927 = vmatprep.subr.mxu0 0.0
        %2928 = vmatpush1.msra.mxu0 0.0
        %2929 = vmatprep.subr.mxu0 0.0
        %2930 = vmatpush1.msra.mxu0 0.0
        %2931 = vmatprep.subr.mxu0 0.0
        %2932 = vmatpush1.msra.mxu0 0.0
        %2933 = vmatprep.subr.mxu0 0.0
        %2934 = vmatpush1.msra.mxu0 0.0
        %2935 = vmatprep.subr.mxu0 0.0
        %2936 = vmatpush1.msra.mxu0 0.0
        %2937 = vmatprep.subr.mxu0 0.0
        %2938 = vmatpush1.msra.mxu0 0.0
        %2939 = vmatprep.subr.mxu0 0.0
        %2940 = vmatpush1.msra.mxu0 0.0
        %2941 = vmatprep.subr.mxu0 0.0
        %2942 = vmatpush1.msra.mxu0 0.0
        %2943 = vmatprep.subr.mxu0 0.0
        %2944 = vmatpush1.msra.mxu0 0.0
        %2945 = vmatprep.mubr.f32.mxu0 0.0
        %2946 = vmatmul.mubr.f32.gmra.mrb[0].mxu0 %v2808
        %v2947 = vpop.f32.mrb[0].mxu0
        %v2948 = vadd.f32 0.0, %v2947
        %v2949 = vpop.f32.mrb[0].mxu0
        %v2950 = vadd.f32 0.0, %v2949
        %2951 = vdwg.mxu0
        %v2952 = vadd.f32 %v2782, %v2877
        %v2953 = vadd.f32 %v2783, %v2879
        %v2954 = vadd.f32 %v2784, %v2948
        %v2955 = vadd.f32 %v2785, %v2950
        %s2956 = scalar_lea.vmem %s2, 120
        %v2957 = vld [vmem:[%s2956] sm:$0xff]
        %2958 = vrot.lane.b32.xlu0 %v2608, 110
        %v2959 = vpop.permute.xlu0 %2958
        %2960 = vrot.lane.b32.xlu0 %v2609, 110
        %v2961 = vpop.permute.xlu0 %2960
        %2962 = vrot.lane.b32.xlu0 %v2610, 110
        %v2963 = vpop.permute.xlu0 %2962
        %2964 = vrot.lane.b32.xlu0 %v2611, 110
        %v2965 = vpop.permute.xlu0 %2964
        %2966 = vrot.lane.b32.xlu0 %v2612, 110
        %v2967 = vpop.permute.xlu0 %2966
        %vm2968 = vcmask 900096
        %v2969 = vsel %vm2968, %v2959, %v2961
        %v2970 = vsel %vm2968, %v2961, %v2963
        %v2971 = vsel %vm2968, %v2963, %v2965
        %v2972 = vsel %vm2968, %v2965, %v2967
        %v2978 = vsel %vm445, %v2957, 0
        %2980 = vmatprep.subr.mxu0 %v2970
        %2981 = vmatpush1.msra.mxu0 %v2969
        %2982 = vmatprep.subr.mxu0 0.0
        %2983 = vmatpush1.msra.mxu0 0.0
        %2984 = vmatprep.subr.mxu0 0.0
        %2985 = vmatpush1.msra.mxu0 0.0
        %2986 = vmatprep.subr.mxu0 0.0
        %2987 = vmatpush1.msra.mxu0 0.0
        %2988 = vmatprep.subr.mxu0 0.0
        %2989 = vmatpush1.msra.mxu0 0.0
        %2990 = vmatprep.subr.mxu0 0.0
        %2991 = vmatpush1.msra.mxu0 0.0
        %2992 = vmatprep.subr.mxu0 0.0
        %2993 = vmatpush1.msra.mxu0 0.0
        %2994 = vmatprep.subr.mxu0 0.0
        %2995 = vmatpush1.msra.mxu0 0.0
        %2996 = vmatprep.subr.mxu0 0.0
        %2997 = vmatpush1.msra.mxu0 0.0
        %2998 = vmatprep.subr.mxu0 0.0
        %2999 = vmatpush1.msra.mxu0 0.0
        %3000 = vmatprep.subr.mxu0 0.0
        %3001 = vmatpush1.msra.mxu0 0.0
        %3002 = vmatprep.subr.mxu0 0.0
        %3003 = vmatpush1.msra.mxu0 0.0
        %3004 = vmatprep.subr.mxu0 0.0
        %3005 = vmatpush1.msra.mxu0 0.0
        %3006 = vmatprep.subr.mxu0 0.0
        %3007 = vmatpush1.msra.mxu0 0.0
        %3008 = vmatprep.subr.mxu0 0.0
        %3009 = vmatpush1.msra.mxu0 0.0
        %3010 = vmatprep.subr.mxu0 0.0
        %3011 = vmatpush1.msra.mxu0 0.0
        %3012 = vmatprep.subr.mxu0 0.0
        %3013 = vmatpush1.msra.mxu0 0.0
        %3014 = vmatprep.subr.mxu0 0.0
        %3015 = vmatpush1.msra.mxu0 0.0
        %3016 = vmatprep.subr.mxu0 0.0
        %3017 = vmatpush1.msra.mxu0 0.0
        %3018 = vmatprep.subr.mxu0 0.0
        %3019 = vmatpush1.msra.mxu0 0.0
        %3020 = vmatprep.subr.mxu0 0.0
        %3021 = vmatpush1.msra.mxu0 0.0
        %3022 = vmatprep.subr.mxu0 0.0
        %3023 = vmatpush1.msra.mxu0 0.0
        %3024 = vmatprep.subr.mxu0 0.0
        %3025 = vmatpush1.msra.mxu0 0.0
        %3026 = vmatprep.subr.mxu0 0.0
        %3027 = vmatpush1.msra.mxu0 0.0
        %3028 = vmatprep.subr.mxu0 0.0
        %3029 = vmatpush1.msra.mxu0 0.0
        %3030 = vmatprep.subr.mxu0 0.0
        %3031 = vmatpush1.msra.mxu0 0.0
        %3032 = vmatprep.subr.mxu0 0.0
        %3033 = vmatpush1.msra.mxu0 0.0
        %3034 = vmatprep.subr.mxu0 0.0
        %3035 = vmatpush1.msra.mxu0 0.0
        %3036 = vmatprep.subr.mxu0 0.0
        %3037 = vmatpush1.msra.mxu0 0.0
        %3038 = vmatprep.subr.mxu0 0.0
        %3039 = vmatpush1.msra.mxu0 0.0
        %3040 = vmatprep.subr.mxu0 0.0
        %3041 = vmatpush1.msra.mxu0 0.0
        %3042 = vmatprep.subr.mxu0 0.0
        %3043 = vmatpush1.msra.mxu0 0.0
        %3044 = vmatprep.mubr.f32.mxu0 0.0
        %3045 = vmatmul.mubr.f32.gmra.mrb[0].mxu0 %v2978
        %v3046 = vpop.f32.mrb[0].mxu0
        %v3047 = vadd.f32 0.0, %v3046
        %v3048 = vpop.f32.mrb[0].mxu0
        %v3049 = vadd.f32 0.0, %v3048
        %3050 = vdwg.mxu0
        %3051 = vmatprep.subr.mxu0 %v2972
        %3052 = vmatpush1.msra.mxu0 %v2971
        %3053 = vmatprep.subr.mxu0 0.0
        %3054 = vmatpush1.msra.mxu0 0.0
        %3055 = vmatprep.subr.mxu0 0.0
        %3056 = vmatpush1.msra.mxu0 0.0
        %3057 = vmatprep.subr.mxu0 0.0
        %3058 = vmatpush1.msra.mxu0 0.0
        %3059 = vmatprep.subr.mxu0 0.0
        %3060 = vmatpush1.msra.mxu0 0.0
        %3061 = vmatprep.subr.mxu0 0.0
        %3062 = vmatpush1.msra.mxu0 0.0
        %3063 = vmatprep.subr.mxu0 0.0
        %3064 = vmatpush1.msra.mxu0 0.0
        %3065 = vmatprep.subr.mxu0 0.0
        %3066 = vmatpush1.msra.mxu0 0.0
        %3067 = vmatprep.subr.mxu0 0.0
        %3068 = vmatpush1.msra.mxu0 0.0
        %3069 = vmatprep.subr.mxu0 0.0
        %3070 = vmatpush1.msra.mxu0 0.0
        %3071 = vmatprep.subr.mxu0 0.0
        %3072 = vmatpush1.msra.mxu0 0.0
        %3073 = vmatprep.subr.mxu0 0.0
        %3074 = vmatpush1.msra.mxu0 0.0
        %3075 = vmatprep.subr.mxu0 0.0
        %3076 = vmatpush1.msra.mxu0 0.0
        %3077 = vmatprep.subr.mxu0 0.0
        %3078 = vmatpush1.msra.mxu0 0.0
        %3079 = vmatprep.subr.mxu0 0.0
        %3080 = vmatpush1.msra.mxu0 0.0
        %3081 = vmatprep.subr.mxu0 0.0
        %3082 = vmatpush1.msra.mxu0 0.0
        %3083 = vmatprep.subr.mxu0 0.0
        %3084 = vmatpush1.msra.mxu0 0.0
        %3085 = vmatprep.subr.mxu0 0.0
        %3086 = vmatpush1.msra.mxu0 0.0
        %3087 = vmatprep.subr.mxu0 0.0
        %3088 = vmatpush1.msra.mxu0 0.0
        %3089 = vmatprep.subr.mxu0 0.0
        %3090 = vmatpush1.msra.mxu0 0.0
        %3091 = vmatprep.subr.mxu0 0.0
        %3092 = vmatpush1.msra.mxu0 0.0
        %3093 = vmatprep.subr.mxu0 0.0
        %3094 = vmatpush1.msra.mxu0 0.0
        %3095 = vmatprep.subr.mxu0 0.0
        %3096 = vmatpush1.msra.mxu0 0.0
        %3097 = vmatprep.subr.mxu0 0.0
        %3098 = vmatpush1.msra.mxu0 0.0
        %3099 = vmatprep.subr.mxu0 0.0
        %3100 = vmatpush1.msra.mxu0 0.0
        %3101 = vmatprep.subr.mxu0 0.0
        %3102 = vmatpush1.msra.mxu0 0.0
        %3103 = vmatprep.subr.mxu0 0.0
        %3104 = vmatpush1.msra.mxu0 0.0
        %3105 = vmatprep.subr.mxu0 0.0
        %3106 = vmatpush1.msra.mxu0 0.0
        %3107 = vmatprep.subr.mxu0 0.0
        %3108 = vmatpush1.msra.mxu0 0.0
        %3109 = vmatprep.subr.mxu0 0.0
        %3110 = vmatpush1.msra.mxu0 0.0
        %3111 = vmatprep.subr.mxu0 0.0
        %3112 = vmatpush1.msra.mxu0 0.0
        %3113 = vmatprep.subr.mxu0 0.0
        %3114 = vmatpush1.msra.mxu0 0.0
        %3115 = vmatprep.mubr.f32.mxu0 0.0
        %3116 = vmatmul.mubr.f32.gmra.mrb[0].mxu0 %v2978
        %v3117 = vpop.f32.mrb[0].mxu0
        %v3118 = vadd.f32 0.0, %v3117
        %v3119 = vpop.f32.mrb[0].mxu0
        %v3120 = vadd.f32 0.0, %v3119
        %3121 = vdwg.mxu0
        %v3122 = vadd.f32 %v2952, %v3047
        %v3123 = vadd.f32 %v2953, %v3049
        %v3124 = vadd.f32 %v2954, %v3118
        %v3125 = vadd.f32 %v2955, %v3120
        %s3126 = scalar_lea.vmem %s2, 128
        %v3127 = vld [vmem:[%s3126] sm:$0xff]
        %3128 = vrot.lane.b32.xlu0 %v2608, 109
        %v3129 = vpop.permute.xlu0 %3128
        %3130 = vrot.lane.b32.xlu0 %v2609, 109
        %v3131 = vpop.permute.xlu0 %3130
        %3132 = vrot.lane.b32.xlu0 %v2610, 109
        %v3133 = vpop.permute.xlu0 %3132
        %3134 = vrot.lane.b32.xlu0 %v2611, 109
        %v3135 = vpop.permute.xlu0 %3134
        %3136 = vrot.lane.b32.xlu0 %v2612, 109
        %v3137 = vpop.permute.xlu0 %3136
        %vm3138 = vcmask 891904
        %v3139 = vsel %vm3138, %v3129, %v3131
        %v3140 = vsel %vm3138, %v3131, %v3133
        %v3141 = vsel %vm3138, %v3133, %v3135
        %v3142 = vsel %vm3138, %v3135, %v3137
        %v3148 = vsel %vm445, %v3127, 0
        %3150 = vmatprep.subr.mxu0 %v3140
        %3151 = vmatpush1.msra.mxu0 %v3139
        %3152 = vmatprep.subr.mxu0 0.0
        %3153 = vmatpush1.msra.mxu0 0.0
        %3154 = vmatprep.subr.mxu0 0.0
        %3155 = vmatpush1.msra.mxu0 0.0
        %3156 = vmatprep.subr.mxu0 0.0
        %3157 = vmatpush1.msra.mxu0 0.0
        %3158 = vmatprep.subr.mxu0 0.0
        %3159 = vmatpush1.msra.mxu0 0.0
        %3160 = vmatprep.subr.mxu0 0.0
        %3161 = vmatpush1.msra.mxu0 0.0
        %3162 = vmatprep.subr.mxu0 0.0
        %3163 = vmatpush1.msra.mxu0 0.0
        %3164 = vmatprep.subr.mxu0 0.0
        %3165 = vmatpush1.msra.mxu0 0.0
        %3166 = vmatprep.subr.mxu0 0.0
        %3167 = vmatpush1.msra.mxu0 0.0
        %3168 = vmatprep.subr.mxu0 0.0
        %3169 = vmatpush1.msra.mxu0 0.0
        %3170 = vmatprep.subr.mxu0 0.0
        %3171 = vmatpush1.msra.mxu0 0.0
        %3172 = vmatprep.subr.mxu0 0.0
        %3173 = vmatpush1.msra.mxu0 0.0
        %3174 = vmatprep.subr.mxu0 0.0
        %3175 = vmatpush1.msra.mxu0 0.0
        %3176 = vmatprep.subr.mxu0 0.0
        %3177 = vmatpush1.msra.mxu0 0.0
        %3178 = vmatprep.subr.mxu0 0.0
        %3179 = vmatpush1.msra.mxu0 0.0
        %3180 = vmatprep.subr.mxu0 0.0
        %3181 = vmatpush1.msra.mxu0 0.0
        %3182 = vmatprep.subr.mxu0 0.0
        %3183 = vmatpush1.msra.mxu0 0.0
        %3184 = vmatprep.subr.mxu0 0.0
        %3185 = vmatpush1.msra.mxu0 0.0
        %3186 = vmatprep.subr.mxu0 0.0
        %3187 = vmatpush1.msra.mxu0 0.0
        %3188 = vmatprep.subr.mxu0 0.0
        %3189 = vmatpush1.msra.mxu0 0.0
        %3190 = vmatprep.subr.mxu0 0.0
        %3191 = vmatpush1.msra.mxu0 0.0
        %3192 = vmatprep.subr.mxu0 0.0
        %3193 = vmatpush1.msra.mxu0 0.0
        %3194 = vmatprep.subr.mxu0 0.0
        %3195 = vmatpush1.msra.mxu0 0.0
        %3196 = vmatprep.subr.mxu0 0.0
        %3197 = vmatpush1.msra.mxu0 0.0
        %3198 = vmatprep.subr.mxu0 0.0
        %3199 = vmatpush1.msra.mxu0 0.0
        %3200 = vmatprep.subr.mxu0 0.0
        %3201 = vmatpush1.msra.mxu0 0.0
        %3202 = vmatprep.subr.mxu0 0.0
        %3203 = vmatpush1.msra.mxu0 0.0
        %3204 = vmatprep.subr.mxu0 0.0
        %3205 = vmatpush1.msra.mxu0 0.0
        %3206 = vmatprep.subr.mxu0 0.0
        %3207 = vmatpush1.msra.mxu0 0.0
        %3208 = vmatprep.subr.mxu0 0.0
        %3209 = vmatpush1.msra.mxu0 0.0
        %3210 = vmatprep.subr.mxu0 0.0
        %3211 = vmatpush1.msra.mxu0 0.0
        %3212 = vmatprep.subr.mxu0 0.0
        %3213 = vmatpush1.msra.mxu0 0.0
        %3214 = vmatprep.mubr.f32.mxu0 0.0
        %3215 = vmatmul.mubr.f32.gmra.mrb[0].mxu0 %v3148
        %v3216 = vpop.f32.mrb[0].mxu0
        %v3217 = vadd.f32 0.0, %v3216
        %v3218 = vpop.f32.mrb[0].mxu0
        %v3219 = vadd.f32 0.0, %v3218
        %3220 = vdwg.mxu0
        %3221 = vmatprep.subr.mxu0 %v3142
        %3222 = vmatpush1.msra.mxu0 %v3141
        %3223 = vmatprep.subr.mxu0 0.0
        %3224 = vmatpush1.msra.mxu0 0.0
        %3225 = vmatprep.subr.mxu0 0.0
        %3226 = vmatpush1.msra.mxu0 0.0
        %3227 = vmatprep.subr.mxu0 0.0
        %3228 = vmatpush1.msra.mxu0 0.0
        %3229 = vmatprep.subr.mxu0 0.0
        %3230 = vmatpush1.msra.mxu0 0.0
        %3231 = vmatprep.subr.mxu0 0.0
        %3232 = vmatpush1.msra.mxu0 0.0
        %3233 = vmatprep.subr.mxu0 0.0
        %3234 = vmatpush1.msra.mxu0 0.0
        %3235 = vmatprep.subr.mxu0 0.0
        %3236 = vmatpush1.msra.mxu0 0.0
        %3237 = vmatprep.subr.mxu0 0.0
        %3238 = vmatpush1.msra.mxu0 0.0
        %3239 = vmatprep.subr.mxu0 0.0
        %3240 = vmatpush1.msra.mxu0 0.0
        %3241 = vmatprep.subr.mxu0 0.0
        %3242 = vmatpush1.msra.mxu0 0.0
        %3243 = vmatprep.subr.mxu0 0.0
        %3244 = vmatpush1.msra.mxu0 0.0
        %3245 = vmatprep.subr.mxu0 0.0
        %3246 = vmatpush1.msra.mxu0 0.0
        %3247 = vmatprep.subr.mxu0 0.0
        %3248 = vmatpush1.msra.mxu0 0.0
        %3249 = vmatprep.subr.mxu0 0.0
        %3250 = vmatpush1.msra.mxu0 0.0
        %3251 = vmatprep.subr.mxu0 0.0
        %3252 = vmatpush1.msra.mxu0 0.0
        %3253 = vmatprep.subr.mxu0 0.0
        %3254 = vmatpush1.msra.mxu0 0.0
        %3255 = vmatprep.subr.mxu0 0.0
        %3256 = vmatpush1.msra.mxu0 0.0
        %3257 = vmatprep.subr.mxu0 0.0
        %3258 = vmatpush1.msra.mxu0 0.0
        %3259 = vmatprep.subr.mxu0 0.0
        %3260 = vmatpush1.msra.mxu0 0.0
        %3261 = vmatprep.subr.mxu0 0.0
        %3262 = vmatpush1.msra.mxu0 0.0
        %3263 = vmatprep.subr.mxu0 0.0
        %3264 = vmatpush1.msra.mxu0 0.0
        %3265 = vmatprep.subr.mxu0 0.0
        %3266 = vmatpush1.msra.mxu0 0.0
        %3267 = vmatprep.subr.mxu0 0.0
        %3268 = vmatpush1.msra.mxu0 0.0
        %3269 = vmatprep.subr.mxu0 0.0
        %3270 = vmatpush1.msra.mxu0 0.0
        %3271 = vmatprep.subr.mxu0 0.0
        %3272 = vmatpush1.msra.mxu0 0.0
        %3273 = vmatprep.subr.mxu0 0.0
        %3274 = vmatpush1.msra.mxu0 0.0
        %3275 = vmatprep.subr.mxu0 0.0
        %3276 = vmatpush1.msra.mxu0 0.0
        %3277 = vmatprep.subr.mxu0 0.0
        %3278 = vmatpush1.msra.mxu0 0.0
        %3279 = vmatprep.subr.mxu0 0.0
        %3280 = vmatpush1.msra.mxu0 0.0
        %3281 = vmatprep.subr.mxu0 0.0
        %3282 = vmatpush1.msra.mxu0 0.0
        %3283 = vmatprep.subr.mxu0 0.0
        %3284 = vmatpush1.msra.mxu0 0.0
        %3285 = vmatprep.mubr.f32.mxu0 0.0
        %3286 = vmatmul.mubr.f32.gmra.mrb[0].mxu0 %v3148
        %v3287 = vpop.f32.mrb[0].mxu0
        %v3288 = vadd.f32 0.0, %v3287
        %v3289 = vpop.f32.mrb[0].mxu0
        %v3290 = vadd.f32 0.0, %v3289
        %3291 = vdwg.mxu0
        %v3292 = vadd.f32 %v3122, %v3217
        %v3293 = vadd.f32 %v3123, %v3219
        %v3294 = vadd.f32 %v3124, %v3288
        %v3295 = vadd.f32 %v3125, %v3290
        %s3296 = scalar_lea.vmem %s2, 136
        %v3297 = vld [vmem:[%s3296] sm:$0xff]
        %3298 = vrot.lane.b32.xlu0 %v2608, 108
        %v3299 = vpop.permute.xlu0 %3298
        %3300 = vrot.lane.b32.xlu0 %v2609, 108
        %v3301 = vpop.permute.xlu0 %3300
        %3302 = vrot.lane.b32.xlu0 %v2610, 108
        %v3303 = vpop.permute.xlu0 %3302
        %3304 = vrot.lane.b32.xlu0 %v2611, 108
        %v3305 = vpop.permute.xlu0 %3304
        %3306 = vrot.lane.b32.xlu0 %v2612, 108
        %v3307 = vpop.permute.xlu0 %3306
        %vm3308 = vcmask 883712
        %v3309 = vsel %vm3308, %v3299, %v3301
        %v3310 = vsel %vm3308, %v3301, %v3303
        %v3311 = vsel %vm3308, %v3303, %v3305
        %v3312 = vsel %vm3308, %v3305, %v3307
        %v3318 = vsel %vm445, %v3297, 0
        %3320 = vmatprep.subr.mxu0 %v3310
        %3321 = vmatpush1.msra.mxu0 %v3309
        %3322 = vmatprep.subr.mxu0 0.0
        %3323 = vmatpush1.msra.mxu0 0.0
        %3324 = vmatprep.subr.mxu0 0.0
        %3325 = vmatpush1.msra.mxu0 0.0
        %3326 = vmatprep.subr.mxu0 0.0
        %3327 = vmatpush1.msra.mxu0 0.0
        %3328 = vmatprep.subr.mxu0 0.0
        %3329 = vmatpush1.msra.mxu0 0.0
        %3330 = vmatprep.subr.mxu0 0.0
        %3331 = vmatpush1.msra.mxu0 0.0
        %3332 = vmatprep.subr.mxu0 0.0
        %3333 = vmatpush1.msra.mxu0 0.0
        %3334 = vmatprep.subr.mxu0 0.0
        %3335 = vmatpush1.msra.mxu0 0.0
        %3336 = vmatprep.subr.mxu0 0.0
        %3337 = vmatpush1.msra.mxu0 0.0
        %3338 = vmatprep.subr.mxu0 0.0
        %3339 = vmatpush1.msra.mxu0 0.0
        %3340 = vmatprep.subr.mxu0 0.0
        %3341 = vmatpush1.msra.mxu0 0.0
        %3342 = vmatprep.subr.mxu0 0.0
        %3343 = vmatpush1.msra.mxu0 0.0
        %3344 = vmatprep.subr.mxu0 0.0
        %3345 = vmatpush1.msra.mxu0 0.0
        %3346 = vmatprep.subr.mxu0 0.0
        %3347 = vmatpush1.msra.mxu0 0.0
        %3348 = vmatprep.subr.mxu0 0.0
        %3349 = vmatpush1.msra.mxu0 0.0
        %3350 = vmatprep.subr.mxu0 0.0
        %3351 = vmatpush1.msra.mxu0 0.0
        %3352 = vmatprep.subr.mxu0 0.0
        %3353 = vmatpush1.msra.mxu0 0.0
        %3354 = vmatprep.subr.mxu0 0.0
        %3355 = vmatpush1.msra.mxu0 0.0
        %3356 = vmatprep.subr.mxu0 0.0
        %3357 = vmatpush1.msra.mxu0 0.0
        %3358 = vmatprep.subr.mxu0 0.0
        %3359 = vmatpush1.msra.mxu0 0.0
        %3360 = vmatprep.subr.mxu0 0.0
        %3361 = vmatpush1.msra.mxu0 0.0
        %3362 = vmatprep.subr.mxu0 0.0
        %3363 = vmatpush1.msra.mxu0 0.0
        %3364 = vmatprep.subr.mxu0 0.0
        %3365 = vmatpush1.msra.mxu0 0.0
        %3366 = vmatprep.subr.mxu0 0.0
        %3367 = vmatpush1.msra.mxu0 0.0
        %3368 = vmatprep.subr.mxu0 0.0
        %3369 = vmatpush1.msra.mxu0 0.0
        %3370 = vmatprep.subr.mxu0 0.0
        %3371 = vmatpush1.msra.mxu0 0.0
        %3372 = vmatprep.subr.mxu0 0.0
        %3373 = vmatpush1.msra.mxu0 0.0
        %3374 = vmatprep.subr.mxu0 0.0
        %3375 = vmatpush1.msra.mxu0 0.0
        %3376 = vmatprep.subr.mxu0 0.0
        %3377 = vmatpush1.msra.mxu0 0.0
        %3378 = vmatprep.subr.mxu0 0.0
        %3379 = vmatpush1.msra.mxu0 0.0
        %3380 = vmatprep.subr.mxu0 0.0
        %3381 = vmatpush1.msra.mxu0 0.0
        %3382 = vmatprep.subr.mxu0 0.0
        %3383 = vmatpush1.msra.mxu0 0.0
        %3384 = vmatprep.mubr.f32.mxu0 0.0
        %3385 = vmatmul.mubr.f32.gmra.mrb[0].mxu0 %v3318
        %v3386 = vpop.f32.mrb[0].mxu0
        %v3387 = vadd.f32 0.0, %v3386
        %v3388 = vpop.f32.mrb[0].mxu0
        %v3389 = vadd.f32 0.0, %v3388
        %3390 = vdwg.mxu0
        %3391 = vmatprep.subr.mxu0 %v3312
        %3392 = vmatpush1.msra.mxu0 %v3311
        %3393 = vmatprep.subr.mxu0 0.0
        %3394 = vmatpush1.msra.mxu0 0.0
        %3395 = vmatprep.subr.mxu0 0.0
        %3396 = vmatpush1.msra.mxu0 0.0
        %3397 = vmatprep.subr.mxu0 0.0
        %3398 = vmatpush1.msra.mxu0 0.0
        %3399 = vmatprep.subr.mxu0 0.0
        %3400 = vmatpush1.msra.mxu0 0.0
        %3401 = vmatprep.subr.mxu0 0.0
        %3402 = vmatpush1.msra.mxu0 0.0
        %3403 = vmatprep.subr.mxu0 0.0
        %3404 = vmatpush1.msra.mxu0 0.0
        %3405 = vmatprep.subr.mxu0 0.0
        %3406 = vmatpush1.msra.mxu0 0.0
        %3407 = vmatprep.subr.mxu0 0.0
        %3408 = vmatpush1.msra.mxu0 0.0
        %3409 = vmatprep.subr.mxu0 0.0
        %3410 = vmatpush1.msra.mxu0 0.0
        %3411 = vmatprep.subr.mxu0 0.0
        %3412 = vmatpush1.msra.mxu0 0.0
        %3413 = vmatprep.subr.mxu0 0.0
        %3414 = vmatpush1.msra.mxu0 0.0
        %3415 = vmatprep.subr.mxu0 0.0
        %3416 = vmatpush1.msra.mxu0 0.0
        %3417 = vmatprep.subr.mxu0 0.0
        %3418 = vmatpush1.msra.mxu0 0.0
        %3419 = vmatprep.subr.mxu0 0.0
        %3420 = vmatpush1.msra.mxu0 0.0
        %3421 = vmatprep.subr.mxu0 0.0
        %3422 = vmatpush1.msra.mxu0 0.0
        %3423 = vmatprep.subr.mxu0 0.0
        %3424 = vmatpush1.msra.mxu0 0.0
        %3425 = vmatprep.subr.mxu0 0.0
        %3426 = vmatpush1.msra.mxu0 0.0
        %3427 = vmatprep.subr.mxu0 0.0
        %3428 = vmatpush1.msra.mxu0 0.0
        %3429 = vmatprep.subr.mxu0 0.0
        %3430 = vmatpush1.msra.mxu0 0.0
        %3431 = vmatprep.subr.mxu0 0.0
        %3432 = vmatpush1.msra.mxu0 0.0
        %3433 = vmatprep.subr.mxu0 0.0
        %3434 = vmatpush1.msra.mxu0 0.0
        %3435 = vmatprep.subr.mxu0 0.0
        %3436 = vmatpush1.msra.mxu0 0.0
        %3437 = vmatprep.subr.mxu0 0.0
        %3438 = vmatpush1.msra.mxu0 0.0
        %3439 = vmatprep.subr.mxu0 0.0
        %3440 = vmatpush1.msra.mxu0 0.0
        %3441 = vmatprep.subr.mxu0 0.0
        %3442 = vmatpush1.msra.mxu0 0.0
        %3443 = vmatprep.subr.mxu0 0.0
        %3444 = vmatpush1.msra.mxu0 0.0
        %3445 = vmatprep.subr.mxu0 0.0
        %3446 = vmatpush1.msra.mxu0 0.0
        %3447 = vmatprep.subr.mxu0 0.0
        %3448 = vmatpush1.msra.mxu0 0.0
        %3449 = vmatprep.subr.mxu0 0.0
        %3450 = vmatpush1.msra.mxu0 0.0
        %3451 = vmatprep.subr.mxu0 0.0
        %3452 = vmatpush1.msra.mxu0 0.0
        %3453 = vmatprep.subr.mxu0 0.0
        %3454 = vmatpush1.msra.mxu0 0.0
        %3455 = vmatprep.mubr.f32.mxu0 0.0
        %3456 = vmatmul.mubr.f32.gmra.mrb[0].mxu0 %v3318
        %v3457 = vpop.f32.mrb[0].mxu0
        %v3458 = vadd.f32 0.0, %v3457
        %v3459 = vpop.f32.mrb[0].mxu0
        %v3460 = vadd.f32 0.0, %v3459
        %3461 = vdwg.mxu0
        %v3462 = vadd.f32 %v3292, %v3387
        %v3463 = vadd.f32 %v3293, %v3389
        %v3464 = vadd.f32 %v3294, %v3458
        %v3465 = vadd.f32 %v3295, %v3460
        %s3466 = scalar_lea.vmem %s2, 144
        %v3467 = vld [vmem:[%s3466] sm:$0xff]
        %3468 = vrot.lane.b32.xlu0 %v2608, 107
        %v3469 = vpop.permute.xlu0 %3468
        %3470 = vrot.lane.b32.xlu0 %v2609, 107
        %v3471 = vpop.permute.xlu0 %3470
        %3472 = vrot.lane.b32.xlu0 %v2610, 107
        %v3473 = vpop.permute.xlu0 %3472
        %3474 = vrot.lane.b32.xlu0 %v2611, 107
        %v3475 = vpop.permute.xlu0 %3474
        %3476 = vrot.lane.b32.xlu0 %v2612, 107
        %v3477 = vpop.permute.xlu0 %3476
        %vm3478 = vcmask 875520
        %v3479 = vsel %vm3478, %v3469, %v3471
        %v3480 = vsel %vm3478, %v3471, %v3473
        %v3481 = vsel %vm3478, %v3473, %v3475
        %v3482 = vsel %vm3478, %v3475, %v3477
        %v3488 = vsel %vm445, %v3467, 0
        %3490 = vmatprep.subr.mxu0 %v3480
        %3491 = vmatpush1.msra.mxu0 %v3479
        %3492 = vmatprep.subr.mxu0 0.0
        %3493 = vmatpush1.msra.mxu0 0.0
        %3494 = vmatprep.subr.mxu0 0.0
        %3495 = vmatpush1.msra.mxu0 0.0
        %3496 = vmatprep.subr.mxu0 0.0
        %3497 = vmatpush1.msra.mxu0 0.0
        %3498 = vmatprep.subr.mxu0 0.0
        %3499 = vmatpush1.msra.mxu0 0.0
        %3500 = vmatprep.subr.mxu0 0.0
        %3501 = vmatpush1.msra.mxu0 0.0
        %3502 = vmatprep.subr.mxu0 0.0
        %3503 = vmatpush1.msra.mxu0 0.0
        %3504 = vmatprep.subr.mxu0 0.0
        %3505 = vmatpush1.msra.mxu0 0.0
        %3506 = vmatprep.subr.mxu0 0.0
        %3507 = vmatpush1.msra.mxu0 0.0
        %3508 = vmatprep.subr.mxu0 0.0
        %3509 = vmatpush1.msra.mxu0 0.0
        %3510 = vmatprep.subr.mxu0 0.0
        %3511 = vmatpush1.msra.mxu0 0.0
        %3512 = vmatprep.subr.mxu0 0.0
        %3513 = vmatpush1.msra.mxu0 0.0
        %3514 = vmatprep.subr.mxu0 0.0
        %3515 = vmatpush1.msra.mxu0 0.0
        %3516 = vmatprep.subr.mxu0 0.0
        %3517 = vmatpush1.msra.mxu0 0.0
        %3518 = vmatprep.subr.mxu0 0.0
        %3519 = vmatpush1.msra.mxu0 0.0
        %3520 = vmatprep.subr.mxu0 0.0
        %3521 = vmatpush1.msra.mxu0 0.0
        %3522 = vmatprep.subr.mxu0 0.0
        %3523 = vmatpush1.msra.mxu0 0.0
        %3524 = vmatprep.subr.mxu0 0.0
        %3525 = vmatpush1.msra.mxu0 0.0
        %3526 = vmatprep.subr.mxu0 0.0
        %3527 = vmatpush1.msra.mxu0 0.0
        %3528 = vmatprep.subr.mxu0 0.0
        %3529 = vmatpush1.msra.mxu0 0.0
        %3530 = vmatprep.subr.mxu0 0.0
        %3531 = vmatpush1.msra.mxu0 0.0
        %3532 = vmatprep.subr.mxu0 0.0
        %3533 = vmatpush1.msra.mxu0 0.0
        %3534 = vmatprep.subr.mxu0 0.0
        %3535 = vmatpush1.msra.mxu0 0.0
        %3536 = vmatprep.subr.mxu0 0.0
        %3537 = vmatpush1.msra.mxu0 0.0
        %3538 = vmatprep.subr.mxu0 0.0
        %3539 = vmatpush1.msra.mxu0 0.0
        %3540 = vmatprep.subr.mxu0 0.0
        %3541 = vmatpush1.msra.mxu0 0.0
        %3542 = vmatprep.subr.mxu0 0.0
        %3543 = vmatpush1.msra.mxu0 0.0
        %3544 = vmatprep.subr.mxu0 0.0
        %3545 = vmatpush1.msra.mxu0 0.0
        %3546 = vmatprep.subr.mxu0 0.0
        %3547 = vmatpush1.msra.mxu0 0.0
        %3548 = vmatprep.subr.mxu0 0.0
        %3549 = vmatpush1.msra.mxu0 0.0
        %3550 = vmatprep.subr.mxu0 0.0
        %3551 = vmatpush1.msra.mxu0 0.0
        %3552 = vmatprep.subr.mxu0 0.0
        %3553 = vmatpush1.msra.mxu0 0.0
        %3554 = vmatprep.mubr.f32.mxu0 0.0
        %3555 = vmatmul.mubr.f32.gmra.mrb[0].mxu0 %v3488
        %v3556 = vpop.f32.mrb[0].mxu0
        %v3557 = vadd.f32 0.0, %v3556
        %v3558 = vpop.f32.mrb[0].mxu0
        %v3559 = vadd.f32 0.0, %v3558
        %3560 = vdwg.mxu0
        %3561 = vmatprep.subr.mxu0 %v3482
        %3562 = vmatpush1.msra.mxu0 %v3481
        %3563 = vmatprep.subr.mxu0 0.0
        %3564 = vmatpush1.msra.mxu0 0.0
        %3565 = vmatprep.subr.mxu0 0.0
        %3566 = vmatpush1.msra.mxu0 0.0
        %3567 = vmatprep.subr.mxu0 0.0
        %3568 = vmatpush1.msra.mxu0 0.0
        %3569 = vmatprep.subr.mxu0 0.0
        %3570 = vmatpush1.msra.mxu0 0.0
        %3571 = vmatprep.subr.mxu0 0.0
        %3572 = vmatpush1.msra.mxu0 0.0
        %3573 = vmatprep.subr.mxu0 0.0
        %3574 = vmatpush1.msra.mxu0 0.0
        %3575 = vmatprep.subr.mxu0 0.0
        %3576 = vmatpush1.msra.mxu0 0.0
        %3577 = vmatprep.subr.mxu0 0.0
        %3578 = vmatpush1.msra.mxu0 0.0
        %3579 = vmatprep.subr.mxu0 0.0
        %3580 = vmatpush1.msra.mxu0 0.0
        %3581 = vmatprep.subr.mxu0 0.0
        %3582 = vmatpush1.msra.mxu0 0.0
        %3583 = vmatprep.subr.mxu0 0.0
        %3584 = vmatpush1.msra.mxu0 0.0
        %3585 = vmatprep.subr.mxu0 0.0
        %3586 = vmatpush1.msra.mxu0 0.0
        %3587 = vmatprep.subr.mxu0 0.0
        %3588 = vmatpush1.msra.mxu0 0.0
        %3589 = vmatprep.subr.mxu0 0.0
        %3590 = vmatpush1.msra.mxu0 0.0
        %3591 = vmatprep.subr.mxu0 0.0
        %3592 = vmatpush1.msra.mxu0 0.0
        %3593 = vmatprep.subr.mxu0 0.0
        %3594 = vmatpush1.msra.mxu0 0.0
        %3595 = vmatprep.subr.mxu0 0.0
        %3596 = vmatpush1.msra.mxu0 0.0
        %3597 = vmatprep.subr.mxu0 0.0
        %3598 = vmatpush1.msra.mxu0 0.0
        %3599 = vmatprep.subr.mxu0 0.0
        %3600 = vmatpush1.msra.mxu0 0.0
        %3601 = vmatprep.subr.mxu0 0.0
        %3602 = vmatpush1.msra.mxu0 0.0
        %3603 = vmatprep.subr.mxu0 0.0
        %3604 = vmatpush1.msra.mxu0 0.0
        %3605 = vmatprep.subr.mxu0 0.0
        %3606 = vmatpush1.msra.mxu0 0.0
        %3607 = vmatprep.subr.mxu0 0.0
        %3608 = vmatpush1.msra.mxu0 0.0
        %3609 = vmatprep.subr.mxu0 0.0
        %3610 = vmatpush1.msra.mxu0 0.0
        %3611 = vmatprep.subr.mxu0 0.0
        %3612 = vmatpush1.msra.mxu0 0.0
        %3613 = vmatprep.subr.mxu0 0.0
        %3614 = vmatpush1.msra.mxu0 0.0
        %3615 = vmatprep.subr.mxu0 0.0
        %3616 = vmatpush1.msra.mxu0 0.0
        %3617 = vmatprep.subr.mxu0 0.0
        %3618 = vmatpush1.msra.mxu0 0.0
        %3619 = vmatprep.subr.mxu0 0.0
        %3620 = vmatpush1.msra.mxu0 0.0
        %3621 = vmatprep.subr.mxu0 0.0
        %3622 = vmatpush1.msra.mxu0 0.0
        %3623 = vmatprep.subr.mxu0 0.0
        %3624 = vmatpush1.msra.mxu0 0.0
        %3625 = vmatprep.mubr.f32.mxu0 0.0
        %3626 = vmatmul.mubr.f32.gmra.mrb[0].mxu0 %v3488
        %v3627 = vpop.f32.mrb[0].mxu0
        %v3628 = vadd.f32 0.0, %v3627
        %v3629 = vpop.f32.mrb[0].mxu0
        %v3630 = vadd.f32 0.0, %v3629
        %3631 = vdwg.mxu0
        %v3632 = vadd.f32 %v3462, %v3557
        %v3633 = vadd.f32 %v3463, %v3559
        %v3634 = vadd.f32 %v3464, %v3628
        %v3635 = vadd.f32 %v3465, %v3630
        %s3636 = scalar_lea.vmem %s2, 152
        %v3637 = vld [vmem:[%s3636] sm:$0xff]
        %3638 = vrot.lane.b32.xlu0 %v2608, 106
        %v3639 = vpop.permute.xlu0 %3638
        %3640 = vrot.lane.b32.xlu0 %v2609, 106
        %v3641 = vpop.permute.xlu0 %3640
        %3642 = vrot.lane.b32.xlu0 %v2610, 106
        %v3643 = vpop.permute.xlu0 %3642
        %3644 = vrot.lane.b32.xlu0 %v2611, 106
        %v3645 = vpop.permute.xlu0 %3644
        %3646 = vrot.lane.b32.xlu0 %v2612, 106
        %v3647 = vpop.permute.xlu0 %3646
        %vm3648 = vcmask 867328
        %v3649 = vsel %vm3648, %v3639, %v3641
        %v3650 = vsel %vm3648, %v3641, %v3643
        %v3651 = vsel %vm3648, %v3643, %v3645
        %v3652 = vsel %vm3648, %v3645, %v3647
        %v3658 = vsel %vm445, %v3637, 0
        %3660 = vmatprep.subr.mxu0 %v3650
        %3661 = vmatpush1.msra.mxu0 %v3649
        %3662 = vmatprep.subr.mxu0 0.0
        %3663 = vmatpush1.msra.mxu0 0.0
        %3664 = vmatprep.subr.mxu0 0.0
        %3665 = vmatpush1.msra.mxu0 0.0
        %3666 = vmatprep.subr.mxu0 0.0
        %3667 = vmatpush1.msra.mxu0 0.0
        %3668 = vmatprep.subr.mxu0 0.0
        %3669 = vmatpush1.msra.mxu0 0.0
        %3670 = vmatprep.subr.mxu0 0.0
        %3671 = vmatpush1.msra.mxu0 0.0
        %3672 = vmatprep.subr.mxu0 0.0
        %3673 = vmatpush1.msra.mxu0 0.0
        %3674 = vmatprep.subr.mxu0 0.0
        %3675 = vmatpush1.msra.mxu0 0.0
        %3676 = vmatprep.subr.mxu0 0.0
        %3677 = vmatpush1.msra.mxu0 0.0
        %3678 = vmatprep.subr.mxu0 0.0
        %3679 = vmatpush1.msra.mxu0 0.0
        %3680 = vmatprep.subr.mxu0 0.0
        %3681 = vmatpush1.msra.mxu0 0.0
        %3682 = vmatprep.subr.mxu0 0.0
        %3683 = vmatpush1.msra.mxu0 0.0
        %3684 = vmatprep.subr.mxu0 0.0
        %3685 = vmatpush1.msra.mxu0 0.0
        %3686 = vmatprep.subr.mxu0 0.0
        %3687 = vmatpush1.msra.mxu0 0.0
        %3688 = vmatprep.subr.mxu0 0.0
        %3689 = vmatpush1.msra.mxu0 0.0
        %3690 = vmatprep.subr.mxu0 0.0
        %3691 = vmatpush1.msra.mxu0 0.0
        %3692 = vmatprep.subr.mxu0 0.0
        %3693 = vmatpush1.msra.mxu0 0.0
        %3694 = vmatprep.subr.mxu0 0.0
        %3695 = vmatpush1.msra.mxu0 0.0
        %3696 = vmatprep.subr.mxu0 0.0
        %3697 = vmatpush1.msra.mxu0 0.0
        %3698 = vmatprep.subr.mxu0 0.0
        %3699 = vmatpush1.msra.mxu0 0.0
        %3700 = vmatprep.subr.mxu0 0.0
        %3701 = vmatpush1.msra.mxu0 0.0
        %3702 = vmatprep.subr.mxu0 0.0
        %3703 = vmatpush1.msra.mxu0 0.0
        %3704 = vmatprep.subr.mxu0 0.0
        %3705 = vmatpush1.msra.mxu0 0.0
        %3706 = vmatprep.subr.mxu0 0.0
        %3707 = vmatpush1.msra.mxu0 0.0
        %3708 = vmatprep.subr.mxu0 0.0
        %3709 = vmatpush1.msra.mxu0 0.0
        %3710 = vmatprep.subr.mxu0 0.0
        %3711 = vmatpush1.msra.mxu0 0.0
        %3712 = vmatprep.subr.mxu0 0.0
        %3713 = vmatpush1.msra.mxu0 0.0
        %3714 = vmatprep.subr.mxu0 0.0
        %3715 = vmatpush1.msra.mxu0 0.0
        %3716 = vmatprep.subr.mxu0 0.0
        %3717 = vmatpush1.msra.mxu0 0.0
        %3718 = vmatprep.subr.mxu0 0.0
        %3719 = vmatpush1.msra.mxu0 0.0
        %3720 = vmatprep.subr.mxu0 0.0
        %3721 = vmatpush1.msra.mxu0 0.0
        %3722 = vmatprep.subr.mxu0 0.0
        %3723 = vmatpush1.msra.mxu0 0.0
        %3724 = vmatprep.mubr.f32.mxu0 0.0
        %3725 = vmatmul.mubr.f32.gmra.mrb[0].mxu0 %v3658
        %v3726 = vpop.f32.mrb[0].mxu0
        %v3727 = vadd.f32 0.0, %v3726
        %v3728 = vpop.f32.mrb[0].mxu0
        %v3729 = vadd.f32 0.0, %v3728
        %3730 = vdwg.mxu0
        %3731 = vmatprep.subr.mxu0 %v3652
        %3732 = vmatpush1.msra.mxu0 %v3651
        %3733 = vmatprep.subr.mxu0 0.0
        %3734 = vmatpush1.msra.mxu0 0.0
        %3735 = vmatprep.subr.mxu0 0.0
        %3736 = vmatpush1.msra.mxu0 0.0
        %3737 = vmatprep.subr.mxu0 0.0
        %3738 = vmatpush1.msra.mxu0 0.0
        %3739 = vmatprep.subr.mxu0 0.0
        %3740 = vmatpush1.msra.mxu0 0.0
        %3741 = vmatprep.subr.mxu0 0.0
        %3742 = vmatpush1.msra.mxu0 0.0
        %3743 = vmatprep.subr.mxu0 0.0
        %3744 = vmatpush1.msra.mxu0 0.0
        %3745 = vmatprep.subr.mxu0 0.0
        %3746 = vmatpush1.msra.mxu0 0.0
        %3747 = vmatprep.subr.mxu0 0.0
        %3748 = vmatpush1.msra.mxu0 0.0
        %3749 = vmatprep.subr.mxu0 0.0
        %3750 = vmatpush1.msra.mxu0 0.0
        %3751 = vmatprep.subr.mxu0 0.0
        %3752 = vmatpush1.msra.mxu0 0.0
        %3753 = vmatprep.subr.mxu0 0.0
        %3754 = vmatpush1.msra.mxu0 0.0
        %3755 = vmatprep.subr.mxu0 0.0
        %3756 = vmatpush1.msra.mxu0 0.0
        %3757 = vmatprep.subr.mxu0 0.0
        %3758 = vmatpush1.msra.mxu0 0.0
        %3759 = vmatprep.subr.mxu0 0.0
        %3760 = vmatpush1.msra.mxu0 0.0
        %3761 = vmatprep.subr.mxu0 0.0
        %3762 = vmatpush1.msra.mxu0 0.0
        %3763 = vmatprep.subr.mxu0 0.0
        %3764 = vmatpush1.msra.mxu0 0.0
        %3765 = vmatprep.subr.mxu0 0.0
        %3766 = vmatpush1.msra.mxu0 0.0
        %3767 = vmatprep.subr.mxu0 0.0
        %3768 = vmatpush1.msra.mxu0 0.0
        %3769 = vmatprep.subr.mxu0 0.0
        %3770 = vmatpush1.msra.mxu0 0.0
        %3771 = vmatprep.subr.mxu0 0.0
        %3772 = vmatpush1.msra.mxu0 0.0
        %3773 = vmatprep.subr.mxu0 0.0
        %3774 = vmatpush1.msra.mxu0 0.0
        %3775 = vmatprep.subr.mxu0 0.0
        %3776 = vmatpush1.msra.mxu0 0.0
        %3777 = vmatprep.subr.mxu0 0.0
        %3778 = vmatpush1.msra.mxu0 0.0
        %3779 = vmatprep.subr.mxu0 0.0
        %3780 = vmatpush1.msra.mxu0 0.0
        %3781 = vmatprep.subr.mxu0 0.0
        %3782 = vmatpush1.msra.mxu0 0.0
        %3783 = vmatprep.subr.mxu0 0.0
        %3784 = vmatpush1.msra.mxu0 0.0
        %3785 = vmatprep.subr.mxu0 0.0
        %3786 = vmatpush1.msra.mxu0 0.0
        %3787 = vmatprep.subr.mxu0 0.0
        %3788 = vmatpush1.msra.mxu0 0.0
        %3789 = vmatprep.subr.mxu0 0.0
        %3790 = vmatpush1.msra.mxu0 0.0
        %3791 = vmatprep.subr.mxu0 0.0
        %3792 = vmatpush1.msra.mxu0 0.0
        %3793 = vmatprep.subr.mxu0 0.0
        %3794 = vmatpush1.msra.mxu0 0.0
        %3795 = vmatprep.mubr.f32.mxu0 0.0
        %3796 = vmatmul.mubr.f32.gmra.mrb[0].mxu0 %v3658
        %v3797 = vpop.f32.mrb[0].mxu0
        %v3798 = vadd.f32 0.0, %v3797
        %v3799 = vpop.f32.mrb[0].mxu0
        %v3800 = vadd.f32 0.0, %v3799
        %3801 = vdwg.mxu0
        %v3802 = vadd.f32 %v3632, %v3727
        %v3803 = vadd.f32 %v3633, %v3729
        %v3804 = vadd.f32 %v3634, %v3798
        %v3805 = vadd.f32 %v3635, %v3800
        %s3806 = scalar_lea.vmem %s2, 160
        %v3807 = vld [vmem:[%s3806] sm:$0xff]
        %3808 = vrot.lane.b32.xlu0 %v2608, 90
        %v3809 = vpop.permute.xlu0 %3808
        %3810 = vrot.lane.b32.xlu0 %v2609, 90
        %v3811 = vpop.permute.xlu0 %3810
        %3812 = vrot.lane.b32.xlu0 %v2610, 90
        %v3813 = vpop.permute.xlu0 %3812
        %3814 = vrot.lane.b32.xlu0 %v2611, 90
        %v3815 = vpop.permute.xlu0 %3814
        %3816 = vrot.lane.b32.xlu0 %v2612, 90
        %v3817 = vpop.permute.xlu0 %3816
        %vm3818 = vcmask 736256
        %v3819 = vsel %vm3818, %v3809, %v3811
        %v3820 = vsel %vm3818, %v3811, %v3813
        %v3821 = vsel %vm3818, %v3813, %v3815
        %v3822 = vsel %vm3818, %v3815, %v3817
        %v3828 = vsel %vm445, %v3807, 0
        %3830 = vmatprep.subr.mxu0 %v3820
        %3831 = vmatpush1.msra.mxu0 %v3819
        %3832 = vmatprep.subr.mxu0 0.0
        %3833 = vmatpush1.msra.mxu0 0.0
        %3834 = vmatprep.subr.mxu0 0.0
        %3835 = vmatpush1.msra.mxu0 0.0
        %3836 = vmatprep.subr.mxu0 0.0
        %3837 = vmatpush1.msra.mxu0 0.0
        %3838 = vmatprep.subr.mxu0 0.0
        %3839 = vmatpush1.msra.mxu0 0.0
        %3840 = vmatprep.subr.mxu0 0.0
        %3841 = vmatpush1.msra.mxu0 0.0
        %3842 = vmatprep.subr.mxu0 0.0
        %3843 = vmatpush1.msra.mxu0 0.0
        %3844 = vmatprep.subr.mxu0 0.0
        %3845 = vmatpush1.msra.mxu0 0.0
        %3846 = vmatprep.subr.mxu0 0.0
        %3847 = vmatpush1.msra.mxu0 0.0
        %3848 = vmatprep.subr.mxu0 0.0
        %3849 = vmatpush1.msra.mxu0 0.0
        %3850 = vmatprep.subr.mxu0 0.0
        %3851 = vmatpush1.msra.mxu0 0.0
        %3852 = vmatprep.subr.mxu0 0.0
        %3853 = vmatpush1.msra.mxu0 0.0
        %3854 = vmatprep.subr.mxu0 0.0
        %3855 = vmatpush1.msra.mxu0 0.0
        %3856 = vmatprep.subr.mxu0 0.0
        %3857 = vmatpush1.msra.mxu0 0.0
        %3858 = vmatprep.subr.mxu0 0.0
        %3859 = vmatpush1.msra.mxu0 0.0
        %3860 = vmatprep.subr.mxu0 0.0
        %3861 = vmatpush1.msra.mxu0 0.0
        %3862 = vmatprep.subr.mxu0 0.0
        %3863 = vmatpush1.msra.mxu0 0.0
        %3864 = vmatprep.subr.mxu0 0.0
        %3865 = vmatpush1.msra.mxu0 0.0
        %3866 = vmatprep.subr.mxu0 0.0
        %3867 = vmatpush1.msra.mxu0 0.0
        %3868 = vmatprep.subr.mxu0 0.0
        %3869 = vmatpush1.msra.mxu0 0.0
        %3870 = vmatprep.subr.mxu0 0.0
        %3871 = vmatpush1.msra.mxu0 0.0
        %3872 = vmatprep.subr.mxu0 0.0
        %3873 = vmatpush1.msra.mxu0 0.0
        %3874 = vmatprep.subr.mxu0 0.0
        %3875 = vmatpush1.msra.mxu0 0.0
        %3876 = vmatprep.subr.mxu0 0.0
        %3877 = vmatpush1.msra.mxu0 0.0
        %3878 = vmatprep.subr.mxu0 0.0
        %3879 = vmatpush1.msra.mxu0 0.0
        %3880 = vmatprep.subr.mxu0 0.0
        %3881 = vmatpush1.msra.mxu0 0.0
        %3882 = vmatprep.subr.mxu0 0.0
        %3883 = vmatpush1.msra.mxu0 0.0
        %3884 = vmatprep.subr.mxu0 0.0
        %3885 = vmatpush1.msra.mxu0 0.0
        %3886 = vmatprep.subr.mxu0 0.0
        %3887 = vmatpush1.msra.mxu0 0.0
        %3888 = vmatprep.subr.mxu0 0.0
        %3889 = vmatpush1.msra.mxu0 0.0
        %3890 = vmatprep.subr.mxu0 0.0
        %3891 = vmatpush1.msra.mxu0 0.0
        %3892 = vmatprep.subr.mxu0 0.0
        %3893 = vmatpush1.msra.mxu0 0.0
        %3894 = vmatprep.mubr.f32.mxu0 0.0
        %3895 = vmatmul.mubr.f32.gmra.mrb[0].mxu0 %v3828
        %v3896 = vpop.f32.mrb[0].mxu0
        %v3897 = vadd.f32 0.0, %v3896
        %v3898 = vpop.f32.mrb[0].mxu0
        %v3899 = vadd.f32 0.0, %v3898
        %3900 = vdwg.mxu0
        %3901 = vmatprep.subr.mxu0 %v3822
        %3902 = vmatpush1.msra.mxu0 %v3821
        %3903 = vmatprep.subr.mxu0 0.0
        %3904 = vmatpush1.msra.mxu0 0.0
        %3905 = vmatprep.subr.mxu0 0.0
        %3906 = vmatpush1.msra.mxu0 0.0
        %3907 = vmatprep.subr.mxu0 0.0
        %3908 = vmatpush1.msra.mxu0 0.0
        %3909 = vmatprep.subr.mxu0 0.0
        %3910 = vmatpush1.msra.mxu0 0.0
        %3911 = vmatprep.subr.mxu0 0.0
        %3912 = vmatpush1.msra.mxu0 0.0
        %3913 = vmatprep.subr.mxu0 0.0
        %3914 = vmatpush1.msra.mxu0 0.0
        %3915 = vmatprep.subr.mxu0 0.0
        %3916 = vmatpush1.msra.mxu0 0.0
        %3917 = vmatprep.subr.mxu0 0.0
        %3918 = vmatpush1.msra.mxu0 0.0
        %3919 = vmatprep.subr.mxu0 0.0
        %3920 = vmatpush1.msra.mxu0 0.0
        %3921 = vmatprep.subr.mxu0 0.0
        %3922 = vmatpush1.msra.mxu0 0.0
        %3923 = vmatprep.subr.mxu0 0.0
        %3924 = vmatpush1.msra.mxu0 0.0
        %3925 = vmatprep.subr.mxu0 0.0
        %3926 = vmatpush1.msra.mxu0 0.0
        %3927 = vmatprep.subr.mxu0 0.0
        %3928 = vmatpush1.msra.mxu0 0.0
        %3929 = vmatprep.subr.mxu0 0.0
        %3930 = vmatpush1.msra.mxu0 0.0
        %3931 = vmatprep.subr.mxu0 0.0
        %3932 = vmatpush1.msra.mxu0 0.0
        %3933 = vmatprep.subr.mxu0 0.0
        %3934 = vmatpush1.msra.mxu0 0.0
        %3935 = vmatprep.subr.mxu0 0.0
        %3936 = vmatpush1.msra.mxu0 0.0
        %3937 = vmatprep.subr.mxu0 0.0
        %3938 = vmatpush1.msra.mxu0 0.0
        %3939 = vmatprep.subr.mxu0 0.0
        %3940 = vmatpush1.msra.mxu0 0.0
        %3941 = vmatprep.subr.mxu0 0.0
        %3942 = vmatpush1.msra.mxu0 0.0
        %3943 = vmatprep.subr.mxu0 0.0
        %3944 = vmatpush1.msra.mxu0 0.0
        %3945 = vmatprep.subr.mxu0 0.0
        %3946 = vmatpush1.msra.mxu0 0.0
        %3947 = vmatprep.subr.mxu0 0.0
        %3948 = vmatpush1.msra.mxu0 0.0
        %3949 = vmatprep.subr.mxu0 0.0
        %3950 = vmatpush1.msra.mxu0 0.0
        %3951 = vmatprep.subr.mxu0 0.0
        %3952 = vmatpush1.msra.mxu0 0.0
        %3953 = vmatprep.subr.mxu0 0.0
        %3954 = vmatpush1.msra.mxu0 0.0
        %3955 = vmatprep.subr.mxu0 0.0
        %3956 = vmatpush1.msra.mxu0 0.0
        %3957 = vmatprep.subr.mxu0 0.0
        %3958 = vmatpush1.msra.mxu0 0.0
        %3959 = vmatprep.subr.mxu0 0.0
        %3960 = vmatpush1.msra.mxu0 0.0
        %3961 = vmatprep.subr.mxu0 0.0
        %3962 = vmatpush1.msra.mxu0 0.0
        %3963 = vmatprep.subr.mxu0 0.0
        %3964 = vmatpush1.msra.mxu0 0.0
        %3965 = vmatprep.mubr.f32.mxu0 0.0
        %3966 = vmatmul.mubr.f32.gmra.mrb[0].mxu0 %v3828
        %v3967 = vpop.f32.mrb[0].mxu0
        %v3968 = vadd.f32 0.0, %v3967
        %v3969 = vpop.f32.mrb[0].mxu0
        %v3970 = vadd.f32 0.0, %v3969
        %3971 = vdwg.mxu0
        %v3972 = vadd.f32 %v3802, %v3897
        %v3973 = vadd.f32 %v3803, %v3899
        %v3974 = vadd.f32 %v3804, %v3968
        %v3975 = vadd.f32 %v3805, %v3970
        %s3976 = scalar_lea.vmem %s2, 168
        %v3977 = vld [vmem:[%s3976] sm:$0xff]
        %3978 = vrot.lane.b32.xlu0 %v2608, 89
        %v3979 = vpop.permute.xlu0 %3978
        %3980 = vrot.lane.b32.xlu0 %v2609, 89
        %v3981 = vpop.permute.xlu0 %3980
        %3982 = vrot.lane.b32.xlu0 %v2610, 89
        %v3983 = vpop.permute.xlu0 %3982
        %3984 = vrot.lane.b32.xlu0 %v2611, 89
        %v3985 = vpop.permute.xlu0 %3984
        %3986 = vrot.lane.b32.xlu0 %v2612, 89
        %v3987 = vpop.permute.xlu0 %3986
        %vm3988 = vcmask 728064
        %v3989 = vsel %vm3988, %v3979, %v3981
        %v3990 = vsel %vm3988, %v3981, %v3983
        %v3991 = vsel %vm3988, %v3983, %v3985
        %v3992 = vsel %vm3988, %v3985, %v3987
        %v3998 = vsel %vm445, %v3977, 0
        %4000 = vmatprep.subr.mxu0 %v3990
        %4001 = vmatpush1.msra.mxu0 %v3989
        %4002 = vmatprep.subr.mxu0 0.0
        %4003 = vmatpush1.msra.mxu0 0.0
        %4004 = vmatprep.subr.mxu0 0.0
        %4005 = vmatpush1.msra.mxu0 0.0
        %4006 = vmatprep.subr.mxu0 0.0
        %4007 = vmatpush1.msra.mxu0 0.0
        %4008 = vmatprep.subr.mxu0 0.0
        %4009 = vmatpush1.msra.mxu0 0.0
        %4010 = vmatprep.subr.mxu0 0.0
        %4011 = vmatpush1.msra.mxu0 0.0
        %4012 = vmatprep.subr.mxu0 0.0
        %4013 = vmatpush1.msra.mxu0 0.0
        %4014 = vmatprep.subr.mxu0 0.0
        %4015 = vmatpush1.msra.mxu0 0.0
        %4016 = vmatprep.subr.mxu0 0.0
        %4017 = vmatpush1.msra.mxu0 0.0
        %4018 = vmatprep.subr.mxu0 0.0
        %4019 = vmatpush1.msra.mxu0 0.0
        %4020 = vmatprep.subr.mxu0 0.0
        %4021 = vmatpush1.msra.mxu0 0.0
        %4022 = vmatprep.subr.mxu0 0.0
        %4023 = vmatpush1.msra.mxu0 0.0
        %4024 = vmatprep.subr.mxu0 0.0
        %4025 = vmatpush1.msra.mxu0 0.0
        %4026 = vmatprep.subr.mxu0 0.0
        %4027 = vmatpush1.msra.mxu0 0.0
        %4028 = vmatprep.subr.mxu0 0.0
        %4029 = vmatpush1.msra.mxu0 0.0
        %4030 = vmatprep.subr.mxu0 0.0
        %4031 = vmatpush1.msra.mxu0 0.0
        %4032 = vmatprep.subr.mxu0 0.0
        %4033 = vmatpush1.msra.mxu0 0.0
        %4034 = vmatprep.subr.mxu0 0.0
        %4035 = vmatpush1.msra.mxu0 0.0
        %4036 = vmatprep.subr.mxu0 0.0
        %4037 = vmatpush1.msra.mxu0 0.0
        %4038 = vmatprep.subr.mxu0 0.0
        %4039 = vmatpush1.msra.mxu0 0.0
        %4040 = vmatprep.subr.mxu0 0.0
        %4041 = vmatpush1.msra.mxu0 0.0
        %4042 = vmatprep.subr.mxu0 0.0
        %4043 = vmatpush1.msra.mxu0 0.0
        %4044 = vmatprep.subr.mxu0 0.0
        %4045 = vmatpush1.msra.mxu0 0.0
        %4046 = vmatprep.subr.mxu0 0.0
        %4047 = vmatpush1.msra.mxu0 0.0
        %4048 = vmatprep.subr.mxu0 0.0
        %4049 = vmatpush1.msra.mxu0 0.0
        %4050 = vmatprep.subr.mxu0 0.0
        %4051 = vmatpush1.msra.mxu0 0.0
        %4052 = vmatprep.subr.mxu0 0.0
        %4053 = vmatpush1.msra.mxu0 0.0
        %4054 = vmatprep.subr.mxu0 0.0
        %4055 = vmatpush1.msra.mxu0 0.0
        %4056 = vmatprep.subr.mxu0 0.0
        %4057 = vmatpush1.msra.mxu0 0.0
        %4058 = vmatprep.subr.mxu0 0.0
        %4059 = vmatpush1.msra.mxu0 0.0
        %4060 = vmatprep.subr.mxu0 0.0
        %4061 = vmatpush1.msra.mxu0 0.0
        %4062 = vmatprep.subr.mxu0 0.0
        %4063 = vmatpush1.msra.mxu0 0.0
        %4064 = vmatprep.mubr.f32.mxu0 0.0
        %4065 = vmatmul.mubr.f32.gmra.mrb[0].mxu0 %v3998
        %v4066 = vpop.f32.mrb[0].mxu0
        %v4067 = vadd.f32 0.0, %v4066
        %v4068 = vpop.f32.mrb[0].mxu0
        %v4069 = vadd.f32 0.0, %v4068
        %4070 = vdwg.mxu0
        %4071 = vmatprep.subr.mxu0 %v3992
        %4072 = vmatpush1.msra.mxu0 %v3991
        %4073 = vmatprep.subr.mxu0 0.0
        %4074 = vmatpush1.msra.mxu0 0.0
        %4075 = vmatprep.subr.mxu0 0.0
        %4076 = vmatpush1.msra.mxu0 0.0
        %4077 = vmatprep.subr.mxu0 0.0
        %4078 = vmatpush1.msra.mxu0 0.0
        %4079 = vmatprep.subr.mxu0 0.0
        %4080 = vmatpush1.msra.mxu0 0.0
        %4081 = vmatprep.subr.mxu0 0.0
        %4082 = vmatpush1.msra.mxu0 0.0
        %4083 = vmatprep.subr.mxu0 0.0
        %4084 = vmatpush1.msra.mxu0 0.0
        %4085 = vmatprep.subr.mxu0 0.0
        %4086 = vmatpush1.msra.mxu0 0.0
        %4087 = vmatprep.subr.mxu0 0.0
        %4088 = vmatpush1.msra.mxu0 0.0
        %4089 = vmatprep.subr.mxu0 0.0
        %4090 = vmatpush1.msra.mxu0 0.0
        %4091 = vmatprep.subr.mxu0 0.0
        %4092 = vmatpush1.msra.mxu0 0.0
        %4093 = vmatprep.subr.mxu0 0.0
        %4094 = vmatpush1.msra.mxu0 0.0
        %4095 = vmatprep.subr.mxu0 0.0
        %4096 = vmatpush1.msra.mxu0 0.0
        %4097 = vmatprep.subr.mxu0 0.0
        %4098 = vmatpush1.msra.mxu0 0.0
        %4099 = vmatprep.subr.mxu0 0.0
        %4100 = vmatpush1.msra.mxu0 0.0
        %4101 = vmatprep.subr.mxu0 0.0
        %4102 = vmatpush1.msra.mxu0 0.0
        %4103 = vmatprep.subr.mxu0 0.0
        %4104 = vmatpush1.msra.mxu0 0.0
        %4105 = vmatprep.subr.mxu0 0.0
        %4106 = vmatpush1.msra.mxu0 0.0
        %4107 = vmatprep.subr.mxu0 0.0
        %4108 = vmatpush1.msra.mxu0 0.0
        %4109 = vmatprep.subr.mxu0 0.0
        %4110 = vmatpush1.msra.mxu0 0.0
        %4111 = vmatprep.subr.mxu0 0.0
        %4112 = vmatpush1.msra.mxu0 0.0
        %4113 = vmatprep.subr.mxu0 0.0
        %4114 = vmatpush1.msra.mxu0 0.0
        %4115 = vmatprep.subr.mxu0 0.0
        %4116 = vmatpush1.msra.mxu0 0.0
        %4117 = vmatprep.subr.mxu0 0.0
        %4118 = vmatpush1.msra.mxu0 0.0
        %4119 = vmatprep.subr.mxu0 0.0
        %4120 = vmatpush1.msra.mxu0 0.0
        %4121 = vmatprep.subr.mxu0 0.0
        %4122 = vmatpush1.msra.mxu0 0.0
        %4123 = vmatprep.subr.mxu0 0.0
        %4124 = vmatpush1.msra.mxu0 0.0
        %4125 = vmatprep.subr.mxu0 0.0
        %4126 = vmatpush1.msra.mxu0 0.0
        %4127 = vmatprep.subr.mxu0 0.0
        %4128 = vmatpush1.msra.mxu0 0.0
        %4129 = vmatprep.subr.mxu0 0.0
        %4130 = vmatpush1.msra.mxu0 0.0
        %4131 = vmatprep.subr.mxu0 0.0
        %4132 = vmatpush1.msra.mxu0 0.0
        %4133 = vmatprep.subr.mxu0 0.0
        %4134 = vmatpush1.msra.mxu0 0.0
        %4135 = vmatprep.mubr.f32.mxu0 0.0
        %4136 = vmatmul.mubr.f32.gmra.mrb[0].mxu0 %v3998
        %v4137 = vpop.f32.mrb[0].mxu0
        %v4138 = vadd.f32 0.0, %v4137
        %v4139 = vpop.f32.mrb[0].mxu0
        %v4140 = vadd.f32 0.0, %v4139
        %4141 = vdwg.mxu0
        %v4142 = vadd.f32 %v3972, %v4067
        %v4143 = vadd.f32 %v3973, %v4069
        %v4144 = vadd.f32 %v3974, %v4138
        %v4145 = vadd.f32 %v3975, %v4140
        %s4146 = scalar_lea.vmem %s2, 176
        %v4147 = vld [vmem:[%s4146] sm:$0xff]
        %4148 = vrot.lane.b32.xlu0 %v2608, 88
        %v4149 = vpop.permute.xlu0 %4148
        %4150 = vrot.lane.b32.xlu0 %v2609, 88
        %v4151 = vpop.permute.xlu0 %4150
        %4152 = vrot.lane.b32.xlu0 %v2610, 88
        %v4153 = vpop.permute.xlu0 %4152
        %4154 = vrot.lane.b32.xlu0 %v2611, 88
        %v4155 = vpop.permute.xlu0 %4154
        %4156 = vrot.lane.b32.xlu0 %v2612, 88
        %v4157 = vpop.permute.xlu0 %4156
        %vm4158 = vcmask 719872
        %v4159 = vsel %vm4158, %v4149, %v4151
        %v4160 = vsel %vm4158, %v4151, %v4153
        %v4161 = vsel %vm4158, %v4153, %v4155
        %v4162 = vsel %vm4158, %v4155, %v4157
        %v4168 = vsel %vm445, %v4147, 0
        %4170 = vmatprep.subr.mxu0 %v4160
        %4171 = vmatpush1.msra.mxu0 %v4159
        %4172 = vmatprep.subr.mxu0 0.0
        %4173 = vmatpush1.msra.mxu0 0.0
        %4174 = vmatprep.subr.mxu0 0.0
        %4175 = vmatpush1.msra.mxu0 0.0
        %4176 = vmatprep.subr.mxu0 0.0
        %4177 = vmatpush1.msra.mxu0 0.0
        %4178 = vmatprep.subr.mxu0 0.0
        %4179 = vmatpush1.msra.mxu0 0.0
        %4180 = vmatprep.subr.mxu0 0.0
        %4181 = vmatpush1.msra.mxu0 0.0
        %4182 = vmatprep.subr.mxu0 0.0
        %4183 = vmatpush1.msra.mxu0 0.0
        %4184 = vmatprep.subr.mxu0 0.0
        %4185 = vmatpush1.msra.mxu0 0.0
        %4186 = vmatprep.subr.mxu0 0.0
        %4187 = vmatpush1.msra.mxu0 0.0
        %4188 = vmatprep.subr.mxu0 0.0
        %4189 = vmatpush1.msra.mxu0 0.0
        %4190 = vmatprep.subr.mxu0 0.0
        %4191 = vmatpush1.msra.mxu0 0.0
        %4192 = vmatprep.subr.mxu0 0.0
        %4193 = vmatpush1.msra.mxu0 0.0
        %4194 = vmatprep.subr.mxu0 0.0
        %4195 = vmatpush1.msra.mxu0 0.0
        %4196 = vmatprep.subr.mxu0 0.0
        %4197 = vmatpush1.msra.mxu0 0.0
        %4198 = vmatprep.subr.mxu0 0.0
        %4199 = vmatpush1.msra.mxu0 0.0
        %4200 = vmatprep.subr.mxu0 0.0
        %4201 = vmatpush1.msra.mxu0 0.0
        %4202 = vmatprep.subr.mxu0 0.0
        %4203 = vmatpush1.msra.mxu0 0.0
        %4204 = vmatprep.subr.mxu0 0.0
        %4205 = vmatpush1.msra.mxu0 0.0
        %4206 = vmatprep.subr.mxu0 0.0
        %4207 = vmatpush1.msra.mxu0 0.0
        %4208 = vmatprep.subr.mxu0 0.0
        %4209 = vmatpush1.msra.mxu0 0.0
        %4210 = vmatprep.subr.mxu0 0.0
        %4211 = vmatpush1.msra.mxu0 0.0
        %4212 = vmatprep.subr.mxu0 0.0
        %4213 = vmatpush1.msra.mxu0 0.0
        %4214 = vmatprep.subr.mxu0 0.0
        %4215 = vmatpush1.msra.mxu0 0.0
        %4216 = vmatprep.subr.mxu0 0.0
        %4217 = vmatpush1.msra.mxu0 0.0
        %4218 = vmatprep.subr.mxu0 0.0
        %4219 = vmatpush1.msra.mxu0 0.0
        %4220 = vmatprep.subr.mxu0 0.0
        %4221 = vmatpush1.msra.mxu0 0.0
        %4222 = vmatprep.subr.mxu0 0.0
        %4223 = vmatpush1.msra.mxu0 0.0
        %4224 = vmatprep.subr.mxu0 0.0
        %4225 = vmatpush1.msra.mxu0 0.0
        %4226 = vmatprep.subr.mxu0 0.0
        %4227 = vmatpush1.msra.mxu0 0.0
        %4228 = vmatprep.subr.mxu0 0.0
        %4229 = vmatpush1.msra.mxu0 0.0
        %4230 = vmatprep.subr.mxu0 0.0
        %4231 = vmatpush1.msra.mxu0 0.0
        %4232 = vmatprep.subr.mxu0 0.0
        %4233 = vmatpush1.msra.mxu0 0.0
        %4234 = vmatprep.mubr.f32.mxu0 0.0
        %4235 = vmatmul.mubr.f32.gmra.mrb[0].mxu0 %v4168
        %v4236 = vpop.f32.mrb[0].mxu0
        %v4237 = vadd.f32 0.0, %v4236
        %v4238 = vpop.f32.mrb[0].mxu0
        %v4239 = vadd.f32 0.0, %v4238
        %4240 = vdwg.mxu0
        %4241 = vmatprep.subr.mxu0 %v4162
        %4242 = vmatpush1.msra.mxu0 %v4161
        %4243 = vmatprep.subr.mxu0 0.0
        %4244 = vmatpush1.msra.mxu0 0.0
        %4245 = vmatprep.subr.mxu0 0.0
        %4246 = vmatpush1.msra.mxu0 0.0
        %4247 = vmatprep.subr.mxu0 0.0
        %4248 = vmatpush1.msra.mxu0 0.0
        %4249 = vmatprep.subr.mxu0 0.0
        %4250 = vmatpush1.msra.mxu0 0.0
        %4251 = vmatprep.subr.mxu0 0.0
        %4252 = vmatpush1.msra.mxu0 0.0
        %4253 = vmatprep.subr.mxu0 0.0
        %4254 = vmatpush1.msra.mxu0 0.0
        %4255 = vmatprep.subr.mxu0 0.0
        %4256 = vmatpush1.msra.mxu0 0.0
        %4257 = vmatprep.subr.mxu0 0.0
        %4258 = vmatpush1.msra.mxu0 0.0
        %4259 = vmatprep.subr.mxu0 0.0
        %4260 = vmatpush1.msra.mxu0 0.0
        %4261 = vmatprep.subr.mxu0 0.0
        %4262 = vmatpush1.msra.mxu0 0.0
        %4263 = vmatprep.subr.mxu0 0.0
        %4264 = vmatpush1.msra.mxu0 0.0
        %4265 = vmatprep.subr.mxu0 0.0
        %4266 = vmatpush1.msra.mxu0 0.0
        %4267 = vmatprep.subr.mxu0 0.0
        %4268 = vmatpush1.msra.mxu0 0.0
        %4269 = vmatprep.subr.mxu0 0.0
        %4270 = vmatpush1.msra.mxu0 0.0
        %4271 = vmatprep.subr.mxu0 0.0
        %4272 = vmatpush1.msra.mxu0 0.0
        %4273 = vmatprep.subr.mxu0 0.0
        %4274 = vmatpush1.msra.mxu0 0.0
        %4275 = vmatprep.subr.mxu0 0.0
        %4276 = vmatpush1.msra.mxu0 0.0
        %4277 = vmatprep.subr.mxu0 0.0
        %4278 = vmatpush1.msra.mxu0 0.0
        %4279 = vmatprep.subr.mxu0 0.0
        %4280 = vmatpush1.msra.mxu0 0.0
        %4281 = vmatprep.subr.mxu0 0.0
        %4282 = vmatpush1.msra.mxu0 0.0
        %4283 = vmatprep.subr.mxu0 0.0
        %4284 = vmatpush1.msra.mxu0 0.0
        %4285 = vmatprep.subr.mxu0 0.0
        %4286 = vmatpush1.msra.mxu0 0.0
        %4287 = vmatprep.subr.mxu0 0.0
        %4288 = vmatpush1.msra.mxu0 0.0
        %4289 = vmatprep.subr.mxu0 0.0
        %4290 = vmatpush1.msra.mxu0 0.0
        %4291 = vmatprep.subr.mxu0 0.0
        %4292 = vmatpush1.msra.mxu0 0.0
        %4293 = vmatprep.subr.mxu0 0.0
        %4294 = vmatpush1.msra.mxu0 0.0
        %4295 = vmatprep.subr.mxu0 0.0
        %4296 = vmatpush1.msra.mxu0 0.0
        %4297 = vmatprep.subr.mxu0 0.0
        %4298 = vmatpush1.msra.mxu0 0.0
        %4299 = vmatprep.subr.mxu0 0.0
        %4300 = vmatpush1.msra.mxu0 0.0
        %4301 = vmatprep.subr.mxu0 0.0
        %4302 = vmatpush1.msra.mxu0 0.0
        %4303 = vmatprep.subr.mxu0 0.0
        %4304 = vmatpush1.msra.mxu0 0.0
        %4305 = vmatprep.mubr.f32.mxu0 0.0
        %4306 = vmatmul.mubr.f32.gmra.mrb[0].mxu0 %v4168
        %v4307 = vpop.f32.mrb[0].mxu0
        %v4308 = vadd.f32 0.0, %v4307
        %v4309 = vpop.f32.mrb[0].mxu0
        %v4310 = vadd.f32 0.0, %v4309
        %4311 = vdwg.mxu0
        %v4312 = vadd.f32 %v4142, %v4237
        %v4313 = vadd.f32 %v4143, %v4239
        %v4314 = vadd.f32 %v4144, %v4308
        %v4315 = vadd.f32 %v4145, %v4310
        %s4316 = scalar_lea.vmem %s2, 184
        %v4317 = vld [vmem:[%s4316] sm:$0xff]
        %4318 = vrot.lane.b32.xlu0 %v2608, 87
        %v4319 = vpop.permute.xlu0 %4318
        %4320 = vrot.lane.b32.xlu0 %v2609, 87
        %v4321 = vpop.permute.xlu0 %4320
        %4322 = vrot.lane.b32.xlu0 %v2610, 87
        %v4323 = vpop.permute.xlu0 %4322
        %4324 = vrot.lane.b32.xlu0 %v2611, 87
        %v4325 = vpop.permute.xlu0 %4324
        %4326 = vrot.lane.b32.xlu0 %v2612, 87
        %v4327 = vpop.permute.xlu0 %4326
        %vm4328 = vcmask 711680
        %v4329 = vsel %vm4328, %v4319, %v4321
        %v4330 = vsel %vm4328, %v4321, %v4323
        %v4331 = vsel %vm4328, %v4323, %v4325
        %v4332 = vsel %vm4328, %v4325, %v4327
        %v4338 = vsel %vm445, %v4317, 0
        %4340 = vmatprep.subr.mxu0 %v4330
        %4341 = vmatpush1.msra.mxu0 %v4329
        %4342 = vmatprep.subr.mxu0 0.0
        %4343 = vmatpush1.msra.mxu0 0.0
        %4344 = vmatprep.subr.mxu0 0.0
        %4345 = vmatpush1.msra.mxu0 0.0
        %4346 = vmatprep.subr.mxu0 0.0
        %4347 = vmatpush1.msra.mxu0 0.0
        %4348 = vmatprep.subr.mxu0 0.0
        %4349 = vmatpush1.msra.mxu0 0.0
        %4350 = vmatprep.subr.mxu0 0.0
        %4351 = vmatpush1.msra.mxu0 0.0
        %4352 = vmatprep.subr.mxu0 0.0
        %4353 = vmatpush1.msra.mxu0 0.0
        %4354 = vmatprep.subr.mxu0 0.0
        %4355 = vmatpush1.msra.mxu0 0.0
        %4356 = vmatprep.subr.mxu0 0.0
        %4357 = vmatpush1.msra.mxu0 0.0
        %4358 = vmatprep.subr.mxu0 0.0
        %4359 = vmatpush1.msra.mxu0 0.0
        %4360 = vmatprep.subr.mxu0 0.0
        %4361 = vmatpush1.msra.mxu0 0.0
        %4362 = vmatprep.subr.mxu0 0.0
        %4363 = vmatpush1.msra.mxu0 0.0
        %4364 = vmatprep.subr.mxu0 0.0
        %4365 = vmatpush1.msra.mxu0 0.0
        %4366 = vmatprep.subr.mxu0 0.0
        %4367 = vmatpush1.msra.mxu0 0.0
        %4368 = vmatprep.subr.mxu0 0.0
        %4369 = vmatpush1.msra.mxu0 0.0
        %4370 = vmatprep.subr.mxu0 0.0
        %4371 = vmatpush1.msra.mxu0 0.0
        %4372 = vmatprep.subr.mxu0 0.0
        %4373 = vmatpush1.msra.mxu0 0.0
        %4374 = vmatprep.subr.mxu0 0.0
        %4375 = vmatpush1.msra.mxu0 0.0
        %4376 = vmatprep.subr.mxu0 0.0
        %4377 = vmatpush1.msra.mxu0 0.0
        %4378 = vmatprep.subr.mxu0 0.0
        %4379 = vmatpush1.msra.mxu0 0.0
        %4380 = vmatprep.subr.mxu0 0.0
        %4381 = vmatpush1.msra.mxu0 0.0
        %4382 = vmatprep.subr.mxu0 0.0
        %4383 = vmatpush1.msra.mxu0 0.0
        %4384 = vmatprep.subr.mxu0 0.0
        %4385 = vmatpush1.msra.mxu0 0.0
        %4386 = vmatprep.subr.mxu0 0.0
        %4387 = vmatpush1.msra.mxu0 0.0
        %4388 = vmatprep.subr.mxu0 0.0
        %4389 = vmatpush1.msra.mxu0 0.0
        %4390 = vmatprep.subr.mxu0 0.0
        %4391 = vmatpush1.msra.mxu0 0.0
        %4392 = vmatprep.subr.mxu0 0.0
        %4393 = vmatpush1.msra.mxu0 0.0
        %4394 = vmatprep.subr.mxu0 0.0
        %4395 = vmatpush1.msra.mxu0 0.0
        %4396 = vmatprep.subr.mxu0 0.0
        %4397 = vmatpush1.msra.mxu0 0.0
        %4398 = vmatprep.subr.mxu0 0.0
        %4399 = vmatpush1.msra.mxu0 0.0
        %4400 = vmatprep.subr.mxu0 0.0
        %4401 = vmatpush1.msra.mxu0 0.0
        %4402 = vmatprep.subr.mxu0 0.0
        %4403 = vmatpush1.msra.mxu0 0.0
        %4404 = vmatprep.mubr.f32.mxu0 0.0
        %4405 = vmatmul.mubr.f32.gmra.mrb[0].mxu0 %v4338
        %v4406 = vpop.f32.mrb[0].mxu0
        %v4407 = vadd.f32 0.0, %v4406
        %v4408 = vpop.f32.mrb[0].mxu0
        %v4409 = vadd.f32 0.0, %v4408
        %4410 = vdwg.mxu0
        %4411 = vmatprep.subr.mxu0 %v4332
        %4412 = vmatpush1.msra.mxu0 %v4331
        %4413 = vmatprep.subr.mxu0 0.0
        %4414 = vmatpush1.msra.mxu0 0.0
        %4415 = vmatprep.subr.mxu0 0.0
        %4416 = vmatpush1.msra.mxu0 0.0
        %4417 = vmatprep.subr.mxu0 0.0
        %4418 = vmatpush1.msra.mxu0 0.0
        %4419 = vmatprep.subr.mxu0 0.0
        %4420 = vmatpush1.msra.mxu0 0.0
        %4421 = vmatprep.subr.mxu0 0.0
        %4422 = vmatpush1.msra.mxu0 0.0
        %4423 = vmatprep.subr.mxu0 0.0
        %4424 = vmatpush1.msra.mxu0 0.0
        %4425 = vmatprep.subr.mxu0 0.0
        %4426 = vmatpush1.msra.mxu0 0.0
        %4427 = vmatprep.subr.mxu0 0.0
        %4428 = vmatpush1.msra.mxu0 0.0
        %4429 = vmatprep.subr.mxu0 0.0
        %4430 = vmatpush1.msra.mxu0 0.0
        %4431 = vmatprep.subr.mxu0 0.0
        %4432 = vmatpush1.msra.mxu0 0.0
        %4433 = vmatprep.subr.mxu0 0.0
        %4434 = vmatpush1.msra.mxu0 0.0
        %4435 = vmatprep.subr.mxu0 0.0
        %4436 = vmatpush1.msra.mxu0 0.0
        %4437 = vmatprep.subr.mxu0 0.0
        %4438 = vmatpush1.msra.mxu0 0.0
        %4439 = vmatprep.subr.mxu0 0.0
        %4440 = vmatpush1.msra.mxu0 0.0
        %4441 = vmatprep.subr.mxu0 0.0
        %4442 = vmatpush1.msra.mxu0 0.0
        %4443 = vmatprep.subr.mxu0 0.0
        %4444 = vmatpush1.msra.mxu0 0.0
        %4445 = vmatprep.subr.mxu0 0.0
        %4446 = vmatpush1.msra.mxu0 0.0
        %4447 = vmatprep.subr.mxu0 0.0
        %4448 = vmatpush1.msra.mxu0 0.0
        %4449 = vmatprep.subr.mxu0 0.0
        %4450 = vmatpush1.msra.mxu0 0.0
        %4451 = vmatprep.subr.mxu0 0.0
        %4452 = vmatpush1.msra.mxu0 0.0
        %4453 = vmatprep.subr.mxu0 0.0
        %4454 = vmatpush1.msra.mxu0 0.0
        %4455 = vmatprep.subr.mxu0 0.0
        %4456 = vmatpush1.msra.mxu0 0.0
        %4457 = vmatprep.subr.mxu0 0.0
        %4458 = vmatpush1.msra.mxu0 0.0
        %4459 = vmatprep.subr.mxu0 0.0
        %4460 = vmatpush1.msra.mxu0 0.0
        %4461 = vmatprep.subr.mxu0 0.0
        %4462 = vmatpush1.msra.mxu0 0.0
        %4463 = vmatprep.subr.mxu0 0.0
        %4464 = vmatpush1.msra.mxu0 0.0
        %4465 = vmatprep.subr.mxu0 0.0
        %4466 = vmatpush1.msra.mxu0 0.0
        %4467 = vmatprep.subr.mxu0 0.0
        %4468 = vmatpush1.msra.mxu0 0.0
        %4469 = vmatprep.subr.mxu0 0.0
        %4470 = vmatpush1.msra.mxu0 0.0
        %4471 = vmatprep.subr.mxu0 0.0
        %4472 = vmatpush1.msra.mxu0 0.0
        %4473 = vmatprep.subr.mxu0 0.0
        %4474 = vmatpush1.msra.mxu0 0.0
        %4475 = vmatprep.mubr.f32.mxu0 0.0
        %4476 = vmatmul.mubr.f32.gmra.mrb[0].mxu0 %v4338
        %v4477 = vpop.f32.mrb[0].mxu0
        %v4478 = vadd.f32 0.0, %v4477
        %v4479 = vpop.f32.mrb[0].mxu0
        %v4480 = vadd.f32 0.0, %v4479
        %4481 = vdwg.mxu0
        %v4482 = vadd.f32 %v4312, %v4407
        %v4483 = vadd.f32 %v4313, %v4409
        %v4484 = vadd.f32 %v4314, %v4478
        %v4485 = vadd.f32 %v4315, %v4480
        %s4486 = scalar_lea.vmem %s2, 192
        %v4487 = vld [vmem:[%s4486] sm:$0xff]
        %4488 = vrot.lane.b32.xlu0 %v2608, 86
        %v4489 = vpop.permute.xlu0 %4488
        %4490 = vrot.lane.b32.xlu0 %v2609, 86
        %v4491 = vpop.permute.xlu0 %4490
        %4492 = vrot.lane.b32.xlu0 %v2610, 86
        %v4493 = vpop.permute.xlu0 %4492
        %4494 = vrot.lane.b32.xlu0 %v2611, 86
        %v4495 = vpop.permute.xlu0 %4494
        %4496 = vrot.lane.b32.xlu0 %v2612, 86
        %v4497 = vpop.permute.xlu0 %4496
        %vm4498 = vcmask 703488
        %v4499 = vsel %vm4498, %v4489, %v4491
        %v4500 = vsel %vm4498, %v4491, %v4493
        %v4501 = vsel %vm4498, %v4493, %v4495
        %v4502 = vsel %vm4498, %v4495, %v4497
        %v4508 = vsel %vm445, %v4487, 0
        %4510 = vmatprep.subr.mxu0 %v4500
        %4511 = vmatpush1.msra.mxu0 %v4499
        %4512 = vmatprep.subr.mxu0 0.0
        %4513 = vmatpush1.msra.mxu0 0.0
        %4514 = vmatprep.subr.mxu0 0.0
        %4515 = vmatpush1.msra.mxu0 0.0
        %4516 = vmatprep.subr.mxu0 0.0
        %4517 = vmatpush1.msra.mxu0 0.0
        %4518 = vmatprep.subr.mxu0 0.0
        %4519 = vmatpush1.msra.mxu0 0.0
        %4520 = vmatprep.subr.mxu0 0.0
        %4521 = vmatpush1.msra.mxu0 0.0
        %4522 = vmatprep.subr.mxu0 0.0
        %4523 = vmatpush1.msra.mxu0 0.0
        %4524 = vmatprep.subr.mxu0 0.0
        %4525 = vmatpush1.msra.mxu0 0.0
        %4526 = vmatprep.subr.mxu0 0.0
        %4527 = vmatpush1.msra.mxu0 0.0
        %4528 = vmatprep.subr.mxu0 0.0
        %4529 = vmatpush1.msra.mxu0 0.0
        %4530 = vmatprep.subr.mxu0 0.0
        %4531 = vmatpush1.msra.mxu0 0.0
        %4532 = vmatprep.subr.mxu0 0.0
        %4533 = vmatpush1.msra.mxu0 0.0
        %4534 = vmatprep.subr.mxu0 0.0
        %4535 = vmatpush1.msra.mxu0 0.0
        %4536 = vmatprep.subr.mxu0 0.0
        %4537 = vmatpush1.msra.mxu0 0.0
        %4538 = vmatprep.subr.mxu0 0.0
        %4539 = vmatpush1.msra.mxu0 0.0
        %4540 = vmatprep.subr.mxu0 0.0
        %4541 = vmatpush1.msra.mxu0 0.0
        %4542 = vmatprep.subr.mxu0 0.0
        %4543 = vmatpush1.msra.mxu0 0.0
        %4544 = vmatprep.subr.mxu0 0.0
        %4545 = vmatpush1.msra.mxu0 0.0
        %4546 = vmatprep.subr.mxu0 0.0
        %4547 = vmatpush1.msra.mxu0 0.0
        %4548 = vmatprep.subr.mxu0 0.0
        %4549 = vmatpush1.msra.mxu0 0.0
        %4550 = vmatprep.subr.mxu0 0.0
        %4551 = vmatpush1.msra.mxu0 0.0
        %4552 = vmatprep.subr.mxu0 0.0
        %4553 = vmatpush1.msra.mxu0 0.0
        %4554 = vmatprep.subr.mxu0 0.0
        %4555 = vmatpush1.msra.mxu0 0.0
        %4556 = vmatprep.subr.mxu0 0.0
        %4557 = vmatpush1.msra.mxu0 0.0
        %4558 = vmatprep.subr.mxu0 0.0
        %4559 = vmatpush1.msra.mxu0 0.0
        %4560 = vmatprep.subr.mxu0 0.0
        %4561 = vmatpush1.msra.mxu0 0.0
        %4562 = vmatprep.subr.mxu0 0.0
        %4563 = vmatpush1.msra.mxu0 0.0
        %4564 = vmatprep.subr.mxu0 0.0
        %4565 = vmatpush1.msra.mxu0 0.0
        %4566 = vmatprep.subr.mxu0 0.0
        %4567 = vmatpush1.msra.mxu0 0.0
        %4568 = vmatprep.subr.mxu0 0.0
        %4569 = vmatpush1.msra.mxu0 0.0
        %4570 = vmatprep.subr.mxu0 0.0
        %4571 = vmatpush1.msra.mxu0 0.0
        %4572 = vmatprep.subr.mxu0 0.0
        %4573 = vmatpush1.msra.mxu0 0.0
        %4574 = vmatprep.mubr.f32.mxu0 0.0
        %4575 = vmatmul.mubr.f32.gmra.mrb[0].mxu0 %v4508
        %v4576 = vpop.f32.mrb[0].mxu0
        %v4577 = vadd.f32 0.0, %v4576
        %v4578 = vpop.f32.mrb[0].mxu0
        %v4579 = vadd.f32 0.0, %v4578
        %4580 = vdwg.mxu0
        %4581 = vmatprep.subr.mxu0 %v4502
        %4582 = vmatpush1.msra.mxu0 %v4501
        %4583 = vmatprep.subr.mxu0 0.0
        %4584 = vmatpush1.msra.mxu0 0.0
        %4585 = vmatprep.subr.mxu0 0.0
        %4586 = vmatpush1.msra.mxu0 0.0
        %4587 = vmatprep.subr.mxu0 0.0
        %4588 = vmatpush1.msra.mxu0 0.0
        %4589 = vmatprep.subr.mxu0 0.0
        %4590 = vmatpush1.msra.mxu0 0.0
        %4591 = vmatprep.subr.mxu0 0.0
        %4592 = vmatpush1.msra.mxu0 0.0
        %4593 = vmatprep.subr.mxu0 0.0
        %4594 = vmatpush1.msra.mxu0 0.0
        %4595 = vmatprep.subr.mxu0 0.0
        %4596 = vmatpush1.msra.mxu0 0.0
        %4597 = vmatprep.subr.mxu0 0.0
        %4598 = vmatpush1.msra.mxu0 0.0
        %4599 = vmatprep.subr.mxu0 0.0
        %4600 = vmatpush1.msra.mxu0 0.0
        %4601 = vmatprep.subr.mxu0 0.0
        %4602 = vmatpush1.msra.mxu0 0.0
        %4603 = vmatprep.subr.mxu0 0.0
        %4604 = vmatpush1.msra.mxu0 0.0
        %4605 = vmatprep.subr.mxu0 0.0
        %4606 = vmatpush1.msra.mxu0 0.0
        %4607 = vmatprep.subr.mxu0 0.0
        %4608 = vmatpush1.msra.mxu0 0.0
        %4609 = vmatprep.subr.mxu0 0.0
        %4610 = vmatpush1.msra.mxu0 0.0
        %4611 = vmatprep.subr.mxu0 0.0
        %4612 = vmatpush1.msra.mxu0 0.0
        %4613 = vmatprep.subr.mxu0 0.0
        %4614 = vmatpush1.msra.mxu0 0.0
        %4615 = vmatprep.subr.mxu0 0.0
        %4616 = vmatpush1.msra.mxu0 0.0
        %4617 = vmatprep.subr.mxu0 0.0
        %4618 = vmatpush1.msra.mxu0 0.0
        %4619 = vmatprep.subr.mxu0 0.0
        %4620 = vmatpush1.msra.mxu0 0.0
        %4621 = vmatprep.subr.mxu0 0.0
        %4622 = vmatpush1.msra.mxu0 0.0
        %4623 = vmatprep.subr.mxu0 0.0
        %4624 = vmatpush1.msra.mxu0 0.0
        %4625 = vmatprep.subr.mxu0 0.0
        %4626 = vmatpush1.msra.mxu0 0.0
        %4627 = vmatprep.subr.mxu0 0.0
        %4628 = vmatpush1.msra.mxu0 0.0
        %4629 = vmatprep.subr.mxu0 0.0
        %4630 = vmatpush1.msra.mxu0 0.0
        %4631 = vmatprep.subr.mxu0 0.0
        %4632 = vmatpush1.msra.mxu0 0.0
        %4633 = vmatprep.subr.mxu0 0.0
        %4634 = vmatpush1.msra.mxu0 0.0
        %4635 = vmatprep.subr.mxu0 0.0
        %4636 = vmatpush1.msra.mxu0 0.0
        %4637 = vmatprep.subr.mxu0 0.0
        %4638 = vmatpush1.msra.mxu0 0.0
        %4639 = vmatprep.subr.mxu0 0.0
        %4640 = vmatpush1.msra.mxu0 0.0
        %4641 = vmatprep.subr.mxu0 0.0
        %4642 = vmatpush1.msra.mxu0 0.0
        %4643 = vmatprep.subr.mxu0 0.0
        %4644 = vmatpush1.msra.mxu0 0.0
        %4645 = vmatprep.mubr.f32.mxu0 0.0
        %4646 = vmatmul.mubr.f32.gmra.mrb[0].mxu0 %v4508
        %v4647 = vpop.f32.mrb[0].mxu0
        %v4648 = vadd.f32 0.0, %v4647
        %v4649 = vpop.f32.mrb[0].mxu0
        %v4650 = vadd.f32 0.0, %v4649
        %4651 = vdwg.mxu0
        %v4652 = vadd.f32 %v4482, %v4577
        %v4653 = vadd.f32 %v4483, %v4579
        %v4654 = vadd.f32 %v4484, %v4648
        %v4655 = vadd.f32 %v4485, %v4650
        %v4656 = vld [vmem:[%s3] sm:$0xff]
        %v4657 = vld [vmem:[%s4] sm:$0xff]
        %v4658 = vld [vmem:[%s5] sm:$0xff]
        %4660 = vset.pattern.permute.xlu0 0
        %4661 = vperm.xlu0 %4660, %v4656
        %v4662 = vpop.permute.xlu0 %4661
        %v4664 = vadd.f32 %v4652, %v4662
        %v4665 = vadd.f32 %v4653, %v4662
        %v4666 = vadd.f32 %v4654, %v4662
        %v4667 = vadd.f32 %v4655, %v4662
        %v4669 = vlaneseq
        %v4670 = vshrl.u32 %v4669, 7
        %v4671 = vsub.s32 0, %v4670
        %v4672 = vrot.slane %v412, %v4671
        %v4673 = vlaneseq
        %v4674 = vshrl.u32 %v4673, 7
        %v4675 = vsub.s32 1, %v4674
        %v4676 = vrot.slane %v412, %v4675
        %v4677 = vlaneseq
        %v4678 = vshrl.u32 %v4677, 7
        %v4679 = vsub.s32 2, %v4678
        %v4680 = vrot.slane %v412, %v4679
        %v4681 = vlaneseq
        %v4682 = vshrl.u32 %v4681, 7
        %v4683 = vsub.s32 3, %v4682
        %v4684 = vrot.slane %v412, %v4683
        %v4689 = vmul.f32 %v4664, %v4672
        %v4690 = vmul.f32 %v4665, %v4676
        %v4691 = vmul.f32 %v4666, %v4680
        %v4692 = vmul.f32 %v4667, %v4684
        %v4693 = vadd.f32 %v4689, %v4690
        %v4694 = vadd.f32 %v4693, %v4691
        %v4695 = vadd.f32 %v4694, %v4692
        %4696 = vadd.xlane.f32.xlu0 %v4695
        %v4697 = vpop.xlane.xlu0 %4696
        %v4698 = vmul.f32 %v4689, %v4664
        %v4699 = vmul.f32 %v4690, %v4665
        %v4700 = vmul.f32 %v4691, %v4666
        %v4701 = vmul.f32 %v4692, %v4667
        %v4702 = vadd.f32 %v4698, %v4699
        %v4703 = vadd.f32 %v4702, %v4700
        %v4704 = vadd.f32 %v4703, %v4701
        %4705 = vadd.xlane.f32.xlu0 %v4704
        %v4706 = vpop.xlane.xlu0 %4705
        %v4707 = vmul.f32 %v4697, 0.00390625
        %v4708 = vmul.f32 %v4706, 0.00390625
        %v4709 = vmul.f32 %v4707, %v4707
        %v4710 = vsub.f32 %v4708, %v4709
        %v4711 = vmax.f32 %v4710, 0.0
        %v4712 = vsub.f32 %v4664, %v4707
        %v4713 = vsub.f32 %v4665, %v4707
        %v4714 = vsub.f32 %v4666, %v4707
        %v4715 = vsub.f32 %v4667, %v4707
        %v4716 = vadd.f32 %v4711, 1e-05
        %v4717 = vrsqrt.pop %v4716
        %v4718 = vmul.f32 %v4712, %v4717
        %v4719 = vmul.f32 %v4713, %v4717
        %v4720 = vmul.f32 %v4714, %v4717
        %v4721 = vmul.f32 %v4715, %v4717
        %4723 = vset.pattern.permute.xlu0 0
        %4724 = vperm.xlu0 %4723, %v4657
        %v4725 = vpop.permute.xlu0 %4724
        %v4727 = vmul.f32 %v4718, %v4725
        %v4728 = vmul.f32 %v4719, %v4725
        %v4729 = vmul.f32 %v4720, %v4725
        %v4730 = vmul.f32 %v4721, %v4725
        %4732 = vset.pattern.permute.xlu0 0
        %4733 = vperm.xlu0 %4732, %v4658
        %v4734 = vpop.permute.xlu0 %4733
        %v4736 = vadd.f32 %v4727, %v4734
        %v4737 = vadd.f32 %v4728, %v4734
        %v4738 = vadd.f32 %v4729, %v4734
        %v4739 = vadd.f32 %v4730, %v4734
        %v4740 = vmul.f32 %v4736, 0.5
        %v4741 = vmul.f32 %v4737, 0.5
        %v4742 = vmul.f32 %v4738, 0.5
        %v4743 = vmul.f32 %v4739, 0.5
        %v4744 = vmul.f32 %v4736, 0.70710677
        %v4745 = vmul.f32 %v4737, 0.70710677
        %v4746 = vmul.f32 %v4738, 0.70710677
        %v4747 = vmul.f32 %v4739, 0.70710677
        %v4748 = vand.u32 2147483647, %v4744
        %v4749 = vand.u32 2147483647, %v4745
        %v4750 = vand.u32 2147483647, %v4746
        %v4751 = vand.u32 2147483647, %v4747
        %v4752 = vmul.f32 %v4748, 0.3275911
        %v4753 = vmul.f32 %v4749, 0.3275911
        %v4754 = vmul.f32 %v4750, 0.3275911
        %v4755 = vmul.f32 %v4751, 0.3275911
        %v4756 = vadd.f32 %v4752, 1.0
        %v4757 = vadd.f32 %v4753, 1.0
        %v4758 = vadd.f32 %v4754, 1.0
        %v4759 = vadd.f32 %v4755, 1.0
        %v4760 = vrcp.pop %v4756
        %v4761 = vmul.f32 1.0, %v4760
        %v4762 = vrcp.pop %v4757
        %v4763 = vmul.f32 1.0, %v4762
        %v4764 = vrcp.pop %v4758
        %v4765 = vmul.f32 1.0, %v4764
        %v4766 = vrcp.pop %v4759
        %v4767 = vmul.f32 1.0, %v4766
        %v4768 = vmul.f32 %v4761, 1.0614054
        %v4769 = vmul.f32 %v4763, 1.0614054
        %v4770 = vmul.f32 %v4765, 1.0614054
        %v4771 = vmul.f32 %v4767, 1.0614054
        %v4772 = vadd.f32 %v4768, -1.4531521
        %v4773 = vadd.f32 %v4769, -1.4531521
        %v4774 = vadd.f32 %v4770, -1.4531521
        %v4775 = vadd.f32 %v4771, -1.4531521
        %v4776 = vmul.f32 %v4761, %v4772
        %v4777 = vmul.f32 %v4763, %v4773
        %v4778 = vmul.f32 %v4765, %v4774
        %v4779 = vmul.f32 %v4767, %v4775
        %v4780 = vadd.f32 %v4776, 1.4214138
        %v4781 = vadd.f32 %v4777, 1.4214138
        %v4782 = vadd.f32 %v4778, 1.4214138
        %v4783 = vadd.f32 %v4779, 1.4214138
        %v4784 = vmul.f32 %v4761, %v4780
        %v4785 = vmul.f32 %v4763, %v4781
        %v4786 = vmul.f32 %v4765, %v4782
        %v4787 = vmul.f32 %v4767, %v4783
        %v4788 = vadd.f32 %v4784, -0.28449672
        %v4789 = vadd.f32 %v4785, -0.28449672
        %v4790 = vadd.f32 %v4786, -0.28449672
        %v4791 = vadd.f32 %v4787, -0.28449672
        %v4792 = vmul.f32 %v4761, %v4788
        %v4793 = vmul.f32 %v4763, %v4789
        %v4794 = vmul.f32 %v4765, %v4790
        %v4795 = vmul.f32 %v4767, %v4791
        %v4796 = vadd.f32 %v4792, 0.2548296
        %v4797 = vadd.f32 %v4793, 0.2548296
        %v4798 = vadd.f32 %v4794, 0.2548296
        %v4799 = vadd.f32 %v4795, 0.2548296
        %v4800 = vmul.f32 %v4761, %v4796
        %v4801 = vmul.f32 %v4763, %v4797
        %v4802 = vmul.f32 %v4765, %v4798
        %v4803 = vmul.f32 %v4767, %v4799
        %v4804 = vmul.f32 %v4748, %v4748
        %v4805 = vmul.f32 %v4749, %v4749
        %v4806 = vmul.f32 %v4750, %v4750
        %v4807 = vmul.f32 %v4751, %v4751
        %v4808 = vsub.f32 0.0, %v4804
        %v4809 = vsub.f32 0.0, %v4805
        %v4810 = vsub.f32 0.0, %v4806
        %v4811 = vsub.f32 0.0, %v4807
        %v4812 = vmul.f32 %v4808, 1.442695
        %v4813 = vpow.pop %v4812
        %v4814 = vmul.f32 %v4809, 1.442695
        %v4815 = vpow.pop %v4814
        %v4816 = vmul.f32 %v4810, 1.442695
        %v4817 = vpow.pop %v4816
        %v4818 = vmul.f32 %v4811, 1.442695
        %v4819 = vpow.pop %v4818
        %v4820 = vmul.f32 %v4800, %v4813
        %v4821 = vmul.f32 %v4801, %v4815
        %v4822 = vmul.f32 %v4802, %v4817
        %v4823 = vmul.f32 %v4803, %v4819
        %v4824 = vsub.f32 1.0, %v4820
        %v4825 = vsub.f32 1.0, %v4821
        %v4826 = vsub.f32 1.0, %v4822
        %v4827 = vsub.f32 1.0, %v4823
        %vm4828 = vcmp.ge.f32.partialorder %v4744, 0.0
        %vm4829 = vcmp.ge.f32.partialorder %v4745, 0.0
        %vm4830 = vcmp.ge.f32.partialorder %v4746, 0.0
        %vm4831 = vcmp.ge.f32.partialorder %v4747, 0.0
        %v4832 = vsub.f32 0.0, %v4824
        %v4833 = vsub.f32 0.0, %v4825
        %v4834 = vsub.f32 0.0, %v4826
        %v4835 = vsub.f32 0.0, %v4827
        %v4836 = vsel %vm4828, %v4824, %v4832
        %v4837 = vsel %vm4829, %v4825, %v4833
        %v4838 = vsel %vm4830, %v4826, %v4834
        %v4839 = vsel %vm4831, %v4827, %v4835
        %v4840 = vadd.f32 %v4836, 1.0
        %v4841 = vadd.f32 %v4837, 1.0
        %v4842 = vadd.f32 %v4838, 1.0
        %v4843 = vadd.f32 %v4839, 1.0
        %v4844 = vmul.f32 %v4740, %v4840
        %v4845 = vmul.f32 %v4741, %v4841
        %v4846 = vmul.f32 %v4742, %v4842
        %v4847 = vmul.f32 %v4743, %v4843
        %v4848 = vmul.f32 %v4844, %v4672
        %v4849 = vmul.f32 %v4845, %v4676
        %v4850 = vmul.f32 %v4846, %v4680
        %v4851 = vmul.f32 %v4847, %v4684
        %4852 = vst [vmem:[#allocation2] sm:$0xff] 0.0
        %4853 = vst [vmem:[#allocation2 + $0x28] sm:$0xff] 0.0
        %4854 = vst [vmem:[#allocation2 + $0x8] sm:$0xff] %v4848
        %4855 = vst [vmem:[#allocation2 + $0x10] sm:$0xff] %v4849
        %4856 = vst [vmem:[#allocation2 + $0x18] sm:$0xff] %v4850
        %4857 = vst [vmem:[#allocation2 + $0x20] sm:$0xff] %v4851
        %v4858 = vld [vmem:[%s6] sm:$0xff]
        %v4859 = vld [vmem:[#allocation2] sm:$0xff]
        %v4860 = vld [vmem:[#allocation2 + $0x8] sm:$0xff]
        %v4861 = vld [vmem:[#allocation2 + $0x10] sm:$0xff]
        %v4862 = vld [vmem:[#allocation2 + $0x18] sm:$0xff]
        %v4863 = vld [vmem:[#allocation2 + $0x20] sm:$0xff]
        %s4864 = scalar_lea.vmem %s6, 8
        %v4865 = vld [vmem:[%s4864] sm:$0xff]
        %4871 = vrot.lane.b32.xlu0 %v4859, 41
        %v4872 = vpop.permute.xlu0 %4871
        %4873 = vrot.lane.b32.xlu0 %v4860, 41
        %v4874 = vpop.permute.xlu0 %4873
        %4875 = vrot.lane.b32.xlu0 %v4861, 41
        %v4876 = vpop.permute.xlu0 %4875
        %4877 = vrot.lane.b32.xlu0 %v4862, 41
        %v4878 = vpop.permute.xlu0 %4877
        %4879 = vrot.lane.b32.xlu0 %v4863, 41
        %v4880 = vpop.permute.xlu0 %4879
        %v4881 = vsel %vm436, %v4872, %v4874
        %v4882 = vsel %vm436, %v4874, %v4876
        %v4883 = vsel %vm436, %v4876, %v4878
        %v4884 = vsel %vm436, %v4878, %v4880
        %v4890 = vsel %vm445, %v4865, 0
        %4892 = vmatprep.subr.mxu0 %v4882
        %4893 = vmatpush1.msra.mxu0 %v4881
        %4894 = vmatprep.subr.mxu0 0.0
        %4895 = vmatpush1.msra.mxu0 0.0
        %4896 = vmatprep.subr.mxu0 0.0
        %4897 = vmatpush1.msra.mxu0 0.0
        %4898 = vmatprep.subr.mxu0 0.0
        %4899 = vmatpush1.msra.mxu0 0.0
        %4900 = vmatprep.subr.mxu0 0.0
        %4901 = vmatpush1.msra.mxu0 0.0
        %4902 = vmatprep.subr.mxu0 0.0
        %4903 = vmatpush1.msra.mxu0 0.0
        %4904 = vmatprep.subr.mxu0 0.0
        %4905 = vmatpush1.msra.mxu0 0.0
        %4906 = vmatprep.subr.mxu0 0.0
        %4907 = vmatpush1.msra.mxu0 0.0
        %4908 = vmatprep.subr.mxu0 0.0
        %4909 = vmatpush1.msra.mxu0 0.0
        %4910 = vmatprep.subr.mxu0 0.0
        %4911 = vmatpush1.msra.mxu0 0.0
        %4912 = vmatprep.subr.mxu0 0.0
        %4913 = vmatpush1.msra.mxu0 0.0
        %4914 = vmatprep.subr.mxu0 0.0
        %4915 = vmatpush1.msra.mxu0 0.0
        %4916 = vmatprep.subr.mxu0 0.0
        %4917 = vmatpush1.msra.mxu0 0.0
        %4918 = vmatprep.subr.mxu0 0.0
        %4919 = vmatpush1.msra.mxu0 0.0
        %4920 = vmatprep.subr.mxu0 0.0
        %4921 = vmatpush1.msra.mxu0 0.0
        %4922 = vmatprep.subr.mxu0 0.0
        %4923 = vmatpush1.msra.mxu0 0.0
        %4924 = vmatprep.subr.mxu0 0.0
        %4925 = vmatpush1.msra.mxu0 0.0
        %4926 = vmatprep.subr.mxu0 0.0
        %4927 = vmatpush1.msra.mxu0 0.0
        %4928 = vmatprep.subr.mxu0 0.0
        %4929 = vmatpush1.msra.mxu0 0.0
        %4930 = vmatprep.subr.mxu0 0.0
        %4931 = vmatpush1.msra.mxu0 0.0
        %4932 = vmatprep.subr.mxu0 0.0
        %4933 = vmatpush1.msra.mxu0 0.0
        %4934 = vmatprep.subr.mxu0 0.0
        %4935 = vmatpush1.msra.mxu0 0.0
        %4936 = vmatprep.subr.mxu0 0.0
        %4937 = vmatpush1.msra.mxu0 0.0
        %4938 = vmatprep.subr.mxu0 0.0
        %4939 = vmatpush1.msra.mxu0 0.0
        %4940 = vmatprep.subr.mxu0 0.0
        %4941 = vmatpush1.msra.mxu0 0.0
        %4942 = vmatprep.subr.mxu0 0.0
        %4943 = vmatpush1.msra.mxu0 0.0
        %4944 = vmatprep.subr.mxu0 0.0
        %4945 = vmatpush1.msra.mxu0 0.0
        %4946 = vmatprep.subr.mxu0 0.0
        %4947 = vmatpush1.msra.mxu0 0.0
        %4948 = vmatprep.subr.mxu0 0.0
        %4949 = vmatpush1.msra.mxu0 0.0
        %4950 = vmatprep.subr.mxu0 0.0
        %4951 = vmatpush1.msra.mxu0 0.0
        %4952 = vmatprep.subr.mxu0 0.0
        %4953 = vmatpush1.msra.mxu0 0.0
        %4954 = vmatprep.subr.mxu0 0.0
        %4955 = vmatpush1.msra.mxu0 0.0
        %4956 = vmatprep.mubr.f32.mxu0 0.0
        %4957 = vmatmul.mubr.f32.gmra.mrb[0].mxu0 %v4890
        %v4958 = vpop.f32.mrb[0].mxu0
        %v4959 = vadd.f32 0.0, %v4958
        %v4960 = vpop.f32.mrb[0].mxu0
        %v4961 = vadd.f32 0.0, %v4960
        %4962 = vdwg.mxu0
        %4963 = vmatprep.subr.mxu0 %v4884
        %4964 = vmatpush1.msra.mxu0 %v4883
        %4965 = vmatprep.subr.mxu0 0.0
        %4966 = vmatpush1.msra.mxu0 0.0
        %4967 = vmatprep.subr.mxu0 0.0
        %4968 = vmatpush1.msra.mxu0 0.0
        %4969 = vmatprep.subr.mxu0 0.0
        %4970 = vmatpush1.msra.mxu0 0.0
        %4971 = vmatprep.subr.mxu0 0.0
        %4972 = vmatpush1.msra.mxu0 0.0
        %4973 = vmatprep.subr.mxu0 0.0
        %4974 = vmatpush1.msra.mxu0 0.0
        %4975 = vmatprep.subr.mxu0 0.0
        %4976 = vmatpush1.msra.mxu0 0.0
        %4977 = vmatprep.subr.mxu0 0.0
        %4978 = vmatpush1.msra.mxu0 0.0
        %4979 = vmatprep.subr.mxu0 0.0
        %4980 = vmatpush1.msra.mxu0 0.0
        %4981 = vmatprep.subr.mxu0 0.0
        %4982 = vmatpush1.msra.mxu0 0.0
        %4983 = vmatprep.subr.mxu0 0.0
        %4984 = vmatpush1.msra.mxu0 0.0
        %4985 = vmatprep.subr.mxu0 0.0
        %4986 = vmatpush1.msra.mxu0 0.0
        %4987 = vmatprep.subr.mxu0 0.0
        %4988 = vmatpush1.msra.mxu0 0.0
        %4989 = vmatprep.subr.mxu0 0.0
        %4990 = vmatpush1.msra.mxu0 0.0
        %4991 = vmatprep.subr.mxu0 0.0
        %4992 = vmatpush1.msra.mxu0 0.0
        %4993 = vmatprep.subr.mxu0 0.0
        %4994 = vmatpush1.msra.mxu0 0.0
        %4995 = vmatprep.subr.mxu0 0.0
        %4996 = vmatpush1.msra.mxu0 0.0
        %4997 = vmatprep.subr.mxu0 0.0
        %4998 = vmatpush1.msra.mxu0 0.0
        %4999 = vmatprep.subr.mxu0 0.0
        %5000 = vmatpush1.msra.mxu0 0.0
        %5001 = vmatprep.subr.mxu0 0.0
        %5002 = vmatpush1.msra.mxu0 0.0
        %5003 = vmatprep.subr.mxu0 0.0
        %5004 = vmatpush1.msra.mxu0 0.0
        %5005 = vmatprep.subr.mxu0 0.0
        %5006 = vmatpush1.msra.mxu0 0.0
        %5007 = vmatprep.subr.mxu0 0.0
        %5008 = vmatpush1.msra.mxu0 0.0
        %5009 = vmatprep.subr.mxu0 0.0
        %5010 = vmatpush1.msra.mxu0 0.0
        %5011 = vmatprep.subr.mxu0 0.0
        %5012 = vmatpush1.msra.mxu0 0.0
        %5013 = vmatprep.subr.mxu0 0.0
        %5014 = vmatpush1.msra.mxu0 0.0
        %5015 = vmatprep.subr.mxu0 0.0
        %5016 = vmatpush1.msra.mxu0 0.0
        %5017 = vmatprep.subr.mxu0 0.0
        %5018 = vmatpush1.msra.mxu0 0.0
        %5019 = vmatprep.subr.mxu0 0.0
        %5020 = vmatpush1.msra.mxu0 0.0
        %5021 = vmatprep.subr.mxu0 0.0
        %5022 = vmatpush1.msra.mxu0 0.0
        %5023 = vmatprep.subr.mxu0 0.0
        %5024 = vmatpush1.msra.mxu0 0.0
        %5025 = vmatprep.subr.mxu0 0.0
        %5026 = vmatpush1.msra.mxu0 0.0
        %5027 = vmatprep.mubr.f32.mxu0 0.0
        %5028 = vmatmul.mubr.f32.gmra.mrb[0].mxu0 %v4890
        %v5029 = vpop.f32.mrb[0].mxu0
        %v5030 = vadd.f32 0.0, %v5029
        %v5031 = vpop.f32.mrb[0].mxu0
        %v5032 = vadd.f32 0.0, %v5031
        %5033 = vdwg.mxu0
        %5034 = vrot.lane.b32.xlu0 %v4859, 42
        %v5035 = vpop.permute.xlu0 %5034
        %5036 = vrot.lane.b32.xlu0 %v4860, 42
        %v5037 = vpop.permute.xlu0 %5036
        %5038 = vrot.lane.b32.xlu0 %v4861, 42
        %v5039 = vpop.permute.xlu0 %5038
        %5040 = vrot.lane.b32.xlu0 %v4862, 42
        %v5041 = vpop.permute.xlu0 %5040
        %5042 = vrot.lane.b32.xlu0 %v4863, 42
        %v5043 = vpop.permute.xlu0 %5042
        %v5044 = vsel %vm601, %v5035, %v5037
        %v5045 = vsel %vm601, %v5037, %v5039
        %v5046 = vsel %vm601, %v5039, %v5041
        %v5047 = vsel %vm601, %v5041, %v5043
        %v5053 = vsel %vm445, %v4858, 0
        %5055 = vmatprep.subr.mxu0 %v5045
        %5056 = vmatpush1.msra.mxu0 %v5044
        %5057 = vmatprep.subr.mxu0 0.0
        %5058 = vmatpush1.msra.mxu0 0.0
        %5059 = vmatprep.subr.mxu0 0.0
        %5060 = vmatpush1.msra.mxu0 0.0
        %5061 = vmatprep.subr.mxu0 0.0
        %5062 = vmatpush1.msra.mxu0 0.0
        %5063 = vmatprep.subr.mxu0 0.0
        %5064 = vmatpush1.msra.mxu0 0.0
        %5065 = vmatprep.subr.mxu0 0.0
        %5066 = vmatpush1.msra.mxu0 0.0
        %5067 = vmatprep.subr.mxu0 0.0
        %5068 = vmatpush1.msra.mxu0 0.0
        %5069 = vmatprep.subr.mxu0 0.0
        %5070 = vmatpush1.msra.mxu0 0.0
        %5071 = vmatprep.subr.mxu0 0.0
        %5072 = vmatpush1.msra.mxu0 0.0
        %5073 = vmatprep.subr.mxu0 0.0
        %5074 = vmatpush1.msra.mxu0 0.0
        %5075 = vmatprep.subr.mxu0 0.0
        %5076 = vmatpush1.msra.mxu0 0.0
        %5077 = vmatprep.subr.mxu0 0.0
        %5078 = vmatpush1.msra.mxu0 0.0
        %5079 = vmatprep.subr.mxu0 0.0
        %5080 = vmatpush1.msra.mxu0 0.0
        %5081 = vmatprep.subr.mxu0 0.0
        %5082 = vmatpush1.msra.mxu0 0.0
        %5083 = vmatprep.subr.mxu0 0.0
        %5084 = vmatpush1.msra.mxu0 0.0
        %5085 = vmatprep.subr.mxu0 0.0
        %5086 = vmatpush1.msra.mxu0 0.0
        %5087 = vmatprep.subr.mxu0 0.0
        %5088 = vmatpush1.msra.mxu0 0.0
        %5089 = vmatprep.subr.mxu0 0.0
        %5090 = vmatpush1.msra.mxu0 0.0
        %5091 = vmatprep.subr.mxu0 0.0
        %5092 = vmatpush1.msra.mxu0 0.0
        %5093 = vmatprep.subr.mxu0 0.0
        %5094 = vmatpush1.msra.mxu0 0.0
        %5095 = vmatprep.subr.mxu0 0.0
        %5096 = vmatpush1.msra.mxu0 0.0
        %5097 = vmatprep.subr.mxu0 0.0
        %5098 = vmatpush1.msra.mxu0 0.0
        %5099 = vmatprep.subr.mxu0 0.0
        %5100 = vmatpush1.msra.mxu0 0.0
        %5101 = vmatprep.subr.mxu0 0.0
        %5102 = vmatpush1.msra.mxu0 0.0
        %5103 = vmatprep.subr.mxu0 0.0
        %5104 = vmatpush1.msra.mxu0 0.0
        %5105 = vmatprep.subr.mxu0 0.0
        %5106 = vmatpush1.msra.mxu0 0.0
        %5107 = vmatprep.subr.mxu0 0.0
        %5108 = vmatpush1.msra.mxu0 0.0
        %5109 = vmatprep.subr.mxu0 0.0
        %5110 = vmatpush1.msra.mxu0 0.0
        %5111 = vmatprep.subr.mxu0 0.0
        %5112 = vmatpush1.msra.mxu0 0.0
        %5113 = vmatprep.subr.mxu0 0.0
        %5114 = vmatpush1.msra.mxu0 0.0
        %5115 = vmatprep.subr.mxu0 0.0
        %5116 = vmatpush1.msra.mxu0 0.0
        %5117 = vmatprep.subr.mxu0 0.0
        %5118 = vmatpush1.msra.mxu0 0.0
        %5119 = vmatprep.mubr.f32.mxu0 0.0
        %5120 = vmatmul.mubr.f32.gmra.mrb[0].mxu0 %v5053
        %v5121 = vpop.f32.mrb[0].mxu0
        %v5122 = vadd.f32 %v4959, %v5121
        %v5123 = vpop.f32.mrb[0].mxu0
        %v5124 = vadd.f32 %v4961, %v5123
        %5125 = vdwg.mxu0
        %5126 = vmatprep.subr.mxu0 %v5047
        %5127 = vmatpush1.msra.mxu0 %v5046
        %5128 = vmatprep.subr.mxu0 0.0
        %5129 = vmatpush1.msra.mxu0 0.0
        %5130 = vmatprep.subr.mxu0 0.0
        %5131 = vmatpush1.msra.mxu0 0.0
        %5132 = vmatprep.subr.mxu0 0.0
        %5133 = vmatpush1.msra.mxu0 0.0
        %5134 = vmatprep.subr.mxu0 0.0
        %5135 = vmatpush1.msra.mxu0 0.0
        %5136 = vmatprep.subr.mxu0 0.0
        %5137 = vmatpush1.msra.mxu0 0.0
        %5138 = vmatprep.subr.mxu0 0.0
        %5139 = vmatpush1.msra.mxu0 0.0
        %5140 = vmatprep.subr.mxu0 0.0
        %5141 = vmatpush1.msra.mxu0 0.0
        %5142 = vmatprep.subr.mxu0 0.0
        %5143 = vmatpush1.msra.mxu0 0.0
        %5144 = vmatprep.subr.mxu0 0.0
        %5145 = vmatpush1.msra.mxu0 0.0
        %5146 = vmatprep.subr.mxu0 0.0
        %5147 = vmatpush1.msra.mxu0 0.0
        %5148 = vmatprep.subr.mxu0 0.0
        %5149 = vmatpush1.msra.mxu0 0.0
        %5150 = vmatprep.subr.mxu0 0.0
        %5151 = vmatpush1.msra.mxu0 0.0
        %5152 = vmatprep.subr.mxu0 0.0
        %5153 = vmatpush1.msra.mxu0 0.0
        %5154 = vmatprep.subr.mxu0 0.0
        %5155 = vmatpush1.msra.mxu0 0.0
        %5156 = vmatprep.subr.mxu0 0.0
        %5157 = vmatpush1.msra.mxu0 0.0
        %5158 = vmatprep.subr.mxu0 0.0
        %5159 = vmatpush1.msra.mxu0 0.0
        %5160 = vmatprep.subr.mxu0 0.0
        %5161 = vmatpush1.msra.mxu0 0.0
        %5162 = vmatprep.subr.mxu0 0.0
        %5163 = vmatpush1.msra.mxu0 0.0
        %5164 = vmatprep.subr.mxu0 0.0
        %5165 = vmatpush1.msra.mxu0 0.0
        %5166 = vmatprep.subr.mxu0 0.0
        %5167 = vmatpush1.msra.mxu0 0.0
        %5168 = vmatprep.subr.mxu0 0.0
        %5169 = vmatpush1.msra.mxu0 0.0
        %5170 = vmatprep.subr.mxu0 0.0
        %5171 = vmatpush1.msra.mxu0 0.0
        %5172 = vmatprep.subr.mxu0 0.0
        %5173 = vmatpush1.msra.mxu0 0.0
        %5174 = vmatprep.subr.mxu0 0.0
        %5175 = vmatpush1.msra.mxu0 0.0
        %5176 = vmatprep.subr.mxu0 0.0
        %5177 = vmatpush1.msra.mxu0 0.0
        %5178 = vmatprep.subr.mxu0 0.0
        %5179 = vmatpush1.msra.mxu0 0.0
        %5180 = vmatprep.subr.mxu0 0.0
        %5181 = vmatpush1.msra.mxu0 0.0
        %5182 = vmatprep.subr.mxu0 0.0
        %5183 = vmatpush1.msra.mxu0 0.0
        %5184 = vmatprep.subr.mxu0 0.0
        %5185 = vmatpush1.msra.mxu0 0.0
        %5186 = vmatprep.subr.mxu0 0.0
        %5187 = vmatpush1.msra.mxu0 0.0
        %5188 = vmatprep.subr.mxu0 0.0
        %5189 = vmatpush1.msra.mxu0 0.0
        %5190 = vmatprep.mubr.f32.mxu0 0.0
        %5191 = vmatmul.mubr.f32.gmra.mrb[0].mxu0 %v5053
        %v5192 = vpop.f32.mrb[0].mxu0
        %v5193 = vadd.f32 %v5030, %v5192
        %v5194 = vpop.f32.mrb[0].mxu0
        %v5195 = vadd.f32 %v5032, %v5194
        %5196 = vdwg.mxu0
        %s5197 = scalar_lea.vmem %s6, 16
        %v5198 = vld [vmem:[%s5197] sm:$0xff]
        %5199 = vrot.lane.b32.xlu0 %v4859, 40
        %v5200 = vpop.permute.xlu0 %5199
        %5201 = vrot.lane.b32.xlu0 %v4860, 40
        %v5202 = vpop.permute.xlu0 %5201
        %5203 = vrot.lane.b32.xlu0 %v4861, 40
        %v5204 = vpop.permute.xlu0 %5203
        %5205 = vrot.lane.b32.xlu0 %v4862, 40
        %v5206 = vpop.permute.xlu0 %5205
        %5207 = vrot.lane.b32.xlu0 %v4863, 40
        %v5208 = vpop.permute.xlu0 %5207
        %v5209 = vsel %vm767, %v5200, %v5202
        %v5210 = vsel %vm767, %v5202, %v5204
        %v5211 = vsel %vm767, %v5204, %v5206
        %v5212 = vsel %vm767, %v5206, %v5208
        %v5218 = vsel %vm445, %v5198, 0
        %5220 = vmatprep.subr.mxu0 %v5210
        %5221 = vmatpush1.msra.mxu0 %v5209
        %5222 = vmatprep.subr.mxu0 0.0
        %5223 = vmatpush1.msra.mxu0 0.0
        %5224 = vmatprep.subr.mxu0 0.0
        %5225 = vmatpush1.msra.mxu0 0.0
        %5226 = vmatprep.subr.mxu0 0.0
        %5227 = vmatpush1.msra.mxu0 0.0
        %5228 = vmatprep.subr.mxu0 0.0
        %5229 = vmatpush1.msra.mxu0 0.0
        %5230 = vmatprep.subr.mxu0 0.0
        %5231 = vmatpush1.msra.mxu0 0.0
        %5232 = vmatprep.subr.mxu0 0.0
        %5233 = vmatpush1.msra.mxu0 0.0
        %5234 = vmatprep.subr.mxu0 0.0
        %5235 = vmatpush1.msra.mxu0 0.0
        %5236 = vmatprep.subr.mxu0 0.0
        %5237 = vmatpush1.msra.mxu0 0.0
        %5238 = vmatprep.subr.mxu0 0.0
        %5239 = vmatpush1.msra.mxu0 0.0
        %5240 = vmatprep.subr.mxu0 0.0
        %5241 = vmatpush1.msra.mxu0 0.0
        %5242 = vmatprep.subr.mxu0 0.0
        %5243 = vmatpush1.msra.mxu0 0.0
        %5244 = vmatprep.subr.mxu0 0.0
        %5245 = vmatpush1.msra.mxu0 0.0
        %5246 = vmatprep.subr.mxu0 0.0
        %5247 = vmatpush1.msra.mxu0 0.0
        %5248 = vmatprep.subr.mxu0 0.0
        %5249 = vmatpush1.msra.mxu0 0.0
        %5250 = vmatprep.subr.mxu0 0.0
        %5251 = vmatpush1.msra.mxu0 0.0
        %5252 = vmatprep.subr.mxu0 0.0
        %5253 = vmatpush1.msra.mxu0 0.0
        %5254 = vmatprep.subr.mxu0 0.0
        %5255 = vmatpush1.msra.mxu0 0.0
        %5256 = vmatprep.subr.mxu0 0.0
        %5257 = vmatpush1.msra.mxu0 0.0
        %5258 = vmatprep.subr.mxu0 0.0
        %5259 = vmatpush1.msra.mxu0 0.0
        %5260 = vmatprep.subr.mxu0 0.0
        %5261 = vmatpush1.msra.mxu0 0.0
        %5262 = vmatprep.subr.mxu0 0.0
        %5263 = vmatpush1.msra.mxu0 0.0
        %5264 = vmatprep.subr.mxu0 0.0
        %5265 = vmatpush1.msra.mxu0 0.0
        %5266 = vmatprep.subr.mxu0 0.0
        %5267 = vmatpush1.msra.mxu0 0.0
        %5268 = vmatprep.subr.mxu0 0.0
        %5269 = vmatpush1.msra.mxu0 0.0
        %5270 = vmatprep.subr.mxu0 0.0
        %5271 = vmatpush1.msra.mxu0 0.0
        %5272 = vmatprep.subr.mxu0 0.0
        %5273 = vmatpush1.msra.mxu0 0.0
        %5274 = vmatprep.subr.mxu0 0.0
        %5275 = vmatpush1.msra.mxu0 0.0
        %5276 = vmatprep.subr.mxu0 0.0
        %5277 = vmatpush1.msra.mxu0 0.0
        %5278 = vmatprep.subr.mxu0 0.0
        %5279 = vmatpush1.msra.mxu0 0.0
        %5280 = vmatprep.subr.mxu0 0.0
        %5281 = vmatpush1.msra.mxu0 0.0
        %5282 = vmatprep.subr.mxu0 0.0
        %5283 = vmatpush1.msra.mxu0 0.0
        %5284 = vmatprep.mubr.f32.mxu0 0.0
        %5285 = vmatmul.mubr.f32.gmra.mrb[0].mxu0 %v5218
        %v5286 = vpop.f32.mrb[0].mxu0
        %v5287 = vadd.f32 0.0, %v5286
        %v5288 = vpop.f32.mrb[0].mxu0
        %v5289 = vadd.f32 0.0, %v5288
        %5290 = vdwg.mxu0
        %5291 = vmatprep.subr.mxu0 %v5212
        %5292 = vmatpush1.msra.mxu0 %v5211
        %5293 = vmatprep.subr.mxu0 0.0
        %5294 = vmatpush1.msra.mxu0 0.0
        %5295 = vmatprep.subr.mxu0 0.0
        %5296 = vmatpush1.msra.mxu0 0.0
        %5297 = vmatprep.subr.mxu0 0.0
        %5298 = vmatpush1.msra.mxu0 0.0
        %5299 = vmatprep.subr.mxu0 0.0
        %5300 = vmatpush1.msra.mxu0 0.0
        %5301 = vmatprep.subr.mxu0 0.0
        %5302 = vmatpush1.msra.mxu0 0.0
        %5303 = vmatprep.subr.mxu0 0.0
        %5304 = vmatpush1.msra.mxu0 0.0
        %5305 = vmatprep.subr.mxu0 0.0
        %5306 = vmatpush1.msra.mxu0 0.0
        %5307 = vmatprep.subr.mxu0 0.0
        %5308 = vmatpush1.msra.mxu0 0.0
        %5309 = vmatprep.subr.mxu0 0.0
        %5310 = vmatpush1.msra.mxu0 0.0
        %5311 = vmatprep.subr.mxu0 0.0
        %5312 = vmatpush1.msra.mxu0 0.0
        %5313 = vmatprep.subr.mxu0 0.0
        %5314 = vmatpush1.msra.mxu0 0.0
        %5315 = vmatprep.subr.mxu0 0.0
        %5316 = vmatpush1.msra.mxu0 0.0
        %5317 = vmatprep.subr.mxu0 0.0
        %5318 = vmatpush1.msra.mxu0 0.0
        %5319 = vmatprep.subr.mxu0 0.0
        %5320 = vmatpush1.msra.mxu0 0.0
        %5321 = vmatprep.subr.mxu0 0.0
        %5322 = vmatpush1.msra.mxu0 0.0
        %5323 = vmatprep.subr.mxu0 0.0
        %5324 = vmatpush1.msra.mxu0 0.0
        %5325 = vmatprep.subr.mxu0 0.0
        %5326 = vmatpush1.msra.mxu0 0.0
        %5327 = vmatprep.subr.mxu0 0.0
        %5328 = vmatpush1.msra.mxu0 0.0
        %5329 = vmatprep.subr.mxu0 0.0
        %5330 = vmatpush1.msra.mxu0 0.0
        %5331 = vmatprep.subr.mxu0 0.0
        %5332 = vmatpush1.msra.mxu0 0.0
        %5333 = vmatprep.subr.mxu0 0.0
        %5334 = vmatpush1.msra.mxu0 0.0
        %5335 = vmatprep.subr.mxu0 0.0
        %5336 = vmatpush1.msra.mxu0 0.0
        %5337 = vmatprep.subr.mxu0 0.0
        %5338 = vmatpush1.msra.mxu0 0.0
        %5339 = vmatprep.subr.mxu0 0.0
        %5340 = vmatpush1.msra.mxu0 0.0
        %5341 = vmatprep.subr.mxu0 0.0
        %5342 = vmatpush1.msra.mxu0 0.0
        %5343 = vmatprep.subr.mxu0 0.0
        %5344 = vmatpush1.msra.mxu0 0.0
        %5345 = vmatprep.subr.mxu0 0.0
        %5346 = vmatpush1.msra.mxu0 0.0
        %5347 = vmatprep.subr.mxu0 0.0
        %5348 = vmatpush1.msra.mxu0 0.0
        %5349 = vmatprep.subr.mxu0 0.0
        %5350 = vmatpush1.msra.mxu0 0.0
        %5351 = vmatprep.subr.mxu0 0.0
        %5352 = vmatpush1.msra.mxu0 0.0
        %5353 = vmatprep.subr.mxu0 0.0
        %5354 = vmatpush1.msra.mxu0 0.0
        %5355 = vmatprep.mubr.f32.mxu0 0.0
        %5356 = vmatmul.mubr.f32.gmra.mrb[0].mxu0 %v5218
        %v5357 = vpop.f32.mrb[0].mxu0
        %v5358 = vadd.f32 0.0, %v5357
        %v5359 = vpop.f32.mrb[0].mxu0
        %v5360 = vadd.f32 0.0, %v5359
        %5361 = vdwg.mxu0
        %v5362 = vadd.f32 %v5122, %v5287
        %v5363 = vadd.f32 %v5124, %v5289
        %v5364 = vadd.f32 %v5193, %v5358
        %v5365 = vadd.f32 %v5195, %v5360
        %s5366 = scalar_lea.vmem %s6, 24
        %v5367 = vld [vmem:[%s5366] sm:$0xff]
        %5368 = vrot.lane.b32.xlu0 %v4859, 39
        %v5369 = vpop.permute.xlu0 %5368
        %5370 = vrot.lane.b32.xlu0 %v4860, 39
        %v5371 = vpop.permute.xlu0 %5370
        %5372 = vrot.lane.b32.xlu0 %v4861, 39
        %v5373 = vpop.permute.xlu0 %5372
        %5374 = vrot.lane.b32.xlu0 %v4862, 39
        %v5375 = vpop.permute.xlu0 %5374
        %5376 = vrot.lane.b32.xlu0 %v4863, 39
        %v5377 = vpop.permute.xlu0 %5376
        %v5378 = vsel %vm937, %v5369, %v5371
        %v5379 = vsel %vm937, %v5371, %v5373
        %v5380 = vsel %vm937, %v5373, %v5375
        %v5381 = vsel %vm937, %v5375, %v5377
        %v5387 = vsel %vm445, %v5367, 0
        %5389 = vmatprep.subr.mxu0 %v5379
        %5390 = vmatpush1.msra.mxu0 %v5378
        %5391 = vmatprep.subr.mxu0 0.0
        %5392 = vmatpush1.msra.mxu0 0.0
        %5393 = vmatprep.subr.mxu0 0.0
        %5394 = vmatpush1.msra.mxu0 0.0
        %5395 = vmatprep.subr.mxu0 0.0
        %5396 = vmatpush1.msra.mxu0 0.0
        %5397 = vmatprep.subr.mxu0 0.0
        %5398 = vmatpush1.msra.mxu0 0.0
        %5399 = vmatprep.subr.mxu0 0.0
        %5400 = vmatpush1.msra.mxu0 0.0
        %5401 = vmatprep.subr.mxu0 0.0
        %5402 = vmatpush1.msra.mxu0 0.0
        %5403 = vmatprep.subr.mxu0 0.0
        %5404 = vmatpush1.msra.mxu0 0.0
        %5405 = vmatprep.subr.mxu0 0.0
        %5406 = vmatpush1.msra.mxu0 0.0
        %5407 = vmatprep.subr.mxu0 0.0
        %5408 = vmatpush1.msra.mxu0 0.0
        %5409 = vmatprep.subr.mxu0 0.0
        %5410 = vmatpush1.msra.mxu0 0.0
        %5411 = vmatprep.subr.mxu0 0.0
        %5412 = vmatpush1.msra.mxu0 0.0
        %5413 = vmatprep.subr.mxu0 0.0
        %5414 = vmatpush1.msra.mxu0 0.0
        %5415 = vmatprep.subr.mxu0 0.0
        %5416 = vmatpush1.msra.mxu0 0.0
        %5417 = vmatprep.subr.mxu0 0.0
        %5418 = vmatpush1.msra.mxu0 0.0
        %5419 = vmatprep.subr.mxu0 0.0
        %5420 = vmatpush1.msra.mxu0 0.0
        %5421 = vmatprep.subr.mxu0 0.0
        %5422 = vmatpush1.msra.mxu0 0.0
        %5423 = vmatprep.subr.mxu0 0.0
        %5424 = vmatpush1.msra.mxu0 0.0
        %5425 = vmatprep.subr.mxu0 0.0
        %5426 = vmatpush1.msra.mxu0 0.0
        %5427 = vmatprep.subr.mxu0 0.0
        %5428 = vmatpush1.msra.mxu0 0.0
        %5429 = vmatprep.subr.mxu0 0.0
        %5430 = vmatpush1.msra.mxu0 0.0
        %5431 = vmatprep.subr.mxu0 0.0
        %5432 = vmatpush1.msra.mxu0 0.0
        %5433 = vmatprep.subr.mxu0 0.0
        %5434 = vmatpush1.msra.mxu0 0.0
        %5435 = vmatprep.subr.mxu0 0.0
        %5436 = vmatpush1.msra.mxu0 0.0
        %5437 = vmatprep.subr.mxu0 0.0
        %5438 = vmatpush1.msra.mxu0 0.0
        %5439 = vmatprep.subr.mxu0 0.0
        %5440 = vmatpush1.msra.mxu0 0.0
        %5441 = vmatprep.subr.mxu0 0.0
        %5442 = vmatpush1.msra.mxu0 0.0
        %5443 = vmatprep.subr.mxu0 0.0
        %5444 = vmatpush1.msra.mxu0 0.0
        %5445 = vmatprep.subr.mxu0 0.0
        %5446 = vmatpush1.msra.mxu0 0.0
        %5447 = vmatprep.subr.mxu0 0.0
        %5448 = vmatpush1.msra.mxu0 0.0
        %5449 = vmatprep.subr.mxu0 0.0
        %5450 = vmatpush1.msra.mxu0 0.0
        %5451 = vmatprep.subr.mxu0 0.0
        %5452 = vmatpush1.msra.mxu0 0.0
        %5453 = vmatprep.mubr.f32.mxu0 0.0
        %5454 = vmatmul.mubr.f32.gmra.mrb[0].mxu0 %v5387
        %v5455 = vpop.f32.mrb[0].mxu0
        %v5456 = vadd.f32 0.0, %v5455
        %v5457 = vpop.f32.mrb[0].mxu0
        %v5458 = vadd.f32 0.0, %v5457
        %5459 = vdwg.mxu0
        %5460 = vmatprep.subr.mxu0 %v5381
        %5461 = vmatpush1.msra.mxu0 %v5380
        %5462 = vmatprep.subr.mxu0 0.0
        %5463 = vmatpush1.msra.mxu0 0.0
        %5464 = vmatprep.subr.mxu0 0.0
        %5465 = vmatpush1.msra.mxu0 0.0
        %5466 = vmatprep.subr.mxu0 0.0
        %5467 = vmatpush1.msra.mxu0 0.0
        %5468 = vmatprep.subr.mxu0 0.0
        %5469 = vmatpush1.msra.mxu0 0.0
        %5470 = vmatprep.subr.mxu0 0.0
        %5471 = vmatpush1.msra.mxu0 0.0
        %5472 = vmatprep.subr.mxu0 0.0
        %5473 = vmatpush1.msra.mxu0 0.0
        %5474 = vmatprep.subr.mxu0 0.0
        %5475 = vmatpush1.msra.mxu0 0.0
        %5476 = vmatprep.subr.mxu0 0.0
        %5477 = vmatpush1.msra.mxu0 0.0
        %5478 = vmatprep.subr.mxu0 0.0
        %5479 = vmatpush1.msra.mxu0 0.0
        %5480 = vmatprep.subr.mxu0 0.0
        %5481 = vmatpush1.msra.mxu0 0.0
        %5482 = vmatprep.subr.mxu0 0.0
        %5483 = vmatpush1.msra.mxu0 0.0
        %5484 = vmatprep.subr.mxu0 0.0
        %5485 = vmatpush1.msra.mxu0 0.0
        %5486 = vmatprep.subr.mxu0 0.0
        %5487 = vmatpush1.msra.mxu0 0.0
        %5488 = vmatprep.subr.mxu0 0.0
        %5489 = vmatpush1.msra.mxu0 0.0
        %5490 = vmatprep.subr.mxu0 0.0
        %5491 = vmatpush1.msra.mxu0 0.0
        %5492 = vmatprep.subr.mxu0 0.0
        %5493 = vmatpush1.msra.mxu0 0.0
        %5494 = vmatprep.subr.mxu0 0.0
        %5495 = vmatpush1.msra.mxu0 0.0
        %5496 = vmatprep.subr.mxu0 0.0
        %5497 = vmatpush1.msra.mxu0 0.0
        %5498 = vmatprep.subr.mxu0 0.0
        %5499 = vmatpush1.msra.mxu0 0.0
        %5500 = vmatprep.subr.mxu0 0.0
        %5501 = vmatpush1.msra.mxu0 0.0
        %5502 = vmatprep.subr.mxu0 0.0
        %5503 = vmatpush1.msra.mxu0 0.0
        %5504 = vmatprep.subr.mxu0 0.0
        %5505 = vmatpush1.msra.mxu0 0.0
        %5506 = vmatprep.subr.mxu0 0.0
        %5507 = vmatpush1.msra.mxu0 0.0
        %5508 = vmatprep.subr.mxu0 0.0
        %5509 = vmatpush1.msra.mxu0 0.0
        %5510 = vmatprep.subr.mxu0 0.0
        %5511 = vmatpush1.msra.mxu0 0.0
        %5512 = vmatprep.subr.mxu0 0.0
        %5513 = vmatpush1.msra.mxu0 0.0
        %5514 = vmatprep.subr.mxu0 0.0
        %5515 = vmatpush1.msra.mxu0 0.0
        %5516 = vmatprep.subr.mxu0 0.0
        %5517 = vmatpush1.msra.mxu0 0.0
        %5518 = vmatprep.subr.mxu0 0.0
        %5519 = vmatpush1.msra.mxu0 0.0
        %5520 = vmatprep.subr.mxu0 0.0
        %5521 = vmatpush1.msra.mxu0 0.0
        %5522 = vmatprep.subr.mxu0 0.0
        %5523 = vmatpush1.msra.mxu0 0.0
        %5524 = vmatprep.mubr.f32.mxu0 0.0
        %5525 = vmatmul.mubr.f32.gmra.mrb[0].mxu0 %v5387
        %v5526 = vpop.f32.mrb[0].mxu0
        %v5527 = vadd.f32 0.0, %v5526
        %v5528 = vpop.f32.mrb[0].mxu0
        %v5529 = vadd.f32 0.0, %v5528
        %5530 = vdwg.mxu0
        %v5531 = vadd.f32 %v5362, %v5456
        %v5532 = vadd.f32 %v5363, %v5458
        %v5533 = vadd.f32 %v5364, %v5527
        %v5534 = vadd.f32 %v5365, %v5529
        %s5535 = scalar_lea.vmem %s6, 32
        %v5536 = vld [vmem:[%s5535] sm:$0xff]
        %5537 = vrot.lane.b32.xlu0 %v4859, 38
        %v5538 = vpop.permute.xlu0 %5537
        %5539 = vrot.lane.b32.xlu0 %v4860, 38
        %v5540 = vpop.permute.xlu0 %5539
        %5541 = vrot.lane.b32.xlu0 %v4861, 38
        %v5542 = vpop.permute.xlu0 %5541
        %5543 = vrot.lane.b32.xlu0 %v4862, 38
        %v5544 = vpop.permute.xlu0 %5543
        %5545 = vrot.lane.b32.xlu0 %v4863, 38
        %v5546 = vpop.permute.xlu0 %5545
        %v5547 = vsel %vm1107, %v5538, %v5540
        %v5548 = vsel %vm1107, %v5540, %v5542
        %v5549 = vsel %vm1107, %v5542, %v5544
        %v5550 = vsel %vm1107, %v5544, %v5546
        %v5556 = vsel %vm445, %v5536, 0
        %5558 = vmatprep.subr.mxu0 %v5548
        %5559 = vmatpush1.msra.mxu0 %v5547
        %5560 = vmatprep.subr.mxu0 0.0
        %5561 = vmatpush1.msra.mxu0 0.0
        %5562 = vmatprep.subr.mxu0 0.0
        %5563 = vmatpush1.msra.mxu0 0.0
        %5564 = vmatprep.subr.mxu0 0.0
        %5565 = vmatpush1.msra.mxu0 0.0
        %5566 = vmatprep.subr.mxu0 0.0
        %5567 = vmatpush1.msra.mxu0 0.0
        %5568 = vmatprep.subr.mxu0 0.0
        %5569 = vmatpush1.msra.mxu0 0.0
        %5570 = vmatprep.subr.mxu0 0.0
        %5571 = vmatpush1.msra.mxu0 0.0
        %5572 = vmatprep.subr.mxu0 0.0
        %5573 = vmatpush1.msra.mxu0 0.0
        %5574 = vmatprep.subr.mxu0 0.0
        %5575 = vmatpush1.msra.mxu0 0.0
        %5576 = vmatprep.subr.mxu0 0.0
        %5577 = vmatpush1.msra.mxu0 0.0
        %5578 = vmatprep.subr.mxu0 0.0
        %5579 = vmatpush1.msra.mxu0 0.0
        %5580 = vmatprep.subr.mxu0 0.0
        %5581 = vmatpush1.msra.mxu0 0.0
        %5582 = vmatprep.subr.mxu0 0.0
        %5583 = vmatpush1.msra.mxu0 0.0
        %5584 = vmatprep.subr.mxu0 0.0
        %5585 = vmatpush1.msra.mxu0 0.0
        %5586 = vmatprep.subr.mxu0 0.0
        %5587 = vmatpush1.msra.mxu0 0.0
        %5588 = vmatprep.subr.mxu0 0.0
        %5589 = vmatpush1.msra.mxu0 0.0
        %5590 = vmatprep.subr.mxu0 0.0
        %5591 = vmatpush1.msra.mxu0 0.0
        %5592 = vmatprep.subr.mxu0 0.0
        %5593 = vmatpush1.msra.mxu0 0.0
        %5594 = vmatprep.subr.mxu0 0.0
        %5595 = vmatpush1.msra.mxu0 0.0
        %5596 = vmatprep.subr.mxu0 0.0
        %5597 = vmatpush1.msra.mxu0 0.0
        %5598 = vmatprep.subr.mxu0 0.0
        %5599 = vmatpush1.msra.mxu0 0.0
        %5600 = vmatprep.subr.mxu0 0.0
        %5601 = vmatpush1.msra.mxu0 0.0
        %5602 = vmatprep.subr.mxu0 0.0
        %5603 = vmatpush1.msra.mxu0 0.0
        %5604 = vmatprep.subr.mxu0 0.0
        %5605 = vmatpush1.msra.mxu0 0.0
        %5606 = vmatprep.subr.mxu0 0.0
        %5607 = vmatpush1.msra.mxu0 0.0
        %5608 = vmatprep.subr.mxu0 0.0
        %5609 = vmatpush1.msra.mxu0 0.0
        %5610 = vmatprep.subr.mxu0 0.0
        %5611 = vmatpush1.msra.mxu0 0.0
        %5612 = vmatprep.subr.mxu0 0.0
        %5613 = vmatpush1.msra.mxu0 0.0
        %5614 = vmatprep.subr.mxu0 0.0
        %5615 = vmatpush1.msra.mxu0 0.0
        %5616 = vmatprep.subr.mxu0 0.0
        %5617 = vmatpush1.msra.mxu0 0.0
        %5618 = vmatprep.subr.mxu0 0.0
        %5619 = vmatpush1.msra.mxu0 0.0
        %5620 = vmatprep.subr.mxu0 0.0
        %5621 = vmatpush1.msra.mxu0 0.0
        %5622 = vmatprep.mubr.f32.mxu0 0.0
        %5623 = vmatmul.mubr.f32.gmra.mrb[0].mxu0 %v5556
        %v5624 = vpop.f32.mrb[0].mxu0
        %v5625 = vadd.f32 0.0, %v5624
        %v5626 = vpop.f32.mrb[0].mxu0
        %v5627 = vadd.f32 0.0, %v5626
        %5628 = vdwg.mxu0
        %5629 = vmatprep.subr.mxu0 %v5550
        %5630 = vmatpush1.msra.mxu0 %v5549
        %5631 = vmatprep.subr.mxu0 0.0
        %5632 = vmatpush1.msra.mxu0 0.0
        %5633 = vmatprep.subr.mxu0 0.0
        %5634 = vmatpush1.msra.mxu0 0.0
        %5635 = vmatprep.subr.mxu0 0.0
        %5636 = vmatpush1.msra.mxu0 0.0
        %5637 = vmatprep.subr.mxu0 0.0
        %5638 = vmatpush1.msra.mxu0 0.0
        %5639 = vmatprep.subr.mxu0 0.0
        %5640 = vmatpush1.msra.mxu0 0.0
        %5641 = vmatprep.subr.mxu0 0.0
        %5642 = vmatpush1.msra.mxu0 0.0
        %5643 = vmatprep.subr.mxu0 0.0
        %5644 = vmatpush1.msra.mxu0 0.0
        %5645 = vmatprep.subr.mxu0 0.0
        %5646 = vmatpush1.msra.mxu0 0.0
        %5647 = vmatprep.subr.mxu0 0.0
        %5648 = vmatpush1.msra.mxu0 0.0
        %5649 = vmatprep.subr.mxu0 0.0
        %5650 = vmatpush1.msra.mxu0 0.0
        %5651 = vmatprep.subr.mxu0 0.0
        %5652 = vmatpush1.msra.mxu0 0.0
        %5653 = vmatprep.subr.mxu0 0.0
        %5654 = vmatpush1.msra.mxu0 0.0
        %5655 = vmatprep.subr.mxu0 0.0
        %5656 = vmatpush1.msra.mxu0 0.0
        %5657 = vmatprep.subr.mxu0 0.0
        %5658 = vmatpush1.msra.mxu0 0.0
        %5659 = vmatprep.subr.mxu0 0.0
        %5660 = vmatpush1.msra.mxu0 0.0
        %5661 = vmatprep.subr.mxu0 0.0
        %5662 = vmatpush1.msra.mxu0 0.0
        %5663 = vmatprep.subr.mxu0 0.0
        %5664 = vmatpush1.msra.mxu0 0.0
        %5665 = vmatprep.subr.mxu0 0.0
        %5666 = vmatpush1.msra.mxu0 0.0
        %5667 = vmatprep.subr.mxu0 0.0
        %5668 = vmatpush1.msra.mxu0 0.0
        %5669 = vmatprep.subr.mxu0 0.0
        %5670 = vmatpush1.msra.mxu0 0.0
        %5671 = vmatprep.subr.mxu0 0.0
        %5672 = vmatpush1.msra.mxu0 0.0
        %5673 = vmatprep.subr.mxu0 0.0
        %5674 = vmatpush1.msra.mxu0 0.0
        %5675 = vmatprep.subr.mxu0 0.0
        %5676 = vmatpush1.msra.mxu0 0.0
        %5677 = vmatprep.subr.mxu0 0.0
        %5678 = vmatpush1.msra.mxu0 0.0
        %5679 = vmatprep.subr.mxu0 0.0
        %5680 = vmatpush1.msra.mxu0 0.0
        %5681 = vmatprep.subr.mxu0 0.0
        %5682 = vmatpush1.msra.mxu0 0.0
        %5683 = vmatprep.subr.mxu0 0.0
        %5684 = vmatpush1.msra.mxu0 0.0
        %5685 = vmatprep.subr.mxu0 0.0
        %5686 = vmatpush1.msra.mxu0 0.0
        %5687 = vmatprep.subr.mxu0 0.0
        %5688 = vmatpush1.msra.mxu0 0.0
        %5689 = vmatprep.subr.mxu0 0.0
        %5690 = vmatpush1.msra.mxu0 0.0
        %5691 = vmatprep.subr.mxu0 0.0
        %5692 = vmatpush1.msra.mxu0 0.0
        %5693 = vmatprep.mubr.f32.mxu0 0.0
        %5694 = vmatmul.mubr.f32.gmra.mrb[0].mxu0 %v5556
        %v5695 = vpop.f32.mrb[0].mxu0
        %v5696 = vadd.f32 0.0, %v5695
        %v5697 = vpop.f32.mrb[0].mxu0
        %v5698 = vadd.f32 0.0, %v5697
        %5699 = vdwg.mxu0
        %v5700 = vadd.f32 %v5531, %v5625
        %v5701 = vadd.f32 %v5532, %v5627
        %v5702 = vadd.f32 %v5533, %v5696
        %v5703 = vadd.f32 %v5534, %v5698
        %s5704 = scalar_lea.vmem %s6, 40
        %v5705 = vld [vmem:[%s5704] sm:$0xff]
        %5706 = vrot.lane.b32.xlu0 %v4859, 22
        %v5707 = vpop.permute.xlu0 %5706
        %5708 = vrot.lane.b32.xlu0 %v4860, 22
        %v5709 = vpop.permute.xlu0 %5708
        %5710 = vrot.lane.b32.xlu0 %v4861, 22
        %v5711 = vpop.permute.xlu0 %5710
        %5712 = vrot.lane.b32.xlu0 %v4862, 22
        %v5713 = vpop.permute.xlu0 %5712
        %5714 = vrot.lane.b32.xlu0 %v4863, 22
        %v5715 = vpop.permute.xlu0 %5714
        %v5716 = vsel %vm1277, %v5707, %v5709
        %v5717 = vsel %vm1277, %v5709, %v5711
        %v5718 = vsel %vm1277, %v5711, %v5713
        %v5719 = vsel %vm1277, %v5713, %v5715
        %v5725 = vsel %vm445, %v5705, 0
        %5727 = vmatprep.subr.mxu0 %v5717
        %5728 = vmatpush1.msra.mxu0 %v5716
        %5729 = vmatprep.subr.mxu0 0.0
        %5730 = vmatpush1.msra.mxu0 0.0
        %5731 = vmatprep.subr.mxu0 0.0
        %5732 = vmatpush1.msra.mxu0 0.0
        %5733 = vmatprep.subr.mxu0 0.0
        %5734 = vmatpush1.msra.mxu0 0.0
        %5735 = vmatprep.subr.mxu0 0.0
        %5736 = vmatpush1.msra.mxu0 0.0
        %5737 = vmatprep.subr.mxu0 0.0
        %5738 = vmatpush1.msra.mxu0 0.0
        %5739 = vmatprep.subr.mxu0 0.0
        %5740 = vmatpush1.msra.mxu0 0.0
        %5741 = vmatprep.subr.mxu0 0.0
        %5742 = vmatpush1.msra.mxu0 0.0
        %5743 = vmatprep.subr.mxu0 0.0
        %5744 = vmatpush1.msra.mxu0 0.0
        %5745 = vmatprep.subr.mxu0 0.0
        %5746 = vmatpush1.msra.mxu0 0.0
        %5747 = vmatprep.subr.mxu0 0.0
        %5748 = vmatpush1.msra.mxu0 0.0
        %5749 = vmatprep.subr.mxu0 0.0
        %5750 = vmatpush1.msra.mxu0 0.0
        %5751 = vmatprep.subr.mxu0 0.0
        %5752 = vmatpush1.msra.mxu0 0.0
        %5753 = vmatprep.subr.mxu0 0.0
        %5754 = vmatpush1.msra.mxu0 0.0
        %5755 = vmatprep.subr.mxu0 0.0
        %5756 = vmatpush1.msra.mxu0 0.0
        %5757 = vmatprep.subr.mxu0 0.0
        %5758 = vmatpush1.msra.mxu0 0.0
        %5759 = vmatprep.subr.mxu0 0.0
        %5760 = vmatpush1.msra.mxu0 0.0
        %5761 = vmatprep.subr.mxu0 0.0
        %5762 = vmatpush1.msra.mxu0 0.0
        %5763 = vmatprep.subr.mxu0 0.0
        %5764 = vmatpush1.msra.mxu0 0.0
        %5765 = vmatprep.subr.mxu0 0.0
        %5766 = vmatpush1.msra.mxu0 0.0
        %5767 = vmatprep.subr.mxu0 0.0
        %5768 = vmatpush1.msra.mxu0 0.0
        %5769 = vmatprep.subr.mxu0 0.0
        %5770 = vmatpush1.msra.mxu0 0.0
        %5771 = vmatprep.subr.mxu0 0.0
        %5772 = vmatpush1.msra.mxu0 0.0
        %5773 = vmatprep.subr.mxu0 0.0
        %5774 = vmatpush1.msra.mxu0 0.0
        %5775 = vmatprep.subr.mxu0 0.0
        %5776 = vmatpush1.msra.mxu0 0.0
        %5777 = vmatprep.subr.mxu0 0.0
        %5778 = vmatpush1.msra.mxu0 0.0
        %5779 = vmatprep.subr.mxu0 0.0
        %5780 = vmatpush1.msra.mxu0 0.0
        %5781 = vmatprep.subr.mxu0 0.0
        %5782 = vmatpush1.msra.mxu0 0.0
        %5783 = vmatprep.subr.mxu0 0.0
        %5784 = vmatpush1.msra.mxu0 0.0
        %5785 = vmatprep.subr.mxu0 0.0
        %5786 = vmatpush1.msra.mxu0 0.0
        %5787 = vmatprep.subr.mxu0 0.0
        %5788 = vmatpush1.msra.mxu0 0.0
        %5789 = vmatprep.subr.mxu0 0.0
        %5790 = vmatpush1.msra.mxu0 0.0
        %5791 = vmatprep.mubr.f32.mxu0 0.0
        %5792 = vmatmul.mubr.f32.gmra.mrb[0].mxu0 %v5725
        %v5793 = vpop.f32.mrb[0].mxu0
        %v5794 = vadd.f32 0.0, %v5793
        %v5795 = vpop.f32.mrb[0].mxu0
        %v5796 = vadd.f32 0.0, %v5795
        %5797 = vdwg.mxu0
        %5798 = vmatprep.subr.mxu0 %v5719
        %5799 = vmatpush1.msra.mxu0 %v5718
        %5800 = vmatprep.subr.mxu0 0.0
        %5801 = vmatpush1.msra.mxu0 0.0
        %5802 = vmatprep.subr.mxu0 0.0
        %5803 = vmatpush1.msra.mxu0 0.0
        %5804 = vmatprep.subr.mxu0 0.0
        %5805 = vmatpush1.msra.mxu0 0.0
        %5806 = vmatprep.subr.mxu0 0.0
        %5807 = vmatpush1.msra.mxu0 0.0
        %5808 = vmatprep.subr.mxu0 0.0
        %5809 = vmatpush1.msra.mxu0 0.0
        %5810 = vmatprep.subr.mxu0 0.0
        %5811 = vmatpush1.msra.mxu0 0.0
        %5812 = vmatprep.subr.mxu0 0.0
        %5813 = vmatpush1.msra.mxu0 0.0
        %5814 = vmatprep.subr.mxu0 0.0
        %5815 = vmatpush1.msra.mxu0 0.0
        %5816 = vmatprep.subr.mxu0 0.0
        %5817 = vmatpush1.msra.mxu0 0.0
        %5818 = vmatprep.subr.mxu0 0.0
        %5819 = vmatpush1.msra.mxu0 0.0
        %5820 = vmatprep.subr.mxu0 0.0
        %5821 = vmatpush1.msra.mxu0 0.0
        %5822 = vmatprep.subr.mxu0 0.0
        %5823 = vmatpush1.msra.mxu0 0.0
        %5824 = vmatprep.subr.mxu0 0.0
        %5825 = vmatpush1.msra.mxu0 0.0
        %5826 = vmatprep.subr.mxu0 0.0
        %5827 = vmatpush1.msra.mxu0 0.0
        %5828 = vmatprep.subr.mxu0 0.0
        %5829 = vmatpush1.msra.mxu0 0.0
        %5830 = vmatprep.subr.mxu0 0.0
        %5831 = vmatpush1.msra.mxu0 0.0
        %5832 = vmatprep.subr.mxu0 0.0
        %5833 = vmatpush1.msra.mxu0 0.0
        %5834 = vmatprep.subr.mxu0 0.0
        %5835 = vmatpush1.msra.mxu0 0.0
        %5836 = vmatprep.subr.mxu0 0.0
        %5837 = vmatpush1.msra.mxu0 0.0
        %5838 = vmatprep.subr.mxu0 0.0
        %5839 = vmatpush1.msra.mxu0 0.0
        %5840 = vmatprep.subr.mxu0 0.0
        %5841 = vmatpush1.msra.mxu0 0.0
        %5842 = vmatprep.subr.mxu0 0.0
        %5843 = vmatpush1.msra.mxu0 0.0
        %5844 = vmatprep.subr.mxu0 0.0
        %5845 = vmatpush1.msra.mxu0 0.0
        %5846 = vmatprep.subr.mxu0 0.0
        %5847 = vmatpush1.msra.mxu0 0.0
        %5848 = vmatprep.subr.mxu0 0.0
        %5849 = vmatpush1.msra.mxu0 0.0
        %5850 = vmatprep.subr.mxu0 0.0
        %5851 = vmatpush1.msra.mxu0 0.0
        %5852 = vmatprep.subr.mxu0 0.0
        %5853 = vmatpush1.msra.mxu0 0.0
        %5854 = vmatprep.subr.mxu0 0.0
        %5855 = vmatpush1.msra.mxu0 0.0
        %5856 = vmatprep.subr.mxu0 0.0
        %5857 = vmatpush1.msra.mxu0 0.0
        %5858 = vmatprep.subr.mxu0 0.0
        %5859 = vmatpush1.msra.mxu0 0.0
        %5860 = vmatprep.subr.mxu0 0.0
        %5861 = vmatpush1.msra.mxu0 0.0
        %5862 = vmatprep.mubr.f32.mxu0 0.0
        %5863 = vmatmul.mubr.f32.gmra.mrb[0].mxu0 %v5725
        %v5864 = vpop.f32.mrb[0].mxu0
        %v5865 = vadd.f32 0.0, %v5864
        %v5866 = vpop.f32.mrb[0].mxu0
        %v5867 = vadd.f32 0.0, %v5866
        %5868 = vdwg.mxu0
        %v5869 = vadd.f32 %v5700, %v5794
        %v5870 = vadd.f32 %v5701, %v5796
        %v5871 = vadd.f32 %v5702, %v5865
        %v5872 = vadd.f32 %v5703, %v5867
        %s5873 = scalar_lea.vmem %s6, 48
        %v5874 = vld [vmem:[%s5873] sm:$0xff]
        %5875 = vrot.lane.b32.xlu0 %v4859, 21
        %v5876 = vpop.permute.xlu0 %5875
        %5877 = vrot.lane.b32.xlu0 %v4860, 21
        %v5878 = vpop.permute.xlu0 %5877
        %5879 = vrot.lane.b32.xlu0 %v4861, 21
        %v5880 = vpop.permute.xlu0 %5879
        %5881 = vrot.lane.b32.xlu0 %v4862, 21
        %v5882 = vpop.permute.xlu0 %5881
        %5883 = vrot.lane.b32.xlu0 %v4863, 21
        %v5884 = vpop.permute.xlu0 %5883
        %v5885 = vsel %vm1447, %v5876, %v5878
        %v5886 = vsel %vm1447, %v5878, %v5880
        %v5887 = vsel %vm1447, %v5880, %v5882
        %v5888 = vsel %vm1447, %v5882, %v5884
        %v5894 = vsel %vm445, %v5874, 0
        %5896 = vmatprep.subr.mxu0 %v5886
        %5897 = vmatpush1.msra.mxu0 %v5885
        %5898 = vmatprep.subr.mxu0 0.0
        %5899 = vmatpush1.msra.mxu0 0.0
        %5900 = vmatprep.subr.mxu0 0.0
        %5901 = vmatpush1.msra.mxu0 0.0
        %5902 = vmatprep.subr.mxu0 0.0
        %5903 = vmatpush1.msra.mxu0 0.0
        %5904 = vmatprep.subr.mxu0 0.0
        %5905 = vmatpush1.msra.mxu0 0.0
        %5906 = vmatprep.subr.mxu0 0.0
        %5907 = vmatpush1.msra.mxu0 0.0
        %5908 = vmatprep.subr.mxu0 0.0
        %5909 = vmatpush1.msra.mxu0 0.0
        %5910 = vmatprep.subr.mxu0 0.0
        %5911 = vmatpush1.msra.mxu0 0.0
        %5912 = vmatprep.subr.mxu0 0.0
        %5913 = vmatpush1.msra.mxu0 0.0
        %5914 = vmatprep.subr.mxu0 0.0
        %5915 = vmatpush1.msra.mxu0 0.0
        %5916 = vmatprep.subr.mxu0 0.0
        %5917 = vmatpush1.msra.mxu0 0.0
        %5918 = vmatprep.subr.mxu0 0.0
        %5919 = vmatpush1.msra.mxu0 0.0
        %5920 = vmatprep.subr.mxu0 0.0
        %5921 = vmatpush1.msra.mxu0 0.0
        %5922 = vmatprep.subr.mxu0 0.0
        %5923 = vmatpush1.msra.mxu0 0.0
        %5924 = vmatprep.subr.mxu0 0.0
        %5925 = vmatpush1.msra.mxu0 0.0
        %5926 = vmatprep.subr.mxu0 0.0
        %5927 = vmatpush1.msra.mxu0 0.0
        %5928 = vmatprep.subr.mxu0 0.0
        %5929 = vmatpush1.msra.mxu0 0.0
        %5930 = vmatprep.subr.mxu0 0.0
        %5931 = vmatpush1.msra.mxu0 0.0
        %5932 = vmatprep.subr.mxu0 0.0
        %5933 = vmatpush1.msra.mxu0 0.0
        %5934 = vmatprep.subr.mxu0 0.0
        %5935 = vmatpush1.msra.mxu0 0.0
        %5936 = vmatprep.subr.mxu0 0.0
        %5937 = vmatpush1.msra.mxu0 0.0
        %5938 = vmatprep.subr.mxu0 0.0
        %5939 = vmatpush1.msra.mxu0 0.0
        %5940 = vmatprep.subr.mxu0 0.0
        %5941 = vmatpush1.msra.mxu0 0.0
        %5942 = vmatprep.subr.mxu0 0.0
        %5943 = vmatpush1.msra.mxu0 0.0
        %5944 = vmatprep.subr.mxu0 0.0
        %5945 = vmatpush1.msra.mxu0 0.0
        %5946 = vmatprep.subr.mxu0 0.0
        %5947 = vmatpush1.msra.mxu0 0.0
        %5948 = vmatprep.subr.mxu0 0.0
        %5949 = vmatpush1.msra.mxu0 0.0
        %5950 = vmatprep.subr.mxu0 0.0
        %5951 = vmatpush1.msra.mxu0 0.0
        %5952 = vmatprep.subr.mxu0 0.0
        %5953 = vmatpush1.msra.mxu0 0.0
        %5954 = vmatprep.subr.mxu0 0.0
        %5955 = vmatpush1.msra.mxu0 0.0
        %5956 = vmatprep.subr.mxu0 0.0
        %5957 = vmatpush1.msra.mxu0 0.0
        %5958 = vmatprep.subr.mxu0 0.0
        %5959 = vmatpush1.msra.mxu0 0.0
        %5960 = vmatprep.mubr.f32.mxu0 0.0
        %5961 = vmatmul.mubr.f32.gmra.mrb[0].mxu0 %v5894
        %v5962 = vpop.f32.mrb[0].mxu0
        %v5963 = vadd.f32 0.0, %v5962
        %v5964 = vpop.f32.mrb[0].mxu0
        %v5965 = vadd.f32 0.0, %v5964
        %5966 = vdwg.mxu0
        %5967 = vmatprep.subr.mxu0 %v5888
        %5968 = vmatpush1.msra.mxu0 %v5887
        %5969 = vmatprep.subr.mxu0 0.0
        %5970 = vmatpush1.msra.mxu0 0.0
        %5971 = vmatprep.subr.mxu0 0.0
        %5972 = vmatpush1.msra.mxu0 0.0
        %5973 = vmatprep.subr.mxu0 0.0
        %5974 = vmatpush1.msra.mxu0 0.0
        %5975 = vmatprep.subr.mxu0 0.0
        %5976 = vmatpush1.msra.mxu0 0.0
        %5977 = vmatprep.subr.mxu0 0.0
        %5978 = vmatpush1.msra.mxu0 0.0
        %5979 = vmatprep.subr.mxu0 0.0
        %5980 = vmatpush1.msra.mxu0 0.0
        %5981 = vmatprep.subr.mxu0 0.0
        %5982 = vmatpush1.msra.mxu0 0.0
        %5983 = vmatprep.subr.mxu0 0.0
        %5984 = vmatpush1.msra.mxu0 0.0
        %5985 = vmatprep.subr.mxu0 0.0
        %5986 = vmatpush1.msra.mxu0 0.0
        %5987 = vmatprep.subr.mxu0 0.0
        %5988 = vmatpush1.msra.mxu0 0.0
        %5989 = vmatprep.subr.mxu0 0.0
        %5990 = vmatpush1.msra.mxu0 0.0
        %5991 = vmatprep.subr.mxu0 0.0
        %5992 = vmatpush1.msra.mxu0 0.0
        %5993 = vmatprep.subr.mxu0 0.0
        %5994 = vmatpush1.msra.mxu0 0.0
        %5995 = vmatprep.subr.mxu0 0.0
        %5996 = vmatpush1.msra.mxu0 0.0
        %5997 = vmatprep.subr.mxu0 0.0
        %5998 = vmatpush1.msra.mxu0 0.0
        %5999 = vmatprep.subr.mxu0 0.0
        %6000 = vmatpush1.msra.mxu0 0.0
        %6001 = vmatprep.subr.mxu0 0.0
        %6002 = vmatpush1.msra.mxu0 0.0
        %6003 = vmatprep.subr.mxu0 0.0
        %6004 = vmatpush1.msra.mxu0 0.0
        %6005 = vmatprep.subr.mxu0 0.0
        %6006 = vmatpush1.msra.mxu0 0.0
        %6007 = vmatprep.subr.mxu0 0.0
        %6008 = vmatpush1.msra.mxu0 0.0
        %6009 = vmatprep.subr.mxu0 0.0
        %6010 = vmatpush1.msra.mxu0 0.0
        %6011 = vmatprep.subr.mxu0 0.0
        %6012 = vmatpush1.msra.mxu0 0.0
        %6013 = vmatprep.subr.mxu0 0.0
        %6014 = vmatpush1.msra.mxu0 0.0
        %6015 = vmatprep.subr.mxu0 0.0
        %6016 = vmatpush1.msra.mxu0 0.0
        %6017 = vmatprep.subr.mxu0 0.0
        %6018 = vmatpush1.msra.mxu0 0.0
        %6019 = vmatprep.subr.mxu0 0.0
        %6020 = vmatpush1.msra.mxu0 0.0
        %6021 = vmatprep.subr.mxu0 0.0
        %6022 = vmatpush1.msra.mxu0 0.0
        %6023 = vmatprep.subr.mxu0 0.0
        %6024 = vmatpush1.msra.mxu0 0.0
        %6025 = vmatprep.subr.mxu0 0.0
        %6026 = vmatpush1.msra.mxu0 0.0
        %6027 = vmatprep.subr.mxu0 0.0
        %6028 = vmatpush1.msra.mxu0 0.0
        %6029 = vmatprep.subr.mxu0 0.0
        %6030 = vmatpush1.msra.mxu0 0.0
        %6031 = vmatprep.mubr.f32.mxu0 0.0
        %6032 = vmatmul.mubr.f32.gmra.mrb[0].mxu0 %v5894
        %v6033 = vpop.f32.mrb[0].mxu0
        %v6034 = vadd.f32 0.0, %v6033
        %v6035 = vpop.f32.mrb[0].mxu0
        %v6036 = vadd.f32 0.0, %v6035
        %6037 = vdwg.mxu0
        %v6038 = vadd.f32 %v5869, %v5963
        %v6039 = vadd.f32 %v5870, %v5965
        %v6040 = vadd.f32 %v5871, %v6034
        %v6041 = vadd.f32 %v5872, %v6036
        %s6042 = scalar_lea.vmem %s6, 56
        %v6043 = vld [vmem:[%s6042] sm:$0xff]
        %6044 = vrot.lane.b32.xlu0 %v4859, 20
        %v6045 = vpop.permute.xlu0 %6044
        %6046 = vrot.lane.b32.xlu0 %v4860, 20
        %v6047 = vpop.permute.xlu0 %6046
        %6048 = vrot.lane.b32.xlu0 %v4861, 20
        %v6049 = vpop.permute.xlu0 %6048
        %6050 = vrot.lane.b32.xlu0 %v4862, 20
        %v6051 = vpop.permute.xlu0 %6050
        %6052 = vrot.lane.b32.xlu0 %v4863, 20
        %v6053 = vpop.permute.xlu0 %6052
        %v6054 = vsel %vm1617, %v6045, %v6047
        %v6055 = vsel %vm1617, %v6047, %v6049
        %v6056 = vsel %vm1617, %v6049, %v6051
        %v6057 = vsel %vm1617, %v6051, %v6053
        %v6063 = vsel %vm445, %v6043, 0
        %6065 = vmatprep.subr.mxu0 %v6055
        %6066 = vmatpush1.msra.mxu0 %v6054
        %6067 = vmatprep.subr.mxu0 0.0
        %6068 = vmatpush1.msra.mxu0 0.0
        %6069 = vmatprep.subr.mxu0 0.0
        %6070 = vmatpush1.msra.mxu0 0.0
        %6071 = vmatprep.subr.mxu0 0.0
        %6072 = vmatpush1.msra.mxu0 0.0
        %6073 = vmatprep.subr.mxu0 0.0
        %6074 = vmatpush1.msra.mxu0 0.0
        %6075 = vmatprep.subr.mxu0 0.0
        %6076 = vmatpush1.msra.mxu0 0.0
        %6077 = vmatprep.subr.mxu0 0.0
        %6078 = vmatpush1.msra.mxu0 0.0
        %6079 = vmatprep.subr.mxu0 0.0
        %6080 = vmatpush1.msra.mxu0 0.0
        %6081 = vmatprep.subr.mxu0 0.0
        %6082 = vmatpush1.msra.mxu0 0.0
        %6083 = vmatprep.subr.mxu0 0.0
        %6084 = vmatpush1.msra.mxu0 0.0
        %6085 = vmatprep.subr.mxu0 0.0
        %6086 = vmatpush1.msra.mxu0 0.0
        %6087 = vmatprep.subr.mxu0 0.0
        %6088 = vmatpush1.msra.mxu0 0.0
        %6089 = vmatprep.subr.mxu0 0.0
        %6090 = vmatpush1.msra.mxu0 0.0
        %6091 = vmatprep.subr.mxu0 0.0
        %6092 = vmatpush1.msra.mxu0 0.0
        %6093 = vmatprep.subr.mxu0 0.0
        %6094 = vmatpush1.msra.mxu0 0.0
        %6095 = vmatprep.subr.mxu0 0.0
        %6096 = vmatpush1.msra.mxu0 0.0
        %6097 = vmatprep.subr.mxu0 0.0
        %6098 = vmatpush1.msra.mxu0 0.0
        %6099 = vmatprep.subr.mxu0 0.0
        %6100 = vmatpush1.msra.mxu0 0.0
        %6101 = vmatprep.subr.mxu0 0.0
        %6102 = vmatpush1.msra.mxu0 0.0
        %6103 = vmatprep.subr.mxu0 0.0
        %6104 = vmatpush1.msra.mxu0 0.0
        %6105 = vmatprep.subr.mxu0 0.0
        %6106 = vmatpush1.msra.mxu0 0.0
        %6107 = vmatprep.subr.mxu0 0.0
        %6108 = vmatpush1.msra.mxu0 0.0
        %6109 = vmatprep.subr.mxu0 0.0
        %6110 = vmatpush1.msra.mxu0 0.0
        %6111 = vmatprep.subr.mxu0 0.0
        %6112 = vmatpush1.msra.mxu0 0.0
        %6113 = vmatprep.subr.mxu0 0.0
        %6114 = vmatpush1.msra.mxu0 0.0
        %6115 = vmatprep.subr.mxu0 0.0
        %6116 = vmatpush1.msra.mxu0 0.0
        %6117 = vmatprep.subr.mxu0 0.0
        %6118 = vmatpush1.msra.mxu0 0.0
        %6119 = vmatprep.subr.mxu0 0.0
        %6120 = vmatpush1.msra.mxu0 0.0
        %6121 = vmatprep.subr.mxu0 0.0
        %6122 = vmatpush1.msra.mxu0 0.0
        %6123 = vmatprep.subr.mxu0 0.0
        %6124 = vmatpush1.msra.mxu0 0.0
        %6125 = vmatprep.subr.mxu0 0.0
        %6126 = vmatpush1.msra.mxu0 0.0
        %6127 = vmatprep.subr.mxu0 0.0
        %6128 = vmatpush1.msra.mxu0 0.0
        %6129 = vmatprep.mubr.f32.mxu0 0.0
        %6130 = vmatmul.mubr.f32.gmra.mrb[0].mxu0 %v6063
        %v6131 = vpop.f32.mrb[0].mxu0
        %v6132 = vadd.f32 0.0, %v6131
        %v6133 = vpop.f32.mrb[0].mxu0
        %v6134 = vadd.f32 0.0, %v6133
        %6135 = vdwg.mxu0
        %6136 = vmatprep.subr.mxu0 %v6057
        %6137 = vmatpush1.msra.mxu0 %v6056
        %6138 = vmatprep.subr.mxu0 0.0
        %6139 = vmatpush1.msra.mxu0 0.0
        %6140 = vmatprep.subr.mxu0 0.0
        %6141 = vmatpush1.msra.mxu0 0.0
        %6142 = vmatprep.subr.mxu0 0.0
        %6143 = vmatpush1.msra.mxu0 0.0
        %6144 = vmatprep.subr.mxu0 0.0
        %6145 = vmatpush1.msra.mxu0 0.0
        %6146 = vmatprep.subr.mxu0 0.0
        %6147 = vmatpush1.msra.mxu0 0.0
        %6148 = vmatprep.subr.mxu0 0.0
        %6149 = vmatpush1.msra.mxu0 0.0
        %6150 = vmatprep.subr.mxu0 0.0
        %6151 = vmatpush1.msra.mxu0 0.0
        %6152 = vmatprep.subr.mxu0 0.0
        %6153 = vmatpush1.msra.mxu0 0.0
        %6154 = vmatprep.subr.mxu0 0.0
        %6155 = vmatpush1.msra.mxu0 0.0
        %6156 = vmatprep.subr.mxu0 0.0
        %6157 = vmatpush1.msra.mxu0 0.0
        %6158 = vmatprep.subr.mxu0 0.0
        %6159 = vmatpush1.msra.mxu0 0.0
        %6160 = vmatprep.subr.mxu0 0.0
        %6161 = vmatpush1.msra.mxu0 0.0
        %6162 = vmatprep.subr.mxu0 0.0
        %6163 = vmatpush1.msra.mxu0 0.0
        %6164 = vmatprep.subr.mxu0 0.0
        %6165 = vmatpush1.msra.mxu0 0.0
        %6166 = vmatprep.subr.mxu0 0.0
        %6167 = vmatpush1.msra.mxu0 0.0
        %6168 = vmatprep.subr.mxu0 0.0
        %6169 = vmatpush1.msra.mxu0 0.0
        %6170 = vmatprep.subr.mxu0 0.0
        %6171 = vmatpush1.msra.mxu0 0.0
        %6172 = vmatprep.subr.mxu0 0.0
        %6173 = vmatpush1.msra.mxu0 0.0
        %6174 = vmatprep.subr.mxu0 0.0
        %6175 = vmatpush1.msra.mxu0 0.0
        %6176 = vmatprep.subr.mxu0 0.0
        %6177 = vmatpush1.msra.mxu0 0.0
        %6178 = vmatprep.subr.mxu0 0.0
        %6179 = vmatpush1.msra.mxu0 0.0
        %6180 = vmatprep.subr.mxu0 0.0
        %6181 = vmatpush1.msra.mxu0 0.0
        %6182 = vmatprep.subr.mxu0 0.0
        %6183 = vmatpush1.msra.mxu0 0.0
        %6184 = vmatprep.subr.mxu0 0.0
        %6185 = vmatpush1.msra.mxu0 0.0
        %6186 = vmatprep.subr.mxu0 0.0
        %6187 = vmatpush1.msra.mxu0 0.0
        %6188 = vmatprep.subr.mxu0 0.0
        %6189 = vmatpush1.msra.mxu0 0.0
        %6190 = vmatprep.subr.mxu0 0.0
        %6191 = vmatpush1.msra.mxu0 0.0
        %6192 = vmatprep.subr.mxu0 0.0
        %6193 = vmatpush1.msra.mxu0 0.0
        %6194 = vmatprep.subr.mxu0 0.0
        %6195 = vmatpush1.msra.mxu0 0.0
        %6196 = vmatprep.subr.mxu0 0.0
        %6197 = vmatpush1.msra.mxu0 0.0
        %6198 = vmatprep.subr.mxu0 0.0
        %6199 = vmatpush1.msra.mxu0 0.0
        %6200 = vmatprep.mubr.f32.mxu0 0.0
        %6201 = vmatmul.mubr.f32.gmra.mrb[0].mxu0 %v6063
        %v6202 = vpop.f32.mrb[0].mxu0
        %v6203 = vadd.f32 0.0, %v6202
        %v6204 = vpop.f32.mrb[0].mxu0
        %v6205 = vadd.f32 0.0, %v6204
        %6206 = vdwg.mxu0
        %v6207 = vadd.f32 %v6038, %v6132
        %v6208 = vadd.f32 %v6039, %v6134
        %v6209 = vadd.f32 %v6040, %v6203
        %v6210 = vadd.f32 %v6041, %v6205
        %s6211 = scalar_lea.vmem %s6, 64
        %v6212 = vld [vmem:[%s6211] sm:$0xff]
        %6213 = vrot.lane.b32.xlu0 %v4859, 19
        %v6214 = vpop.permute.xlu0 %6213
        %6215 = vrot.lane.b32.xlu0 %v4860, 19
        %v6216 = vpop.permute.xlu0 %6215
        %6217 = vrot.lane.b32.xlu0 %v4861, 19
        %v6218 = vpop.permute.xlu0 %6217
        %6219 = vrot.lane.b32.xlu0 %v4862, 19
        %v6220 = vpop.permute.xlu0 %6219
        %6221 = vrot.lane.b32.xlu0 %v4863, 19
        %v6222 = vpop.permute.xlu0 %6221
        %v6223 = vsel %vm1787, %v6214, %v6216
        %v6224 = vsel %vm1787, %v6216, %v6218
        %v6225 = vsel %vm1787, %v6218, %v6220
        %v6226 = vsel %vm1787, %v6220, %v6222
        %v6232 = vsel %vm445, %v6212, 0
        %6234 = vmatprep.subr.mxu0 %v6224
        %6235 = vmatpush1.msra.mxu0 %v6223
        %6236 = vmatprep.subr.mxu0 0.0
        %6237 = vmatpush1.msra.mxu0 0.0
        %6238 = vmatprep.subr.mxu0 0.0
        %6239 = vmatpush1.msra.mxu0 0.0
        %6240 = vmatprep.subr.mxu0 0.0
        %6241 = vmatpush1.msra.mxu0 0.0
        %6242 = vmatprep.subr.mxu0 0.0
        %6243 = vmatpush1.msra.mxu0 0.0
        %6244 = vmatprep.subr.mxu0 0.0
        %6245 = vmatpush1.msra.mxu0 0.0
        %6246 = vmatprep.subr.mxu0 0.0
        %6247 = vmatpush1.msra.mxu0 0.0
        %6248 = vmatprep.subr.mxu0 0.0
        %6249 = vmatpush1.msra.mxu0 0.0
        %6250 = vmatprep.subr.mxu0 0.0
        %6251 = vmatpush1.msra.mxu0 0.0
        %6252 = vmatprep.subr.mxu0 0.0
        %6253 = vmatpush1.msra.mxu0 0.0
        %6254 = vmatprep.subr.mxu0 0.0
        %6255 = vmatpush1.msra.mxu0 0.0
        %6256 = vmatprep.subr.mxu0 0.0
        %6257 = vmatpush1.msra.mxu0 0.0
        %6258 = vmatprep.subr.mxu0 0.0
        %6259 = vmatpush1.msra.mxu0 0.0
        %6260 = vmatprep.subr.mxu0 0.0
        %6261 = vmatpush1.msra.mxu0 0.0
        %6262 = vmatprep.subr.mxu0 0.0
        %6263 = vmatpush1.msra.mxu0 0.0
        %6264 = vmatprep.subr.mxu0 0.0
        %6265 = vmatpush1.msra.mxu0 0.0
        %6266 = vmatprep.subr.mxu0 0.0
        %6267 = vmatpush1.msra.mxu0 0.0
        %6268 = vmatprep.subr.mxu0 0.0
        %6269 = vmatpush1.msra.mxu0 0.0
        %6270 = vmatprep.subr.mxu0 0.0
        %6271 = vmatpush1.msra.mxu0 0.0
        %6272 = vmatprep.subr.mxu0 0.0
        %6273 = vmatpush1.msra.mxu0 0.0
        %6274 = vmatprep.subr.mxu0 0.0
        %6275 = vmatpush1.msra.mxu0 0.0
        %6276 = vmatprep.subr.mxu0 0.0
        %6277 = vmatpush1.msra.mxu0 0.0
        %6278 = vmatprep.subr.mxu0 0.0
        %6279 = vmatpush1.msra.mxu0 0.0
        %6280 = vmatprep.subr.mxu0 0.0
        %6281 = vmatpush1.msra.mxu0 0.0
        %6282 = vmatprep.subr.mxu0 0.0
        %6283 = vmatpush1.msra.mxu0 0.0
        %6284 = vmatprep.subr.mxu0 0.0
        %6285 = vmatpush1.msra.mxu0 0.0
        %6286 = vmatprep.subr.mxu0 0.0
        %6287 = vmatpush1.msra.mxu0 0.0
        %6288 = vmatprep.subr.mxu0 0.0
        %6289 = vmatpush1.msra.mxu0 0.0
        %6290 = vmatprep.subr.mxu0 0.0
        %6291 = vmatpush1.msra.mxu0 0.0
        %6292 = vmatprep.subr.mxu0 0.0
        %6293 = vmatpush1.msra.mxu0 0.0
        %6294 = vmatprep.subr.mxu0 0.0
        %6295 = vmatpush1.msra.mxu0 0.0
        %6296 = vmatprep.subr.mxu0 0.0
        %6297 = vmatpush1.msra.mxu0 0.0
        %6298 = vmatprep.mubr.f32.mxu0 0.0
        %6299 = vmatmul.mubr.f32.gmra.mrb[0].mxu0 %v6232
        %v6300 = vpop.f32.mrb[0].mxu0
        %v6301 = vadd.f32 0.0, %v6300
        %v6302 = vpop.f32.mrb[0].mxu0
        %v6303 = vadd.f32 0.0, %v6302
        %6304 = vdwg.mxu0
        %6305 = vmatprep.subr.mxu0 %v6226
        %6306 = vmatpush1.msra.mxu0 %v6225
        %6307 = vmatprep.subr.mxu0 0.0
        %6308 = vmatpush1.msra.mxu0 0.0
        %6309 = vmatprep.subr.mxu0 0.0
        %6310 = vmatpush1.msra.mxu0 0.0
        %6311 = vmatprep.subr.mxu0 0.0
        %6312 = vmatpush1.msra.mxu0 0.0
        %6313 = vmatprep.subr.mxu0 0.0
        %6314 = vmatpush1.msra.mxu0 0.0
        %6315 = vmatprep.subr.mxu0 0.0
        %6316 = vmatpush1.msra.mxu0 0.0
        %6317 = vmatprep.subr.mxu0 0.0
        %6318 = vmatpush1.msra.mxu0 0.0
        %6319 = vmatprep.subr.mxu0 0.0
        %6320 = vmatpush1.msra.mxu0 0.0
        %6321 = vmatprep.subr.mxu0 0.0
        %6322 = vmatpush1.msra.mxu0 0.0
        %6323 = vmatprep.subr.mxu0 0.0
        %6324 = vmatpush1.msra.mxu0 0.0
        %6325 = vmatprep.subr.mxu0 0.0
        %6326 = vmatpush1.msra.mxu0 0.0
        %6327 = vmatprep.subr.mxu0 0.0
        %6328 = vmatpush1.msra.mxu0 0.0
        %6329 = vmatprep.subr.mxu0 0.0
        %6330 = vmatpush1.msra.mxu0 0.0
        %6331 = vmatprep.subr.mxu0 0.0
        %6332 = vmatpush1.msra.mxu0 0.0
        %6333 = vmatprep.subr.mxu0 0.0
        %6334 = vmatpush1.msra.mxu0 0.0
        %6335 = vmatprep.subr.mxu0 0.0
        %6336 = vmatpush1.msra.mxu0 0.0
        %6337 = vmatprep.subr.mxu0 0.0
        %6338 = vmatpush1.msra.mxu0 0.0
        %6339 = vmatprep.subr.mxu0 0.0
        %6340 = vmatpush1.msra.mxu0 0.0
        %6341 = vmatprep.subr.mxu0 0.0
        %6342 = vmatpush1.msra.mxu0 0.0
        %6343 = vmatprep.subr.mxu0 0.0
        %6344 = vmatpush1.msra.mxu0 0.0
        %6345 = vmatprep.subr.mxu0 0.0
        %6346 = vmatpush1.msra.mxu0 0.0
        %6347 = vmatprep.subr.mxu0 0.0
        %6348 = vmatpush1.msra.mxu0 0.0
        %6349 = vmatprep.subr.mxu0 0.0
        %6350 = vmatpush1.msra.mxu0 0.0
        %6351 = vmatprep.subr.mxu0 0.0
        %6352 = vmatpush1.msra.mxu0 0.0
        %6353 = vmatprep.subr.mxu0 0.0
        %6354 = vmatpush1.msra.mxu0 0.0
        %6355 = vmatprep.subr.mxu0 0.0
        %6356 = vmatpush1.msra.mxu0 0.0
        %6357 = vmatprep.subr.mxu0 0.0
        %6358 = vmatpush1.msra.mxu0 0.0
        %6359 = vmatprep.subr.mxu0 0.0
        %6360 = vmatpush1.msra.mxu0 0.0
        %6361 = vmatprep.subr.mxu0 0.0
        %6362 = vmatpush1.msra.mxu0 0.0
        %6363 = vmatprep.subr.mxu0 0.0
        %6364 = vmatpush1.msra.mxu0 0.0
        %6365 = vmatprep.subr.mxu0 0.0
        %6366 = vmatpush1.msra.mxu0 0.0
        %6367 = vmatprep.subr.mxu0 0.0
        %6368 = vmatpush1.msra.mxu0 0.0
        %6369 = vmatprep.mubr.f32.mxu0 0.0
        %6370 = vmatmul.mubr.f32.gmra.mrb[0].mxu0 %v6232
        %v6371 = vpop.f32.mrb[0].mxu0
        %v6372 = vadd.f32 0.0, %v6371
        %v6373 = vpop.f32.mrb[0].mxu0
        %v6374 = vadd.f32 0.0, %v6373
        %6375 = vdwg.mxu0
        %v6376 = vadd.f32 %v6207, %v6301
        %v6377 = vadd.f32 %v6208, %v6303
        %v6378 = vadd.f32 %v6209, %v6372
        %v6379 = vadd.f32 %v6210, %v6374
        %s6380 = scalar_lea.vmem %s6, 72
        %v6381 = vld [vmem:[%s6380] sm:$0xff]
        %6382 = vrot.lane.b32.xlu0 %v4859, 18
        %v6383 = vpop.permute.xlu0 %6382
        %6384 = vrot.lane.b32.xlu0 %v4860, 18
        %v6385 = vpop.permute.xlu0 %6384
        %6386 = vrot.lane.b32.xlu0 %v4861, 18
        %v6387 = vpop.permute.xlu0 %6386
        %6388 = vrot.lane.b32.xlu0 %v4862, 18
        %v6389 = vpop.permute.xlu0 %6388
        %6390 = vrot.lane.b32.xlu0 %v4863, 18
        %v6391 = vpop.permute.xlu0 %6390
        %v6392 = vsel %vm1957, %v6383, %v6385
        %v6393 = vsel %vm1957, %v6385, %v6387
        %v6394 = vsel %vm1957, %v6387, %v6389
        %v6395 = vsel %vm1957, %v6389, %v6391
        %v6401 = vsel %vm445, %v6381, 0
        %6403 = vmatprep.subr.mxu0 %v6393
        %6404 = vmatpush1.msra.mxu0 %v6392
        %6405 = vmatprep.subr.mxu0 0.0
        %6406 = vmatpush1.msra.mxu0 0.0
        %6407 = vmatprep.subr.mxu0 0.0
        %6408 = vmatpush1.msra.mxu0 0.0
        %6409 = vmatprep.subr.mxu0 0.0
        %6410 = vmatpush1.msra.mxu0 0.0
        %6411 = vmatprep.subr.mxu0 0.0
        %6412 = vmatpush1.msra.mxu0 0.0
        %6413 = vmatprep.subr.mxu0 0.0
        %6414 = vmatpush1.msra.mxu0 0.0
        %6415 = vmatprep.subr.mxu0 0.0
        %6416 = vmatpush1.msra.mxu0 0.0
        %6417 = vmatprep.subr.mxu0 0.0
        %6418 = vmatpush1.msra.mxu0 0.0
        %6419 = vmatprep.subr.mxu0 0.0
        %6420 = vmatpush1.msra.mxu0 0.0
        %6421 = vmatprep.subr.mxu0 0.0
        %6422 = vmatpush1.msra.mxu0 0.0
        %6423 = vmatprep.subr.mxu0 0.0
        %6424 = vmatpush1.msra.mxu0 0.0
        %6425 = vmatprep.subr.mxu0 0.0
        %6426 = vmatpush1.msra.mxu0 0.0
        %6427 = vmatprep.subr.mxu0 0.0
        %6428 = vmatpush1.msra.mxu0 0.0
        %6429 = vmatprep.subr.mxu0 0.0
        %6430 = vmatpush1.msra.mxu0 0.0
        %6431 = vmatprep.subr.mxu0 0.0
        %6432 = vmatpush1.msra.mxu0 0.0
        %6433 = vmatprep.subr.mxu0 0.0
        %6434 = vmatpush1.msra.mxu0 0.0
        %6435 = vmatprep.subr.mxu0 0.0
        %6436 = vmatpush1.msra.mxu0 0.0
        %6437 = vmatprep.subr.mxu0 0.0
        %6438 = vmatpush1.msra.mxu0 0.0
        %6439 = vmatprep.subr.mxu0 0.0
        %6440 = vmatpush1.msra.mxu0 0.0
        %6441 = vmatprep.subr.mxu0 0.0
        %6442 = vmatpush1.msra.mxu0 0.0
        %6443 = vmatprep.subr.mxu0 0.0
        %6444 = vmatpush1.msra.mxu0 0.0
        %6445 = vmatprep.subr.mxu0 0.0
        %6446 = vmatpush1.msra.mxu0 0.0
        %6447 = vmatprep.subr.mxu0 0.0
        %6448 = vmatpush1.msra.mxu0 0.0
        %6449 = vmatprep.subr.mxu0 0.0
        %6450 = vmatpush1.msra.mxu0 0.0
        %6451 = vmatprep.subr.mxu0 0.0
        %6452 = vmatpush1.msra.mxu0 0.0
        %6453 = vmatprep.subr.mxu0 0.0
        %6454 = vmatpush1.msra.mxu0 0.0
        %6455 = vmatprep.subr.mxu0 0.0
        %6456 = vmatpush1.msra.mxu0 0.0
        %6457 = vmatprep.subr.mxu0 0.0
        %6458 = vmatpush1.msra.mxu0 0.0
        %6459 = vmatprep.subr.mxu0 0.0
        %6460 = vmatpush1.msra.mxu0 0.0
        %6461 = vmatprep.subr.mxu0 0.0
        %6462 = vmatpush1.msra.mxu0 0.0
        %6463 = vmatprep.subr.mxu0 0.0
        %6464 = vmatpush1.msra.mxu0 0.0
        %6465 = vmatprep.subr.mxu0 0.0
        %6466 = vmatpush1.msra.mxu0 0.0
        %6467 = vmatprep.mubr.f32.mxu0 0.0
        %6468 = vmatmul.mubr.f32.gmra.mrb[0].mxu0 %v6401
        %v6469 = vpop.f32.mrb[0].mxu0
        %v6470 = vadd.f32 0.0, %v6469
        %v6471 = vpop.f32.mrb[0].mxu0
        %v6472 = vadd.f32 0.0, %v6471
        %6473 = vdwg.mxu0
        %6474 = vmatprep.subr.mxu0 %v6395
        %6475 = vmatpush1.msra.mxu0 %v6394
        %6476 = vmatprep.subr.mxu0 0.0
        %6477 = vmatpush1.msra.mxu0 0.0
        %6478 = vmatprep.subr.mxu0 0.0
        %6479 = vmatpush1.msra.mxu0 0.0
        %6480 = vmatprep.subr.mxu0 0.0
        %6481 = vmatpush1.msra.mxu0 0.0
        %6482 = vmatprep.subr.mxu0 0.0
        %6483 = vmatpush1.msra.mxu0 0.0
        %6484 = vmatprep.subr.mxu0 0.0
        %6485 = vmatpush1.msra.mxu0 0.0
        %6486 = vmatprep.subr.mxu0 0.0
        %6487 = vmatpush1.msra.mxu0 0.0
        %6488 = vmatprep.subr.mxu0 0.0
        %6489 = vmatpush1.msra.mxu0 0.0
        %6490 = vmatprep.subr.mxu0 0.0
        %6491 = vmatpush1.msra.mxu0 0.0
        %6492 = vmatprep.subr.mxu0 0.0
        %6493 = vmatpush1.msra.mxu0 0.0
        %6494 = vmatprep.subr.mxu0 0.0
        %6495 = vmatpush1.msra.mxu0 0.0
        %6496 = vmatprep.subr.mxu0 0.0
        %6497 = vmatpush1.msra.mxu0 0.0
        %6498 = vmatprep.subr.mxu0 0.0
        %6499 = vmatpush1.msra.mxu0 0.0
        %6500 = vmatprep.subr.mxu0 0.0
        %6501 = vmatpush1.msra.mxu0 0.0
        %6502 = vmatprep.subr.mxu0 0.0
        %6503 = vmatpush1.msra.mxu0 0.0
        %6504 = vmatprep.subr.mxu0 0.0
        %6505 = vmatpush1.msra.mxu0 0.0
        %6506 = vmatprep.subr.mxu0 0.0
        %6507 = vmatpush1.msra.mxu0 0.0
        %6508 = vmatprep.subr.mxu0 0.0
        %6509 = vmatpush1.msra.mxu0 0.0
        %6510 = vmatprep.subr.mxu0 0.0
        %6511 = vmatpush1.msra.mxu0 0.0
        %6512 = vmatprep.subr.mxu0 0.0
        %6513 = vmatpush1.msra.mxu0 0.0
        %6514 = vmatprep.subr.mxu0 0.0
        %6515 = vmatpush1.msra.mxu0 0.0
        %6516 = vmatprep.subr.mxu0 0.0
        %6517 = vmatpush1.msra.mxu0 0.0
        %6518 = vmatprep.subr.mxu0 0.0
        %6519 = vmatpush1.msra.mxu0 0.0
        %6520 = vmatprep.subr.mxu0 0.0
        %6521 = vmatpush1.msra.mxu0 0.0
        %6522 = vmatprep.subr.mxu0 0.0
        %6523 = vmatpush1.msra.mxu0 0.0
        %6524 = vmatprep.subr.mxu0 0.0
        %6525 = vmatpush1.msra.mxu0 0.0
        %6526 = vmatprep.subr.mxu0 0.0
        %6527 = vmatpush1.msra.mxu0 0.0
        %6528 = vmatprep.subr.mxu0 0.0
        %6529 = vmatpush1.msra.mxu0 0.0
        %6530 = vmatprep.subr.mxu0 0.0
        %6531 = vmatpush1.msra.mxu0 0.0
        %6532 = vmatprep.subr.mxu0 0.0
        %6533 = vmatpush1.msra.mxu0 0.0
        %6534 = vmatprep.subr.mxu0 0.0
        %6535 = vmatpush1.msra.mxu0 0.0
        %6536 = vmatprep.subr.mxu0 0.0
        %6537 = vmatpush1.msra.mxu0 0.0
        %6538 = vmatprep.mubr.f32.mxu0 0.0
        %6539 = vmatmul.mubr.f32.gmra.mrb[0].mxu0 %v6401
        %v6540 = vpop.f32.mrb[0].mxu0
        %v6541 = vadd.f32 0.0, %v6540
        %v6542 = vpop.f32.mrb[0].mxu0
        %v6543 = vadd.f32 0.0, %v6542
        %6544 = vdwg.mxu0
        %v6545 = vadd.f32 %v6376, %v6470
        %v6546 = vadd.f32 %v6377, %v6472
        %v6547 = vadd.f32 %v6378, %v6541
        %v6548 = vadd.f32 %v6379, %v6543
        %s6549 = scalar_lea.vmem %s6, 80
        %v6550 = vld [vmem:[%s6549] sm:$0xff]
        %6551 = vrot.lane.b32.xlu0 %v4859, 2
        %v6552 = vpop.permute.xlu0 %6551
        %6553 = vrot.lane.b32.xlu0 %v4860, 2
        %v6554 = vpop.permute.xlu0 %6553
        %6555 = vrot.lane.b32.xlu0 %v4861, 2
        %v6556 = vpop.permute.xlu0 %6555
        %6557 = vrot.lane.b32.xlu0 %v4862, 2
        %v6558 = vpop.permute.xlu0 %6557
        %6559 = vrot.lane.b32.xlu0 %v4863, 2
        %v6560 = vpop.permute.xlu0 %6559
        %v6561 = vsel %vm2127, %v6552, %v6554
        %v6562 = vsel %vm2127, %v6554, %v6556
        %v6563 = vsel %vm2127, %v6556, %v6558
        %v6564 = vsel %vm2127, %v6558, %v6560
        %v6570 = vsel %vm445, %v6550, 0
        %6572 = vmatprep.subr.mxu0 %v6562
        %6573 = vmatpush1.msra.mxu0 %v6561
        %6574 = vmatprep.subr.mxu0 0.0
        %6575 = vmatpush1.msra.mxu0 0.0
        %6576 = vmatprep.subr.mxu0 0.0
        %6577 = vmatpush1.msra.mxu0 0.0
        %6578 = vmatprep.subr.mxu0 0.0
        %6579 = vmatpush1.msra.mxu0 0.0
        %6580 = vmatprep.subr.mxu0 0.0
        %6581 = vmatpush1.msra.mxu0 0.0
        %6582 = vmatprep.subr.mxu0 0.0
        %6583 = vmatpush1.msra.mxu0 0.0
        %6584 = vmatprep.subr.mxu0 0.0
        %6585 = vmatpush1.msra.mxu0 0.0
        %6586 = vmatprep.subr.mxu0 0.0
        %6587 = vmatpush1.msra.mxu0 0.0
        %6588 = vmatprep.subr.mxu0 0.0
        %6589 = vmatpush1.msra.mxu0 0.0
        %6590 = vmatprep.subr.mxu0 0.0
        %6591 = vmatpush1.msra.mxu0 0.0
        %6592 = vmatprep.subr.mxu0 0.0
        %6593 = vmatpush1.msra.mxu0 0.0
        %6594 = vmatprep.subr.mxu0 0.0
        %6595 = vmatpush1.msra.mxu0 0.0
        %6596 = vmatprep.subr.mxu0 0.0
        %6597 = vmatpush1.msra.mxu0 0.0
        %6598 = vmatprep.subr.mxu0 0.0
        %6599 = vmatpush1.msra.mxu0 0.0
        %6600 = vmatprep.subr.mxu0 0.0
        %6601 = vmatpush1.msra.mxu0 0.0
        %6602 = vmatprep.subr.mxu0 0.0
        %6603 = vmatpush1.msra.mxu0 0.0
        %6604 = vmatprep.subr.mxu0 0.0
        %6605 = vmatpush1.msra.mxu0 0.0
        %6606 = vmatprep.subr.mxu0 0.0
        %6607 = vmatpush1.msra.mxu0 0.0
        %6608 = vmatprep.subr.mxu0 0.0
        %6609 = vmatpush1.msra.mxu0 0.0
        %6610 = vmatprep.subr.mxu0 0.0
        %6611 = vmatpush1.msra.mxu0 0.0
        %6612 = vmatprep.subr.mxu0 0.0
        %6613 = vmatpush1.msra.mxu0 0.0
        %6614 = vmatprep.subr.mxu0 0.0
        %6615 = vmatpush1.msra.mxu0 0.0
        %6616 = vmatprep.subr.mxu0 0.0
        %6617 = vmatpush1.msra.mxu0 0.0
        %6618 = vmatprep.subr.mxu0 0.0
        %6619 = vmatpush1.msra.mxu0 0.0
        %6620 = vmatprep.subr.mxu0 0.0
        %6621 = vmatpush1.msra.mxu0 0.0
        %6622 = vmatprep.subr.mxu0 0.0
        %6623 = vmatpush1.msra.mxu0 0.0
        %6624 = vmatprep.subr.mxu0 0.0
        %6625 = vmatpush1.msra.mxu0 0.0
        %6626 = vmatprep.subr.mxu0 0.0
        %6627 = vmatpush1.msra.mxu0 0.0
        %6628 = vmatprep.subr.mxu0 0.0
        %6629 = vmatpush1.msra.mxu0 0.0
        %6630 = vmatprep.subr.mxu0 0.0
        %6631 = vmatpush1.msra.mxu0 0.0
        %6632 = vmatprep.subr.mxu0 0.0
        %6633 = vmatpush1.msra.mxu0 0.0
        %6634 = vmatprep.subr.mxu0 0.0
        %6635 = vmatpush1.msra.mxu0 0.0
        %6636 = vmatprep.mubr.f32.mxu0 0.0
        %6637 = vmatmul.mubr.f32.gmra.mrb[0].mxu0 %v6570
        %v6638 = vpop.f32.mrb[0].mxu0
        %v6639 = vadd.f32 0.0, %v6638
        %v6640 = vpop.f32.mrb[0].mxu0
        %v6641 = vadd.f32 0.0, %v6640
        %6642 = vdwg.mxu0
        %6643 = vmatprep.subr.mxu0 %v6564
        %6644 = vmatpush1.msra.mxu0 %v6563
        %6645 = vmatprep.subr.mxu0 0.0
        %6646 = vmatpush1.msra.mxu0 0.0
        %6647 = vmatprep.subr.mxu0 0.0
        %6648 = vmatpush1.msra.mxu0 0.0
        %6649 = vmatprep.subr.mxu0 0.0
        %6650 = vmatpush1.msra.mxu0 0.0
        %6651 = vmatprep.subr.mxu0 0.0
        %6652 = vmatpush1.msra.mxu0 0.0
        %6653 = vmatprep.subr.mxu0 0.0
        %6654 = vmatpush1.msra.mxu0 0.0
        %6655 = vmatprep.subr.mxu0 0.0
        %6656 = vmatpush1.msra.mxu0 0.0
        %6657 = vmatprep.subr.mxu0 0.0
        %6658 = vmatpush1.msra.mxu0 0.0
        %6659 = vmatprep.subr.mxu0 0.0
        %6660 = vmatpush1.msra.mxu0 0.0
        %6661 = vmatprep.subr.mxu0 0.0
        %6662 = vmatpush1.msra.mxu0 0.0
        %6663 = vmatprep.subr.mxu0 0.0
        %6664 = vmatpush1.msra.mxu0 0.0
        %6665 = vmatprep.subr.mxu0 0.0
        %6666 = vmatpush1.msra.mxu0 0.0
        %6667 = vmatprep.subr.mxu0 0.0
        %6668 = vmatpush1.msra.mxu0 0.0
        %6669 = vmatprep.subr.mxu0 0.0
        %6670 = vmatpush1.msra.mxu0 0.0
        %6671 = vmatprep.subr.mxu0 0.0
        %6672 = vmatpush1.msra.mxu0 0.0
        %6673 = vmatprep.subr.mxu0 0.0
        %6674 = vmatpush1.msra.mxu0 0.0
        %6675 = vmatprep.subr.mxu0 0.0
        %6676 = vmatpush1.msra.mxu0 0.0
        %6677 = vmatprep.subr.mxu0 0.0
        %6678 = vmatpush1.msra.mxu0 0.0
        %6679 = vmatprep.subr.mxu0 0.0
        %6680 = vmatpush1.msra.mxu0 0.0
        %6681 = vmatprep.subr.mxu0 0.0
        %6682 = vmatpush1.msra.mxu0 0.0
        %6683 = vmatprep.subr.mxu0 0.0
        %6684 = vmatpush1.msra.mxu0 0.0
        %6685 = vmatprep.subr.mxu0 0.0
        %6686 = vmatpush1.msra.mxu0 0.0
        %6687 = vmatprep.subr.mxu0 0.0
        %6688 = vmatpush1.msra.mxu0 0.0
        %6689 = vmatprep.subr.mxu0 0.0
        %6690 = vmatpush1.msra.mxu0 0.0
        %6691 = vmatprep.subr.mxu0 0.0
        %6692 = vmatpush1.msra.mxu0 0.0
        %6693 = vmatprep.subr.mxu0 0.0
        %6694 = vmatpush1.msra.mxu0 0.0
        %6695 = vmatprep.subr.mxu0 0.0
        %6696 = vmatpush1.msra.mxu0 0.0
        %6697 = vmatprep.subr.mxu0 0.0
        %6698 = vmatpush1.msra.mxu0 0.0
        %6699 = vmatprep.subr.mxu0 0.0
        %6700 = vmatpush1.msra.mxu0 0.0
        %6701 = vmatprep.subr.mxu0 0.0
        %6702 = vmatpush1.msra.mxu0 0.0
        %6703 = vmatprep.subr.mxu0 0.0
        %6704 = vmatpush1.msra.mxu0 0.0
        %6705 = vmatprep.subr.mxu0 0.0
        %6706 = vmatpush1.msra.mxu0 0.0
        %6707 = vmatprep.mubr.f32.mxu0 0.0
        %6708 = vmatmul.mubr.f32.gmra.mrb[0].mxu0 %v6570
        %v6709 = vpop.f32.mrb[0].mxu0
        %v6710 = vadd.f32 0.0, %v6709
        %v6711 = vpop.f32.mrb[0].mxu0
        %v6712 = vadd.f32 0.0, %v6711
        %6713 = vdwg.mxu0
        %v6714 = vadd.f32 %v6545, %v6639
        %v6715 = vadd.f32 %v6546, %v6641
        %v6716 = vadd.f32 %v6547, %v6710
        %v6717 = vadd.f32 %v6548, %v6712
        %s6718 = scalar_lea.vmem %s6, 88
        %v6719 = vld [vmem:[%s6718] sm:$0xff]
        %6720 = vrot.lane.b32.xlu0 %v4859, 1
        %v6721 = vpop.permute.xlu0 %6720
        %6722 = vrot.lane.b32.xlu0 %v4860, 1
        %v6723 = vpop.permute.xlu0 %6722
        %6724 = vrot.lane.b32.xlu0 %v4861, 1
        %v6725 = vpop.permute.xlu0 %6724
        %6726 = vrot.lane.b32.xlu0 %v4862, 1
        %v6727 = vpop.permute.xlu0 %6726
        %6728 = vrot.lane.b32.xlu0 %v4863, 1
        %v6729 = vpop.permute.xlu0 %6728
        %v6730 = vsel %vm2297, %v6721, %v6723
        %v6731 = vsel %vm2297, %v6723, %v6725
        %v6732 = vsel %vm2297, %v6725, %v6727
        %v6733 = vsel %vm2297, %v6727, %v6729
        %v6739 = vsel %vm445, %v6719, 0
        %6741 = vmatprep.subr.mxu0 %v6731
        %6742 = vmatpush1.msra.mxu0 %v6730
        %6743 = vmatprep.subr.mxu0 0.0
        %6744 = vmatpush1.msra.mxu0 0.0
        %6745 = vmatprep.subr.mxu0 0.0
        %6746 = vmatpush1.msra.mxu0 0.0
        %6747 = vmatprep.subr.mxu0 0.0
        %6748 = vmatpush1.msra.mxu0 0.0
        %6749 = vmatprep.subr.mxu0 0.0
        %6750 = vmatpush1.msra.mxu0 0.0
        %6751 = vmatprep.subr.mxu0 0.0
        %6752 = vmatpush1.msra.mxu0 0.0
        %6753 = vmatprep.subr.mxu0 0.0
        %6754 = vmatpush1.msra.mxu0 0.0
        %6755 = vmatprep.subr.mxu0 0.0
        %6756 = vmatpush1.msra.mxu0 0.0
        %6757 = vmatprep.subr.mxu0 0.0
        %6758 = vmatpush1.msra.mxu0 0.0
        %6759 = vmatprep.subr.mxu0 0.0
        %6760 = vmatpush1.msra.mxu0 0.0
        %6761 = vmatprep.subr.mxu0 0.0
        %6762 = vmatpush1.msra.mxu0 0.0
        %6763 = vmatprep.subr.mxu0 0.0
        %6764 = vmatpush1.msra.mxu0 0.0
        %6765 = vmatprep.subr.mxu0 0.0
        %6766 = vmatpush1.msra.mxu0 0.0
        %6767 = vmatprep.subr.mxu0 0.0
        %6768 = vmatpush1.msra.mxu0 0.0
        %6769 = vmatprep.subr.mxu0 0.0
        %6770 = vmatpush1.msra.mxu0 0.0
        %6771 = vmatprep.subr.mxu0 0.0
        %6772 = vmatpush1.msra.mxu0 0.0
        %6773 = vmatprep.subr.mxu0 0.0
        %6774 = vmatpush1.msra.mxu0 0.0
        %6775 = vmatprep.subr.mxu0 0.0
        %6776 = vmatpush1.msra.mxu0 0.0
        %6777 = vmatprep.subr.mxu0 0.0
        %6778 = vmatpush1.msra.mxu0 0.0
        %6779 = vmatprep.subr.mxu0 0.0
        %6780 = vmatpush1.msra.mxu0 0.0
        %6781 = vmatprep.subr.mxu0 0.0
        %6782 = vmatpush1.msra.mxu0 0.0
        %6783 = vmatprep.subr.mxu0 0.0
        %6784 = vmatpush1.msra.mxu0 0.0
        %6785 = vmatprep.subr.mxu0 0.0
        %6786 = vmatpush1.msra.mxu0 0.0
        %6787 = vmatprep.subr.mxu0 0.0
        %6788 = vmatpush1.msra.mxu0 0.0
        %6789 = vmatprep.subr.mxu0 0.0
        %6790 = vmatpush1.msra.mxu0 0.0
        %6791 = vmatprep.subr.mxu0 0.0
        %6792 = vmatpush1.msra.mxu0 0.0
        %6793 = vmatprep.subr.mxu0 0.0
        %6794 = vmatpush1.msra.mxu0 0.0
        %6795 = vmatprep.subr.mxu0 0.0
        %6796 = vmatpush1.msra.mxu0 0.0
        %6797 = vmatprep.subr.mxu0 0.0
        %6798 = vmatpush1.msra.mxu0 0.0
        %6799 = vmatprep.subr.mxu0 0.0
        %6800 = vmatpush1.msra.mxu0 0.0
        %6801 = vmatprep.subr.mxu0 0.0
        %6802 = vmatpush1.msra.mxu0 0.0
        %6803 = vmatprep.subr.mxu0 0.0
        %6804 = vmatpush1.msra.mxu0 0.0
        %6805 = vmatprep.mubr.f32.mxu0 0.0
        %6806 = vmatmul.mubr.f32.gmra.mrb[0].mxu0 %v6739
        %v6807 = vpop.f32.mrb[0].mxu0
        %v6808 = vadd.f32 0.0, %v6807
        %v6809 = vpop.f32.mrb[0].mxu0
        %v6810 = vadd.f32 0.0, %v6809
        %6811 = vdwg.mxu0
        %6812 = vmatprep.subr.mxu0 %v6733
        %6813 = vmatpush1.msra.mxu0 %v6732
        %6814 = vmatprep.subr.mxu0 0.0
        %6815 = vmatpush1.msra.mxu0 0.0
        %6816 = vmatprep.subr.mxu0 0.0
        %6817 = vmatpush1.msra.mxu0 0.0
        %6818 = vmatprep.subr.mxu0 0.0
        %6819 = vmatpush1.msra.mxu0 0.0
        %6820 = vmatprep.subr.mxu0 0.0
        %6821 = vmatpush1.msra.mxu0 0.0
        %6822 = vmatprep.subr.mxu0 0.0
        %6823 = vmatpush1.msra.mxu0 0.0
        %6824 = vmatprep.subr.mxu0 0.0
        %6825 = vmatpush1.msra.mxu0 0.0
        %6826 = vmatprep.subr.mxu0 0.0
        %6827 = vmatpush1.msra.mxu0 0.0
        %6828 = vmatprep.subr.mxu0 0.0
        %6829 = vmatpush1.msra.mxu0 0.0
        %6830 = vmatprep.subr.mxu0 0.0
        %6831 = vmatpush1.msra.mxu0 0.0
        %6832 = vmatprep.subr.mxu0 0.0
        %6833 = vmatpush1.msra.mxu0 0.0
        %6834 = vmatprep.subr.mxu0 0.0
        %6835 = vmatpush1.msra.mxu0 0.0
        %6836 = vmatprep.subr.mxu0 0.0
        %6837 = vmatpush1.msra.mxu0 0.0
        %6838 = vmatprep.subr.mxu0 0.0
        %6839 = vmatpush1.msra.mxu0 0.0
        %6840 = vmatprep.subr.mxu0 0.0
        %6841 = vmatpush1.msra.mxu0 0.0
        %6842 = vmatprep.subr.mxu0 0.0
        %6843 = vmatpush1.msra.mxu0 0.0
        %6844 = vmatprep.subr.mxu0 0.0
        %6845 = vmatpush1.msra.mxu0 0.0
        %6846 = vmatprep.subr.mxu0 0.0
        %6847 = vmatpush1.msra.mxu0 0.0
        %6848 = vmatprep.subr.mxu0 0.0
        %6849 = vmatpush1.msra.mxu0 0.0
        %6850 = vmatprep.subr.mxu0 0.0
        %6851 = vmatpush1.msra.mxu0 0.0
        %6852 = vmatprep.subr.mxu0 0.0
        %6853 = vmatpush1.msra.mxu0 0.0
        %6854 = vmatprep.subr.mxu0 0.0
        %6855 = vmatpush1.msra.mxu0 0.0
        %6856 = vmatprep.subr.mxu0 0.0
        %6857 = vmatpush1.msra.mxu0 0.0
        %6858 = vmatprep.subr.mxu0 0.0
        %6859 = vmatpush1.msra.mxu0 0.0
        %6860 = vmatprep.subr.mxu0 0.0
        %6861 = vmatpush1.msra.mxu0 0.0
        %6862 = vmatprep.subr.mxu0 0.0
        %6863 = vmatpush1.msra.mxu0 0.0
        %6864 = vmatprep.subr.mxu0 0.0
        %6865 = vmatpush1.msra.mxu0 0.0
        %6866 = vmatprep.subr.mxu0 0.0
        %6867 = vmatpush1.msra.mxu0 0.0
        %6868 = vmatprep.subr.mxu0 0.0
        %6869 = vmatpush1.msra.mxu0 0.0
        %6870 = vmatprep.subr.mxu0 0.0
        %6871 = vmatpush1.msra.mxu0 0.0
        %6872 = vmatprep.subr.mxu0 0.0
        %6873 = vmatpush1.msra.mxu0 0.0
        %6874 = vmatprep.subr.mxu0 0.0
        %6875 = vmatpush1.msra.mxu0 0.0
        %6876 = vmatprep.mubr.f32.mxu0 0.0
        %6877 = vmatmul.mubr.f32.gmra.mrb[0].mxu0 %v6739
        %v6878 = vpop.f32.mrb[0].mxu0
        %v6879 = vadd.f32 0.0, %v6878
        %v6880 = vpop.f32.mrb[0].mxu0
        %v6881 = vadd.f32 0.0, %v6880
        %6882 = vdwg.mxu0
        %v6883 = vadd.f32 %v6714, %v6808
        %v6884 = vadd.f32 %v6715, %v6810
        %v6885 = vadd.f32 %v6716, %v6879
        %v6886 = vadd.f32 %v6717, %v6881
        %s6887 = scalar_lea.vmem %s6, 96
        %v6888 = vld [vmem:[%s6887] sm:$0xff]
        %v6890 = vsel %vm445, %v6888, 0
        %6892 = vmatprep.subr.mxu0 %v4861
        %6893 = vmatpush1.msra.mxu0 %v4860
        %6894 = vmatprep.subr.mxu0 0.0
        %6895 = vmatpush1.msra.mxu0 0.0
        %6896 = vmatprep.subr.mxu0 0.0
        %6897 = vmatpush1.msra.mxu0 0.0
        %6898 = vmatprep.subr.mxu0 0.0
        %6899 = vmatpush1.msra.mxu0 0.0
        %6900 = vmatprep.subr.mxu0 0.0
        %6901 = vmatpush1.msra.mxu0 0.0
        %6902 = vmatprep.subr.mxu0 0.0
        %6903 = vmatpush1.msra.mxu0 0.0
        %6904 = vmatprep.subr.mxu0 0.0
        %6905 = vmatpush1.msra.mxu0 0.0
        %6906 = vmatprep.subr.mxu0 0.0
        %6907 = vmatpush1.msra.mxu0 0.0
        %6908 = vmatprep.subr.mxu0 0.0
        %6909 = vmatpush1.msra.mxu0 0.0
        %6910 = vmatprep.subr.mxu0 0.0
        %6911 = vmatpush1.msra.mxu0 0.0
        %6912 = vmatprep.subr.mxu0 0.0
        %6913 = vmatpush1.msra.mxu0 0.0
        %6914 = vmatprep.subr.mxu0 0.0
        %6915 = vmatpush1.msra.mxu0 0.0
        %6916 = vmatprep.subr.mxu0 0.0
        %6917 = vmatpush1.msra.mxu0 0.0
        %6918 = vmatprep.subr.mxu0 0.0
        %6919 = vmatpush1.msra.mxu0 0.0
        %6920 = vmatprep.subr.mxu0 0.0
        %6921 = vmatpush1.msra.mxu0 0.0
        %6922 = vmatprep.subr.mxu0 0.0
        %6923 = vmatpush1.msra.mxu0 0.0
        %6924 = vmatprep.subr.mxu0 0.0
        %6925 = vmatpush1.msra.mxu0 0.0
        %6926 = vmatprep.subr.mxu0 0.0
        %6927 = vmatpush1.msra.mxu0 0.0
        %6928 = vmatprep.subr.mxu0 0.0
        %6929 = vmatpush1.msra.mxu0 0.0
        %6930 = vmatprep.subr.mxu0 0.0
        %6931 = vmatpush1.msra.mxu0 0.0
        %6932 = vmatprep.subr.mxu0 0.0
        %6933 = vmatpush1.msra.mxu0 0.0
        %6934 = vmatprep.subr.mxu0 0.0
        %6935 = vmatpush1.msra.mxu0 0.0
        %6936 = vmatprep.subr.mxu0 0.0
        %6937 = vmatpush1.msra.mxu0 0.0
        %6938 = vmatprep.subr.mxu0 0.0
        %6939 = vmatpush1.msra.mxu0 0.0
        %6940 = vmatprep.subr.mxu0 0.0
        %6941 = vmatpush1.msra.mxu0 0.0
        %6942 = vmatprep.subr.mxu0 0.0
        %6943 = vmatpush1.msra.mxu0 0.0
        %6944 = vmatprep.subr.mxu0 0.0
        %6945 = vmatpush1.msra.mxu0 0.0
        %6946 = vmatprep.subr.mxu0 0.0
        %6947 = vmatpush1.msra.mxu0 0.0
        %6948 = vmatprep.subr.mxu0 0.0
        %6949 = vmatpush1.msra.mxu0 0.0
        %6950 = vmatprep.subr.mxu0 0.0
        %6951 = vmatpush1.msra.mxu0 0.0
        %6952 = vmatprep.subr.mxu0 0.0
        %6953 = vmatpush1.msra.mxu0 0.0
        %6954 = vmatprep.subr.mxu0 0.0
        %6955 = vmatpush1.msra.mxu0 0.0
        %6956 = vmatprep.mubr.f32.mxu0 0.0
        %6957 = vmatmul.mubr.f32.gmra.mrb[0].mxu0 %v6890
        %v6958 = vpop.f32.mrb[0].mxu0
        %v6959 = vadd.f32 0.0, %v6958
        %v6960 = vpop.f32.mrb[0].mxu0
        %v6961 = vadd.f32 0.0, %v6960
        %6962 = vdwg.mxu0
        %6963 = vmatprep.subr.mxu0 %v4863
        %6964 = vmatpush1.msra.mxu0 %v4862
        %6965 = vmatprep.subr.mxu0 0.0
        %6966 = vmatpush1.msra.mxu0 0.0
        %6967 = vmatprep.subr.mxu0 0.0
        %6968 = vmatpush1.msra.mxu0 0.0
        %6969 = vmatprep.subr.mxu0 0.0
        %6970 = vmatpush1.msra.mxu0 0.0
        %6971 = vmatprep.subr.mxu0 0.0
        %6972 = vmatpush1.msra.mxu0 0.0
        %6973 = vmatprep.subr.mxu0 0.0
        %6974 = vmatpush1.msra.mxu0 0.0
        %6975 = vmatprep.subr.mxu0 0.0
        %6976 = vmatpush1.msra.mxu0 0.0
        %6977 = vmatprep.subr.mxu0 0.0
        %6978 = vmatpush1.msra.mxu0 0.0
        %6979 = vmatprep.subr.mxu0 0.0
        %6980 = vmatpush1.msra.mxu0 0.0
        %6981 = vmatprep.subr.mxu0 0.0
        %6982 = vmatpush1.msra.mxu0 0.0
        %6983 = vmatprep.subr.mxu0 0.0
        %6984 = vmatpush1.msra.mxu0 0.0
        %6985 = vmatprep.subr.mxu0 0.0
        %6986 = vmatpush1.msra.mxu0 0.0
        %6987 = vmatprep.subr.mxu0 0.0
        %6988 = vmatpush1.msra.mxu0 0.0
        %6989 = vmatprep.subr.mxu0 0.0
        %6990 = vmatpush1.msra.mxu0 0.0
        %6991 = vmatprep.subr.mxu0 0.0
        %6992 = vmatpush1.msra.mxu0 0.0
        %6993 = vmatprep.subr.mxu0 0.0
        %6994 = vmatpush1.msra.mxu0 0.0
        %6995 = vmatprep.subr.mxu0 0.0
        %6996 = vmatpush1.msra.mxu0 0.0
        %6997 = vmatprep.subr.mxu0 0.0
        %6998 = vmatpush1.msra.mxu0 0.0
        %6999 = vmatprep.subr.mxu0 0.0
        %7000 = vmatpush1.msra.mxu0 0.0
        %7001 = vmatprep.subr.mxu0 0.0
        %7002 = vmatpush1.msra.mxu0 0.0
        %7003 = vmatprep.subr.mxu0 0.0
        %7004 = vmatpush1.msra.mxu0 0.0
        %7005 = vmatprep.subr.mxu0 0.0
        %7006 = vmatpush1.msra.mxu0 0.0
        %7007 = vmatprep.subr.mxu0 0.0
        %7008 = vmatpush1.msra.mxu0 0.0
        %7009 = vmatprep.subr.mxu0 0.0
        %7010 = vmatpush1.msra.mxu0 0.0
        %7011 = vmatprep.subr.mxu0 0.0
        %7012 = vmatpush1.msra.mxu0 0.0
        %7013 = vmatprep.subr.mxu0 0.0
        %7014 = vmatpush1.msra.mxu0 0.0
        %7015 = vmatprep.subr.mxu0 0.0
        %7016 = vmatpush1.msra.mxu0 0.0
        %7017 = vmatprep.subr.mxu0 0.0
        %7018 = vmatpush1.msra.mxu0 0.0
        %7019 = vmatprep.subr.mxu0 0.0
        %7020 = vmatpush1.msra.mxu0 0.0
        %7021 = vmatprep.subr.mxu0 0.0
        %7022 = vmatpush1.msra.mxu0 0.0
        %7023 = vmatprep.subr.mxu0 0.0
        %7024 = vmatpush1.msra.mxu0 0.0
        %7025 = vmatprep.subr.mxu0 0.0
        %7026 = vmatpush1.msra.mxu0 0.0
        %7027 = vmatprep.mubr.f32.mxu0 0.0
        %7028 = vmatmul.mubr.f32.gmra.mrb[0].mxu0 %v6890
        %v7029 = vpop.f32.mrb[0].mxu0
        %v7030 = vadd.f32 0.0, %v7029
        %v7031 = vpop.f32.mrb[0].mxu0
        %v7032 = vadd.f32 0.0, %v7031
        %7033 = vdwg.mxu0
        %v7034 = vadd.f32 %v6883, %v6959
        %v7035 = vadd.f32 %v6884, %v6961
        %v7036 = vadd.f32 %v6885, %v7030
        %v7037 = vadd.f32 %v6886, %v7032
        %s7038 = scalar_lea.vmem %s6, 104
        %v7039 = vld [vmem:[%s7038] sm:$0xff]
        %v7040 = vld [vmem:[#allocation2 + $0x8] sm:$0xff]
        %v7041 = vld [vmem:[#allocation2 + $0x10] sm:$0xff]
        %v7042 = vld [vmem:[#allocation2 + $0x18] sm:$0xff]
        %v7043 = vld [vmem:[#allocation2 + $0x20] sm:$0xff]
        %v7044 = vld [vmem:[#allocation2 + $0x28] sm:$0xff]
        %7050 = vrot.lane.b32.xlu0 %v7040, 127
        %v7051 = vpop.permute.xlu0 %7050
        %7052 = vrot.lane.b32.xlu0 %v7041, 127
        %v7053 = vpop.permute.xlu0 %7052
        %7054 = vrot.lane.b32.xlu0 %v7042, 127
        %v7055 = vpop.permute.xlu0 %7054
        %7056 = vrot.lane.b32.xlu0 %v7043, 127
        %v7057 = vpop.permute.xlu0 %7056
        %7058 = vrot.lane.b32.xlu0 %v7044, 127
        %v7059 = vpop.permute.xlu0 %7058
        %v7060 = vsel %vm2628, %v7051, %v7053
        %v7061 = vsel %vm2628, %v7053, %v7055
        %v7062 = vsel %vm2628, %v7055, %v7057
        %v7063 = vsel %vm2628, %v7057, %v7059
        %v7069 = vsel %vm445, %v7039, 0
        %7071 = vmatprep.subr.mxu0 %v7061
        %7072 = vmatpush1.msra.mxu0 %v7060
        %7073 = vmatprep.subr.mxu0 0.0
        %7074 = vmatpush1.msra.mxu0 0.0
        %7075 = vmatprep.subr.mxu0 0.0
        %7076 = vmatpush1.msra.mxu0 0.0
        %7077 = vmatprep.subr.mxu0 0.0
        %7078 = vmatpush1.msra.mxu0 0.0
        %7079 = vmatprep.subr.mxu0 0.0
        %7080 = vmatpush1.msra.mxu0 0.0
        %7081 = vmatprep.subr.mxu0 0.0
        %7082 = vmatpush1.msra.mxu0 0.0
        %7083 = vmatprep.subr.mxu0 0.0
        %7084 = vmatpush1.msra.mxu0 0.0
        %7085 = vmatprep.subr.mxu0 0.0
        %7086 = vmatpush1.msra.mxu0 0.0
        %7087 = vmatprep.subr.mxu0 0.0
        %7088 = vmatpush1.msra.mxu0 0.0
        %7089 = vmatprep.subr.mxu0 0.0
        %7090 = vmatpush1.msra.mxu0 0.0
        %7091 = vmatprep.subr.mxu0 0.0
        %7092 = vmatpush1.msra.mxu0 0.0
        %7093 = vmatprep.subr.mxu0 0.0
        %7094 = vmatpush1.msra.mxu0 0.0
        %7095 = vmatprep.subr.mxu0 0.0
        %7096 = vmatpush1.msra.mxu0 0.0
        %7097 = vmatprep.subr.mxu0 0.0
        %7098 = vmatpush1.msra.mxu0 0.0
        %7099 = vmatprep.subr.mxu0 0.0
        %7100 = vmatpush1.msra.mxu0 0.0
        %7101 = vmatprep.subr.mxu0 0.0
        %7102 = vmatpush1.msra.mxu0 0.0
        %7103 = vmatprep.subr.mxu0 0.0
        %7104 = vmatpush1.msra.mxu0 0.0
        %7105 = vmatprep.subr.mxu0 0.0
        %7106 = vmatpush1.msra.mxu0 0.0
        %7107 = vmatprep.subr.mxu0 0.0
        %7108 = vmatpush1.msra.mxu0 0.0
        %7109 = vmatprep.subr.mxu0 0.0
        %7110 = vmatpush1.msra.mxu0 0.0
        %7111 = vmatprep.subr.mxu0 0.0
        %7112 = vmatpush1.msra.mxu0 0.0
        %7113 = vmatprep.subr.mxu0 0.0
        %7114 = vmatpush1.msra.mxu0 0.0
        %7115 = vmatprep.subr.mxu0 0.0
        %7116 = vmatpush1.msra.mxu0 0.0
        %7117 = vmatprep.subr.mxu0 0.0
        %7118 = vmatpush1.msra.mxu0 0.0
        %7119 = vmatprep.subr.mxu0 0.0
        %7120 = vmatpush1.msra.mxu0 0.0
        %7121 = vmatprep.subr.mxu0 0.0
        %7122 = vmatpush1.msra.mxu0 0.0
        %7123 = vmatprep.subr.mxu0 0.0
        %7124 = vmatpush1.msra.mxu0 0.0
        %7125 = vmatprep.subr.mxu0 0.0
        %7126 = vmatpush1.msra.mxu0 0.0
        %7127 = vmatprep.subr.mxu0 0.0
        %7128 = vmatpush1.msra.mxu0 0.0
        %7129 = vmatprep.subr.mxu0 0.0
        %7130 = vmatpush1.msra.mxu0 0.0
        %7131 = vmatprep.subr.mxu0 0.0
        %7132 = vmatpush1.msra.mxu0 0.0
        %7133 = vmatprep.subr.mxu0 0.0
        %7134 = vmatpush1.msra.mxu0 0.0
        %7135 = vmatprep.mubr.f32.mxu0 0.0
        %7136 = vmatmul.mubr.f32.gmra.mrb[0].mxu0 %v7069
        %v7137 = vpop.f32.mrb[0].mxu0
        %v7138 = vadd.f32 0.0, %v7137
        %v7139 = vpop.f32.mrb[0].mxu0
        %v7140 = vadd.f32 0.0, %v7139
        %7141 = vdwg.mxu0
        %7142 = vmatprep.subr.mxu0 %v7063
        %7143 = vmatpush1.msra.mxu0 %v7062
        %7144 = vmatprep.subr.mxu0 0.0
        %7145 = vmatpush1.msra.mxu0 0.0
        %7146 = vmatprep.subr.mxu0 0.0
        %7147 = vmatpush1.msra.mxu0 0.0
        %7148 = vmatprep.subr.mxu0 0.0
        %7149 = vmatpush1.msra.mxu0 0.0
        %7150 = vmatprep.subr.mxu0 0.0
        %7151 = vmatpush1.msra.mxu0 0.0
        %7152 = vmatprep.subr.mxu0 0.0
        %7153 = vmatpush1.msra.mxu0 0.0
        %7154 = vmatprep.subr.mxu0 0.0
        %7155 = vmatpush1.msra.mxu0 0.0
        %7156 = vmatprep.subr.mxu0 0.0
        %7157 = vmatpush1.msra.mxu0 0.0
        %7158 = vmatprep.subr.mxu0 0.0
        %7159 = vmatpush1.msra.mxu0 0.0
        %7160 = vmatprep.subr.mxu0 0.0
        %7161 = vmatpush1.msra.mxu0 0.0
        %7162 = vmatprep.subr.mxu0 0.0
        %7163 = vmatpush1.msra.mxu0 0.0
        %7164 = vmatprep.subr.mxu0 0.0
        %7165 = vmatpush1.msra.mxu0 0.0
        %7166 = vmatprep.subr.mxu0 0.0
        %7167 = vmatpush1.msra.mxu0 0.0
        %7168 = vmatprep.subr.mxu0 0.0
        %7169 = vmatpush1.msra.mxu0 0.0
        %7170 = vmatprep.subr.mxu0 0.0
        %7171 = vmatpush1.msra.mxu0 0.0
        %7172 = vmatprep.subr.mxu0 0.0
        %7173 = vmatpush1.msra.mxu0 0.0
        %7174 = vmatprep.subr.mxu0 0.0
        %7175 = vmatpush1.msra.mxu0 0.0
        %7176 = vmatprep.subr.mxu0 0.0
        %7177 = vmatpush1.msra.mxu0 0.0
        %7178 = vmatprep.subr.mxu0 0.0
        %7179 = vmatpush1.msra.mxu0 0.0
        %7180 = vmatprep.subr.mxu0 0.0
        %7181 = vmatpush1.msra.mxu0 0.0
        %7182 = vmatprep.subr.mxu0 0.0
        %7183 = vmatpush1.msra.mxu0 0.0
        %7184 = vmatprep.subr.mxu0 0.0
        %7185 = vmatpush1.msra.mxu0 0.0
        %7186 = vmatprep.subr.mxu0 0.0
        %7187 = vmatpush1.msra.mxu0 0.0
        %7188 = vmatprep.subr.mxu0 0.0
        %7189 = vmatpush1.msra.mxu0 0.0
        %7190 = vmatprep.subr.mxu0 0.0
        %7191 = vmatpush1.msra.mxu0 0.0
        %7192 = vmatprep.subr.mxu0 0.0
        %7193 = vmatpush1.msra.mxu0 0.0
        %7194 = vmatprep.subr.mxu0 0.0
        %7195 = vmatpush1.msra.mxu0 0.0
        %7196 = vmatprep.subr.mxu0 0.0
        %7197 = vmatpush1.msra.mxu0 0.0
        %7198 = vmatprep.subr.mxu0 0.0
        %7199 = vmatpush1.msra.mxu0 0.0
        %7200 = vmatprep.subr.mxu0 0.0
        %7201 = vmatpush1.msra.mxu0 0.0
        %7202 = vmatprep.subr.mxu0 0.0
        %7203 = vmatpush1.msra.mxu0 0.0
        %7204 = vmatprep.subr.mxu0 0.0
        %7205 = vmatpush1.msra.mxu0 0.0
        %7206 = vmatprep.mubr.f32.mxu0 0.0
        %7207 = vmatmul.mubr.f32.gmra.mrb[0].mxu0 %v7069
        %v7208 = vpop.f32.mrb[0].mxu0
        %v7209 = vadd.f32 0.0, %v7208
        %v7210 = vpop.f32.mrb[0].mxu0
        %v7211 = vadd.f32 0.0, %v7210
        %7212 = vdwg.mxu0
        %v7213 = vadd.f32 %v7034, %v7138
        %v7214 = vadd.f32 %v7035, %v7140
        %v7215 = vadd.f32 %v7036, %v7209
        %v7216 = vadd.f32 %v7037, %v7211
        %s7217 = scalar_lea.vmem %s6, 112
        %v7218 = vld [vmem:[%s7217] sm:$0xff]
        %7219 = vrot.lane.b32.xlu0 %v7040, 126
        %v7220 = vpop.permute.xlu0 %7219
        %7221 = vrot.lane.b32.xlu0 %v7041, 126
        %v7222 = vpop.permute.xlu0 %7221
        %7223 = vrot.lane.b32.xlu0 %v7042, 126
        %v7224 = vpop.permute.xlu0 %7223
        %7225 = vrot.lane.b32.xlu0 %v7043, 126
        %v7226 = vpop.permute.xlu0 %7225
        %7227 = vrot.lane.b32.xlu0 %v7044, 126
        %v7228 = vpop.permute.xlu0 %7227
        %v7229 = vsel %vm2798, %v7220, %v7222
        %v7230 = vsel %vm2798, %v7222, %v7224
        %v7231 = vsel %vm2798, %v7224, %v7226
        %v7232 = vsel %vm2798, %v7226, %v7228
        %v7238 = vsel %vm445, %v7218, 0
        %7240 = vmatprep.subr.mxu0 %v7230
        %7241 = vmatpush1.msra.mxu0 %v7229
        %7242 = vmatprep.subr.mxu0 0.0
        %7243 = vmatpush1.msra.mxu0 0.0
        %7244 = vmatprep.subr.mxu0 0.0
        %7245 = vmatpush1.msra.mxu0 0.0
        %7246 = vmatprep.subr.mxu0 0.0
        %7247 = vmatpush1.msra.mxu0 0.0
        %7248 = vmatprep.subr.mxu0 0.0
        %7249 = vmatpush1.msra.mxu0 0.0
        %7250 = vmatprep.subr.mxu0 0.0
        %7251 = vmatpush1.msra.mxu0 0.0
        %7252 = vmatprep.subr.mxu0 0.0
        %7253 = vmatpush1.msra.mxu0 0.0
        %7254 = vmatprep.subr.mxu0 0.0
        %7255 = vmatpush1.msra.mxu0 0.0
        %7256 = vmatprep.subr.mxu0 0.0
        %7257 = vmatpush1.msra.mxu0 0.0
        %7258 = vmatprep.subr.mxu0 0.0
        %7259 = vmatpush1.msra.mxu0 0.0
        %7260 = vmatprep.subr.mxu0 0.0
        %7261 = vmatpush1.msra.mxu0 0.0
        %7262 = vmatprep.subr.mxu0 0.0
        %7263 = vmatpush1.msra.mxu0 0.0
        %7264 = vmatprep.subr.mxu0 0.0
        %7265 = vmatpush1.msra.mxu0 0.0
        %7266 = vmatprep.subr.mxu0 0.0
        %7267 = vmatpush1.msra.mxu0 0.0
        %7268 = vmatprep.subr.mxu0 0.0
        %7269 = vmatpush1.msra.mxu0 0.0
        %7270 = vmatprep.subr.mxu0 0.0
        %7271 = vmatpush1.msra.mxu0 0.0
        %7272 = vmatprep.subr.mxu0 0.0
        %7273 = vmatpush1.msra.mxu0 0.0
        %7274 = vmatprep.subr.mxu0 0.0
        %7275 = vmatpush1.msra.mxu0 0.0
        %7276 = vmatprep.subr.mxu0 0.0
        %7277 = vmatpush1.msra.mxu0 0.0
        %7278 = vmatprep.subr.mxu0 0.0
        %7279 = vmatpush1.msra.mxu0 0.0
        %7280 = vmatprep.subr.mxu0 0.0
        %7281 = vmatpush1.msra.mxu0 0.0
        %7282 = vmatprep.subr.mxu0 0.0
        %7283 = vmatpush1.msra.mxu0 0.0
        %7284 = vmatprep.subr.mxu0 0.0
        %7285 = vmatpush1.msra.mxu0 0.0
        %7286 = vmatprep.subr.mxu0 0.0
        %7287 = vmatpush1.msra.mxu0 0.0
        %7288 = vmatprep.subr.mxu0 0.0
        %7289 = vmatpush1.msra.mxu0 0.0
        %7290 = vmatprep.subr.mxu0 0.0
        %7291 = vmatpush1.msra.mxu0 0.0
        %7292 = vmatprep.subr.mxu0 0.0
        %7293 = vmatpush1.msra.mxu0 0.0
        %7294 = vmatprep.subr.mxu0 0.0
        %7295 = vmatpush1.msra.mxu0 0.0
        %7296 = vmatprep.subr.mxu0 0.0
        %7297 = vmatpush1.msra.mxu0 0.0
        %7298 = vmatprep.subr.mxu0 0.0
        %7299 = vmatpush1.msra.mxu0 0.0
        %7300 = vmatprep.subr.mxu0 0.0
        %7301 = vmatpush1.msra.mxu0 0.0
        %7302 = vmatprep.subr.mxu0 0.0
        %7303 = vmatpush1.msra.mxu0 0.0
        %7304 = vmatprep.mubr.f32.mxu0 0.0
        %7305 = vmatmul.mubr.f32.gmra.mrb[0].mxu0 %v7238
        %v7306 = vpop.f32.mrb[0].mxu0
        %v7307 = vadd.f32 0.0, %v7306
        %v7308 = vpop.f32.mrb[0].mxu0
        %v7309 = vadd.f32 0.0, %v7308
        %7310 = vdwg.mxu0
        %7311 = vmatprep.subr.mxu0 %v7232
        %7312 = vmatpush1.msra.mxu0 %v7231
        %7313 = vmatprep.subr.mxu0 0.0
        %7314 = vmatpush1.msra.mxu0 0.0
        %7315 = vmatprep.subr.mxu0 0.0
        %7316 = vmatpush1.msra.mxu0 0.0
        %7317 = vmatprep.subr.mxu0 0.0
        %7318 = vmatpush1.msra.mxu0 0.0
        %7319 = vmatprep.subr.mxu0 0.0
        %7320 = vmatpush1.msra.mxu0 0.0
        %7321 = vmatprep.subr.mxu0 0.0
        %7322 = vmatpush1.msra.mxu0 0.0
        %7323 = vmatprep.subr.mxu0 0.0
        %7324 = vmatpush1.msra.mxu0 0.0
        %7325 = vmatprep.subr.mxu0 0.0
        %7326 = vmatpush1.msra.mxu0 0.0
        %7327 = vmatprep.subr.mxu0 0.0
        %7328 = vmatpush1.msra.mxu0 0.0
        %7329 = vmatprep.subr.mxu0 0.0
        %7330 = vmatpush1.msra.mxu0 0.0
        %7331 = vmatprep.subr.mxu0 0.0
        %7332 = vmatpush1.msra.mxu0 0.0
        %7333 = vmatprep.subr.mxu0 0.0
        %7334 = vmatpush1.msra.mxu0 0.0
        %7335 = vmatprep.subr.mxu0 0.0
        %7336 = vmatpush1.msra.mxu0 0.0
        %7337 = vmatprep.subr.mxu0 0.0
        %7338 = vmatpush1.msra.mxu0 0.0
        %7339 = vmatprep.subr.mxu0 0.0
        %7340 = vmatpush1.msra.mxu0 0.0
        %7341 = vmatprep.subr.mxu0 0.0
        %7342 = vmatpush1.msra.mxu0 0.0
        %7343 = vmatprep.subr.mxu0 0.0
        %7344 = vmatpush1.msra.mxu0 0.0
        %7345 = vmatprep.subr.mxu0 0.0
        %7346 = vmatpush1.msra.mxu0 0.0
        %7347 = vmatprep.subr.mxu0 0.0
        %7348 = vmatpush1.msra.mxu0 0.0
        %7349 = vmatprep.subr.mxu0 0.0
        %7350 = vmatpush1.msra.mxu0 0.0
        %7351 = vmatprep.subr.mxu0 0.0
        %7352 = vmatpush1.msra.mxu0 0.0
        %7353 = vmatprep.subr.mxu0 0.0
        %7354 = vmatpush1.msra.mxu0 0.0
        %7355 = vmatprep.subr.mxu0 0.0
        %7356 = vmatpush1.msra.mxu0 0.0
        %7357 = vmatprep.subr.mxu0 0.0
        %7358 = vmatpush1.msra.mxu0 0.0
        %7359 = vmatprep.subr.mxu0 0.0
        %7360 = vmatpush1.msra.mxu0 0.0
        %7361 = vmatprep.subr.mxu0 0.0
        %7362 = vmatpush1.msra.mxu0 0.0
        %7363 = vmatprep.subr.mxu0 0.0
        %7364 = vmatpush1.msra.mxu0 0.0
        %7365 = vmatprep.subr.mxu0 0.0
        %7366 = vmatpush1.msra.mxu0 0.0
        %7367 = vmatprep.subr.mxu0 0.0
        %7368 = vmatpush1.msra.mxu0 0.0
        %7369 = vmatprep.subr.mxu0 0.0
        %7370 = vmatpush1.msra.mxu0 0.0
        %7371 = vmatprep.subr.mxu0 0.0
        %7372 = vmatpush1.msra.mxu0 0.0
        %7373 = vmatprep.subr.mxu0 0.0
        %7374 = vmatpush1.msra.mxu0 0.0
        %7375 = vmatprep.mubr.f32.mxu0 0.0
        %7376 = vmatmul.mubr.f32.gmra.mrb[0].mxu0 %v7238
        %v7377 = vpop.f32.mrb[0].mxu0
        %v7378 = vadd.f32 0.0, %v7377
        %v7379 = vpop.f32.mrb[0].mxu0
        %v7380 = vadd.f32 0.0, %v7379
        %7381 = vdwg.mxu0
        %v7382 = vadd.f32 %v7213, %v7307
        %v7383 = vadd.f32 %v7214, %v7309
        %v7384 = vadd.f32 %v7215, %v7378
        %v7385 = vadd.f32 %v7216, %v7380
        %s7386 = scalar_lea.vmem %s6, 120
        %v7387 = vld [vmem:[%s7386] sm:$0xff]
        %7388 = vrot.lane.b32.xlu0 %v7040, 110
        %v7389 = vpop.permute.xlu0 %7388
        %7390 = vrot.lane.b32.xlu0 %v7041, 110
        %v7391 = vpop.permute.xlu0 %7390
        %7392 = vrot.lane.b32.xlu0 %v7042, 110
        %v7393 = vpop.permute.xlu0 %7392
        %7394 = vrot.lane.b32.xlu0 %v7043, 110
        %v7395 = vpop.permute.xlu0 %7394
        %7396 = vrot.lane.b32.xlu0 %v7044, 110
        %v7397 = vpop.permute.xlu0 %7396
        %v7398 = vsel %vm2968, %v7389, %v7391
        %v7399 = vsel %vm2968, %v7391, %v7393
        %v7400 = vsel %vm2968, %v7393, %v7395
        %v7401 = vsel %vm2968, %v7395, %v7397
        %v7407 = vsel %vm445, %v7387, 0
        %7409 = vmatprep.subr.mxu0 %v7399
        %7410 = vmatpush1.msra.mxu0 %v7398
        %7411 = vmatprep.subr.mxu0 0.0
        %7412 = vmatpush1.msra.mxu0 0.0
        %7413 = vmatprep.subr.mxu0 0.0
        %7414 = vmatpush1.msra.mxu0 0.0
        %7415 = vmatprep.subr.mxu0 0.0
        %7416 = vmatpush1.msra.mxu0 0.0
        %7417 = vmatprep.subr.mxu0 0.0
        %7418 = vmatpush1.msra.mxu0 0.0
        %7419 = vmatprep.subr.mxu0 0.0
        %7420 = vmatpush1.msra.mxu0 0.0
        %7421 = vmatprep.subr.mxu0 0.0
        %7422 = vmatpush1.msra.mxu0 0.0
        %7423 = vmatprep.subr.mxu0 0.0
        %7424 = vmatpush1.msra.mxu0 0.0
        %7425 = vmatprep.subr.mxu0 0.0
        %7426 = vmatpush1.msra.mxu0 0.0
        %7427 = vmatprep.subr.mxu0 0.0
        %7428 = vmatpush1.msra.mxu0 0.0
        %7429 = vmatprep.subr.mxu0 0.0
        %7430 = vmatpush1.msra.mxu0 0.0
        %7431 = vmatprep.subr.mxu0 0.0
        %7432 = vmatpush1.msra.mxu0 0.0
        %7433 = vmatprep.subr.mxu0 0.0
        %7434 = vmatpush1.msra.mxu0 0.0
        %7435 = vmatprep.subr.mxu0 0.0
        %7436 = vmatpush1.msra.mxu0 0.0
        %7437 = vmatprep.subr.mxu0 0.0
        %7438 = vmatpush1.msra.mxu0 0.0
        %7439 = vmatprep.subr.mxu0 0.0
        %7440 = vmatpush1.msra.mxu0 0.0
        %7441 = vmatprep.subr.mxu0 0.0
        %7442 = vmatpush1.msra.mxu0 0.0
        %7443 = vmatprep.subr.mxu0 0.0
        %7444 = vmatpush1.msra.mxu0 0.0
        %7445 = vmatprep.subr.mxu0 0.0
        %7446 = vmatpush1.msra.mxu0 0.0
        %7447 = vmatprep.subr.mxu0 0.0
        %7448 = vmatpush1.msra.mxu0 0.0
        %7449 = vmatprep.subr.mxu0 0.0
        %7450 = vmatpush1.msra.mxu0 0.0
        %7451 = vmatprep.subr.mxu0 0.0
        %7452 = vmatpush1.msra.mxu0 0.0
        %7453 = vmatprep.subr.mxu0 0.0
        %7454 = vmatpush1.msra.mxu0 0.0
        %7455 = vmatprep.subr.mxu0 0.0
        %7456 = vmatpush1.msra.mxu0 0.0
        %7457 = vmatprep.subr.mxu0 0.0
        %7458 = vmatpush1.msra.mxu0 0.0
        %7459 = vmatprep.subr.mxu0 0.0
        %7460 = vmatpush1.msra.mxu0 0.0
        %7461 = vmatprep.subr.mxu0 0.0
        %7462 = vmatpush1.msra.mxu0 0.0
        %7463 = vmatprep.subr.mxu0 0.0
        %7464 = vmatpush1.msra.mxu0 0.0
        %7465 = vmatprep.subr.mxu0 0.0
        %7466 = vmatpush1.msra.mxu0 0.0
        %7467 = vmatprep.subr.mxu0 0.0
        %7468 = vmatpush1.msra.mxu0 0.0
        %7469 = vmatprep.subr.mxu0 0.0
        %7470 = vmatpush1.msra.mxu0 0.0
        %7471 = vmatprep.subr.mxu0 0.0
        %7472 = vmatpush1.msra.mxu0 0.0
        %7473 = vmatprep.mubr.f32.mxu0 0.0
        %7474 = vmatmul.mubr.f32.gmra.mrb[0].mxu0 %v7407
        %v7475 = vpop.f32.mrb[0].mxu0
        %v7476 = vadd.f32 0.0, %v7475
        %v7477 = vpop.f32.mrb[0].mxu0
        %v7478 = vadd.f32 0.0, %v7477
        %7479 = vdwg.mxu0
        %7480 = vmatprep.subr.mxu0 %v7401
        %7481 = vmatpush1.msra.mxu0 %v7400
        %7482 = vmatprep.subr.mxu0 0.0
        %7483 = vmatpush1.msra.mxu0 0.0
        %7484 = vmatprep.subr.mxu0 0.0
        %7485 = vmatpush1.msra.mxu0 0.0
        %7486 = vmatprep.subr.mxu0 0.0
        %7487 = vmatpush1.msra.mxu0 0.0
        %7488 = vmatprep.subr.mxu0 0.0
        %7489 = vmatpush1.msra.mxu0 0.0
        %7490 = vmatprep.subr.mxu0 0.0
        %7491 = vmatpush1.msra.mxu0 0.0
        %7492 = vmatprep.subr.mxu0 0.0
        %7493 = vmatpush1.msra.mxu0 0.0
        %7494 = vmatprep.subr.mxu0 0.0
        %7495 = vmatpush1.msra.mxu0 0.0
        %7496 = vmatprep.subr.mxu0 0.0
        %7497 = vmatpush1.msra.mxu0 0.0
        %7498 = vmatprep.subr.mxu0 0.0
        %7499 = vmatpush1.msra.mxu0 0.0
        %7500 = vmatprep.subr.mxu0 0.0
        %7501 = vmatpush1.msra.mxu0 0.0
        %7502 = vmatprep.subr.mxu0 0.0
        %7503 = vmatpush1.msra.mxu0 0.0
        %7504 = vmatprep.subr.mxu0 0.0
        %7505 = vmatpush1.msra.mxu0 0.0
        %7506 = vmatprep.subr.mxu0 0.0
        %7507 = vmatpush1.msra.mxu0 0.0
        %7508 = vmatprep.subr.mxu0 0.0
        %7509 = vmatpush1.msra.mxu0 0.0
        %7510 = vmatprep.subr.mxu0 0.0
        %7511 = vmatpush1.msra.mxu0 0.0
        %7512 = vmatprep.subr.mxu0 0.0
        %7513 = vmatpush1.msra.mxu0 0.0
        %7514 = vmatprep.subr.mxu0 0.0
        %7515 = vmatpush1.msra.mxu0 0.0
        %7516 = vmatprep.subr.mxu0 0.0
        %7517 = vmatpush1.msra.mxu0 0.0
        %7518 = vmatprep.subr.mxu0 0.0
        %7519 = vmatpush1.msra.mxu0 0.0
        %7520 = vmatprep.subr.mxu0 0.0
        %7521 = vmatpush1.msra.mxu0 0.0
        %7522 = vmatprep.subr.mxu0 0.0
        %7523 = vmatpush1.msra.mxu0 0.0
        %7524 = vmatprep.subr.mxu0 0.0
        %7525 = vmatpush1.msra.mxu0 0.0
        %7526 = vmatprep.subr.mxu0 0.0
        %7527 = vmatpush1.msra.mxu0 0.0
        %7528 = vmatprep.subr.mxu0 0.0
        %7529 = vmatpush1.msra.mxu0 0.0
        %7530 = vmatprep.subr.mxu0 0.0
        %7531 = vmatpush1.msra.mxu0 0.0
        %7532 = vmatprep.subr.mxu0 0.0
        %7533 = vmatpush1.msra.mxu0 0.0
        %7534 = vmatprep.subr.mxu0 0.0
        %7535 = vmatpush1.msra.mxu0 0.0
        %7536 = vmatprep.subr.mxu0 0.0
        %7537 = vmatpush1.msra.mxu0 0.0
        %7538 = vmatprep.subr.mxu0 0.0
        %7539 = vmatpush1.msra.mxu0 0.0
        %7540 = vmatprep.subr.mxu0 0.0
        %7541 = vmatpush1.msra.mxu0 0.0
        %7542 = vmatprep.subr.mxu0 0.0
        %7543 = vmatpush1.msra.mxu0 0.0
        %7544 = vmatprep.mubr.f32.mxu0 0.0
        %7545 = vmatmul.mubr.f32.gmra.mrb[0].mxu0 %v7407
        %v7546 = vpop.f32.mrb[0].mxu0
        %v7547 = vadd.f32 0.0, %v7546
        %v7548 = vpop.f32.mrb[0].mxu0
        %v7549 = vadd.f32 0.0, %v7548
        %7550 = vdwg.mxu0
        %v7551 = vadd.f32 %v7382, %v7476
        %v7552 = vadd.f32 %v7383, %v7478
        %v7553 = vadd.f32 %v7384, %v7547
        %v7554 = vadd.f32 %v7385, %v7549
        %s7555 = scalar_lea.vmem %s6, 128
        %v7556 = vld [vmem:[%s7555] sm:$0xff]
        %7557 = vrot.lane.b32.xlu0 %v7040, 109
        %v7558 = vpop.permute.xlu0 %7557
        %7559 = vrot.lane.b32.xlu0 %v7041, 109
        %v7560 = vpop.permute.xlu0 %7559
        %7561 = vrot.lane.b32.xlu0 %v7042, 109
        %v7562 = vpop.permute.xlu0 %7561
        %7563 = vrot.lane.b32.xlu0 %v7043, 109
        %v7564 = vpop.permute.xlu0 %7563
        %7565 = vrot.lane.b32.xlu0 %v7044, 109
        %v7566 = vpop.permute.xlu0 %7565
        %v7567 = vsel %vm3138, %v7558, %v7560
        %v7568 = vsel %vm3138, %v7560, %v7562
        %v7569 = vsel %vm3138, %v7562, %v7564
        %v7570 = vsel %vm3138, %v7564, %v7566
        %v7576 = vsel %vm445, %v7556, 0
        %7578 = vmatprep.subr.mxu0 %v7568
        %7579 = vmatpush1.msra.mxu0 %v7567
        %7580 = vmatprep.subr.mxu0 0.0
        %7581 = vmatpush1.msra.mxu0 0.0
        %7582 = vmatprep.subr.mxu0 0.0
        %7583 = vmatpush1.msra.mxu0 0.0
        %7584 = vmatprep.subr.mxu0 0.0
        %7585 = vmatpush1.msra.mxu0 0.0
        %7586 = vmatprep.subr.mxu0 0.0
        %7587 = vmatpush1.msra.mxu0 0.0
        %7588 = vmatprep.subr.mxu0 0.0
        %7589 = vmatpush1.msra.mxu0 0.0
        %7590 = vmatprep.subr.mxu0 0.0
        %7591 = vmatpush1.msra.mxu0 0.0
        %7592 = vmatprep.subr.mxu0 0.0
        %7593 = vmatpush1.msra.mxu0 0.0
        %7594 = vmatprep.subr.mxu0 0.0
        %7595 = vmatpush1.msra.mxu0 0.0
        %7596 = vmatprep.subr.mxu0 0.0
        %7597 = vmatpush1.msra.mxu0 0.0
        %7598 = vmatprep.subr.mxu0 0.0
        %7599 = vmatpush1.msra.mxu0 0.0
        %7600 = vmatprep.subr.mxu0 0.0
        %7601 = vmatpush1.msra.mxu0 0.0
        %7602 = vmatprep.subr.mxu0 0.0
        %7603 = vmatpush1.msra.mxu0 0.0
        %7604 = vmatprep.subr.mxu0 0.0
        %7605 = vmatpush1.msra.mxu0 0.0
        %7606 = vmatprep.subr.mxu0 0.0
        %7607 = vmatpush1.msra.mxu0 0.0
        %7608 = vmatprep.subr.mxu0 0.0
        %7609 = vmatpush1.msra.mxu0 0.0
        %7610 = vmatprep.subr.mxu0 0.0
        %7611 = vmatpush1.msra.mxu0 0.0
        %7612 = vmatprep.subr.mxu0 0.0
        %7613 = vmatpush1.msra.mxu0 0.0
        %7614 = vmatprep.subr.mxu0 0.0
        %7615 = vmatpush1.msra.mxu0 0.0
        %7616 = vmatprep.subr.mxu0 0.0
        %7617 = vmatpush1.msra.mxu0 0.0
        %7618 = vmatprep.subr.mxu0 0.0
        %7619 = vmatpush1.msra.mxu0 0.0
        %7620 = vmatprep.subr.mxu0 0.0
        %7621 = vmatpush1.msra.mxu0 0.0
        %7622 = vmatprep.subr.mxu0 0.0
        %7623 = vmatpush1.msra.mxu0 0.0
        %7624 = vmatprep.subr.mxu0 0.0
        %7625 = vmatpush1.msra.mxu0 0.0
        %7626 = vmatprep.subr.mxu0 0.0
        %7627 = vmatpush1.msra.mxu0 0.0
        %7628 = vmatprep.subr.mxu0 0.0
        %7629 = vmatpush1.msra.mxu0 0.0
        %7630 = vmatprep.subr.mxu0 0.0
        %7631 = vmatpush1.msra.mxu0 0.0
        %7632 = vmatprep.subr.mxu0 0.0
        %7633 = vmatpush1.msra.mxu0 0.0
        %7634 = vmatprep.subr.mxu0 0.0
        %7635 = vmatpush1.msra.mxu0 0.0
        %7636 = vmatprep.subr.mxu0 0.0
        %7637 = vmatpush1.msra.mxu0 0.0
        %7638 = vmatprep.subr.mxu0 0.0
        %7639 = vmatpush1.msra.mxu0 0.0
        %7640 = vmatprep.subr.mxu0 0.0
        %7641 = vmatpush1.msra.mxu0 0.0
        %7642 = vmatprep.mubr.f32.mxu0 0.0
        %7643 = vmatmul.mubr.f32.gmra.mrb[0].mxu0 %v7576
        %v7644 = vpop.f32.mrb[0].mxu0
        %v7645 = vadd.f32 0.0, %v7644
        %v7646 = vpop.f32.mrb[0].mxu0
        %v7647 = vadd.f32 0.0, %v7646
        %7648 = vdwg.mxu0
        %7649 = vmatprep.subr.mxu0 %v7570
        %7650 = vmatpush1.msra.mxu0 %v7569
        %7651 = vmatprep.subr.mxu0 0.0
        %7652 = vmatpush1.msra.mxu0 0.0
        %7653 = vmatprep.subr.mxu0 0.0
        %7654 = vmatpush1.msra.mxu0 0.0
        %7655 = vmatprep.subr.mxu0 0.0
        %7656 = vmatpush1.msra.mxu0 0.0
        %7657 = vmatprep.subr.mxu0 0.0
        %7658 = vmatpush1.msra.mxu0 0.0
        %7659 = vmatprep.subr.mxu0 0.0
        %7660 = vmatpush1.msra.mxu0 0.0
        %7661 = vmatprep.subr.mxu0 0.0
        %7662 = vmatpush1.msra.mxu0 0.0
        %7663 = vmatprep.subr.mxu0 0.0
        %7664 = vmatpush1.msra.mxu0 0.0
        %7665 = vmatprep.subr.mxu0 0.0
        %7666 = vmatpush1.msra.mxu0 0.0
        %7667 = vmatprep.subr.mxu0 0.0
        %7668 = vmatpush1.msra.mxu0 0.0
        %7669 = vmatprep.subr.mxu0 0.0
        %7670 = vmatpush1.msra.mxu0 0.0
        %7671 = vmatprep.subr.mxu0 0.0
        %7672 = vmatpush1.msra.mxu0 0.0
        %7673 = vmatprep.subr.mxu0 0.0
        %7674 = vmatpush1.msra.mxu0 0.0
        %7675 = vmatprep.subr.mxu0 0.0
        %7676 = vmatpush1.msra.mxu0 0.0
        %7677 = vmatprep.subr.mxu0 0.0
        %7678 = vmatpush1.msra.mxu0 0.0
        %7679 = vmatprep.subr.mxu0 0.0
        %7680 = vmatpush1.msra.mxu0 0.0
        %7681 = vmatprep.subr.mxu0 0.0
        %7682 = vmatpush1.msra.mxu0 0.0
        %7683 = vmatprep.subr.mxu0 0.0
        %7684 = vmatpush1.msra.mxu0 0.0
        %7685 = vmatprep.subr.mxu0 0.0
        %7686 = vmatpush1.msra.mxu0 0.0
        %7687 = vmatprep.subr.mxu0 0.0
        %7688 = vmatpush1.msra.mxu0 0.0
        %7689 = vmatprep.subr.mxu0 0.0
        %7690 = vmatpush1.msra.mxu0 0.0
        %7691 = vmatprep.subr.mxu0 0.0
        %7692 = vmatpush1.msra.mxu0 0.0
        %7693 = vmatprep.subr.mxu0 0.0
        %7694 = vmatpush1.msra.mxu0 0.0
        %7695 = vmatprep.subr.mxu0 0.0
        %7696 = vmatpush1.msra.mxu0 0.0
        %7697 = vmatprep.subr.mxu0 0.0
        %7698 = vmatpush1.msra.mxu0 0.0
        %7699 = vmatprep.subr.mxu0 0.0
        %7700 = vmatpush1.msra.mxu0 0.0
        %7701 = vmatprep.subr.mxu0 0.0
        %7702 = vmatpush1.msra.mxu0 0.0
        %7703 = vmatprep.subr.mxu0 0.0
        %7704 = vmatpush1.msra.mxu0 0.0
        %7705 = vmatprep.subr.mxu0 0.0
        %7706 = vmatpush1.msra.mxu0 0.0
        %7707 = vmatprep.subr.mxu0 0.0
        %7708 = vmatpush1.msra.mxu0 0.0
        %7709 = vmatprep.subr.mxu0 0.0
        %7710 = vmatpush1.msra.mxu0 0.0
        %7711 = vmatprep.subr.mxu0 0.0
        %7712 = vmatpush1.msra.mxu0 0.0
        %7713 = vmatprep.mubr.f32.mxu0 0.0
        %7714 = vmatmul.mubr.f32.gmra.mrb[0].mxu0 %v7576
        %v7715 = vpop.f32.mrb[0].mxu0
        %v7716 = vadd.f32 0.0, %v7715
        %v7717 = vpop.f32.mrb[0].mxu0
        %v7718 = vadd.f32 0.0, %v7717
        %7719 = vdwg.mxu0
        %v7720 = vadd.f32 %v7551, %v7645
        %v7721 = vadd.f32 %v7552, %v7647
        %v7722 = vadd.f32 %v7553, %v7716
        %v7723 = vadd.f32 %v7554, %v7718
        %s7724 = scalar_lea.vmem %s6, 136
        %v7725 = vld [vmem:[%s7724] sm:$0xff]
        %7726 = vrot.lane.b32.xlu0 %v7040, 108
        %v7727 = vpop.permute.xlu0 %7726
        %7728 = vrot.lane.b32.xlu0 %v7041, 108
        %v7729 = vpop.permute.xlu0 %7728
        %7730 = vrot.lane.b32.xlu0 %v7042, 108
        %v7731 = vpop.permute.xlu0 %7730
        %7732 = vrot.lane.b32.xlu0 %v7043, 108
        %v7733 = vpop.permute.xlu0 %7732
        %7734 = vrot.lane.b32.xlu0 %v7044, 108
        %v7735 = vpop.permute.xlu0 %7734
        %v7736 = vsel %vm3308, %v7727, %v7729
        %v7737 = vsel %vm3308, %v7729, %v7731
        %v7738 = vsel %vm3308, %v7731, %v7733
        %v7739 = vsel %vm3308, %v7733, %v7735
        %v7745 = vsel %vm445, %v7725, 0
        %7747 = vmatprep.subr.mxu0 %v7737
        %7748 = vmatpush1.msra.mxu0 %v7736
        %7749 = vmatprep.subr.mxu0 0.0
        %7750 = vmatpush1.msra.mxu0 0.0
        %7751 = vmatprep.subr.mxu0 0.0
        %7752 = vmatpush1.msra.mxu0 0.0
        %7753 = vmatprep.subr.mxu0 0.0
        %7754 = vmatpush1.msra.mxu0 0.0
        %7755 = vmatprep.subr.mxu0 0.0
        %7756 = vmatpush1.msra.mxu0 0.0
        %7757 = vmatprep.subr.mxu0 0.0
        %7758 = vmatpush1.msra.mxu0 0.0
        %7759 = vmatprep.subr.mxu0 0.0
        %7760 = vmatpush1.msra.mxu0 0.0
        %7761 = vmatprep.subr.mxu0 0.0
        %7762 = vmatpush1.msra.mxu0 0.0
        %7763 = vmatprep.subr.mxu0 0.0
        %7764 = vmatpush1.msra.mxu0 0.0
        %7765 = vmatprep.subr.mxu0 0.0
        %7766 = vmatpush1.msra.mxu0 0.0
        %7767 = vmatprep.subr.mxu0 0.0
        %7768 = vmatpush1.msra.mxu0 0.0
        %7769 = vmatprep.subr.mxu0 0.0
        %7770 = vmatpush1.msra.mxu0 0.0
        %7771 = vmatprep.subr.mxu0 0.0
        %7772 = vmatpush1.msra.mxu0 0.0
        %7773 = vmatprep.subr.mxu0 0.0
        %7774 = vmatpush1.msra.mxu0 0.0
        %7775 = vmatprep.subr.mxu0 0.0
        %7776 = vmatpush1.msra.mxu0 0.0
        %7777 = vmatprep.subr.mxu0 0.0
        %7778 = vmatpush1.msra.mxu0 0.0
        %7779 = vmatprep.subr.mxu0 0.0
        %7780 = vmatpush1.msra.mxu0 0.0
        %7781 = vmatprep.subr.mxu0 0.0
        %7782 = vmatpush1.msra.mxu0 0.0
        %7783 = vmatprep.subr.mxu0 0.0
        %7784 = vmatpush1.msra.mxu0 0.0
        %7785 = vmatprep.subr.mxu0 0.0
        %7786 = vmatpush1.msra.mxu0 0.0
        %7787 = vmatprep.subr.mxu0 0.0
        %7788 = vmatpush1.msra.mxu0 0.0
        %7789 = vmatprep.subr.mxu0 0.0
        %7790 = vmatpush1.msra.mxu0 0.0
        %7791 = vmatprep.subr.mxu0 0.0
        %7792 = vmatpush1.msra.mxu0 0.0
        %7793 = vmatprep.subr.mxu0 0.0
        %7794 = vmatpush1.msra.mxu0 0.0
        %7795 = vmatprep.subr.mxu0 0.0
        %7796 = vmatpush1.msra.mxu0 0.0
        %7797 = vmatprep.subr.mxu0 0.0
        %7798 = vmatpush1.msra.mxu0 0.0
        %7799 = vmatprep.subr.mxu0 0.0
        %7800 = vmatpush1.msra.mxu0 0.0
        %7801 = vmatprep.subr.mxu0 0.0
        %7802 = vmatpush1.msra.mxu0 0.0
        %7803 = vmatprep.subr.mxu0 0.0
        %7804 = vmatpush1.msra.mxu0 0.0
        %7805 = vmatprep.subr.mxu0 0.0
        %7806 = vmatpush1.msra.mxu0 0.0
        %7807 = vmatprep.subr.mxu0 0.0
        %7808 = vmatpush1.msra.mxu0 0.0
        %7809 = vmatprep.subr.mxu0 0.0
        %7810 = vmatpush1.msra.mxu0 0.0
        %7811 = vmatprep.mubr.f32.mxu0 0.0
        %7812 = vmatmul.mubr.f32.gmra.mrb[0].mxu0 %v7745
        %v7813 = vpop.f32.mrb[0].mxu0
        %v7814 = vadd.f32 0.0, %v7813
        %v7815 = vpop.f32.mrb[0].mxu0
        %v7816 = vadd.f32 0.0, %v7815
        %7817 = vdwg.mxu0
        %7818 = vmatprep.subr.mxu0 %v7739
        %7819 = vmatpush1.msra.mxu0 %v7738
        %7820 = vmatprep.subr.mxu0 0.0
        %7821 = vmatpush1.msra.mxu0 0.0
        %7822 = vmatprep.subr.mxu0 0.0
        %7823 = vmatpush1.msra.mxu0 0.0
        %7824 = vmatprep.subr.mxu0 0.0
        %7825 = vmatpush1.msra.mxu0 0.0
        %7826 = vmatprep.subr.mxu0 0.0
        %7827 = vmatpush1.msra.mxu0 0.0
        %7828 = vmatprep.subr.mxu0 0.0
        %7829 = vmatpush1.msra.mxu0 0.0
        %7830 = vmatprep.subr.mxu0 0.0
        %7831 = vmatpush1.msra.mxu0 0.0
        %7832 = vmatprep.subr.mxu0 0.0
        %7833 = vmatpush1.msra.mxu0 0.0
        %7834 = vmatprep.subr.mxu0 0.0
        %7835 = vmatpush1.msra.mxu0 0.0
        %7836 = vmatprep.subr.mxu0 0.0
        %7837 = vmatpush1.msra.mxu0 0.0
        %7838 = vmatprep.subr.mxu0 0.0
        %7839 = vmatpush1.msra.mxu0 0.0
        %7840 = vmatprep.subr.mxu0 0.0
        %7841 = vmatpush1.msra.mxu0 0.0
        %7842 = vmatprep.subr.mxu0 0.0
        %7843 = vmatpush1.msra.mxu0 0.0
        %7844 = vmatprep.subr.mxu0 0.0
        %7845 = vmatpush1.msra.mxu0 0.0
        %7846 = vmatprep.subr.mxu0 0.0
        %7847 = vmatpush1.msra.mxu0 0.0
        %7848 = vmatprep.subr.mxu0 0.0
        %7849 = vmatpush1.msra.mxu0 0.0
        %7850 = vmatprep.subr.mxu0 0.0
        %7851 = vmatpush1.msra.mxu0 0.0
        %7852 = vmatprep.subr.mxu0 0.0
        %7853 = vmatpush1.msra.mxu0 0.0
        %7854 = vmatprep.subr.mxu0 0.0
        %7855 = vmatpush1.msra.mxu0 0.0
        %7856 = vmatprep.subr.mxu0 0.0
        %7857 = vmatpush1.msra.mxu0 0.0
        %7858 = vmatprep.subr.mxu0 0.0
        %7859 = vmatpush1.msra.mxu0 0.0
        %7860 = vmatprep.subr.mxu0 0.0
        %7861 = vmatpush1.msra.mxu0 0.0
        %7862 = vmatprep.subr.mxu0 0.0
        %7863 = vmatpush1.msra.mxu0 0.0
        %7864 = vmatprep.subr.mxu0 0.0
        %7865 = vmatpush1.msra.mxu0 0.0
        %7866 = vmatprep.subr.mxu0 0.0
        %7867 = vmatpush1.msra.mxu0 0.0
        %7868 = vmatprep.subr.mxu0 0.0
        %7869 = vmatpush1.msra.mxu0 0.0
        %7870 = vmatprep.subr.mxu0 0.0
        %7871 = vmatpush1.msra.mxu0 0.0
        %7872 = vmatprep.subr.mxu0 0.0
        %7873 = vmatpush1.msra.mxu0 0.0
        %7874 = vmatprep.subr.mxu0 0.0
        %7875 = vmatpush1.msra.mxu0 0.0
        %7876 = vmatprep.subr.mxu0 0.0
        %7877 = vmatpush1.msra.mxu0 0.0
        %7878 = vmatprep.subr.mxu0 0.0
        %7879 = vmatpush1.msra.mxu0 0.0
        %7880 = vmatprep.subr.mxu0 0.0
        %7881 = vmatpush1.msra.mxu0 0.0
        %7882 = vmatprep.mubr.f32.mxu0 0.0
        %7883 = vmatmul.mubr.f32.gmra.mrb[0].mxu0 %v7745
        %v7884 = vpop.f32.mrb[0].mxu0
        %v7885 = vadd.f32 0.0, %v7884
        %v7886 = vpop.f32.mrb[0].mxu0
        %v7887 = vadd.f32 0.0, %v7886
        %7888 = vdwg.mxu0
        %v7889 = vadd.f32 %v7720, %v7814
        %v7890 = vadd.f32 %v7721, %v7816
        %v7891 = vadd.f32 %v7722, %v7885
        %v7892 = vadd.f32 %v7723, %v7887
        %s7893 = scalar_lea.vmem %s6, 144
        %v7894 = vld [vmem:[%s7893] sm:$0xff]
        %7895 = vrot.lane.b32.xlu0 %v7040, 107
        %v7896 = vpop.permute.xlu0 %7895
        %7897 = vrot.lane.b32.xlu0 %v7041, 107
        %v7898 = vpop.permute.xlu0 %7897
        %7899 = vrot.lane.b32.xlu0 %v7042, 107
        %v7900 = vpop.permute.xlu0 %7899
        %7901 = vrot.lane.b32.xlu0 %v7043, 107
        %v7902 = vpop.permute.xlu0 %7901
        %7903 = vrot.lane.b32.xlu0 %v7044, 107
        %v7904 = vpop.permute.xlu0 %7903
        %v7905 = vsel %vm3478, %v7896, %v7898
        %v7906 = vsel %vm3478, %v7898, %v7900
        %v7907 = vsel %vm3478, %v7900, %v7902
        %v7908 = vsel %vm3478, %v7902, %v7904
        %v7914 = vsel %vm445, %v7894, 0
        %7916 = vmatprep.subr.mxu0 %v7906
        %7917 = vmatpush1.msra.mxu0 %v7905
        %7918 = vmatprep.subr.mxu0 0.0
        %7919 = vmatpush1.msra.mxu0 0.0
        %7920 = vmatprep.subr.mxu0 0.0
        %7921 = vmatpush1.msra.mxu0 0.0
        %7922 = vmatprep.subr.mxu0 0.0
        %7923 = vmatpush1.msra.mxu0 0.0
        %7924 = vmatprep.subr.mxu0 0.0
        %7925 = vmatpush1.msra.mxu0 0.0
        %7926 = vmatprep.subr.mxu0 0.0
        %7927 = vmatpush1.msra.mxu0 0.0
        %7928 = vmatprep.subr.mxu0 0.0
        %7929 = vmatpush1.msra.mxu0 0.0
        %7930 = vmatprep.subr.mxu0 0.0
        %7931 = vmatpush1.msra.mxu0 0.0
        %7932 = vmatprep.subr.mxu0 0.0
        %7933 = vmatpush1.msra.mxu0 0.0
        %7934 = vmatprep.subr.mxu0 0.0
        %7935 = vmatpush1.msra.mxu0 0.0
        %7936 = vmatprep.subr.mxu0 0.0
        %7937 = vmatpush1.msra.mxu0 0.0
        %7938 = vmatprep.subr.mxu0 0.0
        %7939 = vmatpush1.msra.mxu0 0.0
        %7940 = vmatprep.subr.mxu0 0.0
        %7941 = vmatpush1.msra.mxu0 0.0
        %7942 = vmatprep.subr.mxu0 0.0
        %7943 = vmatpush1.msra.mxu0 0.0
        %7944 = vmatprep.subr.mxu0 0.0
        %7945 = vmatpush1.msra.mxu0 0.0
        %7946 = vmatprep.subr.mxu0 0.0
        %7947 = vmatpush1.msra.mxu0 0.0
        %7948 = vmatprep.subr.mxu0 0.0
        %7949 = vmatpush1.msra.mxu0 0.0
        %7950 = vmatprep.subr.mxu0 0.0
        %7951 = vmatpush1.msra.mxu0 0.0
        %7952 = vmatprep.subr.mxu0 0.0
        %7953 = vmatpush1.msra.mxu0 0.0
        %7954 = vmatprep.subr.mxu0 0.0
        %7955 = vmatpush1.msra.mxu0 0.0
        %7956 = vmatprep.subr.mxu0 0.0
        %7957 = vmatpush1.msra.mxu0 0.0
        %7958 = vmatprep.subr.mxu0 0.0
        %7959 = vmatpush1.msra.mxu0 0.0
        %7960 = vmatprep.subr.mxu0 0.0
        %7961 = vmatpush1.msra.mxu0 0.0
        %7962 = vmatprep.subr.mxu0 0.0
        %7963 = vmatpush1.msra.mxu0 0.0
        %7964 = vmatprep.subr.mxu0 0.0
        %7965 = vmatpush1.msra.mxu0 0.0
        %7966 = vmatprep.subr.mxu0 0.0
        %7967 = vmatpush1.msra.mxu0 0.0
        %7968 = vmatprep.subr.mxu0 0.0
        %7969 = vmatpush1.msra.mxu0 0.0
        %7970 = vmatprep.subr.mxu0 0.0
        %7971 = vmatpush1.msra.mxu0 0.0
        %7972 = vmatprep.subr.mxu0 0.0
        %7973 = vmatpush1.msra.mxu0 0.0
        %7974 = vmatprep.subr.mxu0 0.0
        %7975 = vmatpush1.msra.mxu0 0.0
        %7976 = vmatprep.subr.mxu0 0.0
        %7977 = vmatpush1.msra.mxu0 0.0
        %7978 = vmatprep.subr.mxu0 0.0
        %7979 = vmatpush1.msra.mxu0 0.0
        %7980 = vmatprep.mubr.f32.mxu0 0.0
        %7981 = vmatmul.mubr.f32.gmra.mrb[0].mxu0 %v7914
        %v7982 = vpop.f32.mrb[0].mxu0
        %v7983 = vadd.f32 0.0, %v7982
        %v7984 = vpop.f32.mrb[0].mxu0
        %v7985 = vadd.f32 0.0, %v7984
        %7986 = vdwg.mxu0
        %7987 = vmatprep.subr.mxu0 %v7908
        %7988 = vmatpush1.msra.mxu0 %v7907
        %7989 = vmatprep.subr.mxu0 0.0
        %7990 = vmatpush1.msra.mxu0 0.0
        %7991 = vmatprep.subr.mxu0 0.0
        %7992 = vmatpush1.msra.mxu0 0.0
        %7993 = vmatprep.subr.mxu0 0.0
        %7994 = vmatpush1.msra.mxu0 0.0
        %7995 = vmatprep.subr.mxu0 0.0
        %7996 = vmatpush1.msra.mxu0 0.0
        %7997 = vmatprep.subr.mxu0 0.0
        %7998 = vmatpush1.msra.mxu0 0.0
        %7999 = vmatprep.subr.mxu0 0.0
        %8000 = vmatpush1.msra.mxu0 0.0
        %8001 = vmatprep.subr.mxu0 0.0
        %8002 = vmatpush1.msra.mxu0 0.0
        %8003 = vmatprep.subr.mxu0 0.0
        %8004 = vmatpush1.msra.mxu0 0.0
        %8005 = vmatprep.subr.mxu0 0.0
        %8006 = vmatpush1.msra.mxu0 0.0
        %8007 = vmatprep.subr.mxu0 0.0
        %8008 = vmatpush1.msra.mxu0 0.0
        %8009 = vmatprep.subr.mxu0 0.0
        %8010 = vmatpush1.msra.mxu0 0.0
        %8011 = vmatprep.subr.mxu0 0.0
        %8012 = vmatpush1.msra.mxu0 0.0
        %8013 = vmatprep.subr.mxu0 0.0
        %8014 = vmatpush1.msra.mxu0 0.0
        %8015 = vmatprep.subr.mxu0 0.0
        %8016 = vmatpush1.msra.mxu0 0.0
        %8017 = vmatprep.subr.mxu0 0.0
        %8018 = vmatpush1.msra.mxu0 0.0
        %8019 = vmatprep.subr.mxu0 0.0
        %8020 = vmatpush1.msra.mxu0 0.0
        %8021 = vmatprep.subr.mxu0 0.0
        %8022 = vmatpush1.msra.mxu0 0.0
        %8023 = vmatprep.subr.mxu0 0.0
        %8024 = vmatpush1.msra.mxu0 0.0
        %8025 = vmatprep.subr.mxu0 0.0
        %8026 = vmatpush1.msra.mxu0 0.0
        %8027 = vmatprep.subr.mxu0 0.0
        %8028 = vmatpush1.msra.mxu0 0.0
        %8029 = vmatprep.subr.mxu0 0.0
        %8030 = vmatpush1.msra.mxu0 0.0
        %8031 = vmatprep.subr.mxu0 0.0
        %8032 = vmatpush1.msra.mxu0 0.0
        %8033 = vmatprep.subr.mxu0 0.0
        %8034 = vmatpush1.msra.mxu0 0.0
        %8035 = vmatprep.subr.mxu0 0.0
        %8036 = vmatpush1.msra.mxu0 0.0
        %8037 = vmatprep.subr.mxu0 0.0
        %8038 = vmatpush1.msra.mxu0 0.0
        %8039 = vmatprep.subr.mxu0 0.0
        %8040 = vmatpush1.msra.mxu0 0.0
        %8041 = vmatprep.subr.mxu0 0.0
        %8042 = vmatpush1.msra.mxu0 0.0
        %8043 = vmatprep.subr.mxu0 0.0
        %8044 = vmatpush1.msra.mxu0 0.0
        %8045 = vmatprep.subr.mxu0 0.0
        %8046 = vmatpush1.msra.mxu0 0.0
        %8047 = vmatprep.subr.mxu0 0.0
        %8048 = vmatpush1.msra.mxu0 0.0
        %8049 = vmatprep.subr.mxu0 0.0
        %8050 = vmatpush1.msra.mxu0 0.0
        %8051 = vmatprep.mubr.f32.mxu0 0.0
        %8052 = vmatmul.mubr.f32.gmra.mrb[0].mxu0 %v7914
        %v8053 = vpop.f32.mrb[0].mxu0
        %v8054 = vadd.f32 0.0, %v8053
        %v8055 = vpop.f32.mrb[0].mxu0
        %v8056 = vadd.f32 0.0, %v8055
        %8057 = vdwg.mxu0
        %v8058 = vadd.f32 %v7889, %v7983
        %v8059 = vadd.f32 %v7890, %v7985
        %v8060 = vadd.f32 %v7891, %v8054
        %v8061 = vadd.f32 %v7892, %v8056
        %s8062 = scalar_lea.vmem %s6, 152
        %v8063 = vld [vmem:[%s8062] sm:$0xff]
        %8064 = vrot.lane.b32.xlu0 %v7040, 106
        %v8065 = vpop.permute.xlu0 %8064
        %8066 = vrot.lane.b32.xlu0 %v7041, 106
        %v8067 = vpop.permute.xlu0 %8066
        %8068 = vrot.lane.b32.xlu0 %v7042, 106
        %v8069 = vpop.permute.xlu0 %8068
        %8070 = vrot.lane.b32.xlu0 %v7043, 106
        %v8071 = vpop.permute.xlu0 %8070
        %8072 = vrot.lane.b32.xlu0 %v7044, 106
        %v8073 = vpop.permute.xlu0 %8072
        %v8074 = vsel %vm3648, %v8065, %v8067
        %v8075 = vsel %vm3648, %v8067, %v8069
        %v8076 = vsel %vm3648, %v8069, %v8071
        %v8077 = vsel %vm3648, %v8071, %v8073
        %v8083 = vsel %vm445, %v8063, 0
        %8085 = vmatprep.subr.mxu0 %v8075
        %8086 = vmatpush1.msra.mxu0 %v8074
        %8087 = vmatprep.subr.mxu0 0.0
        %8088 = vmatpush1.msra.mxu0 0.0
        %8089 = vmatprep.subr.mxu0 0.0
        %8090 = vmatpush1.msra.mxu0 0.0
        %8091 = vmatprep.subr.mxu0 0.0
        %8092 = vmatpush1.msra.mxu0 0.0
        %8093 = vmatprep.subr.mxu0 0.0
        %8094 = vmatpush1.msra.mxu0 0.0
        %8095 = vmatprep.subr.mxu0 0.0
        %8096 = vmatpush1.msra.mxu0 0.0
        %8097 = vmatprep.subr.mxu0 0.0
        %8098 = vmatpush1.msra.mxu0 0.0
        %8099 = vmatprep.subr.mxu0 0.0
        %8100 = vmatpush1.msra.mxu0 0.0
        %8101 = vmatprep.subr.mxu0 0.0
        %8102 = vmatpush1.msra.mxu0 0.0
        %8103 = vmatprep.subr.mxu0 0.0
        %8104 = vmatpush1.msra.mxu0 0.0
        %8105 = vmatprep.subr.mxu0 0.0
        %8106 = vmatpush1.msra.mxu0 0.0
        %8107 = vmatprep.subr.mxu0 0.0
        %8108 = vmatpush1.msra.mxu0 0.0
        %8109 = vmatprep.subr.mxu0 0.0
        %8110 = vmatpush1.msra.mxu0 0.0
        %8111 = vmatprep.subr.mxu0 0.0
        %8112 = vmatpush1.msra.mxu0 0.0
        %8113 = vmatprep.subr.mxu0 0.0
        %8114 = vmatpush1.msra.mxu0 0.0
        %8115 = vmatprep.subr.mxu0 0.0
        %8116 = vmatpush1.msra.mxu0 0.0
        %8117 = vmatprep.subr.mxu0 0.0
        %8118 = vmatpush1.msra.mxu0 0.0
        %8119 = vmatprep.subr.mxu0 0.0
        %8120 = vmatpush1.msra.mxu0 0.0
        %8121 = vmatprep.subr.mxu0 0.0
        %8122 = vmatpush1.msra.mxu0 0.0
        %8123 = vmatprep.subr.mxu0 0.0
        %8124 = vmatpush1.msra.mxu0 0.0
        %8125 = vmatprep.subr.mxu0 0.0
        %8126 = vmatpush1.msra.mxu0 0.0
        %8127 = vmatprep.subr.mxu0 0.0
        %8128 = vmatpush1.msra.mxu0 0.0
        %8129 = vmatprep.subr.mxu0 0.0
        %8130 = vmatpush1.msra.mxu0 0.0
        %8131 = vmatprep.subr.mxu0 0.0
        %8132 = vmatpush1.msra.mxu0 0.0
        %8133 = vmatprep.subr.mxu0 0.0
        %8134 = vmatpush1.msra.mxu0 0.0
        %8135 = vmatprep.subr.mxu0 0.0
        %8136 = vmatpush1.msra.mxu0 0.0
        %8137 = vmatprep.subr.mxu0 0.0
        %8138 = vmatpush1.msra.mxu0 0.0
        %8139 = vmatprep.subr.mxu0 0.0
        %8140 = vmatpush1.msra.mxu0 0.0
        %8141 = vmatprep.subr.mxu0 0.0
        %8142 = vmatpush1.msra.mxu0 0.0
        %8143 = vmatprep.subr.mxu0 0.0
        %8144 = vmatpush1.msra.mxu0 0.0
        %8145 = vmatprep.subr.mxu0 0.0
        %8146 = vmatpush1.msra.mxu0 0.0
        %8147 = vmatprep.subr.mxu0 0.0
        %8148 = vmatpush1.msra.mxu0 0.0
        %8149 = vmatprep.mubr.f32.mxu0 0.0
        %8150 = vmatmul.mubr.f32.gmra.mrb[0].mxu0 %v8083
        %v8151 = vpop.f32.mrb[0].mxu0
        %v8152 = vadd.f32 0.0, %v8151
        %v8153 = vpop.f32.mrb[0].mxu0
        %v8154 = vadd.f32 0.0, %v8153
        %8155 = vdwg.mxu0
        %8156 = vmatprep.subr.mxu0 %v8077
        %8157 = vmatpush1.msra.mxu0 %v8076
        %8158 = vmatprep.subr.mxu0 0.0
        %8159 = vmatpush1.msra.mxu0 0.0
        %8160 = vmatprep.subr.mxu0 0.0
        %8161 = vmatpush1.msra.mxu0 0.0
        %8162 = vmatprep.subr.mxu0 0.0
        %8163 = vmatpush1.msra.mxu0 0.0
        %8164 = vmatprep.subr.mxu0 0.0
        %8165 = vmatpush1.msra.mxu0 0.0
        %8166 = vmatprep.subr.mxu0 0.0
        %8167 = vmatpush1.msra.mxu0 0.0
        %8168 = vmatprep.subr.mxu0 0.0
        %8169 = vmatpush1.msra.mxu0 0.0
        %8170 = vmatprep.subr.mxu0 0.0
        %8171 = vmatpush1.msra.mxu0 0.0
        %8172 = vmatprep.subr.mxu0 0.0
        %8173 = vmatpush1.msra.mxu0 0.0
        %8174 = vmatprep.subr.mxu0 0.0
        %8175 = vmatpush1.msra.mxu0 0.0
        %8176 = vmatprep.subr.mxu0 0.0
        %8177 = vmatpush1.msra.mxu0 0.0
        %8178 = vmatprep.subr.mxu0 0.0
        %8179 = vmatpush1.msra.mxu0 0.0
        %8180 = vmatprep.subr.mxu0 0.0
        %8181 = vmatpush1.msra.mxu0 0.0
        %8182 = vmatprep.subr.mxu0 0.0
        %8183 = vmatpush1.msra.mxu0 0.0
        %8184 = vmatprep.subr.mxu0 0.0
        %8185 = vmatpush1.msra.mxu0 0.0
        %8186 = vmatprep.subr.mxu0 0.0
        %8187 = vmatpush1.msra.mxu0 0.0
        %8188 = vmatprep.subr.mxu0 0.0
        %8189 = vmatpush1.msra.mxu0 0.0
        %8190 = vmatprep.subr.mxu0 0.0
        %8191 = vmatpush1.msra.mxu0 0.0
        %8192 = vmatprep.subr.mxu0 0.0
        %8193 = vmatpush1.msra.mxu0 0.0
        %8194 = vmatprep.subr.mxu0 0.0
        %8195 = vmatpush1.msra.mxu0 0.0
        %8196 = vmatprep.subr.mxu0 0.0
        %8197 = vmatpush1.msra.mxu0 0.0
        %8198 = vmatprep.subr.mxu0 0.0
        %8199 = vmatpush1.msra.mxu0 0.0
        %8200 = vmatprep.subr.mxu0 0.0
        %8201 = vmatpush1.msra.mxu0 0.0
        %8202 = vmatprep.subr.mxu0 0.0
        %8203 = vmatpush1.msra.mxu0 0.0
        %8204 = vmatprep.subr.mxu0 0.0
        %8205 = vmatpush1.msra.mxu0 0.0
        %8206 = vmatprep.subr.mxu0 0.0
        %8207 = vmatpush1.msra.mxu0 0.0
        %8208 = vmatprep.subr.mxu0 0.0
        %8209 = vmatpush1.msra.mxu0 0.0
        %8210 = vmatprep.subr.mxu0 0.0
        %8211 = vmatpush1.msra.mxu0 0.0
        %8212 = vmatprep.subr.mxu0 0.0
        %8213 = vmatpush1.msra.mxu0 0.0
        %8214 = vmatprep.subr.mxu0 0.0
        %8215 = vmatpush1.msra.mxu0 0.0
        %8216 = vmatprep.subr.mxu0 0.0
        %8217 = vmatpush1.msra.mxu0 0.0
        %8218 = vmatprep.subr.mxu0 0.0
        %8219 = vmatpush1.msra.mxu0 0.0
        %8220 = vmatprep.mubr.f32.mxu0 0.0
        %8221 = vmatmul.mubr.f32.gmra.mrb[0].mxu0 %v8083
        %v8222 = vpop.f32.mrb[0].mxu0
        %v8223 = vadd.f32 0.0, %v8222
        %v8224 = vpop.f32.mrb[0].mxu0
        %v8225 = vadd.f32 0.0, %v8224
        %8226 = vdwg.mxu0
        %v8227 = vadd.f32 %v8058, %v8152
        %v8228 = vadd.f32 %v8059, %v8154
        %v8229 = vadd.f32 %v8060, %v8223
        %v8230 = vadd.f32 %v8061, %v8225
        %s8231 = scalar_lea.vmem %s6, 160
        %v8232 = vld [vmem:[%s8231] sm:$0xff]
        %8233 = vrot.lane.b32.xlu0 %v7040, 90
        %v8234 = vpop.permute.xlu0 %8233
        %8235 = vrot.lane.b32.xlu0 %v7041, 90
        %v8236 = vpop.permute.xlu0 %8235
        %8237 = vrot.lane.b32.xlu0 %v7042, 90
        %v8238 = vpop.permute.xlu0 %8237
        %8239 = vrot.lane.b32.xlu0 %v7043, 90
        %v8240 = vpop.permute.xlu0 %8239
        %8241 = vrot.lane.b32.xlu0 %v7044, 90
        %v8242 = vpop.permute.xlu0 %8241
        %v8243 = vsel %vm3818, %v8234, %v8236
        %v8244 = vsel %vm3818, %v8236, %v8238
        %v8245 = vsel %vm3818, %v8238, %v8240
        %v8246 = vsel %vm3818, %v8240, %v8242
        %v8252 = vsel %vm445, %v8232, 0
        %8254 = vmatprep.subr.mxu0 %v8244
        %8255 = vmatpush1.msra.mxu0 %v8243
        %8256 = vmatprep.subr.mxu0 0.0
        %8257 = vmatpush1.msra.mxu0 0.0
        %8258 = vmatprep.subr.mxu0 0.0
        %8259 = vmatpush1.msra.mxu0 0.0
        %8260 = vmatprep.subr.mxu0 0.0
        %8261 = vmatpush1.msra.mxu0 0.0
        %8262 = vmatprep.subr.mxu0 0.0
        %8263 = vmatpush1.msra.mxu0 0.0
        %8264 = vmatprep.subr.mxu0 0.0
        %8265 = vmatpush1.msra.mxu0 0.0
        %8266 = vmatprep.subr.mxu0 0.0
        %8267 = vmatpush1.msra.mxu0 0.0
        %8268 = vmatprep.subr.mxu0 0.0
        %8269 = vmatpush1.msra.mxu0 0.0
        %8270 = vmatprep.subr.mxu0 0.0
        %8271 = vmatpush1.msra.mxu0 0.0
        %8272 = vmatprep.subr.mxu0 0.0
        %8273 = vmatpush1.msra.mxu0 0.0
        %8274 = vmatprep.subr.mxu0 0.0
        %8275 = vmatpush1.msra.mxu0 0.0
        %8276 = vmatprep.subr.mxu0 0.0
        %8277 = vmatpush1.msra.mxu0 0.0
        %8278 = vmatprep.subr.mxu0 0.0
        %8279 = vmatpush1.msra.mxu0 0.0
        %8280 = vmatprep.subr.mxu0 0.0
        %8281 = vmatpush1.msra.mxu0 0.0
        %8282 = vmatprep.subr.mxu0 0.0
        %8283 = vmatpush1.msra.mxu0 0.0
        %8284 = vmatprep.subr.mxu0 0.0
        %8285 = vmatpush1.msra.mxu0 0.0
        %8286 = vmatprep.subr.mxu0 0.0
        %8287 = vmatpush1.msra.mxu0 0.0
        %8288 = vmatprep.subr.mxu0 0.0
        %8289 = vmatpush1.msra.mxu0 0.0
        %8290 = vmatprep.subr.mxu0 0.0
        %8291 = vmatpush1.msra.mxu0 0.0
        %8292 = vmatprep.subr.mxu0 0.0
        %8293 = vmatpush1.msra.mxu0 0.0
        %8294 = vmatprep.subr.mxu0 0.0
        %8295 = vmatpush1.msra.mxu0 0.0
        %8296 = vmatprep.subr.mxu0 0.0
        %8297 = vmatpush1.msra.mxu0 0.0
        %8298 = vmatprep.subr.mxu0 0.0
        %8299 = vmatpush1.msra.mxu0 0.0
        %8300 = vmatprep.subr.mxu0 0.0
        %8301 = vmatpush1.msra.mxu0 0.0
        %8302 = vmatprep.subr.mxu0 0.0
        %8303 = vmatpush1.msra.mxu0 0.0
        %8304 = vmatprep.subr.mxu0 0.0
        %8305 = vmatpush1.msra.mxu0 0.0
        %8306 = vmatprep.subr.mxu0 0.0
        %8307 = vmatpush1.msra.mxu0 0.0
        %8308 = vmatprep.subr.mxu0 0.0
        %8309 = vmatpush1.msra.mxu0 0.0
        %8310 = vmatprep.subr.mxu0 0.0
        %8311 = vmatpush1.msra.mxu0 0.0
        %8312 = vmatprep.subr.mxu0 0.0
        %8313 = vmatpush1.msra.mxu0 0.0
        %8314 = vmatprep.subr.mxu0 0.0
        %8315 = vmatpush1.msra.mxu0 0.0
        %8316 = vmatprep.subr.mxu0 0.0
        %8317 = vmatpush1.msra.mxu0 0.0
        %8318 = vmatprep.mubr.f32.mxu0 0.0
        %8319 = vmatmul.mubr.f32.gmra.mrb[0].mxu0 %v8252
        %v8320 = vpop.f32.mrb[0].mxu0
        %v8321 = vadd.f32 0.0, %v8320
        %v8322 = vpop.f32.mrb[0].mxu0
        %v8323 = vadd.f32 0.0, %v8322
        %8324 = vdwg.mxu0
        %8325 = vmatprep.subr.mxu0 %v8246
        %8326 = vmatpush1.msra.mxu0 %v8245
        %8327 = vmatprep.subr.mxu0 0.0
        %8328 = vmatpush1.msra.mxu0 0.0
        %8329 = vmatprep.subr.mxu0 0.0
        %8330 = vmatpush1.msra.mxu0 0.0
        %8331 = vmatprep.subr.mxu0 0.0
        %8332 = vmatpush1.msra.mxu0 0.0
        %8333 = vmatprep.subr.mxu0 0.0
        %8334 = vmatpush1.msra.mxu0 0.0
        %8335 = vmatprep.subr.mxu0 0.0
        %8336 = vmatpush1.msra.mxu0 0.0
        %8337 = vmatprep.subr.mxu0 0.0
        %8338 = vmatpush1.msra.mxu0 0.0
        %8339 = vmatprep.subr.mxu0 0.0
        %8340 = vmatpush1.msra.mxu0 0.0
        %8341 = vmatprep.subr.mxu0 0.0
        %8342 = vmatpush1.msra.mxu0 0.0
        %8343 = vmatprep.subr.mxu0 0.0
        %8344 = vmatpush1.msra.mxu0 0.0
        %8345 = vmatprep.subr.mxu0 0.0
        %8346 = vmatpush1.msra.mxu0 0.0
        %8347 = vmatprep.subr.mxu0 0.0
        %8348 = vmatpush1.msra.mxu0 0.0
        %8349 = vmatprep.subr.mxu0 0.0
        %8350 = vmatpush1.msra.mxu0 0.0
        %8351 = vmatprep.subr.mxu0 0.0
        %8352 = vmatpush1.msra.mxu0 0.0
        %8353 = vmatprep.subr.mxu0 0.0
        %8354 = vmatpush1.msra.mxu0 0.0
        %8355 = vmatprep.subr.mxu0 0.0
        %8356 = vmatpush1.msra.mxu0 0.0
        %8357 = vmatprep.subr.mxu0 0.0
        %8358 = vmatpush1.msra.mxu0 0.0
        %8359 = vmatprep.subr.mxu0 0.0
        %8360 = vmatpush1.msra.mxu0 0.0
        %8361 = vmatprep.subr.mxu0 0.0
        %8362 = vmatpush1.msra.mxu0 0.0
        %8363 = vmatprep.subr.mxu0 0.0
        %8364 = vmatpush1.msra.mxu0 0.0
        %8365 = vmatprep.subr.mxu0 0.0
        %8366 = vmatpush1.msra.mxu0 0.0
        %8367 = vmatprep.subr.mxu0 0.0
        %8368 = vmatpush1.msra.mxu0 0.0
        %8369 = vmatprep.subr.mxu0 0.0
        %8370 = vmatpush1.msra.mxu0 0.0
        %8371 = vmatprep.subr.mxu0 0.0
        %8372 = vmatpush1.msra.mxu0 0.0
        %8373 = vmatprep.subr.mxu0 0.0
        %8374 = vmatpush1.msra.mxu0 0.0
        %8375 = vmatprep.subr.mxu0 0.0
        %8376 = vmatpush1.msra.mxu0 0.0
        %8377 = vmatprep.subr.mxu0 0.0
        %8378 = vmatpush1.msra.mxu0 0.0
        %8379 = vmatprep.subr.mxu0 0.0
        %8380 = vmatpush1.msra.mxu0 0.0
        %8381 = vmatprep.subr.mxu0 0.0
        %8382 = vmatpush1.msra.mxu0 0.0
        %8383 = vmatprep.subr.mxu0 0.0
        %8384 = vmatpush1.msra.mxu0 0.0
        %8385 = vmatprep.subr.mxu0 0.0
        %8386 = vmatpush1.msra.mxu0 0.0
        %8387 = vmatprep.subr.mxu0 0.0
        %8388 = vmatpush1.msra.mxu0 0.0
        %8389 = vmatprep.mubr.f32.mxu0 0.0
        %8390 = vmatmul.mubr.f32.gmra.mrb[0].mxu0 %v8252
        %v8391 = vpop.f32.mrb[0].mxu0
        %v8392 = vadd.f32 0.0, %v8391
        %v8393 = vpop.f32.mrb[0].mxu0
        %v8394 = vadd.f32 0.0, %v8393
        %8395 = vdwg.mxu0
        %v8396 = vadd.f32 %v8227, %v8321
        %v8397 = vadd.f32 %v8228, %v8323
        %v8398 = vadd.f32 %v8229, %v8392
        %v8399 = vadd.f32 %v8230, %v8394
        %s8400 = scalar_lea.vmem %s6, 168
        %v8401 = vld [vmem:[%s8400] sm:$0xff]
        %8402 = vrot.lane.b32.xlu0 %v7040, 89
        %v8403 = vpop.permute.xlu0 %8402
        %8404 = vrot.lane.b32.xlu0 %v7041, 89
        %v8405 = vpop.permute.xlu0 %8404
        %8406 = vrot.lane.b32.xlu0 %v7042, 89
        %v8407 = vpop.permute.xlu0 %8406
        %8408 = vrot.lane.b32.xlu0 %v7043, 89
        %v8409 = vpop.permute.xlu0 %8408
        %8410 = vrot.lane.b32.xlu0 %v7044, 89
        %v8411 = vpop.permute.xlu0 %8410
        %v8412 = vsel %vm3988, %v8403, %v8405
        %v8413 = vsel %vm3988, %v8405, %v8407
        %v8414 = vsel %vm3988, %v8407, %v8409
        %v8415 = vsel %vm3988, %v8409, %v8411
        %v8421 = vsel %vm445, %v8401, 0
        %8423 = vmatprep.subr.mxu0 %v8413
        %8424 = vmatpush1.msra.mxu0 %v8412
        %8425 = vmatprep.subr.mxu0 0.0
        %8426 = vmatpush1.msra.mxu0 0.0
        %8427 = vmatprep.subr.mxu0 0.0
        %8428 = vmatpush1.msra.mxu0 0.0
        %8429 = vmatprep.subr.mxu0 0.0
        %8430 = vmatpush1.msra.mxu0 0.0
        %8431 = vmatprep.subr.mxu0 0.0
        %8432 = vmatpush1.msra.mxu0 0.0
        %8433 = vmatprep.subr.mxu0 0.0
        %8434 = vmatpush1.msra.mxu0 0.0
        %8435 = vmatprep.subr.mxu0 0.0
        %8436 = vmatpush1.msra.mxu0 0.0
        %8437 = vmatprep.subr.mxu0 0.0
        %8438 = vmatpush1.msra.mxu0 0.0
        %8439 = vmatprep.subr.mxu0 0.0
        %8440 = vmatpush1.msra.mxu0 0.0
        %8441 = vmatprep.subr.mxu0 0.0
        %8442 = vmatpush1.msra.mxu0 0.0
        %8443 = vmatprep.subr.mxu0 0.0
        %8444 = vmatpush1.msra.mxu0 0.0
        %8445 = vmatprep.subr.mxu0 0.0
        %8446 = vmatpush1.msra.mxu0 0.0
        %8447 = vmatprep.subr.mxu0 0.0
        %8448 = vmatpush1.msra.mxu0 0.0
        %8449 = vmatprep.subr.mxu0 0.0
        %8450 = vmatpush1.msra.mxu0 0.0
        %8451 = vmatprep.subr.mxu0 0.0
        %8452 = vmatpush1.msra.mxu0 0.0
        %8453 = vmatprep.subr.mxu0 0.0
        %8454 = vmatpush1.msra.mxu0 0.0
        %8455 = vmatprep.subr.mxu0 0.0
        %8456 = vmatpush1.msra.mxu0 0.0
        %8457 = vmatprep.subr.mxu0 0.0
        %8458 = vmatpush1.msra.mxu0 0.0
        %8459 = vmatprep.subr.mxu0 0.0
        %8460 = vmatpush1.msra.mxu0 0.0
        %8461 = vmatprep.subr.mxu0 0.0
        %8462 = vmatpush1.msra.mxu0 0.0
        %8463 = vmatprep.subr.mxu0 0.0
        %8464 = vmatpush1.msra.mxu0 0.0
        %8465 = vmatprep.subr.mxu0 0.0
        %8466 = vmatpush1.msra.mxu0 0.0
        %8467 = vmatprep.subr.mxu0 0.0
        %8468 = vmatpush1.msra.mxu0 0.0
        %8469 = vmatprep.subr.mxu0 0.0
        %8470 = vmatpush1.msra.mxu0 0.0
        %8471 = vmatprep.subr.mxu0 0.0
        %8472 = vmatpush1.msra.mxu0 0.0
        %8473 = vmatprep.subr.mxu0 0.0
        %8474 = vmatpush1.msra.mxu0 0.0
        %8475 = vmatprep.subr.mxu0 0.0
        %8476 = vmatpush1.msra.mxu0 0.0
        %8477 = vmatprep.subr.mxu0 0.0
        %8478 = vmatpush1.msra.mxu0 0.0
        %8479 = vmatprep.subr.mxu0 0.0
        %8480 = vmatpush1.msra.mxu0 0.0
        %8481 = vmatprep.subr.mxu0 0.0
        %8482 = vmatpush1.msra.mxu0 0.0
        %8483 = vmatprep.subr.mxu0 0.0
        %8484 = vmatpush1.msra.mxu0 0.0
        %8485 = vmatprep.subr.mxu0 0.0
        %8486 = vmatpush1.msra.mxu0 0.0
        %8487 = vmatprep.mubr.f32.mxu0 0.0
        %8488 = vmatmul.mubr.f32.gmra.mrb[0].mxu0 %v8421
        %v8489 = vpop.f32.mrb[0].mxu0
        %v8490 = vadd.f32 0.0, %v8489
        %v8491 = vpop.f32.mrb[0].mxu0
        %v8492 = vadd.f32 0.0, %v8491
        %8493 = vdwg.mxu0
        %8494 = vmatprep.subr.mxu0 %v8415
        %8495 = vmatpush1.msra.mxu0 %v8414
        %8496 = vmatprep.subr.mxu0 0.0
        %8497 = vmatpush1.msra.mxu0 0.0
        %8498 = vmatprep.subr.mxu0 0.0
        %8499 = vmatpush1.msra.mxu0 0.0
        %8500 = vmatprep.subr.mxu0 0.0
        %8501 = vmatpush1.msra.mxu0 0.0
        %8502 = vmatprep.subr.mxu0 0.0
        %8503 = vmatpush1.msra.mxu0 0.0
        %8504 = vmatprep.subr.mxu0 0.0
        %8505 = vmatpush1.msra.mxu0 0.0
        %8506 = vmatprep.subr.mxu0 0.0
        %8507 = vmatpush1.msra.mxu0 0.0
        %8508 = vmatprep.subr.mxu0 0.0
        %8509 = vmatpush1.msra.mxu0 0.0
        %8510 = vmatprep.subr.mxu0 0.0
        %8511 = vmatpush1.msra.mxu0 0.0
        %8512 = vmatprep.subr.mxu0 0.0
        %8513 = vmatpush1.msra.mxu0 0.0
        %8514 = vmatprep.subr.mxu0 0.0
        %8515 = vmatpush1.msra.mxu0 0.0
        %8516 = vmatprep.subr.mxu0 0.0
        %8517 = vmatpush1.msra.mxu0 0.0
        %8518 = vmatprep.subr.mxu0 0.0
        %8519 = vmatpush1.msra.mxu0 0.0
        %8520 = vmatprep.subr.mxu0 0.0
        %8521 = vmatpush1.msra.mxu0 0.0
        %8522 = vmatprep.subr.mxu0 0.0
        %8523 = vmatpush1.msra.mxu0 0.0
        %8524 = vmatprep.subr.mxu0 0.0
        %8525 = vmatpush1.msra.mxu0 0.0
        %8526 = vmatprep.subr.mxu0 0.0
        %8527 = vmatpush1.msra.mxu0 0.0
        %8528 = vmatprep.subr.mxu0 0.0
        %8529 = vmatpush1.msra.mxu0 0.0
        %8530 = vmatprep.subr.mxu0 0.0
        %8531 = vmatpush1.msra.mxu0 0.0
        %8532 = vmatprep.subr.mxu0 0.0
        %8533 = vmatpush1.msra.mxu0 0.0
        %8534 = vmatprep.subr.mxu0 0.0
        %8535 = vmatpush1.msra.mxu0 0.0
        %8536 = vmatprep.subr.mxu0 0.0
        %8537 = vmatpush1.msra.mxu0 0.0
        %8538 = vmatprep.subr.mxu0 0.0
        %8539 = vmatpush1.msra.mxu0 0.0
        %8540 = vmatprep.subr.mxu0 0.0
        %8541 = vmatpush1.msra.mxu0 0.0
        %8542 = vmatprep.subr.mxu0 0.0
        %8543 = vmatpush1.msra.mxu0 0.0
        %8544 = vmatprep.subr.mxu0 0.0
        %8545 = vmatpush1.msra.mxu0 0.0
        %8546 = vmatprep.subr.mxu0 0.0
        %8547 = vmatpush1.msra.mxu0 0.0
        %8548 = vmatprep.subr.mxu0 0.0
        %8549 = vmatpush1.msra.mxu0 0.0
        %8550 = vmatprep.subr.mxu0 0.0
        %8551 = vmatpush1.msra.mxu0 0.0
        %8552 = vmatprep.subr.mxu0 0.0
        %8553 = vmatpush1.msra.mxu0 0.0
        %8554 = vmatprep.subr.mxu0 0.0
        %8555 = vmatpush1.msra.mxu0 0.0
        %8556 = vmatprep.subr.mxu0 0.0
        %8557 = vmatpush1.msra.mxu0 0.0
        %8558 = vmatprep.mubr.f32.mxu0 0.0
        %8559 = vmatmul.mubr.f32.gmra.mrb[0].mxu0 %v8421
        %v8560 = vpop.f32.mrb[0].mxu0
        %v8561 = vadd.f32 0.0, %v8560
        %v8562 = vpop.f32.mrb[0].mxu0
        %v8563 = vadd.f32 0.0, %v8562
        %8564 = vdwg.mxu0
        %v8565 = vadd.f32 %v8396, %v8490
        %v8566 = vadd.f32 %v8397, %v8492
        %v8567 = vadd.f32 %v8398, %v8561
        %v8568 = vadd.f32 %v8399, %v8563
        %s8569 = scalar_lea.vmem %s6, 176
        %v8570 = vld [vmem:[%s8569] sm:$0xff]
        %8571 = vrot.lane.b32.xlu0 %v7040, 88
        %v8572 = vpop.permute.xlu0 %8571
        %8573 = vrot.lane.b32.xlu0 %v7041, 88
        %v8574 = vpop.permute.xlu0 %8573
        %8575 = vrot.lane.b32.xlu0 %v7042, 88
        %v8576 = vpop.permute.xlu0 %8575
        %8577 = vrot.lane.b32.xlu0 %v7043, 88
        %v8578 = vpop.permute.xlu0 %8577
        %8579 = vrot.lane.b32.xlu0 %v7044, 88
        %v8580 = vpop.permute.xlu0 %8579
        %v8581 = vsel %vm4158, %v8572, %v8574
        %v8582 = vsel %vm4158, %v8574, %v8576
        %v8583 = vsel %vm4158, %v8576, %v8578
        %v8584 = vsel %vm4158, %v8578, %v8580
        %v8590 = vsel %vm445, %v8570, 0
        %8592 = vmatprep.subr.mxu0 %v8582
        %8593 = vmatpush1.msra.mxu0 %v8581
        %8594 = vmatprep.subr.mxu0 0.0
        %8595 = vmatpush1.msra.mxu0 0.0
        %8596 = vmatprep.subr.mxu0 0.0
        %8597 = vmatpush1.msra.mxu0 0.0
        %8598 = vmatprep.subr.mxu0 0.0
        %8599 = vmatpush1.msra.mxu0 0.0
        %8600 = vmatprep.subr.mxu0 0.0
        %8601 = vmatpush1.msra.mxu0 0.0
        %8602 = vmatprep.subr.mxu0 0.0
        %8603 = vmatpush1.msra.mxu0 0.0
        %8604 = vmatprep.subr.mxu0 0.0
        %8605 = vmatpush1.msra.mxu0 0.0
        %8606 = vmatprep.subr.mxu0 0.0
        %8607 = vmatpush1.msra.mxu0 0.0
        %8608 = vmatprep.subr.mxu0 0.0
        %8609 = vmatpush1.msra.mxu0 0.0
        %8610 = vmatprep.subr.mxu0 0.0
        %8611 = vmatpush1.msra.mxu0 0.0
        %8612 = vmatprep.subr.mxu0 0.0
        %8613 = vmatpush1.msra.mxu0 0.0
        %8614 = vmatprep.subr.mxu0 0.0
        %8615 = vmatpush1.msra.mxu0 0.0
        %8616 = vmatprep.subr.mxu0 0.0
        %8617 = vmatpush1.msra.mxu0 0.0
        %8618 = vmatprep.subr.mxu0 0.0
        %8619 = vmatpush1.msra.mxu0 0.0
        %8620 = vmatprep.subr.mxu0 0.0
        %8621 = vmatpush1.msra.mxu0 0.0
        %8622 = vmatprep.subr.mxu0 0.0
        %8623 = vmatpush1.msra.mxu0 0.0
        %8624 = vmatprep.subr.mxu0 0.0
        %8625 = vmatpush1.msra.mxu0 0.0
        %8626 = vmatprep.subr.mxu0 0.0
        %8627 = vmatpush1.msra.mxu0 0.0
        %8628 = vmatprep.subr.mxu0 0.0
        %8629 = vmatpush1.msra.mxu0 0.0
        %8630 = vmatprep.subr.mxu0 0.0
        %8631 = vmatpush1.msra.mxu0 0.0
        %8632 = vmatprep.subr.mxu0 0.0
        %8633 = vmatpush1.msra.mxu0 0.0
        %8634 = vmatprep.subr.mxu0 0.0
        %8635 = vmatpush1.msra.mxu0 0.0
        %8636 = vmatprep.subr.mxu0 0.0
        %8637 = vmatpush1.msra.mxu0 0.0
        %8638 = vmatprep.subr.mxu0 0.0
        %8639 = vmatpush1.msra.mxu0 0.0
        %8640 = vmatprep.subr.mxu0 0.0
        %8641 = vmatpush1.msra.mxu0 0.0
        %8642 = vmatprep.subr.mxu0 0.0
        %8643 = vmatpush1.msra.mxu0 0.0
        %8644 = vmatprep.subr.mxu0 0.0
        %8645 = vmatpush1.msra.mxu0 0.0
        %8646 = vmatprep.subr.mxu0 0.0
        %8647 = vmatpush1.msra.mxu0 0.0
        %8648 = vmatprep.subr.mxu0 0.0
        %8649 = vmatpush1.msra.mxu0 0.0
        %8650 = vmatprep.subr.mxu0 0.0
        %8651 = vmatpush1.msra.mxu0 0.0
        %8652 = vmatprep.subr.mxu0 0.0
        %8653 = vmatpush1.msra.mxu0 0.0
        %8654 = vmatprep.subr.mxu0 0.0
        %8655 = vmatpush1.msra.mxu0 0.0
        %8656 = vmatprep.mubr.f32.mxu0 0.0
        %8657 = vmatmul.mubr.f32.gmra.mrb[0].mxu0 %v8590
        %v8658 = vpop.f32.mrb[0].mxu0
        %v8659 = vadd.f32 0.0, %v8658
        %v8660 = vpop.f32.mrb[0].mxu0
        %v8661 = vadd.f32 0.0, %v8660
        %8662 = vdwg.mxu0
        %8663 = vmatprep.subr.mxu0 %v8584
        %8664 = vmatpush1.msra.mxu0 %v8583
        %8665 = vmatprep.subr.mxu0 0.0
        %8666 = vmatpush1.msra.mxu0 0.0
        %8667 = vmatprep.subr.mxu0 0.0
        %8668 = vmatpush1.msra.mxu0 0.0
        %8669 = vmatprep.subr.mxu0 0.0
        %8670 = vmatpush1.msra.mxu0 0.0
        %8671 = vmatprep.subr.mxu0 0.0
        %8672 = vmatpush1.msra.mxu0 0.0
        %8673 = vmatprep.subr.mxu0 0.0
        %8674 = vmatpush1.msra.mxu0 0.0
        %8675 = vmatprep.subr.mxu0 0.0
        %8676 = vmatpush1.msra.mxu0 0.0
        %8677 = vmatprep.subr.mxu0 0.0
        %8678 = vmatpush1.msra.mxu0 0.0
        %8679 = vmatprep.subr.mxu0 0.0
        %8680 = vmatpush1.msra.mxu0 0.0
        %8681 = vmatprep.subr.mxu0 0.0
        %8682 = vmatpush1.msra.mxu0 0.0
        %8683 = vmatprep.subr.mxu0 0.0
        %8684 = vmatpush1.msra.mxu0 0.0
        %8685 = vmatprep.subr.mxu0 0.0
        %8686 = vmatpush1.msra.mxu0 0.0
        %8687 = vmatprep.subr.mxu0 0.0
        %8688 = vmatpush1.msra.mxu0 0.0
        %8689 = vmatprep.subr.mxu0 0.0
        %8690 = vmatpush1.msra.mxu0 0.0
        %8691 = vmatprep.subr.mxu0 0.0
        %8692 = vmatpush1.msra.mxu0 0.0
        %8693 = vmatprep.subr.mxu0 0.0
        %8694 = vmatpush1.msra.mxu0 0.0
        %8695 = vmatprep.subr.mxu0 0.0
        %8696 = vmatpush1.msra.mxu0 0.0
        %8697 = vmatprep.subr.mxu0 0.0
        %8698 = vmatpush1.msra.mxu0 0.0
        %8699 = vmatprep.subr.mxu0 0.0
        %8700 = vmatpush1.msra.mxu0 0.0
        %8701 = vmatprep.subr.mxu0 0.0
        %8702 = vmatpush1.msra.mxu0 0.0
        %8703 = vmatprep.subr.mxu0 0.0
        %8704 = vmatpush1.msra.mxu0 0.0
        %8705 = vmatprep.subr.mxu0 0.0
        %8706 = vmatpush1.msra.mxu0 0.0
        %8707 = vmatprep.subr.mxu0 0.0
        %8708 = vmatpush1.msra.mxu0 0.0
        %8709 = vmatprep.subr.mxu0 0.0
        %8710 = vmatpush1.msra.mxu0 0.0
        %8711 = vmatprep.subr.mxu0 0.0
        %8712 = vmatpush1.msra.mxu0 0.0
        %8713 = vmatprep.subr.mxu0 0.0
        %8714 = vmatpush1.msra.mxu0 0.0
        %8715 = vmatprep.subr.mxu0 0.0
        %8716 = vmatpush1.msra.mxu0 0.0
        %8717 = vmatprep.subr.mxu0 0.0
        %8718 = vmatpush1.msra.mxu0 0.0
        %8719 = vmatprep.subr.mxu0 0.0
        %8720 = vmatpush1.msra.mxu0 0.0
        %8721 = vmatprep.subr.mxu0 0.0
        %8722 = vmatpush1.msra.mxu0 0.0
        %8723 = vmatprep.subr.mxu0 0.0
        %8724 = vmatpush1.msra.mxu0 0.0
        %8725 = vmatprep.subr.mxu0 0.0
        %8726 = vmatpush1.msra.mxu0 0.0
        %8727 = vmatprep.mubr.f32.mxu0 0.0
        %8728 = vmatmul.mubr.f32.gmra.mrb[0].mxu0 %v8590
        %v8729 = vpop.f32.mrb[0].mxu0
        %v8730 = vadd.f32 0.0, %v8729
        %v8731 = vpop.f32.mrb[0].mxu0
        %v8732 = vadd.f32 0.0, %v8731
        %8733 = vdwg.mxu0
        %v8734 = vadd.f32 %v8565, %v8659
        %v8735 = vadd.f32 %v8566, %v8661
        %v8736 = vadd.f32 %v8567, %v8730
        %v8737 = vadd.f32 %v8568, %v8732
        %s8738 = scalar_lea.vmem %s6, 184
        %v8739 = vld [vmem:[%s8738] sm:$0xff]
        %8740 = vrot.lane.b32.xlu0 %v7040, 87
        %v8741 = vpop.permute.xlu0 %8740
        %8742 = vrot.lane.b32.xlu0 %v7041, 87
        %v8743 = vpop.permute.xlu0 %8742
        %8744 = vrot.lane.b32.xlu0 %v7042, 87
        %v8745 = vpop.permute.xlu0 %8744
        %8746 = vrot.lane.b32.xlu0 %v7043, 87
        %v8747 = vpop.permute.xlu0 %8746
        %8748 = vrot.lane.b32.xlu0 %v7044, 87
        %v8749 = vpop.permute.xlu0 %8748
        %v8750 = vsel %vm4328, %v8741, %v8743
        %v8751 = vsel %vm4328, %v8743, %v8745
        %v8752 = vsel %vm4328, %v8745, %v8747
        %v8753 = vsel %vm4328, %v8747, %v8749
        %v8759 = vsel %vm445, %v8739, 0
        %8761 = vmatprep.subr.mxu0 %v8751
        %8762 = vmatpush1.msra.mxu0 %v8750
        %8763 = vmatprep.subr.mxu0 0.0
        %8764 = vmatpush1.msra.mxu0 0.0
        %8765 = vmatprep.subr.mxu0 0.0
        %8766 = vmatpush1.msra.mxu0 0.0
        %8767 = vmatprep.subr.mxu0 0.0
        %8768 = vmatpush1.msra.mxu0 0.0
        %8769 = vmatprep.subr.mxu0 0.0
        %8770 = vmatpush1.msra.mxu0 0.0
        %8771 = vmatprep.subr.mxu0 0.0
        %8772 = vmatpush1.msra.mxu0 0.0
        %8773 = vmatprep.subr.mxu0 0.0
        %8774 = vmatpush1.msra.mxu0 0.0
        %8775 = vmatprep.subr.mxu0 0.0
        %8776 = vmatpush1.msra.mxu0 0.0
        %8777 = vmatprep.subr.mxu0 0.0
        %8778 = vmatpush1.msra.mxu0 0.0
        %8779 = vmatprep.subr.mxu0 0.0
        %8780 = vmatpush1.msra.mxu0 0.0
        %8781 = vmatprep.subr.mxu0 0.0
        %8782 = vmatpush1.msra.mxu0 0.0
        %8783 = vmatprep.subr.mxu0 0.0
        %8784 = vmatpush1.msra.mxu0 0.0
        %8785 = vmatprep.subr.mxu0 0.0
        %8786 = vmatpush1.msra.mxu0 0.0
        %8787 = vmatprep.subr.mxu0 0.0
        %8788 = vmatpush1.msra.mxu0 0.0
        %8789 = vmatprep.subr.mxu0 0.0
        %8790 = vmatpush1.msra.mxu0 0.0
        %8791 = vmatprep.subr.mxu0 0.0
        %8792 = vmatpush1.msra.mxu0 0.0
        %8793 = vmatprep.subr.mxu0 0.0
        %8794 = vmatpush1.msra.mxu0 0.0
        %8795 = vmatprep.subr.mxu0 0.0
        %8796 = vmatpush1.msra.mxu0 0.0
        %8797 = vmatprep.subr.mxu0 0.0
        %8798 = vmatpush1.msra.mxu0 0.0
        %8799 = vmatprep.subr.mxu0 0.0
        %8800 = vmatpush1.msra.mxu0 0.0
        %8801 = vmatprep.subr.mxu0 0.0
        %8802 = vmatpush1.msra.mxu0 0.0
        %8803 = vmatprep.subr.mxu0 0.0
        %8804 = vmatpush1.msra.mxu0 0.0
        %8805 = vmatprep.subr.mxu0 0.0
        %8806 = vmatpush1.msra.mxu0 0.0
        %8807 = vmatprep.subr.mxu0 0.0
        %8808 = vmatpush1.msra.mxu0 0.0
        %8809 = vmatprep.subr.mxu0 0.0
        %8810 = vmatpush1.msra.mxu0 0.0
        %8811 = vmatprep.subr.mxu0 0.0
        %8812 = vmatpush1.msra.mxu0 0.0
        %8813 = vmatprep.subr.mxu0 0.0
        %8814 = vmatpush1.msra.mxu0 0.0
        %8815 = vmatprep.subr.mxu0 0.0
        %8816 = vmatpush1.msra.mxu0 0.0
        %8817 = vmatprep.subr.mxu0 0.0
        %8818 = vmatpush1.msra.mxu0 0.0
        %8819 = vmatprep.subr.mxu0 0.0
        %8820 = vmatpush1.msra.mxu0 0.0
        %8821 = vmatprep.subr.mxu0 0.0
        %8822 = vmatpush1.msra.mxu0 0.0
        %8823 = vmatprep.subr.mxu0 0.0
        %8824 = vmatpush1.msra.mxu0 0.0
        %8825 = vmatprep.mubr.f32.mxu0 0.0
        %8826 = vmatmul.mubr.f32.gmra.mrb[0].mxu0 %v8759
        %v8827 = vpop.f32.mrb[0].mxu0
        %v8828 = vadd.f32 0.0, %v8827
        %v8829 = vpop.f32.mrb[0].mxu0
        %v8830 = vadd.f32 0.0, %v8829
        %8831 = vdwg.mxu0
        %8832 = vmatprep.subr.mxu0 %v8753
        %8833 = vmatpush1.msra.mxu0 %v8752
        %8834 = vmatprep.subr.mxu0 0.0
        %8835 = vmatpush1.msra.mxu0 0.0
        %8836 = vmatprep.subr.mxu0 0.0
        %8837 = vmatpush1.msra.mxu0 0.0
        %8838 = vmatprep.subr.mxu0 0.0
        %8839 = vmatpush1.msra.mxu0 0.0
        %8840 = vmatprep.subr.mxu0 0.0
        %8841 = vmatpush1.msra.mxu0 0.0
        %8842 = vmatprep.subr.mxu0 0.0
        %8843 = vmatpush1.msra.mxu0 0.0
        %8844 = vmatprep.subr.mxu0 0.0
        %8845 = vmatpush1.msra.mxu0 0.0
        %8846 = vmatprep.subr.mxu0 0.0
        %8847 = vmatpush1.msra.mxu0 0.0
        %8848 = vmatprep.subr.mxu0 0.0
        %8849 = vmatpush1.msra.mxu0 0.0
        %8850 = vmatprep.subr.mxu0 0.0
        %8851 = vmatpush1.msra.mxu0 0.0
        %8852 = vmatprep.subr.mxu0 0.0
        %8853 = vmatpush1.msra.mxu0 0.0
        %8854 = vmatprep.subr.mxu0 0.0
        %8855 = vmatpush1.msra.mxu0 0.0
        %8856 = vmatprep.subr.mxu0 0.0
        %8857 = vmatpush1.msra.mxu0 0.0
        %8858 = vmatprep.subr.mxu0 0.0
        %8859 = vmatpush1.msra.mxu0 0.0
        %8860 = vmatprep.subr.mxu0 0.0
        %8861 = vmatpush1.msra.mxu0 0.0
        %8862 = vmatprep.subr.mxu0 0.0
        %8863 = vmatpush1.msra.mxu0 0.0
        %8864 = vmatprep.subr.mxu0 0.0
        %8865 = vmatpush1.msra.mxu0 0.0
        %8866 = vmatprep.subr.mxu0 0.0
        %8867 = vmatpush1.msra.mxu0 0.0
        %8868 = vmatprep.subr.mxu0 0.0
        %8869 = vmatpush1.msra.mxu0 0.0
        %8870 = vmatprep.subr.mxu0 0.0
        %8871 = vmatpush1.msra.mxu0 0.0
        %8872 = vmatprep.subr.mxu0 0.0
        %8873 = vmatpush1.msra.mxu0 0.0
        %8874 = vmatprep.subr.mxu0 0.0
        %8875 = vmatpush1.msra.mxu0 0.0
        %8876 = vmatprep.subr.mxu0 0.0
        %8877 = vmatpush1.msra.mxu0 0.0
        %8878 = vmatprep.subr.mxu0 0.0
        %8879 = vmatpush1.msra.mxu0 0.0
        %8880 = vmatprep.subr.mxu0 0.0
        %8881 = vmatpush1.msra.mxu0 0.0
        %8882 = vmatprep.subr.mxu0 0.0
        %8883 = vmatpush1.msra.mxu0 0.0
        %8884 = vmatprep.subr.mxu0 0.0
        %8885 = vmatpush1.msra.mxu0 0.0
        %8886 = vmatprep.subr.mxu0 0.0
        %8887 = vmatpush1.msra.mxu0 0.0
        %8888 = vmatprep.subr.mxu0 0.0
        %8889 = vmatpush1.msra.mxu0 0.0
        %8890 = vmatprep.subr.mxu0 0.0
        %8891 = vmatpush1.msra.mxu0 0.0
        %8892 = vmatprep.subr.mxu0 0.0
        %8893 = vmatpush1.msra.mxu0 0.0
        %8894 = vmatprep.subr.mxu0 0.0
        %8895 = vmatpush1.msra.mxu0 0.0
        %8896 = vmatprep.mubr.f32.mxu0 0.0
        %8897 = vmatmul.mubr.f32.gmra.mrb[0].mxu0 %v8759
        %v8898 = vpop.f32.mrb[0].mxu0
        %v8899 = vadd.f32 0.0, %v8898
        %v8900 = vpop.f32.mrb[0].mxu0
        %v8901 = vadd.f32 0.0, %v8900
        %8902 = vdwg.mxu0
        %v8903 = vadd.f32 %v8734, %v8828
        %v8904 = vadd.f32 %v8735, %v8830
        %v8905 = vadd.f32 %v8736, %v8899
        %v8906 = vadd.f32 %v8737, %v8901
        %s8907 = scalar_lea.vmem %s6, 192
        %v8908 = vld [vmem:[%s8907] sm:$0xff]
        %8909 = vrot.lane.b32.xlu0 %v7040, 86
        %v8910 = vpop.permute.xlu0 %8909
        %8911 = vrot.lane.b32.xlu0 %v7041, 86
        %v8912 = vpop.permute.xlu0 %8911
        %8913 = vrot.lane.b32.xlu0 %v7042, 86
        %v8914 = vpop.permute.xlu0 %8913
        %8915 = vrot.lane.b32.xlu0 %v7043, 86
        %v8916 = vpop.permute.xlu0 %8915
        %8917 = vrot.lane.b32.xlu0 %v7044, 86
        %v8918 = vpop.permute.xlu0 %8917
        %v8919 = vsel %vm4498, %v8910, %v8912
        %v8920 = vsel %vm4498, %v8912, %v8914
        %v8921 = vsel %vm4498, %v8914, %v8916
        %v8922 = vsel %vm4498, %v8916, %v8918
        %v8928 = vsel %vm445, %v8908, 0
        %8930 = vmatprep.subr.mxu0 %v8920
        %8931 = vmatpush1.msra.mxu0 %v8919
        %8932 = vmatprep.subr.mxu0 0.0
        %8933 = vmatpush1.msra.mxu0 0.0
        %8934 = vmatprep.subr.mxu0 0.0
        %8935 = vmatpush1.msra.mxu0 0.0
        %8936 = vmatprep.subr.mxu0 0.0
        %8937 = vmatpush1.msra.mxu0 0.0
        %8938 = vmatprep.subr.mxu0 0.0
        %8939 = vmatpush1.msra.mxu0 0.0
        %8940 = vmatprep.subr.mxu0 0.0
        %8941 = vmatpush1.msra.mxu0 0.0
        %8942 = vmatprep.subr.mxu0 0.0
        %8943 = vmatpush1.msra.mxu0 0.0
        %8944 = vmatprep.subr.mxu0 0.0
        %8945 = vmatpush1.msra.mxu0 0.0
        %8946 = vmatprep.subr.mxu0 0.0
        %8947 = vmatpush1.msra.mxu0 0.0
        %8948 = vmatprep.subr.mxu0 0.0
        %8949 = vmatpush1.msra.mxu0 0.0
        %8950 = vmatprep.subr.mxu0 0.0
        %8951 = vmatpush1.msra.mxu0 0.0
        %8952 = vmatprep.subr.mxu0 0.0
        %8953 = vmatpush1.msra.mxu0 0.0
        %8954 = vmatprep.subr.mxu0 0.0
        %8955 = vmatpush1.msra.mxu0 0.0
        %8956 = vmatprep.subr.mxu0 0.0
        %8957 = vmatpush1.msra.mxu0 0.0
        %8958 = vmatprep.subr.mxu0 0.0
        %8959 = vmatpush1.msra.mxu0 0.0
        %8960 = vmatprep.subr.mxu0 0.0
        %8961 = vmatpush1.msra.mxu0 0.0
        %8962 = vmatprep.subr.mxu0 0.0
        %8963 = vmatpush1.msra.mxu0 0.0
        %8964 = vmatprep.subr.mxu0 0.0
        %8965 = vmatpush1.msra.mxu0 0.0
        %8966 = vmatprep.subr.mxu0 0.0
        %8967 = vmatpush1.msra.mxu0 0.0
        %8968 = vmatprep.subr.mxu0 0.0
        %8969 = vmatpush1.msra.mxu0 0.0
        %8970 = vmatprep.subr.mxu0 0.0
        %8971 = vmatpush1.msra.mxu0 0.0
        %8972 = vmatprep.subr.mxu0 0.0
        %8973 = vmatpush1.msra.mxu0 0.0
        %8974 = vmatprep.subr.mxu0 0.0
        %8975 = vmatpush1.msra.mxu0 0.0
        %8976 = vmatprep.subr.mxu0 0.0
        %8977 = vmatpush1.msra.mxu0 0.0
        %8978 = vmatprep.subr.mxu0 0.0
        %8979 = vmatpush1.msra.mxu0 0.0
        %8980 = vmatprep.subr.mxu0 0.0
        %8981 = vmatpush1.msra.mxu0 0.0
        %8982 = vmatprep.subr.mxu0 0.0
        %8983 = vmatpush1.msra.mxu0 0.0
        %8984 = vmatprep.subr.mxu0 0.0
        %8985 = vmatpush1.msra.mxu0 0.0
        %8986 = vmatprep.subr.mxu0 0.0
        %8987 = vmatpush1.msra.mxu0 0.0
        %8988 = vmatprep.subr.mxu0 0.0
        %8989 = vmatpush1.msra.mxu0 0.0
        %8990 = vmatprep.subr.mxu0 0.0
        %8991 = vmatpush1.msra.mxu0 0.0
        %8992 = vmatprep.subr.mxu0 0.0
        %8993 = vmatpush1.msra.mxu0 0.0
        %8994 = vmatprep.mubr.f32.mxu0 0.0
        %8995 = vmatmul.mubr.f32.gmra.mrb[0].mxu0 %v8928
        %v8996 = vpop.f32.mrb[0].mxu0
        %v8997 = vadd.f32 0.0, %v8996
        %v8998 = vpop.f32.mrb[0].mxu0
        %v8999 = vadd.f32 0.0, %v8998
        %9000 = vdwg.mxu0
        %9001 = vmatprep.subr.mxu0 %v8922
        %9002 = vmatpush1.msra.mxu0 %v8921
        %9003 = vmatprep.subr.mxu0 0.0
        %9004 = vmatpush1.msra.mxu0 0.0
        %9005 = vmatprep.subr.mxu0 0.0
        %9006 = vmatpush1.msra.mxu0 0.0
        %9007 = vmatprep.subr.mxu0 0.0
        %9008 = vmatpush1.msra.mxu0 0.0
        %9009 = vmatprep.subr.mxu0 0.0
        %9010 = vmatpush1.msra.mxu0 0.0
        %9011 = vmatprep.subr.mxu0 0.0
        %9012 = vmatpush1.msra.mxu0 0.0
        %9013 = vmatprep.subr.mxu0 0.0
        %9014 = vmatpush1.msra.mxu0 0.0
        %9015 = vmatprep.subr.mxu0 0.0
        %9016 = vmatpush1.msra.mxu0 0.0
        %9017 = vmatprep.subr.mxu0 0.0
        %9018 = vmatpush1.msra.mxu0 0.0
        %9019 = vmatprep.subr.mxu0 0.0
        %9020 = vmatpush1.msra.mxu0 0.0
        %9021 = vmatprep.subr.mxu0 0.0
        %9022 = vmatpush1.msra.mxu0 0.0
        %9023 = vmatprep.subr.mxu0 0.0
        %9024 = vmatpush1.msra.mxu0 0.0
        %9025 = vmatprep.subr.mxu0 0.0
        %9026 = vmatpush1.msra.mxu0 0.0
        %9027 = vmatprep.subr.mxu0 0.0
        %9028 = vmatpush1.msra.mxu0 0.0
        %9029 = vmatprep.subr.mxu0 0.0
        %9030 = vmatpush1.msra.mxu0 0.0
        %9031 = vmatprep.subr.mxu0 0.0
        %9032 = vmatpush1.msra.mxu0 0.0
        %9033 = vmatprep.subr.mxu0 0.0
        %9034 = vmatpush1.msra.mxu0 0.0
        %9035 = vmatprep.subr.mxu0 0.0
        %9036 = vmatpush1.msra.mxu0 0.0
        %9037 = vmatprep.subr.mxu0 0.0
        %9038 = vmatpush1.msra.mxu0 0.0
        %9039 = vmatprep.subr.mxu0 0.0
        %9040 = vmatpush1.msra.mxu0 0.0
        %9041 = vmatprep.subr.mxu0 0.0
        %9042 = vmatpush1.msra.mxu0 0.0
        %9043 = vmatprep.subr.mxu0 0.0
        %9044 = vmatpush1.msra.mxu0 0.0
        %9045 = vmatprep.subr.mxu0 0.0
        %9046 = vmatpush1.msra.mxu0 0.0
        %9047 = vmatprep.subr.mxu0 0.0
        %9048 = vmatpush1.msra.mxu0 0.0
        %9049 = vmatprep.subr.mxu0 0.0
        %9050 = vmatpush1.msra.mxu0 0.0
        %9051 = vmatprep.subr.mxu0 0.0
        %9052 = vmatpush1.msra.mxu0 0.0
        %9053 = vmatprep.subr.mxu0 0.0
        %9054 = vmatpush1.msra.mxu0 0.0
        %9055 = vmatprep.subr.mxu0 0.0
        %9056 = vmatpush1.msra.mxu0 0.0
        %9057 = vmatprep.subr.mxu0 0.0
        %9058 = vmatpush1.msra.mxu0 0.0
        %9059 = vmatprep.subr.mxu0 0.0
        %9060 = vmatpush1.msra.mxu0 0.0
        %9061 = vmatprep.subr.mxu0 0.0
        %9062 = vmatpush1.msra.mxu0 0.0
        %9063 = vmatprep.subr.mxu0 0.0
        %9064 = vmatpush1.msra.mxu0 0.0
        %9065 = vmatprep.mubr.f32.mxu0 0.0
        %9066 = vmatmul.mubr.f32.gmra.mrb[0].mxu0 %v8928
        %v9067 = vpop.f32.mrb[0].mxu0
        %v9068 = vadd.f32 0.0, %v9067
        %v9069 = vpop.f32.mrb[0].mxu0
        %v9070 = vadd.f32 0.0, %v9069
        %9071 = vdwg.mxu0
        %v9072 = vadd.f32 %v8903, %v8997
        %v9073 = vadd.f32 %v8904, %v8999
        %v9074 = vadd.f32 %v8905, %v9068
        %v9075 = vadd.f32 %v8906, %v9070
        %v9076 = vld [vmem:[%s7] sm:$0xff]
        %v9077 = vld [vmem:[%s8] sm:$0xff]
        %v9078 = vld [vmem:[%s9] sm:$0xff]
        %9080 = vset.pattern.permute.xlu0 0
        %9081 = vperm.xlu0 %9080, %v9076
        %v9082 = vpop.permute.xlu0 %9081
        %v9084 = vadd.f32 %v9072, %v9082
        %v9085 = vadd.f32 %v9073, %v9082
        %v9086 = vadd.f32 %v9074, %v9082
        %v9087 = vadd.f32 %v9075, %v9082
        %v9088 = vmul.f32 %v9084, %v4672
        %v9089 = vmul.f32 %v9085, %v4676
        %v9090 = vmul.f32 %v9086, %v4680
        %v9091 = vmul.f32 %v9087, %v4684
        %v9092 = vadd.f32 %v9088, %v9089
        %v9093 = vadd.f32 %v9092, %v9090
        %v9094 = vadd.f32 %v9093, %v9091
        %9095 = vadd.xlane.f32.xlu0 %v9094
        %v9096 = vpop.xlane.xlu0 %9095
        %v9097 = vmul.f32 %v9088, %v9084
        %v9098 = vmul.f32 %v9089, %v9085
        %v9099 = vmul.f32 %v9090, %v9086
        %v9100 = vmul.f32 %v9091, %v9087
        %v9101 = vadd.f32 %v9097, %v9098
        %v9102 = vadd.f32 %v9101, %v9099
        %v9103 = vadd.f32 %v9102, %v9100
        %9104 = vadd.xlane.f32.xlu0 %v9103
        %v9105 = vpop.xlane.xlu0 %9104
        %v9106 = vmul.f32 %v9096, 0.00390625
        %v9107 = vmul.f32 %v9105, 0.00390625
        %v9108 = vmul.f32 %v9106, %v9106
        %v9109 = vsub.f32 %v9107, %v9108
        %v9110 = vmax.f32 %v9109, 0.0
        %v9111 = vsub.f32 %v9084, %v9106
        %v9112 = vsub.f32 %v9085, %v9106
        %v9113 = vsub.f32 %v9086, %v9106
        %v9114 = vsub.f32 %v9087, %v9106
        %v9115 = vadd.f32 %v9110, 1e-05
        %v9116 = vrsqrt.pop %v9115
        %v9117 = vmul.f32 %v9111, %v9116
        %v9118 = vmul.f32 %v9112, %v9116
        %v9119 = vmul.f32 %v9113, %v9116
        %v9120 = vmul.f32 %v9114, %v9116
        %9122 = vset.pattern.permute.xlu0 0
        %9123 = vperm.xlu0 %9122, %v9077
        %v9124 = vpop.permute.xlu0 %9123
        %v9126 = vmul.f32 %v9117, %v9124
        %v9127 = vmul.f32 %v9118, %v9124
        %v9128 = vmul.f32 %v9119, %v9124
        %v9129 = vmul.f32 %v9120, %v9124
        %9131 = vset.pattern.permute.xlu0 0
        %9132 = vperm.xlu0 %9131, %v9078
        %v9133 = vpop.permute.xlu0 %9132
        %v9135 = vadd.f32 %v9126, %v9133
        %v9136 = vadd.f32 %v9127, %v9133
        %v9137 = vadd.f32 %v9128, %v9133
        %v9138 = vadd.f32 %v9129, %v9133
        %v9139 = vmul.f32 %v9135, 0.5
        %v9140 = vmul.f32 %v9136, 0.5
        %v9141 = vmul.f32 %v9137, 0.5
        %v9142 = vmul.f32 %v9138, 0.5
        %v9143 = vmul.f32 %v9135, 0.70710677
        %v9144 = vmul.f32 %v9136, 0.70710677
        %v9145 = vmul.f32 %v9137, 0.70710677
        %v9146 = vmul.f32 %v9138, 0.70710677
        %v9147 = vand.u32 2147483647, %v9143
        %v9148 = vand.u32 2147483647, %v9144
        %v9149 = vand.u32 2147483647, %v9145
        %v9150 = vand.u32 2147483647, %v9146
        %v9151 = vmul.f32 %v9147, 0.3275911
        %v9152 = vmul.f32 %v9148, 0.3275911
        %v9153 = vmul.f32 %v9149, 0.3275911
        %v9154 = vmul.f32 %v9150, 0.3275911
        %v9155 = vadd.f32 %v9151, 1.0
        %v9156 = vadd.f32 %v9152, 1.0
        %v9157 = vadd.f32 %v9153, 1.0
        %v9158 = vadd.f32 %v9154, 1.0
        %v9159 = vrcp.pop %v9155
        %v9160 = vmul.f32 1.0, %v9159
        %v9161 = vrcp.pop %v9156
        %v9162 = vmul.f32 1.0, %v9161
        %v9163 = vrcp.pop %v9157
        %v9164 = vmul.f32 1.0, %v9163
        %v9165 = vrcp.pop %v9158
        %v9166 = vmul.f32 1.0, %v9165
        %v9167 = vmul.f32 %v9160, 1.0614054
        %v9168 = vmul.f32 %v9162, 1.0614054
        %v9169 = vmul.f32 %v9164, 1.0614054
        %v9170 = vmul.f32 %v9166, 1.0614054
        %v9171 = vadd.f32 %v9167, -1.4531521
        %v9172 = vadd.f32 %v9168, -1.4531521
        %v9173 = vadd.f32 %v9169, -1.4531521
        %v9174 = vadd.f32 %v9170, -1.4531521
        %v9175 = vmul.f32 %v9160, %v9171
        %v9176 = vmul.f32 %v9162, %v9172
        %v9177 = vmul.f32 %v9164, %v9173
        %v9178 = vmul.f32 %v9166, %v9174
        %v9179 = vadd.f32 %v9175, 1.4214138
        %v9180 = vadd.f32 %v9176, 1.4214138
        %v9181 = vadd.f32 %v9177, 1.4214138
        %v9182 = vadd.f32 %v9178, 1.4214138
        %v9183 = vmul.f32 %v9160, %v9179
        %v9184 = vmul.f32 %v9162, %v9180
        %v9185 = vmul.f32 %v9164, %v9181
        %v9186 = vmul.f32 %v9166, %v9182
        %v9187 = vadd.f32 %v9183, -0.28449672
        %v9188 = vadd.f32 %v9184, -0.28449672
        %v9189 = vadd.f32 %v9185, -0.28449672
        %v9190 = vadd.f32 %v9186, -0.28449672
        %v9191 = vmul.f32 %v9160, %v9187
        %v9192 = vmul.f32 %v9162, %v9188
        %v9193 = vmul.f32 %v9164, %v9189
        %v9194 = vmul.f32 %v9166, %v9190
        %v9195 = vadd.f32 %v9191, 0.2548296
        %v9196 = vadd.f32 %v9192, 0.2548296
        %v9197 = vadd.f32 %v9193, 0.2548296
        %v9198 = vadd.f32 %v9194, 0.2548296
        %v9199 = vmul.f32 %v9160, %v9195
        %v9200 = vmul.f32 %v9162, %v9196
        %v9201 = vmul.f32 %v9164, %v9197
        %v9202 = vmul.f32 %v9166, %v9198
        %v9203 = vmul.f32 %v9147, %v9147
        %v9204 = vmul.f32 %v9148, %v9148
        %v9205 = vmul.f32 %v9149, %v9149
        %v9206 = vmul.f32 %v9150, %v9150
        %v9207 = vsub.f32 0.0, %v9203
        %v9208 = vsub.f32 0.0, %v9204
        %v9209 = vsub.f32 0.0, %v9205
        %v9210 = vsub.f32 0.0, %v9206
        %v9211 = vmul.f32 %v9207, 1.442695
        %v9212 = vpow.pop %v9211
        %v9213 = vmul.f32 %v9208, 1.442695
        %v9214 = vpow.pop %v9213
        %v9215 = vmul.f32 %v9209, 1.442695
        %v9216 = vpow.pop %v9215
        %v9217 = vmul.f32 %v9210, 1.442695
        %v9218 = vpow.pop %v9217
        %v9219 = vmul.f32 %v9199, %v9212
        %v9220 = vmul.f32 %v9200, %v9214
        %v9221 = vmul.f32 %v9201, %v9216
        %v9222 = vmul.f32 %v9202, %v9218
        %v9223 = vsub.f32 1.0, %v9219
        %v9224 = vsub.f32 1.0, %v9220
        %v9225 = vsub.f32 1.0, %v9221
        %v9226 = vsub.f32 1.0, %v9222
        %vm9227 = vcmp.ge.f32.partialorder %v9143, 0.0
        %vm9228 = vcmp.ge.f32.partialorder %v9144, 0.0
        %vm9229 = vcmp.ge.f32.partialorder %v9145, 0.0
        %vm9230 = vcmp.ge.f32.partialorder %v9146, 0.0
        %v9231 = vsub.f32 0.0, %v9223
        %v9232 = vsub.f32 0.0, %v9224
        %v9233 = vsub.f32 0.0, %v9225
        %v9234 = vsub.f32 0.0, %v9226
        %v9235 = vsel %vm9227, %v9223, %v9231
        %v9236 = vsel %vm9228, %v9224, %v9232
        %v9237 = vsel %vm9229, %v9225, %v9233
        %v9238 = vsel %vm9230, %v9226, %v9234
        %v9239 = vadd.f32 %v9235, 1.0
        %v9240 = vadd.f32 %v9236, 1.0
        %v9241 = vadd.f32 %v9237, 1.0
        %v9242 = vadd.f32 %v9238, 1.0
        %v9243 = vmul.f32 %v9139, %v9239
        %v9244 = vmul.f32 %v9140, %v9240
        %v9245 = vmul.f32 %v9141, %v9241
        %v9246 = vmul.f32 %v9142, %v9242
        %v9247 = vld [vmem:[%s411 + $0x8] sm:$0xff]
        %v9248 = vld [vmem:[%s411 + $0x10] sm:$0xff]
        %v9249 = vld [vmem:[%s411 + $0x18] sm:$0xff]
        %v9250 = vld [vmem:[%s411 + $0x20] sm:$0xff]
        %v9251 = vld [vmem:[%s10] sm:$0xff]
        %v9252 = vld [vmem:[%s11] sm:$0xff]
        %9254 = vset.pattern.permute.xlu0 0
        %9255 = vperm.xlu0 %9254, %v9252
        %v9256 = vpop.permute.xlu0 %9255
        %v9259 = vsel %vm445, %v9251, 0
        %9261 = vmatprep.subr.mxu0 %v9248
        %9262 = vmatpush1.msra.mxu0 %v9247
        %9263 = vmatprep.subr.mxu0 0.0
        %9264 = vmatpush1.msra.mxu0 0.0
        %9265 = vmatprep.subr.mxu0 0.0
        %9266 = vmatpush1.msra.mxu0 0.0
        %9267 = vmatprep.subr.mxu0 0.0
        %9268 = vmatpush1.msra.mxu0 0.0
        %9269 = vmatprep.subr.mxu0 0.0
        %9270 = vmatpush1.msra.mxu0 0.0
        %9271 = vmatprep.subr.mxu0 0.0
        %9272 = vmatpush1.msra.mxu0 0.0
        %9273 = vmatprep.subr.mxu0 0.0
        %9274 = vmatpush1.msra.mxu0 0.0
        %9275 = vmatprep.subr.mxu0 0.0
        %9276 = vmatpush1.msra.mxu0 0.0
        %9277 = vmatprep.subr.mxu0 0.0
        %9278 = vmatpush1.msra.mxu0 0.0
        %9279 = vmatprep.subr.mxu0 0.0
        %9280 = vmatpush1.msra.mxu0 0.0
        %9281 = vmatprep.subr.mxu0 0.0
        %9282 = vmatpush1.msra.mxu0 0.0
        %9283 = vmatprep.subr.mxu0 0.0
        %9284 = vmatpush1.msra.mxu0 0.0
        %9285 = vmatprep.subr.mxu0 0.0
        %9286 = vmatpush1.msra.mxu0 0.0
        %9287 = vmatprep.subr.mxu0 0.0
        %9288 = vmatpush1.msra.mxu0 0.0
        %9289 = vmatprep.subr.mxu0 0.0
        %9290 = vmatpush1.msra.mxu0 0.0
        %9291 = vmatprep.subr.mxu0 0.0
        %9292 = vmatpush1.msra.mxu0 0.0
        %9293 = vmatprep.subr.mxu0 0.0
        %9294 = vmatpush1.msra.mxu0 0.0
        %9295 = vmatprep.subr.mxu0 0.0
        %9296 = vmatpush1.msra.mxu0 0.0
        %9297 = vmatprep.subr.mxu0 0.0
        %9298 = vmatpush1.msra.mxu0 0.0
        %9299 = vmatprep.subr.mxu0 0.0
        %9300 = vmatpush1.msra.mxu0 0.0
        %9301 = vmatprep.subr.mxu0 0.0
        %9302 = vmatpush1.msra.mxu0 0.0
        %9303 = vmatprep.subr.mxu0 0.0
        %9304 = vmatpush1.msra.mxu0 0.0
        %9305 = vmatprep.subr.mxu0 0.0
        %9306 = vmatpush1.msra.mxu0 0.0
        %9307 = vmatprep.subr.mxu0 0.0
        %9308 = vmatpush1.msra.mxu0 0.0
        %9309 = vmatprep.subr.mxu0 0.0
        %9310 = vmatpush1.msra.mxu0 0.0
        %9311 = vmatprep.subr.mxu0 0.0
        %9312 = vmatpush1.msra.mxu0 0.0
        %9313 = vmatprep.subr.mxu0 0.0
        %9314 = vmatpush1.msra.mxu0 0.0
        %9315 = vmatprep.subr.mxu0 0.0
        %9316 = vmatpush1.msra.mxu0 0.0
        %9317 = vmatprep.subr.mxu0 0.0
        %9318 = vmatpush1.msra.mxu0 0.0
        %9319 = vmatprep.subr.mxu0 0.0
        %9320 = vmatpush1.msra.mxu0 0.0
        %9321 = vmatprep.subr.mxu0 0.0
        %9322 = vmatpush1.msra.mxu0 0.0
        %9323 = vmatprep.subr.mxu0 0.0
        %9324 = vmatpush1.msra.mxu0 0.0
        %9325 = vmatprep.mubr.f32.mxu0 0.0
        %9326 = vmatmul.mubr.f32.gmra.mrb[0].mxu0 %v9259
        %v9327 = vpop.f32.mrb[0].mxu0
        %v9328 = vadd.f32 %v9256, %v9327
        %v9329 = vpop.f32.mrb[0].mxu0
        %v9330 = vadd.f32 %v9256, %v9329
        %9331 = vdwg.mxu0
        %9332 = vmatprep.subr.mxu0 %v9250
        %9333 = vmatpush1.msra.mxu0 %v9249
        %9334 = vmatprep.subr.mxu0 0.0
        %9335 = vmatpush1.msra.mxu0 0.0
        %9336 = vmatprep.subr.mxu0 0.0
        %9337 = vmatpush1.msra.mxu0 0.0
        %9338 = vmatprep.subr.mxu0 0.0
        %9339 = vmatpush1.msra.mxu0 0.0
        %9340 = vmatprep.subr.mxu0 0.0
        %9341 = vmatpush1.msra.mxu0 0.0
        %9342 = vmatprep.subr.mxu0 0.0
        %9343 = vmatpush1.msra.mxu0 0.0
        %9344 = vmatprep.subr.mxu0 0.0
        %9345 = vmatpush1.msra.mxu0 0.0
        %9346 = vmatprep.subr.mxu0 0.0
        %9347 = vmatpush1.msra.mxu0 0.0
        %9348 = vmatprep.subr.mxu0 0.0
        %9349 = vmatpush1.msra.mxu0 0.0
        %9350 = vmatprep.subr.mxu0 0.0
        %9351 = vmatpush1.msra.mxu0 0.0
        %9352 = vmatprep.subr.mxu0 0.0
        %9353 = vmatpush1.msra.mxu0 0.0
        %9354 = vmatprep.subr.mxu0 0.0
        %9355 = vmatpush1.msra.mxu0 0.0
        %9356 = vmatprep.subr.mxu0 0.0
        %9357 = vmatpush1.msra.mxu0 0.0
        %9358 = vmatprep.subr.mxu0 0.0
        %9359 = vmatpush1.msra.mxu0 0.0
        %9360 = vmatprep.subr.mxu0 0.0
        %9361 = vmatpush1.msra.mxu0 0.0
        %9362 = vmatprep.subr.mxu0 0.0
        %9363 = vmatpush1.msra.mxu0 0.0
        %9364 = vmatprep.subr.mxu0 0.0
        %9365 = vmatpush1.msra.mxu0 0.0
        %9366 = vmatprep.subr.mxu0 0.0
        %9367 = vmatpush1.msra.mxu0 0.0
        %9368 = vmatprep.subr.mxu0 0.0
        %9369 = vmatpush1.msra.mxu0 0.0
        %9370 = vmatprep.subr.mxu0 0.0
        %9371 = vmatpush1.msra.mxu0 0.0
        %9372 = vmatprep.subr.mxu0 0.0
        %9373 = vmatpush1.msra.mxu0 0.0
        %9374 = vmatprep.subr.mxu0 0.0
        %9375 = vmatpush1.msra.mxu0 0.0
        %9376 = vmatprep.subr.mxu0 0.0
        %9377 = vmatpush1.msra.mxu0 0.0
        %9378 = vmatprep.subr.mxu0 0.0
        %9379 = vmatpush1.msra.mxu0 0.0
        %9380 = vmatprep.subr.mxu0 0.0
        %9381 = vmatpush1.msra.mxu0 0.0
        %9382 = vmatprep.subr.mxu0 0.0
        %9383 = vmatpush1.msra.mxu0 0.0
        %9384 = vmatprep.subr.mxu0 0.0
        %9385 = vmatpush1.msra.mxu0 0.0
        %9386 = vmatprep.subr.mxu0 0.0
        %9387 = vmatpush1.msra.mxu0 0.0
        %9388 = vmatprep.subr.mxu0 0.0
        %9389 = vmatpush1.msra.mxu0 0.0
        %9390 = vmatprep.subr.mxu0 0.0
        %9391 = vmatpush1.msra.mxu0 0.0
        %9392 = vmatprep.subr.mxu0 0.0
        %9393 = vmatpush1.msra.mxu0 0.0
        %9394 = vmatprep.subr.mxu0 0.0
        %9395 = vmatpush1.msra.mxu0 0.0
        %9396 = vmatprep.mubr.f32.mxu0 0.0
        %9397 = vmatmul.mubr.f32.gmra.mrb[0].mxu0 %v9259
        %v9398 = vpop.f32.mrb[0].mxu0
        %v9399 = vadd.f32 %v9256, %v9398
        %v9400 = vpop.f32.mrb[0].mxu0
        %v9401 = vadd.f32 %v9256, %v9400
        %9402 = vdwg.mxu0
        %v9403 = vadd.f32 %v9243, %v9328
        %v9404 = vadd.f32 %v9244, %v9330
        %v9405 = vadd.f32 %v9245, %v9399
        %v9406 = vadd.f32 %v9246, %v9401
        %v9407 = vmul.f32 %v9403, 0.5
        %v9408 = vmul.f32 %v9404, 0.5
        %v9409 = vmul.f32 %v9405, 0.5
        %v9410 = vmul.f32 %v9406, 0.5
        %v9411 = vmul.f32 %v9403, 0.70710677
        %v9412 = vmul.f32 %v9404, 0.70710677
        %v9413 = vmul.f32 %v9405, 0.70710677
        %v9414 = vmul.f32 %v9406, 0.70710677
        %v9415 = vand.u32 2147483647, %v9411
        %v9416 = vand.u32 2147483647, %v9412
        %v9417 = vand.u32 2147483647, %v9413
        %v9418 = vand.u32 2147483647, %v9414
        %v9419 = vmul.f32 %v9415, 0.3275911
        %v9420 = vmul.f32 %v9416, 0.3275911
        %v9421 = vmul.f32 %v9417, 0.3275911
        %v9422 = vmul.f32 %v9418, 0.3275911
        %v9423 = vadd.f32 %v9419, 1.0
        %v9424 = vadd.f32 %v9420, 1.0
        %v9425 = vadd.f32 %v9421, 1.0
        %v9426 = vadd.f32 %v9422, 1.0
        %v9427 = vrcp.pop %v9423
        %v9428 = vmul.f32 1.0, %v9427
        %v9429 = vrcp.pop %v9424
        %v9430 = vmul.f32 1.0, %v9429
        %v9431 = vrcp.pop %v9425
        %v9432 = vmul.f32 1.0, %v9431
        %v9433 = vrcp.pop %v9426
        %v9434 = vmul.f32 1.0, %v9433
        %v9435 = vmul.f32 %v9428, 1.0614054
        %v9436 = vmul.f32 %v9430, 1.0614054
        %v9437 = vmul.f32 %v9432, 1.0614054
        %v9438 = vmul.f32 %v9434, 1.0614054
        %v9439 = vadd.f32 %v9435, -1.4531521
        %v9440 = vadd.f32 %v9436, -1.4531521
        %v9441 = vadd.f32 %v9437, -1.4531521
        %v9442 = vadd.f32 %v9438, -1.4531521
        %v9443 = vmul.f32 %v9428, %v9439
        %v9444 = vmul.f32 %v9430, %v9440
        %v9445 = vmul.f32 %v9432, %v9441
        %v9446 = vmul.f32 %v9434, %v9442
        %v9447 = vadd.f32 %v9443, 1.4214138
        %v9448 = vadd.f32 %v9444, 1.4214138
        %v9449 = vadd.f32 %v9445, 1.4214138
        %v9450 = vadd.f32 %v9446, 1.4214138
        %v9451 = vmul.f32 %v9428, %v9447
        %v9452 = vmul.f32 %v9430, %v9448
        %v9453 = vmul.f32 %v9432, %v9449
        %v9454 = vmul.f32 %v9434, %v9450
        %v9455 = vadd.f32 %v9451, -0.28449672
        %v9456 = vadd.f32 %v9452, -0.28449672
        %v9457 = vadd.f32 %v9453, -0.28449672
        %v9458 = vadd.f32 %v9454, -0.28449672
        %v9459 = vmul.f32 %v9428, %v9455
        %v9460 = vmul.f32 %v9430, %v9456
        %v9461 = vmul.f32 %v9432, %v9457
        %v9462 = vmul.f32 %v9434, %v9458
        %v9463 = vadd.f32 %v9459, 0.2548296
        %v9464 = vadd.f32 %v9460, 0.2548296
        %v9465 = vadd.f32 %v9461, 0.2548296
        %v9466 = vadd.f32 %v9462, 0.2548296
        %v9467 = vmul.f32 %v9428, %v9463
        %v9468 = vmul.f32 %v9430, %v9464
        %v9469 = vmul.f32 %v9432, %v9465
        %v9470 = vmul.f32 %v9434, %v9466
        %v9471 = vmul.f32 %v9415, %v9415
        %v9472 = vmul.f32 %v9416, %v9416
        %v9473 = vmul.f32 %v9417, %v9417
        %v9474 = vmul.f32 %v9418, %v9418
        %v9475 = vsub.f32 0.0, %v9471
        %v9476 = vsub.f32 0.0, %v9472
        %v9477 = vsub.f32 0.0, %v9473
        %v9478 = vsub.f32 0.0, %v9474
        %v9479 = vmul.f32 %v9475, 1.442695
        %v9480 = vpow.pop %v9479
        %v9481 = vmul.f32 %v9476, 1.442695
        %v9482 = vpow.pop %v9481
        %v9483 = vmul.f32 %v9477, 1.442695
        %v9484 = vpow.pop %v9483
        %v9485 = vmul.f32 %v9478, 1.442695
        %v9486 = vpow.pop %v9485
        %v9487 = vmul.f32 %v9467, %v9480
        %v9488 = vmul.f32 %v9468, %v9482
        %v9489 = vmul.f32 %v9469, %v9484
        %v9490 = vmul.f32 %v9470, %v9486
        %v9491 = vsub.f32 1.0, %v9487
        %v9492 = vsub.f32 1.0, %v9488
        %v9493 = vsub.f32 1.0, %v9489
        %v9494 = vsub.f32 1.0, %v9490
        %vm9495 = vcmp.ge.f32.partialorder %v9411, 0.0
        %vm9496 = vcmp.ge.f32.partialorder %v9412, 0.0
        %vm9497 = vcmp.ge.f32.partialorder %v9413, 0.0
        %vm9498 = vcmp.ge.f32.partialorder %v9414, 0.0
        %v9499 = vsub.f32 0.0, %v9491
        %v9500 = vsub.f32 0.0, %v9492
        %v9501 = vsub.f32 0.0, %v9493
        %v9502 = vsub.f32 0.0, %v9494
        %v9503 = vsel %vm9495, %v9491, %v9499
        %v9504 = vsel %vm9496, %v9492, %v9500
        %v9505 = vsel %vm9497, %v9493, %v9501
        %v9506 = vsel %vm9498, %v9494, %v9502
        %v9507 = vadd.f32 %v9503, 1.0
        %v9508 = vadd.f32 %v9504, 1.0
        %v9509 = vadd.f32 %v9505, 1.0
        %v9510 = vadd.f32 %v9506, 1.0
        %v9511 = vmul.f32 %v9407, %v9507
        %v9512 = vmul.f32 %v9408, %v9508
        %v9513 = vmul.f32 %v9409, %v9509
        %v9514 = vmul.f32 %v9410, %v9510
        %9515 = vst [vmem:[%s406] sm:$0xff] %v9511
        %9516 = vst [vmem:[%s406 + $0x8] sm:$0xff] %v9512
        %9517 = vst [vmem:[%s406 + $0x10] sm:$0xff] %v9513
        %9518 = vst [vmem:[%s406 + $0x18] sm:$0xff] %v9514
        %s9519 = sand.u32 %s291, 1
        %s9520 = scalar_lea.sflag [#allocation4], %s9519
        %s9521 = sand.u32 %s291, 1
        %s9522 = smul.addr %s9521, 32
        %s9523 = scalar_lea.vmem [#allocation3], %s9522
        // Predicated region
        $region69: #{tpu_custom_call.1} parent=67 // pred_check
          %p9524 = pneg %p301
        $region70: #{tpu_custom_call.1} parent=67 // pred_check_branch
          %9526 = sbr.rel (%p9524) target = $region72
        $region71: #{tpu_custom_call.1} parent=67 // pred_region
          %s9528 = ssub.s32 512, 512
          %9529 = vsyncadd %s9520, %s9528
          %s9530 = smul.addr %s26, 4
          %s9531 = smul.addr %s9530, 128
          %s9532 = scalar_lea.hbm %s12, %s9531
          %s9534 = sshll.u32 %s9523, 4
          %s9535 = int_to_ptr.vmem [resolvable:$true] %s9534
          %9537 = dma.vmem_to_hbm [thread:$0]  %s9535, 512, %s9532, %s9520
        $region72: #{tpu_custom_call.1} parent=67 // pred_fallthru
          _
      $region68: #{tpu_custom_call.1} parent=5 // pred_fallthru
        _
      %p9538 = scmp.le.s32.totalorder 2, %s21
      // Predicated region
      $region73: #{tpu_custom_call.1} parent=5 // pred_check
        %p9539 = pneg %p9538
      $region74: #{tpu_custom_call.1} parent=5 // pred_check_branch
        %9541 = sbr.rel (%p9539) target = $region76
      $region75: #{tpu_custom_call.1} parent=5 // pred_region
        %s9542 = ssub.s32 %s21, 2
        // Predicated region
        $region77: #{tpu_custom_call.1} parent=75 // pred_check
          %p9543 = pneg %p307
        $region78: #{tpu_custom_call.1} parent=75 // pred_check_branch
          %9545 = sbr.rel (%p9543) target = $region80
        $region79: #{tpu_custom_call.1} parent=75 // pred_region
          %s9546 = sand.u32 %s292, 1
          %s9547 = scalar_lea.sflag [#allocation4], %s9546
          %s9548 = sand.u32 %s292, 1
          %s9549 = smul.addr %s9548, 32
          %s9550 = scalar_lea.vmem [#allocation3], %s9549
          %9551 = dma.done %s9547, 512
        $region80: #{tpu_custom_call.1} parent=75 // pred_fallthru
          _
      $region76: #{tpu_custom_call.1} parent=5 // pred_fallthru
        _
    $region6: #{tpu_custom_call.1} parent=1 // loop_footer
      %s25 = sadd.s32 1, %s21
    $region7: #{tpu_custom_call.1} parent=1 // loop_footer_branch
      %20 = sbr.rel target = $region3
    $region8: #{tpu_custom_call.1} parent=1 // loop_exit
      _
    %9552 = vsyncpa [#allocation4], 1
    %s9553 = scalar_lea.sflag [#allocation4], 1
    %9554 = vsyncpa %s9553, 1

</llo_original>
